<compile_context>
chip_gen: v7x
topology: tpu7x:2x2x1
jax: 0.10.0
libtpu: 0.0.40
codegen_flags: <defaults>
</compile_context>

<pallas_src>
import numpy as np
import jax
import jax.numpy as jnp
from jax.experimental import pallas as pl
from jax.experimental.pallas import tpu as pltpu


ENC_CH = [(1, 4), (4, 8), (8, 16), (16, 32), (32, 64), (64, 128)]
DEC_CH = [(128, 64), (64, 32), (32, 16), (16, 8), (8, 4), (4, 1)]


# ----------------------------------------------------------------------------
# Parameters (deterministic, kaiming-normal-like, zero bias)
# ----------------------------------------------------------------------------
def init_params(key, hidden_dim=64):
    keys = iter(jax.random.split(key, 32))
    enc_convs = []
    for cin, cout in ENC_CH:
        std = np.sqrt(2.0 / (cin * 3 * 3))
        w = jax.random.normal(next(keys), (cout, cin, 3, 3), jnp.float32) * std
        enc_convs.append((w, jnp.zeros((cout,), jnp.float32)))
    enc_fc = (
        jax.random.normal(next(keys), (128, hidden_dim), jnp.float32) * np.sqrt(2.0 / 128),
        jnp.zeros((hidden_dim,), jnp.float32),
    )
    dec_fc = (
        jax.random.normal(next(keys), (hidden_dim, 128), jnp.float32) * np.sqrt(2.0 / hidden_dim),
        jnp.zeros((128,), jnp.float32),
    )
    dec_convs = []
    for cin, cout in DEC_CH:
        std = np.sqrt(2.0 / (cin * 4 * 4))
        w = jax.random.normal(next(keys), (cin, cout, 4, 4), jnp.float32) * std
        dec_convs.append((w, jnp.zeros((cout,), jnp.float32)))
    return dict(enc_convs=enc_convs, enc_fc=enc_fc, dec_fc=dec_fc, dec_convs=dec_convs)


# ----------------------------------------------------------------------------
# One-time host-side prepack: fold im2col / padding / pixel-shuffle / channel
# mixing of every layer into (row-op, lane-op, bias) dense matrices acting on
# the fused (B*H, W*C) activation layout.
# ----------------------------------------------------------------------------
def prepack_params(params, batch, in_hw=64):
    B = batch

    enc = []
    Hi = in_hw
    for (w, b) in params["enc_convs"]:
        w_np = np.asarray(w, dtype=np.float32)
        b_np = np.asarray(b, dtype=np.float32)
        Cout, Cin = int(w_np.shape[0]), int(w_np.shape[1])
        Wi = Hi
        Ho, Wo = Hi // 2, Wi // 2
        # Lane operator per kh: (Wi*Cin, Wo*Cout); fused index = w*C + c.
        lane = np.zeros((3, Wi * Cin, Wo * Cout), np.float32)
        # Row gather per kh: (Ho, Hi), hi = 2*ho + kh - 1 (zero-padded edges).
        row = np.zeros((3, Ho, Hi), np.float32)
        for kh in range(3):
            for vo in range(Wo):
                for kw in range(3):
                    wi = 2 * vo + kw - 1
                    if 0 <= wi < Wi:
                        lane[kh, wi * Cin:(wi + 1) * Cin,
                             vo * Cout:(vo + 1) * Cout] = w_np[:, :, kh, kw].T
            for ho in range(Ho):
                hi = 2 * ho + kh - 1
                if 0 <= hi < Hi:
                    row[kh, ho, hi] = 1.0
        rowb = np.stack(
            [np.kron(np.eye(B, dtype=np.float32), row[kh]) for kh in range(3)], 0)
        bias = np.tile(b_np, Wo).reshape(1, Wo * Cout)
        enc.append((jnp.asarray(lane), jnp.asarray(rowb), jnp.asarray(bias)))
        Hi = Ho
    assert Hi == 1, "architecture expects 64x64 input reduced to 1x1"

    wf, bf = params["enc_fc"]
    wd, bd = params["dec_fc"]
    fc = (jnp.asarray(wf, jnp.float32),
          jnp.asarray(bf, jnp.float32).reshape(1, -1),
          jnp.asarray(wd, jnp.float32),
          jnp.asarray(bd, jnp.float32).reshape(1, -1))

    dec = []
    H = 1
    for (w, b) in params["dec_convs"]:
        w_np = np.asarray(w, dtype=np.float32)   # torch layout (Cin, Cout, 4, 4)
        b_np = np.asarray(b, dtype=np.float32)
        Cin, Cout = int(w_np.shape[0]), int(w_np.shape[1])
        W = H
        # Sub-pixel decomposition; term index t = dy*2 + t_r (4 terms).
        # Lane op scatters straight into the interleaved full-res lane vector,
        # so no per-layer pixel-shuffle is needed anywhere.
        lane = np.zeros((4, W * Cin, 2 * W * Cout), np.float32)
        row = np.zeros((4, 2 * H, H), np.float32)
        for dy in range(2):
            for t_r in range(2):
                idx = dy * 2 + t_r
                kh_w = 3 - dy - 2 * t_r
                for j in range(W):
                    for dx in range(2):
                        for t_c in range(2):
                            wi = j + dx + t_c - 1
                            if 0 <= wi < W:
                                kw_w = 3 - dx - 2 * t_c
                                lane[idx, wi * Cin:(wi + 1) * Cin,
                                     (2 * j + dx) * Cout:(2 * j + dx + 1) * Cout] += \
                                    w_np[:, :, kh_w, kw_w]
                for i in range(H):
                    hi = i + dy + t_r - 1
                    if 0 <= hi < H:
                        row[idx, 2 * i + dy, hi] = 1.0
        rowb = np.stack(
            [np.kron(np.eye(B, dtype=np.float32), row[t]) for t in range(4)], 0)
        bias = np.tile(b_np, 2 * W).reshape(1, 2 * W * Cout)
        dec.append((jnp.asarray(lane), jnp.asarray(rowb), jnp.asarray(bias)))
        H = 2 * H
    return {"dec": dec, "enc": enc, "fc": fc}


# ----------------------------------------------------------------------------
# Single fused forward pass
# ----------------------------------------------------------------------------
def _full_spec(a):
    nd = a.ndim
    return pl.BlockSpec(tuple(a.shape), lambda i, _nd=nd: (0,) * _nd)


def image_reconstructor_forward(x, packed):
    """x: (B, 1, 64, 64) NCHW -> (B, 1, 64, 64).  One pallas_call total."""
    B, _, H, W = x.shape
    x2d = x.reshape(B * H, W)                    # fused (B*H, W*Cin) layout, Cin=1
    leaves, treedef = jax.tree_util.tree_flatten(packed)

    def kernel(*refs):
        x_ref = refs[0]
        out_ref = refs[-1]
        p = jax.tree_util.tree_unflatten(treedef, refs[1:-1])

        a = x_ref[...]                                           # (B*64, 64)

        # --- Encoder: 6x (Conv2d k3 s2 p1 + ReLU) ---
        for lane_ref, row_ref, bias_ref in p["enc"]:
            acc = None
            for kh in range(3):
                t = jnp.dot(row_ref[kh], a, preferred_element_type=jnp.float32)
                t = jnp.dot(t, lane_ref[kh], preferred_element_type=jnp.float32)
                acc = t if acc is None else acc + t
            a = jnp.maximum(acc + bias_ref[...], 0.0)            # (B*Ho, Wo*Cout)

        # --- enc_fc (no relu) then dec_fc (+ relu) ---
        wf_ref, bf_ref, wd_ref, bd_ref = p["fc"]
        a = jnp.dot(a, wf_ref[...], preferred_element_type=jnp.float32) + bf_ref[...]
        a = jnp.dot(a, wd_ref[...], preferred_element_type=jnp.float32) + bd_ref[...]
        a = jnp.maximum(a, 0.0)                                  # (B, 128)

        # --- Decoder: 6x (ConvTranspose2d k4 s2 p1 + ReLU) ---
        for lane_ref, row_ref, bias_ref in p["dec"]:
            acc = None
            for t_i in range(4):
                u = jnp.dot(a, lane_ref[t_i], preferred_element_type=jnp.float32)
                u = jnp.dot(row_ref[t_i], u, preferred_element_type=jnp.float32)
                acc = u if acc is None else acc + u
            a = jnp.maximum(acc + bias_ref[...], 0.0)            # (B*2H, 2W*Cout)

        out_ref[...] = a                                         # (B*64, 64)

    nbytes = 4 * (x2d.size + sum(int(l.size) for l in leaves) + B * H * W)
    out2d = pl.pallas_call(
        kernel,
        out_shape=jax.ShapeDtypeStruct((B * H, W), jnp.float32),
        grid=(1,),
        in_specs=[_full_spec(x2d)] + [_full_spec(l) for l in leaves],
        out_specs=pl.BlockSpec((B * H, W), lambda i: (0, 0)),
        compiler_params=pltpu.CompilerParams(
            dimension_semantics=("arbitrary",)),
        cost_estimate=pl.CostEstimate(
            flops=20_000_000, transcendentals=0, bytes_accessed=int(nbytes)),
    )(x2d, *leaves)
    return out2d.reshape(B, 1, H, W)


# ----------------------------------------------------------------------------
# Pure-JAX reference (lax convs) for validation
# ----------------------------------------------------------------------------
def _ref_forward(x, params):
    dn = ("NCHW", "OIHW", "NCHW")
    for w, b in params["enc_convs"]:
        y = jax.lax.conv_general_dilated(x, w, (2, 2), ((1, 1), (1, 1)),
                                         dimension_numbers=dn)
        x = jax.nn.relu(y + b[None, :, None, None])
    B = x.shape[0]
    w, b = params["enc_fc"]
    z = x.reshape(B, -1) @ w + b
    w, b = params["dec_fc"]
    h = jax.nn.relu(z @ w + b)
    y = h.reshape(B, 128, 1, 1)
    for w, b in params["dec_convs"]:
        w_conv = jnp.flip(jnp.transpose(w, (1, 0, 2, 3)), axis=(2, 3))
        o = jax.lax.conv_general_dilated(y, w_conv, (1, 1), ((2, 2), (2, 2)),
                                         lhs_dilation=(2, 2),
                                         dimension_numbers=dn)
        y = jax.nn.relu(o + b[None, :, None, None])
    return y


if __name__ == "__main__":
    key = jax.random.PRNGKey(0)
    k_param, k_x = jax.random.split(key)
    params = init_params(k_param)

    # Input shape is dictated by the architecture: 6 stride-2 convs must reduce
    # 64x64 -> 1x1 so the flatten yields 128 features for the Linear(128, 64).
    B = 2
    x = jax.random.normal(k_x, (B, 1, 64, 64), jnp.float32)

    packed = prepack_params(params, batch=B, in_hw=64)

    fwd = jax.jit(image_reconstructor_forward)
    out = jax.block_until_ready(fwd(x, packed))
    assert out.shape == (B, 1, 64, 64), out.shape

    ref = jax.block_until_ready(_ref_forward(x, params))
    np.testing.assert_allclose(np.asarray(out), np.asarray(ref), rtol=1e-3, atol=1e-3)

    print("KERNEL_OK")
</pallas_src>

<mosaic_0001>
module attributes {stable_mosaic.version = 11 : i64} {
  func.func @kernel(%arg0: i32, %arg1: memref<128x64xf32, #tpu.memory_space<vmem>>, %arg2: memref<4x128x128xf32, #tpu.memory_space<vmem>>, %arg3: memref<4x4x2xf32, #tpu.memory_space<vmem>>, %arg4: memref<1x128xf32, #tpu.memory_space<vmem>>, %arg5: memref<4x128x128xf32, #tpu.memory_space<vmem>>, %arg6: memref<4x8x4xf32, #tpu.memory_space<vmem>>, %arg7: memref<1x128xf32, #tpu.memory_space<vmem>>, %arg8: memref<4x128x128xf32, #tpu.memory_space<vmem>>, %arg9: memref<4x16x8xf32, #tpu.memory_space<vmem>>, %arg10: memref<1x128xf32, #tpu.memory_space<vmem>>, %arg11: memref<4x128x128xf32, #tpu.memory_space<vmem>>, %arg12: memref<4x32x16xf32, #tpu.memory_space<vmem>>, %arg13: memref<1x128xf32, #tpu.memory_space<vmem>>, %arg14: memref<4x128x128xf32, #tpu.memory_space<vmem>>, %arg15: memref<4x64x32xf32, #tpu.memory_space<vmem>>, %arg16: memref<1x128xf32, #tpu.memory_space<vmem>>, %arg17: memref<4x128x64xf32, #tpu.memory_space<vmem>>, %arg18: memref<4x128x64xf32, #tpu.memory_space<vmem>>, %arg19: memref<1x64xf32, #tpu.memory_space<vmem>>, %arg20: memref<3x64x128xf32, #tpu.memory_space<vmem>>, %arg21: memref<3x64x128xf32, #tpu.memory_space<vmem>>, %arg22: memref<1x128xf32, #tpu.memory_space<vmem>>, %arg23: memref<3x128x128xf32, #tpu.memory_space<vmem>>, %arg24: memref<3x32x64xf32, #tpu.memory_space<vmem>>, %arg25: memref<1x128xf32, #tpu.memory_space<vmem>>, %arg26: memref<3x128x128xf32, #tpu.memory_space<vmem>>, %arg27: memref<3x16x32xf32, #tpu.memory_space<vmem>>, %arg28: memref<1x128xf32, #tpu.memory_space<vmem>>, %arg29: memref<3x128x128xf32, #tpu.memory_space<vmem>>, %arg30: memref<3x8x16xf32, #tpu.memory_space<vmem>>, %arg31: memref<1x128xf32, #tpu.memory_space<vmem>>, %arg32: memref<3x128x128xf32, #tpu.memory_space<vmem>>, %arg33: memref<3x4x8xf32, #tpu.memory_space<vmem>>, %arg34: memref<1x128xf32, #tpu.memory_space<vmem>>, %arg35: memref<3x128x128xf32, #tpu.memory_space<vmem>>, %arg36: memref<3x2x4xf32, #tpu.memory_space<vmem>>, %arg37: memref<1x128xf32, #tpu.memory_space<vmem>>, %arg38: memref<128x64xf32, #tpu.memory_space<vmem>>, %arg39: memref<1x64xf32, #tpu.memory_space<vmem>>, %arg40: memref<64x128xf32, #tpu.memory_space<vmem>>, %arg41: memref<1x128xf32, #tpu.memory_space<vmem>>, %arg42: memref<128x64xf32, #tpu.memory_space<vmem>>) attributes {dimension_semantics = [#tpu.dimension_semantics<arbitrary>], iteration_bounds = array<i64: 1>, scalar_prefetch = 0 : i64, scratch_operands = 0 : i64, tpu.core_type = #tpu.core_type<tc>, window_params = [{pipeline_mode = #tpu.pipeline_mode<synchronous>, transform_indices = @transform_0, window_bounds = array<i64: 128, 64>}, {pipeline_mode = #tpu.pipeline_mode<synchronous>, transform_indices = @transform_1, window_bounds = array<i64: 4, 128, 128>}, {pipeline_mode = #tpu.pipeline_mode<synchronous>, transform_indices = @transform_2, window_bounds = array<i64: 4, 4, 2>}, {pipeline_mode = #tpu.pipeline_mode<synchronous>, transform_indices = @transform_3, window_bounds = array<i64: 1, 128>}, {pipeline_mode = #tpu.pipeline_mode<synchronous>, transform_indices = @transform_4, window_bounds = array<i64: 4, 128, 128>}, {pipeline_mode = #tpu.pipeline_mode<synchronous>, transform_indices = @transform_5, window_bounds = array<i64: 4, 8, 4>}, {pipeline_mode = #tpu.pipeline_mode<synchronous>, transform_indices = @transform_6, window_bounds = array<i64: 1, 128>}, {pipeline_mode = #tpu.pipeline_mode<synchronous>, transform_indices = @transform_7, window_bounds = array<i64: 4, 128, 128>}, {pipeline_mode = #tpu.pipeline_mode<synchronous>, transform_indices = @transform_8, window_bounds = array<i64: 4, 16, 8>}, {pipeline_mode = #tpu.pipeline_mode<synchronous>, transform_indices = @transform_9, window_bounds = array<i64: 1, 128>}, {pipeline_mode = #tpu.pipeline_mode<synchronous>, transform_indices = @transform_10, window_bounds = array<i64: 4, 128, 128>}, {pipeline_mode = #tpu.pipeline_mode<synchronous>, transform_indices = @transform_11, window_bounds = array<i64: 4, 32, 16>}, {pipeline_mode = #tpu.pipeline_mode<synchronous>, transform_indices = @transform_12, window_bounds = array<i64: 1, 128>}, {pipeline_mode = #tpu.pipeline_mode<synchronous>, transform_indices = @transform_13, window_bounds = array<i64: 4, 128, 128>}, {pipeline_mode = #tpu.pipeline_mode<synchronous>, transform_indices = @transform_14, window_bounds = array<i64: 4, 64, 32>}, {pipeline_mode = #tpu.pipeline_mode<synchronous>, transform_indices = @transform_15, window_bounds = array<i64: 1, 128>}, {pipeline_mode = #tpu.pipeline_mode<synchronous>, transform_indices = @transform_16, window_bounds = array<i64: 4, 128, 64>}, {pipeline_mode = #tpu.pipeline_mode<synchronous>, transform_indices = @transform_17, window_bounds = array<i64: 4, 128, 64>}, {pipeline_mode = #tpu.pipeline_mode<synchronous>, transform_indices = @transform_18, window_bounds = array<i64: 1, 64>}, {pipeline_mode = #tpu.pipeline_mode<synchronous>, transform_indices = @transform_19, window_bounds = array<i64: 3, 64, 128>}, {pipeline_mode = #tpu.pipeline_mode<synchronous>, transform_indices = @transform_20, window_bounds = array<i64: 3, 64, 128>}, {pipeline_mode = #tpu.pipeline_mode<synchronous>, transform_indices = @transform_21, window_bounds = array<i64: 1, 128>}, {pipeline_mode = #tpu.pipeline_mode<synchronous>, transform_indices = @transform_22, window_bounds = array<i64: 3, 128, 128>}, {pipeline_mode = #tpu.pipeline_mode<synchronous>, transform_indices = @transform_23, window_bounds = array<i64: 3, 32, 64>}, {pipeline_mode = #tpu.pipeline_mode<synchronous>, transform_indices = @transform_24, window_bounds = array<i64: 1, 128>}, {pipeline_mode = #tpu.pipeline_mode<synchronous>, transform_indices = @transform_25, window_bounds = array<i64: 3, 128, 128>}, {pipeline_mode = #tpu.pipeline_mode<synchronous>, transform_indices = @transform_26, window_bounds = array<i64: 3, 16, 32>}, {pipeline_mode = #tpu.pipeline_mode<synchronous>, transform_indices = @transform_27, window_bounds = array<i64: 1, 128>}, {pipeline_mode = #tpu.pipeline_mode<synchronous>, transform_indices = @transform_28, window_bounds = array<i64: 3, 128, 128>}, {pipeline_mode = #tpu.pipeline_mode<synchronous>, transform_indices = @transform_29, window_bounds = array<i64: 3, 8, 16>}, {pipeline_mode = #tpu.pipeline_mode<synchronous>, transform_indices = @transform_30, window_bounds = array<i64: 1, 128>}, {pipeline_mode = #tpu.pipeline_mode<synchronous>, transform_indices = @transform_31, window_bounds = array<i64: 3, 128, 128>}, {pipeline_mode = #tpu.pipeline_mode<synchronous>, transform_indices = @transform_32, window_bounds = array<i64: 3, 4, 8>}, {pipeline_mode = #tpu.pipeline_mode<synchronous>, transform_indices = @transform_33, window_bounds = array<i64: 1, 128>}, {pipeline_mode = #tpu.pipeline_mode<synchronous>, transform_indices = @transform_34, window_bounds = array<i64: 3, 128, 128>}, {pipeline_mode = #tpu.pipeline_mode<synchronous>, transform_indices = @transform_35, window_bounds = array<i64: 3, 2, 4>}, {pipeline_mode = #tpu.pipeline_mode<synchronous>, transform_indices = @transform_36, window_bounds = array<i64: 1, 128>}, {pipeline_mode = #tpu.pipeline_mode<synchronous>, transform_indices = @transform_37, window_bounds = array<i64: 128, 64>}, {pipeline_mode = #tpu.pipeline_mode<synchronous>, transform_indices = @transform_38, window_bounds = array<i64: 1, 64>}, {pipeline_mode = #tpu.pipeline_mode<synchronous>, transform_indices = @transform_39, window_bounds = array<i64: 64, 128>}, {pipeline_mode = #tpu.pipeline_mode<synchronous>, transform_indices = @transform_40, window_bounds = array<i64: 1, 128>}, {pipeline_mode = #tpu.pipeline_mode<synchronous>, transform_indices = @transform_41, window_bounds = array<i64: 128, 64>}]} {
    %c0 = arith.constant 0 : index
    %c0_0 = arith.constant 0 : index
    %0 = vector.load %arg1[%c0, %c0_0] : memref<128x64xf32, #tpu.memory_space<vmem>>, vector<128x64xf32>
    %c0_1 = arith.constant 0 : index
    %c0_2 = arith.constant 0 : index
    %c0_3 = arith.constant 0 : index
    %1 = vector.load %arg21[%c0_1, %c0_2, %c0_3] : memref<3x64x128xf32, #tpu.memory_space<vmem>>, vector<1x64x128xf32>
    %2 = vector.shape_cast %1 : vector<1x64x128xf32> to vector<64x128xf32>
    %cst = arith.constant dense<0.000000e+00> : vector<64x64xf32>
    %3 = tpu.matmul %2, %0, %cst {dimension_numbers = #tpu.dot_dimension_numbers<[1], [0], [0], [1], [0, 0, 1, 1], [], []>} : vector<64x128xf32>, vector<128x64xf32>, vector<64x64xf32> -> vector<64x64xf32>
    %c0_4 = arith.constant 0 : index
    %c0_5 = arith.constant 0 : index
    %c0_6 = arith.constant 0 : index
    %4 = vector.load %arg20[%c0_4, %c0_5, %c0_6] : memref<3x64x128xf32, #tpu.memory_space<vmem>>, vector<1x64x128xf32>
    %5 = vector.shape_cast %4 : vector<1x64x128xf32> to vector<64x128xf32>
    %cst_7 = arith.constant dense<0.000000e+00> : vector<64x128xf32>
    %6 = tpu.matmul %3, %5, %cst_7 {dimension_numbers = #tpu.dot_dimension_numbers<[1], [0], [0], [1], [0, 0, 1, 1], [], []>} : vector<64x64xf32>, vector<64x128xf32>, vector<64x128xf32> -> vector<64x128xf32>
    %c1 = arith.constant 1 : index
    %c0_8 = arith.constant 0 : index
    %c0_9 = arith.constant 0 : index
    %7 = vector.load %arg21[%c1, %c0_8, %c0_9] : memref<3x64x128xf32, #tpu.memory_space<vmem>>, vector<1x64x128xf32>
    %8 = vector.shape_cast %7 : vector<1x64x128xf32> to vector<64x128xf32>
    %cst_10 = arith.constant dense<0.000000e+00> : vector<64x64xf32>
    %9 = tpu.matmul %8, %0, %cst_10 {dimension_numbers = #tpu.dot_dimension_numbers<[1], [0], [0], [1], [0, 0, 1, 1], [], []>} : vector<64x128xf32>, vector<128x64xf32>, vector<64x64xf32> -> vector<64x64xf32>
    %c1_11 = arith.constant 1 : index
    %c0_12 = arith.constant 0 : index
    %c0_13 = arith.constant 0 : index
    %10 = vector.load %arg20[%c1_11, %c0_12, %c0_13] : memref<3x64x128xf32, #tpu.memory_space<vmem>>, vector<1x64x128xf32>
    %11 = vector.shape_cast %10 : vector<1x64x128xf32> to vector<64x128xf32>
    %cst_14 = arith.constant dense<0.000000e+00> : vector<64x128xf32>
    %12 = tpu.matmul %9, %11, %cst_14 {dimension_numbers = #tpu.dot_dimension_numbers<[1], [0], [0], [1], [0, 0, 1, 1], [], []>} : vector<64x64xf32>, vector<64x128xf32>, vector<64x128xf32> -> vector<64x128xf32>
    %13 = arith.addf %6, %12 : vector<64x128xf32>
    %c2 = arith.constant 2 : index
    %c0_15 = arith.constant 0 : index
    %c0_16 = arith.constant 0 : index
    %14 = vector.load %arg21[%c2, %c0_15, %c0_16] : memref<3x64x128xf32, #tpu.memory_space<vmem>>, vector<1x64x128xf32>
    %15 = vector.shape_cast %14 : vector<1x64x128xf32> to vector<64x128xf32>
    %cst_17 = arith.constant dense<0.000000e+00> : vector<64x64xf32>
    %16 = tpu.matmul %15, %0, %cst_17 {dimension_numbers = #tpu.dot_dimension_numbers<[1], [0], [0], [1], [0, 0, 1, 1], [], []>} : vector<64x128xf32>, vector<128x64xf32>, vector<64x64xf32> -> vector<64x64xf32>
    %c2_18 = arith.constant 2 : index
    %c0_19 = arith.constant 0 : index
    %c0_20 = arith.constant 0 : index
    %17 = vector.load %arg20[%c2_18, %c0_19, %c0_20] : memref<3x64x128xf32, #tpu.memory_space<vmem>>, vector<1x64x128xf32>
    %18 = vector.shape_cast %17 : vector<1x64x128xf32> to vector<64x128xf32>
    %cst_21 = arith.constant dense<0.000000e+00> : vector<64x128xf32>
    %19 = tpu.matmul %16, %18, %cst_21 {dimension_numbers = #tpu.dot_dimension_numbers<[1], [0], [0], [1], [0, 0, 1, 1], [], []>} : vector<64x64xf32>, vector<64x128xf32>, vector<64x128xf32> -> vector<64x128xf32>
    %20 = arith.addf %13, %19 : vector<64x128xf32>
    %c0_22 = arith.constant 0 : index
    %c0_23 = arith.constant 0 : index
    %21 = vector.load %arg22[%c0_22, %c0_23] : memref<1x128xf32, #tpu.memory_space<vmem>>, vector<1x128xf32>
    %22 = vector.broadcast %21 : vector<1x128xf32> to vector<64x128xf32>
    %23 = arith.addf %20, %22 : vector<64x128xf32>
    %cst_24 = arith.constant 0.000000e+00 : f32
    %24 = vector.broadcast %cst_24 : f32 to vector<64x128xf32>
    %25 = arith.maximumf %23, %24 : vector<64x128xf32>
    %c0_25 = arith.constant 0 : index
    %c0_26 = arith.constant 0 : index
    %c0_27 = arith.constant 0 : index
    %26 = vector.load %arg24[%c0_25, %c0_26, %c0_27] : memref<3x32x64xf32, #tpu.memory_space<vmem>>, vector<1x32x64xf32>
    %27 = vector.shape_cast %26 : vector<1x32x64xf32> to vector<32x64xf32>
    %cst_28 = arith.constant dense<0.000000e+00> : vector<32x128xf32>
    %28 = tpu.matmul %27, %25, %cst_28 {dimension_numbers = #tpu.dot_dimension_numbers<[1], [0], [0], [1], [0, 0, 1, 1], [], []>} : vector<32x64xf32>, vector<64x128xf32>, vector<32x128xf32> -> vector<32x128xf32>
    %c0_29 = arith.constant 0 : index
    %c0_30 = arith.constant 0 : index
    %c0_31 = arith.constant 0 : index
    %29 = vector.load %arg23[%c0_29, %c0_30, %c0_31] : memref<3x128x128xf32, #tpu.memory_space<vmem>>, vector<1x128x128xf32>
    %30 = vector.shape_cast %29 : vector<1x128x128xf32> to vector<128x128xf32>
    %cst_32 = arith.constant dense<0.000000e+00> : vector<32x128xf32>
    %31 = tpu.matmul %28, %30, %cst_32 {dimension_numbers = #tpu.dot_dimension_numbers<[1], [0], [0], [1], [0, 0, 1, 1], [], []>} : vector<32x128xf32>, vector<128x128xf32>, vector<32x128xf32> -> vector<32x128xf32>
    %c1_33 = arith.constant 1 : index
    %c0_34 = arith.constant 0 : index
    %c0_35 = arith.constant 0 : index
    %32 = vector.load %arg24[%c1_33, %c0_34, %c0_35] : memref<3x32x64xf32, #tpu.memory_space<vmem>>, vector<1x32x64xf32>
    %33 = vector.shape_cast %32 : vector<1x32x64xf32> to vector<32x64xf32>
    %cst_36 = arith.constant dense<0.000000e+00> : vector<32x128xf32>
    %34 = tpu.matmul %33, %25, %cst_36 {dimension_numbers = #tpu.dot_dimension_numbers<[1], [0], [0], [1], [0, 0, 1, 1], [], []>} : vector<32x64xf32>, vector<64x128xf32>, vector<32x128xf32> -> vector<32x128xf32>
    %c1_37 = arith.constant 1 : index
    %c0_38 = arith.constant 0 : index
    %c0_39 = arith.constant 0 : index
    %35 = vector.load %arg23[%c1_37, %c0_38, %c0_39] : memref<3x128x128xf32, #tpu.memory_space<vmem>>, vector<1x128x128xf32>
    %36 = vector.shape_cast %35 : vector<1x128x128xf32> to vector<128x128xf32>
    %cst_40 = arith.constant dense<0.000000e+00> : vector<32x128xf32>
    %37 = tpu.matmul %34, %36, %cst_40 {dimension_numbers = #tpu.dot_dimension_numbers<[1], [0], [0], [1], [0, 0, 1, 1], [], []>} : vector<32x128xf32>, vector<128x128xf32>, vector<32x128xf32> -> vector<32x128xf32>
    %38 = arith.addf %31, %37 : vector<32x128xf32>
    %c2_41 = arith.constant 2 : index
    %c0_42 = arith.constant 0 : index
    %c0_43 = arith.constant 0 : index
    %39 = vector.load %arg24[%c2_41, %c0_42, %c0_43] : memref<3x32x64xf32, #tpu.memory_space<vmem>>, vector<1x32x64xf32>
    %40 = vector.shape_cast %39 : vector<1x32x64xf32> to vector<32x64xf32>
    %cst_44 = arith.constant dense<0.000000e+00> : vector<32x128xf32>
    %41 = tpu.matmul %40, %25, %cst_44 {dimension_numbers = #tpu.dot_dimension_numbers<[1], [0], [0], [1], [0, 0, 1, 1], [], []>} : vector<32x64xf32>, vector<64x128xf32>, vector<32x128xf32> -> vector<32x128xf32>
    %c2_45 = arith.constant 2 : index
    %c0_46 = arith.constant 0 : index
    %c0_47 = arith.constant 0 : index
    %42 = vector.load %arg23[%c2_45, %c0_46, %c0_47] : memref<3x128x128xf32, #tpu.memory_space<vmem>>, vector<1x128x128xf32>
    %43 = vector.shape_cast %42 : vector<1x128x128xf32> to vector<128x128xf32>
    %cst_48 = arith.constant dense<0.000000e+00> : vector<32x128xf32>
    %44 = tpu.matmul %41, %43, %cst_48 {dimension_numbers = #tpu.dot_dimension_numbers<[1], [0], [0], [1], [0, 0, 1, 1], [], []>} : vector<32x128xf32>, vector<128x128xf32>, vector<32x128xf32> -> vector<32x128xf32>
    %45 = arith.addf %38, %44 : vector<32x128xf32>
    %c0_49 = arith.constant 0 : index
    %c0_50 = arith.constant 0 : index
    %46 = vector.load %arg25[%c0_49, %c0_50] : memref<1x128xf32, #tpu.memory_space<vmem>>, vector<1x128xf32>
    %47 = vector.broadcast %46 : vector<1x128xf32> to vector<32x128xf32>
    %48 = arith.addf %45, %47 : vector<32x128xf32>
    %cst_51 = arith.constant 0.000000e+00 : f32
    %49 = vector.broadcast %cst_51 : f32 to vector<32x128xf32>
    %50 = arith.maximumf %48, %49 : vector<32x128xf32>
    %c0_52 = arith.constant 0 : index
    %c0_53 = arith.constant 0 : index
    %c0_54 = arith.constant 0 : index
    %51 = vector.load %arg27[%c0_52, %c0_53, %c0_54] : memref<3x16x32xf32, #tpu.memory_space<vmem>>, vector<1x16x32xf32>
    %52 = vector.shape_cast %51 : vector<1x16x32xf32> to vector<16x32xf32>
    %cst_55 = arith.constant dense<0.000000e+00> : vector<16x128xf32>
    %53 = tpu.matmul %52, %50, %cst_55 {dimension_numbers = #tpu.dot_dimension_numbers<[1], [0], [0], [1], [0, 0, 1, 1], [], []>} : vector<16x32xf32>, vector<32x128xf32>, vector<16x128xf32> -> vector<16x128xf32>
    %c0_56 = arith.constant 0 : index
    %c0_57 = arith.constant 0 : index
    %c0_58 = arith.constant 0 : index
    %54 = vector.load %arg26[%c0_56, %c0_57, %c0_58] : memref<3x128x128xf32, #tpu.memory_space<vmem>>, vector<1x128x128xf32>
    %55 = vector.shape_cast %54 : vector<1x128x128xf32> to vector<128x128xf32>
    %cst_59 = arith.constant dense<0.000000e+00> : vector<16x128xf32>
    %56 = tpu.matmul %53, %55, %cst_59 {dimension_numbers = #tpu.dot_dimension_numbers<[1], [0], [0], [1], [0, 0, 1, 1], [], []>} : vector<16x128xf32>, vector<128x128xf32>, vector<16x128xf32> -> vector<16x128xf32>
    %c1_60 = arith.constant 1 : index
    %c0_61 = arith.constant 0 : index
    %c0_62 = arith.constant 0 : index
    %57 = vector.load %arg27[%c1_60, %c0_61, %c0_62] : memref<3x16x32xf32, #tpu.memory_space<vmem>>, vector<1x16x32xf32>
    %58 = vector.shape_cast %57 : vector<1x16x32xf32> to vector<16x32xf32>
    %cst_63 = arith.constant dense<0.000000e+00> : vector<16x128xf32>
    %59 = tpu.matmul %58, %50, %cst_63 {dimension_numbers = #tpu.dot_dimension_numbers<[1], [0], [0], [1], [0, 0, 1, 1], [], []>} : vector<16x32xf32>, vector<32x128xf32>, vector<16x128xf32> -> vector<16x128xf32>
    %c1_64 = arith.constant 1 : index
    %c0_65 = arith.constant 0 : index
    %c0_66 = arith.constant 0 : index
    %60 = vector.load %arg26[%c1_64, %c0_65, %c0_66] : memref<3x128x128xf32, #tpu.memory_space<vmem>>, vector<1x128x128xf32>
    %61 = vector.shape_cast %60 : vector<1x128x128xf32> to vector<128x128xf32>
    %cst_67 = arith.constant dense<0.000000e+00> : vector<16x128xf32>
    %62 = tpu.matmul %59, %61, %cst_67 {dimension_numbers = #tpu.dot_dimension_numbers<[1], [0], [0], [1], [0, 0, 1, 1], [], []>} : vector<16x128xf32>, vector<128x128xf32>, vector<16x128xf32> -> vector<16x128xf32>
    %63 = arith.addf %56, %62 : vector<16x128xf32>
    %c2_68 = arith.constant 2 : index
    %c0_69 = arith.constant 0 : index
    %c0_70 = arith.constant 0 : index
    %64 = vector.load %arg27[%c2_68, %c0_69, %c0_70] : memref<3x16x32xf32, #tpu.memory_space<vmem>>, vector<1x16x32xf32>
    %65 = vector.shape_cast %64 : vector<1x16x32xf32> to vector<16x32xf32>
    %cst_71 = arith.constant dense<0.000000e+00> : vector<16x128xf32>
    %66 = tpu.matmul %65, %50, %cst_71 {dimension_numbers = #tpu.dot_dimension_numbers<[1], [0], [0], [1], [0, 0, 1, 1], [], []>} : vector<16x32xf32>, vector<32x128xf32>, vector<16x128xf32> -> vector<16x128xf32>
    %c2_72 = arith.constant 2 : index
    %c0_73 = arith.constant 0 : index
    %c0_74 = arith.constant 0 : index
    %67 = vector.load %arg26[%c2_72, %c0_73, %c0_74] : memref<3x128x128xf32, #tpu.memory_space<vmem>>, vector<1x128x128xf32>
    %68 = vector.shape_cast %67 : vector<1x128x128xf32> to vector<128x128xf32>
    %cst_75 = arith.constant dense<0.000000e+00> : vector<16x128xf32>
    %69 = tpu.matmul %66, %68, %cst_75 {dimension_numbers = #tpu.dot_dimension_numbers<[1], [0], [0], [1], [0, 0, 1, 1], [], []>} : vector<16x128xf32>, vector<128x128xf32>, vector<16x128xf32> -> vector<16x128xf32>
    %70 = arith.addf %63, %69 : vector<16x128xf32>
    %c0_76 = arith.constant 0 : index
    %c0_77 = arith.constant 0 : index
    %71 = vector.load %arg28[%c0_76, %c0_77] : memref<1x128xf32, #tpu.memory_space<vmem>>, vector<1x128xf32>
    %72 = vector.broadcast %71 : vector<1x128xf32> to vector<16x128xf32>
    %73 = arith.addf %70, %72 : vector<16x128xf32>
    %cst_78 = arith.constant 0.000000e+00 : f32
    %74 = vector.broadcast %cst_78 : f32 to vector<16x128xf32>
    %75 = arith.maximumf %73, %74 : vector<16x128xf32>
    %c0_79 = arith.constant 0 : index
    %c0_80 = arith.constant 0 : index
    %c0_81 = arith.constant 0 : index
    %76 = vector.load %arg30[%c0_79, %c0_80, %c0_81] : memref<3x8x16xf32, #tpu.memory_space<vmem>>, vector<1x8x16xf32>
    %77 = vector.shape_cast %76 : vector<1x8x16xf32> to vector<8x16xf32>
    %cst_82 = arith.constant dense<0.000000e+00> : vector<8x128xf32>
    %78 = tpu.matmul %77, %75, %cst_82 {dimension_numbers = #tpu.dot_dimension_numbers<[1], [0], [0], [1], [0, 0, 1, 1], [], []>} : vector<8x16xf32>, vector<16x128xf32>, vector<8x128xf32> -> vector<8x128xf32>
    %c0_83 = arith.constant 0 : index
    %c0_84 = arith.constant 0 : index
    %c0_85 = arith.constant 0 : index
    %79 = vector.load %arg29[%c0_83, %c0_84, %c0_85] : memref<3x128x128xf32, #tpu.memory_space<vmem>>, vector<1x128x128xf32>
    %80 = vector.shape_cast %79 : vector<1x128x128xf32> to vector<128x128xf32>
    %cst_86 = arith.constant dense<0.000000e+00> : vector<8x128xf32>
    %81 = tpu.matmul %78, %80, %cst_86 {dimension_numbers = #tpu.dot_dimension_numbers<[1], [0], [0], [1], [0, 0, 1, 1], [], []>} : vector<8x128xf32>, vector<128x128xf32>, vector<8x128xf32> -> vector<8x128xf32>
    %c1_87 = arith.constant 1 : index
    %c0_88 = arith.constant 0 : index
    %c0_89 = arith.constant 0 : index
    %82 = vector.load %arg30[%c1_87, %c0_88, %c0_89] : memref<3x8x16xf32, #tpu.memory_space<vmem>>, vector<1x8x16xf32>
    %83 = vector.shape_cast %82 : vector<1x8x16xf32> to vector<8x16xf32>
    %cst_90 = arith.constant dense<0.000000e+00> : vector<8x128xf32>
    %84 = tpu.matmul %83, %75, %cst_90 {dimension_numbers = #tpu.dot_dimension_numbers<[1], [0], [0], [1], [0, 0, 1, 1], [], []>} : vector<8x16xf32>, vector<16x128xf32>, vector<8x128xf32> -> vector<8x128xf32>
    %c1_91 = arith.constant 1 : index
    %c0_92 = arith.constant 0 : index
    %c0_93 = arith.constant 0 : index
    %85 = vector.load %arg29[%c1_91, %c0_92, %c0_93] : memref<3x128x128xf32, #tpu.memory_space<vmem>>, vector<1x128x128xf32>
    %86 = vector.shape_cast %85 : vector<1x128x128xf32> to vector<128x128xf32>
    %cst_94 = arith.constant dense<0.000000e+00> : vector<8x128xf32>
    %87 = tpu.matmul %84, %86, %cst_94 {dimension_numbers = #tpu.dot_dimension_numbers<[1], [0], [0], [1], [0, 0, 1, 1], [], []>} : vector<8x128xf32>, vector<128x128xf32>, vector<8x128xf32> -> vector<8x128xf32>
    %88 = arith.addf %81, %87 : vector<8x128xf32>
    %c2_95 = arith.constant 2 : index
    %c0_96 = arith.constant 0 : index
    %c0_97 = arith.constant 0 : index
    %89 = vector.load %arg30[%c2_95, %c0_96, %c0_97] : memref<3x8x16xf32, #tpu.memory_space<vmem>>, vector<1x8x16xf32>
    %90 = vector.shape_cast %89 : vector<1x8x16xf32> to vector<8x16xf32>
    %cst_98 = arith.constant dense<0.000000e+00> : vector<8x128xf32>
    %91 = tpu.matmul %90, %75, %cst_98 {dimension_numbers = #tpu.dot_dimension_numbers<[1], [0], [0], [1], [0, 0, 1, 1], [], []>} : vector<8x16xf32>, vector<16x128xf32>, vector<8x128xf32> -> vector<8x128xf32>
    %c2_99 = arith.constant 2 : index
    %c0_100 = arith.constant 0 : index
    %c0_101 = arith.constant 0 : index
    %92 = vector.load %arg29[%c2_99, %c0_100, %c0_101] : memref<3x128x128xf32, #tpu.memory_space<vmem>>, vector<1x128x128xf32>
    %93 = vector.shape_cast %92 : vector<1x128x128xf32> to vector<128x128xf32>
    %cst_102 = arith.constant dense<0.000000e+00> : vector<8x128xf32>
    %94 = tpu.matmul %91, %93, %cst_102 {dimension_numbers = #tpu.dot_dimension_numbers<[1], [0], [0], [1], [0, 0, 1, 1], [], []>} : vector<8x128xf32>, vector<128x128xf32>, vector<8x128xf32> -> vector<8x128xf32>
    %95 = arith.addf %88, %94 : vector<8x128xf32>
    %c0_103 = arith.constant 0 : index
    %c0_104 = arith.constant 0 : index
    %96 = vector.load %arg31[%c0_103, %c0_104] : memref<1x128xf32, #tpu.memory_space<vmem>>, vector<1x128xf32>
    %97 = vector.broadcast %96 : vector<1x128xf32> to vector<8x128xf32>
    %98 = arith.addf %95, %97 : vector<8x128xf32>
    %cst_105 = arith.constant 0.000000e+00 : f32
    %99 = vector.broadcast %cst_105 : f32 to vector<8x128xf32>
    %100 = arith.maximumf %98, %99 : vector<8x128xf32>
    %c0_106 = arith.constant 0 : index
    %c0_107 = arith.constant 0 : index
    %c0_108 = arith.constant 0 : index
    %101 = vector.load %arg33[%c0_106, %c0_107, %c0_108] : memref<3x4x8xf32, #tpu.memory_space<vmem>>, vector<1x4x8xf32>
    %102 = vector.shape_cast %101 : vector<1x4x8xf32> to vector<4x8xf32>
    %cst_109 = arith.constant dense<0.000000e+00> : vector<4x128xf32>
    %103 = tpu.matmul %102, %100, %cst_109 {dimension_numbers = #tpu.dot_dimension_numbers<[1], [0], [0], [1], [0, 0, 1, 1], [], []>} : vector<4x8xf32>, vector<8x128xf32>, vector<4x128xf32> -> vector<4x128xf32>
    %c0_110 = arith.constant 0 : index
    %c0_111 = arith.constant 0 : index
    %c0_112 = arith.constant 0 : index
    %104 = vector.load %arg32[%c0_110, %c0_111, %c0_112] : memref<3x128x128xf32, #tpu.memory_space<vmem>>, vector<1x128x128xf32>
    %105 = vector.shape_cast %104 : vector<1x128x128xf32> to vector<128x128xf32>
    %cst_113 = arith.constant dense<0.000000e+00> : vector<4x128xf32>
    %106 = tpu.matmul %103, %105, %cst_113 {dimension_numbers = #tpu.dot_dimension_numbers<[1], [0], [0], [1], [0, 0, 1, 1], [], []>} : vector<4x128xf32>, vector<128x128xf32>, vector<4x128xf32> -> vector<4x128xf32>
    %c1_114 = arith.constant 1 : index
    %c0_115 = arith.constant 0 : index
    %c0_116 = arith.constant 0 : index
    %107 = vector.load %arg33[%c1_114, %c0_115, %c0_116] : memref<3x4x8xf32, #tpu.memory_space<vmem>>, vector<1x4x8xf32>
    %108 = vector.shape_cast %107 : vector<1x4x8xf32> to vector<4x8xf32>
    %cst_117 = arith.constant dense<0.000000e+00> : vector<4x128xf32>
    %109 = tpu.matmul %108, %100, %cst_117 {dimension_numbers = #tpu.dot_dimension_numbers<[1], [0], [0], [1], [0, 0, 1, 1], [], []>} : vector<4x8xf32>, vector<8x128xf32>, vector<4x128xf32> -> vector<4x128xf32>
    %c1_118 = arith.constant 1 : index
    %c0_119 = arith.constant 0 : index
    %c0_120 = arith.constant 0 : index
    %110 = vector.load %arg32[%c1_118, %c0_119, %c0_120] : memref<3x128x128xf32, #tpu.memory_space<vmem>>, vector<1x128x128xf32>
    %111 = vector.shape_cast %110 : vector<1x128x128xf32> to vector<128x128xf32>
    %cst_121 = arith.constant dense<0.000000e+00> : vector<4x128xf32>
    %112 = tpu.matmul %109, %111, %cst_121 {dimension_numbers = #tpu.dot_dimension_numbers<[1], [0], [0], [1], [0, 0, 1, 1], [], []>} : vector<4x128xf32>, vector<128x128xf32>, vector<4x128xf32> -> vector<4x128xf32>
    %113 = arith.addf %106, %112 : vector<4x128xf32>
    %c2_122 = arith.constant 2 : index
    %c0_123 = arith.constant 0 : index
    %c0_124 = arith.constant 0 : index
    %114 = vector.load %arg33[%c2_122, %c0_123, %c0_124] : memref<3x4x8xf32, #tpu.memory_space<vmem>>, vector<1x4x8xf32>
    %115 = vector.shape_cast %114 : vector<1x4x8xf32> to vector<4x8xf32>
    %cst_125 = arith.constant dense<0.000000e+00> : vector<4x128xf32>
    %116 = tpu.matmul %115, %100, %cst_125 {dimension_numbers = #tpu.dot_dimension_numbers<[1], [0], [0], [1], [0, 0, 1, 1], [], []>} : vector<4x8xf32>, vector<8x128xf32>, vector<4x128xf32> -> vector<4x128xf32>
    %c2_126 = arith.constant 2 : index
    %c0_127 = arith.constant 0 : index
    %c0_128 = arith.constant 0 : index
    %117 = vector.load %arg32[%c2_126, %c0_127, %c0_128] : memref<3x128x128xf32, #tpu.memory_space<vmem>>, vector<1x128x128xf32>
    %118 = vector.shape_cast %117 : vector<1x128x128xf32> to vector<128x128xf32>
    %cst_129 = arith.constant dense<0.000000e+00> : vector<4x128xf32>
    %119 = tpu.matmul %116, %118, %cst_129 {dimension_numbers = #tpu.dot_dimension_numbers<[1], [0], [0], [1], [0, 0, 1, 1], [], []>} : vector<4x128xf32>, vector<128x128xf32>, vector<4x128xf32> -> vector<4x128xf32>
    %120 = arith.addf %113, %119 : vector<4x128xf32>
    %c0_130 = arith.constant 0 : index
    %c0_131 = arith.constant 0 : index
    %121 = vector.load %arg34[%c0_130, %c0_131] : memref<1x128xf32, #tpu.memory_space<vmem>>, vector<1x128xf32>
    %122 = vector.broadcast %121 : vector<1x128xf32> to vector<4x128xf32>
    %123 = arith.addf %120, %122 : vector<4x128xf32>
    %cst_132 = arith.constant 0.000000e+00 : f32
    %124 = vector.broadcast %cst_132 : f32 to vector<4x128xf32>
    %125 = arith.maximumf %123, %124 : vector<4x128xf32>
    %c0_133 = arith.constant 0 : index
    %c0_134 = arith.constant 0 : index
    %c0_135 = arith.constant 0 : index
    %126 = vector.load %arg36[%c0_133, %c0_134, %c0_135] : memref<3x2x4xf32, #tpu.memory_space<vmem>>, vector<1x2x4xf32>
    %127 = vector.shape_cast %126 : vector<1x2x4xf32> to vector<2x4xf32>
    %cst_136 = arith.constant dense<0.000000e+00> : vector<2x128xf32>
    %128 = tpu.matmul %127, %125, %cst_136 {dimension_numbers = #tpu.dot_dimension_numbers<[1], [0], [0], [1], [0, 0, 1, 1], [], []>} : vector<2x4xf32>, vector<4x128xf32>, vector<2x128xf32> -> vector<2x128xf32>
    %c0_137 = arith.constant 0 : index
    %c0_138 = arith.constant 0 : index
    %c0_139 = arith.constant 0 : index
    %129 = vector.load %arg35[%c0_137, %c0_138, %c0_139] : memref<3x128x128xf32, #tpu.memory_space<vmem>>, vector<1x128x128xf32>
    %130 = vector.shape_cast %129 : vector<1x128x128xf32> to vector<128x128xf32>
    %cst_140 = arith.constant dense<0.000000e+00> : vector<2x128xf32>
    %131 = tpu.matmul %128, %130, %cst_140 {dimension_numbers = #tpu.dot_dimension_numbers<[1], [0], [0], [1], [0, 0, 1, 1], [], []>} : vector<2x128xf32>, vector<128x128xf32>, vector<2x128xf32> -> vector<2x128xf32>
    %c1_141 = arith.constant 1 : index
    %c0_142 = arith.constant 0 : index
    %c0_143 = arith.constant 0 : index
    %132 = vector.load %arg36[%c1_141, %c0_142, %c0_143] : memref<3x2x4xf32, #tpu.memory_space<vmem>>, vector<1x2x4xf32>
    %133 = vector.shape_cast %132 : vector<1x2x4xf32> to vector<2x4xf32>
    %cst_144 = arith.constant dense<0.000000e+00> : vector<2x128xf32>
    %134 = tpu.matmul %133, %125, %cst_144 {dimension_numbers = #tpu.dot_dimension_numbers<[1], [0], [0], [1], [0, 0, 1, 1], [], []>} : vector<2x4xf32>, vector<4x128xf32>, vector<2x128xf32> -> vector<2x128xf32>
    %c1_145 = arith.constant 1 : index
    %c0_146 = arith.constant 0 : index
    %c0_147 = arith.constant 0 : index
    %135 = vector.load %arg35[%c1_145, %c0_146, %c0_147] : memref<3x128x128xf32, #tpu.memory_space<vmem>>, vector<1x128x128xf32>
    %136 = vector.shape_cast %135 : vector<1x128x128xf32> to vector<128x128xf32>
    %cst_148 = arith.constant dense<0.000000e+00> : vector<2x128xf32>
    %137 = tpu.matmul %134, %136, %cst_148 {dimension_numbers = #tpu.dot_dimension_numbers<[1], [0], [0], [1], [0, 0, 1, 1], [], []>} : vector<2x128xf32>, vector<128x128xf32>, vector<2x128xf32> -> vector<2x128xf32>
    %138 = arith.addf %131, %137 : vector<2x128xf32>
    %c2_149 = arith.constant 2 : index
    %c0_150 = arith.constant 0 : index
    %c0_151 = arith.constant 0 : index
    %139 = vector.load %arg36[%c2_149, %c0_150, %c0_151] : memref<3x2x4xf32, #tpu.memory_space<vmem>>, vector<1x2x4xf32>
    %140 = vector.shape_cast %139 : vector<1x2x4xf32> to vector<2x4xf32>
    %cst_152 = arith.constant dense<0.000000e+00> : vector<2x128xf32>
    %141 = tpu.matmul %140, %125, %cst_152 {dimension_numbers = #tpu.dot_dimension_numbers<[1], [0], [0], [1], [0, 0, 1, 1], [], []>} : vector<2x4xf32>, vector<4x128xf32>, vector<2x128xf32> -> vector<2x128xf32>
    %c2_153 = arith.constant 2 : index
    %c0_154 = arith.constant 0 : index
    %c0_155 = arith.constant 0 : index
    %142 = vector.load %arg35[%c2_153, %c0_154, %c0_155] : memref<3x128x128xf32, #tpu.memory_space<vmem>>, vector<1x128x128xf32>
    %143 = vector.shape_cast %142 : vector<1x128x128xf32> to vector<128x128xf32>
    %cst_156 = arith.constant dense<0.000000e+00> : vector<2x128xf32>
    %144 = tpu.matmul %141, %143, %cst_156 {dimension_numbers = #tpu.dot_dimension_numbers<[1], [0], [0], [1], [0, 0, 1, 1], [], []>} : vector<2x128xf32>, vector<128x128xf32>, vector<2x128xf32> -> vector<2x128xf32>
    %145 = arith.addf %138, %144 : vector<2x128xf32>
    %c0_157 = arith.constant 0 : index
    %c0_158 = arith.constant 0 : index
    %146 = vector.load %arg37[%c0_157, %c0_158] : memref<1x128xf32, #tpu.memory_space<vmem>>, vector<1x128xf32>
    %147 = vector.broadcast %146 : vector<1x128xf32> to vector<2x128xf32>
    %148 = arith.addf %145, %147 : vector<2x128xf32>
    %cst_159 = arith.constant 0.000000e+00 : f32
    %149 = vector.broadcast %cst_159 : f32 to vector<2x128xf32>
    %150 = arith.maximumf %148, %149 : vector<2x128xf32>
    %c0_160 = arith.constant 0 : index
    %c0_161 = arith.constant 0 : index
    %151 = vector.load %arg38[%c0_160, %c0_161] : memref<128x64xf32, #tpu.memory_space<vmem>>, vector<128x64xf32>
    %cst_162 = arith.constant dense<0.000000e+00> : vector<2x64xf32>
    %152 = tpu.matmul %150, %151, %cst_162 {dimension_numbers = #tpu.dot_dimension_numbers<[1], [0], [0], [1], [0, 0, 1, 1], [], []>} : vector<2x128xf32>, vector<128x64xf32>, vector<2x64xf32> -> vector<2x64xf32>
    %c0_163 = arith.constant 0 : index
    %c0_164 = arith.constant 0 : index
    %153 = vector.load %arg39[%c0_163, %c0_164] : memref<1x64xf32, #tpu.memory_space<vmem>>, vector<1x64xf32>
    %154 = vector.broadcast %153 : vector<1x64xf32> to vector<2x64xf32>
    %155 = arith.addf %152, %154 : vector<2x64xf32>
    %c0_165 = arith.constant 0 : index
    %c0_166 = arith.constant 0 : index
    %156 = vector.load %arg40[%c0_165, %c0_166] : memref<64x128xf32, #tpu.memory_space<vmem>>, vector<64x128xf32>
    %cst_167 = arith.constant dense<0.000000e+00> : vector<2x128xf32>
    %157 = tpu.matmul %155, %156, %cst_167 {dimension_numbers = #tpu.dot_dimension_numbers<[1], [0], [0], [1], [0, 0, 1, 1], [], []>} : vector<2x64xf32>, vector<64x128xf32>, vector<2x128xf32> -> vector<2x128xf32>
    %c0_168 = arith.constant 0 : index
    %c0_169 = arith.constant 0 : index
    %158 = vector.load %arg41[%c0_168, %c0_169] : memref<1x128xf32, #tpu.memory_space<vmem>>, vector<1x128xf32>
    %159 = vector.broadcast %158 : vector<1x128xf32> to vector<2x128xf32>
    %160 = arith.addf %157, %159 : vector<2x128xf32>
    %cst_170 = arith.constant 0.000000e+00 : f32
    %161 = vector.broadcast %cst_170 : f32 to vector<2x128xf32>
    %162 = arith.maximumf %160, %161 : vector<2x128xf32>
    %c0_171 = arith.constant 0 : index
    %c0_172 = arith.constant 0 : index
    %c0_173 = arith.constant 0 : index
    %163 = vector.load %arg2[%c0_171, %c0_172, %c0_173] : memref<4x128x128xf32, #tpu.memory_space<vmem>>, vector<1x128x128xf32>
    %164 = vector.shape_cast %163 : vector<1x128x128xf32> to vector<128x128xf32>
    %cst_174 = arith.constant dense<0.000000e+00> : vector<2x128xf32>
    %165 = tpu.matmul %162, %164, %cst_174 {dimension_numbers = #tpu.dot_dimension_numbers<[1], [0], [0], [1], [0, 0, 1, 1], [], []>} : vector<2x128xf32>, vector<128x128xf32>, vector<2x128xf32> -> vector<2x128xf32>
    %c0_175 = arith.constant 0 : index
    %c0_176 = arith.constant 0 : index
    %c0_177 = arith.constant 0 : index
    %166 = vector.load %arg3[%c0_175, %c0_176, %c0_177] : memref<4x4x2xf32, #tpu.memory_space<vmem>>, vector<1x4x2xf32>
    %167 = vector.shape_cast %166 : vector<1x4x2xf32> to vector<4x2xf32>
    %cst_178 = arith.constant dense<0.000000e+00> : vector<4x128xf32>
    %168 = tpu.matmul %167, %165, %cst_178 {dimension_numbers = #tpu.dot_dimension_numbers<[1], [0], [0], [1], [0, 0, 1, 1], [], []>} : vector<4x2xf32>, vector<2x128xf32>, vector<4x128xf32> -> vector<4x128xf32>
    %c1_179 = arith.constant 1 : index
    %c0_180 = arith.constant 0 : index
    %c0_181 = arith.constant 0 : index
    %169 = vector.load %arg2[%c1_179, %c0_180, %c0_181] : memref<4x128x128xf32, #tpu.memory_space<vmem>>, vector<1x128x128xf32>
    %170 = vector.shape_cast %169 : vector<1x128x128xf32> to vector<128x128xf32>
    %cst_182 = arith.constant dense<0.000000e+00> : vector<2x128xf32>
    %171 = tpu.matmul %162, %170, %cst_182 {dimension_numbers = #tpu.dot_dimension_numbers<[1], [0], [0], [1], [0, 0, 1, 1], [], []>} : vector<2x128xf32>, vector<128x128xf32>, vector<2x128xf32> -> vector<2x128xf32>
    %c1_183 = arith.constant 1 : index
    %c0_184 = arith.constant 0 : index
    %c0_185 = arith.constant 0 : index
    %172 = vector.load %arg3[%c1_183, %c0_184, %c0_185] : memref<4x4x2xf32, #tpu.memory_space<vmem>>, vector<1x4x2xf32>
    %173 = vector.shape_cast %172 : vector<1x4x2xf32> to vector<4x2xf32>
    %cst_186 = arith.constant dense<0.000000e+00> : vector<4x128xf32>
    %174 = tpu.matmul %173, %171, %cst_186 {dimension_numbers = #tpu.dot_dimension_numbers<[1], [0], [0], [1], [0, 0, 1, 1], [], []>} : vector<4x2xf32>, vector<2x128xf32>, vector<4x128xf32> -> vector<4x128xf32>
    %175 = arith.addf %168, %174 : vector<4x128xf32>
    %c2_187 = arith.constant 2 : index
    %c0_188 = arith.constant 0 : index
    %c0_189 = arith.constant 0 : index
    %176 = vector.load %arg2[%c2_187, %c0_188, %c0_189] : memref<4x128x128xf32, #tpu.memory_space<vmem>>, vector<1x128x128xf32>
    %177 = vector.shape_cast %176 : vector<1x128x128xf32> to vector<128x128xf32>
    %cst_190 = arith.constant dense<0.000000e+00> : vector<2x128xf32>
    %178 = tpu.matmul %162, %177, %cst_190 {dimension_numbers = #tpu.dot_dimension_numbers<[1], [0], [0], [1], [0, 0, 1, 1], [], []>} : vector<2x128xf32>, vector<128x128xf32>, vector<2x128xf32> -> vector<2x128xf32>
    %c2_191 = arith.constant 2 : index
    %c0_192 = arith.constant 0 : index
    %c0_193 = arith.constant 0 : index
    %179 = vector.load %arg3[%c2_191, %c0_192, %c0_193] : memref<4x4x2xf32, #tpu.memory_space<vmem>>, vector<1x4x2xf32>
    %180 = vector.shape_cast %179 : vector<1x4x2xf32> to vector<4x2xf32>
    %cst_194 = arith.constant dense<0.000000e+00> : vector<4x128xf32>
    %181 = tpu.matmul %180, %178, %cst_194 {dimension_numbers = #tpu.dot_dimension_numbers<[1], [0], [0], [1], [0, 0, 1, 1], [], []>} : vector<4x2xf32>, vector<2x128xf32>, vector<4x128xf32> -> vector<4x128xf32>
    %182 = arith.addf %175, %181 : vector<4x128xf32>
    %c3 = arith.constant 3 : index
    %c0_195 = arith.constant 0 : index
    %c0_196 = arith.constant 0 : index
    %183 = vector.load %arg2[%c3, %c0_195, %c0_196] : memref<4x128x128xf32, #tpu.memory_space<vmem>>, vector<1x128x128xf32>
    %184 = vector.shape_cast %183 : vector<1x128x128xf32> to vector<128x128xf32>
    %cst_197 = arith.constant dense<0.000000e+00> : vector<2x128xf32>
    %185 = tpu.matmul %162, %184, %cst_197 {dimension_numbers = #tpu.dot_dimension_numbers<[1], [0], [0], [1], [0, 0, 1, 1], [], []>} : vector<2x128xf32>, vector<128x128xf32>, vector<2x128xf32> -> vector<2x128xf32>
    %c3_198 = arith.constant 3 : index
    %c0_199 = arith.constant 0 : index
    %c0_200 = arith.constant 0 : index
    %186 = vector.load %arg3[%c3_198, %c0_199, %c0_200] : memref<4x4x2xf32, #tpu.memory_space<vmem>>, vector<1x4x2xf32>
    %187 = vector.shape_cast %186 : vector<1x4x2xf32> to vector<4x2xf32>
    %cst_201 = arith.constant dense<0.000000e+00> : vector<4x128xf32>
    %188 = tpu.matmul %187, %185, %cst_201 {dimension_numbers = #tpu.dot_dimension_numbers<[1], [0], [0], [1], [0, 0, 1, 1], [], []>} : vector<4x2xf32>, vector<2x128xf32>, vector<4x128xf32> -> vector<4x128xf32>
    %189 = arith.addf %182, %188 : vector<4x128xf32>
    %c0_202 = arith.constant 0 : index
    %c0_203 = arith.constant 0 : index
    %190 = vector.load %arg4[%c0_202, %c0_203] : memref<1x128xf32, #tpu.memory_space<vmem>>, vector<1x128xf32>
    %191 = vector.broadcast %190 : vector<1x128xf32> to vector<4x128xf32>
    %192 = arith.addf %189, %191 : vector<4x128xf32>
    %cst_204 = arith.constant 0.000000e+00 : f32
    %193 = vector.broadcast %cst_204 : f32 to vector<4x128xf32>
    %194 = arith.maximumf %192, %193 : vector<4x128xf32>
    %c0_205 = arith.constant 0 : index
    %c0_206 = arith.constant 0 : index
    %c0_207 = arith.constant 0 : index
    %195 = vector.load %arg5[%c0_205, %c0_206, %c0_207] : memref<4x128x128xf32, #tpu.memory_space<vmem>>, vector<1x128x128xf32>
    %196 = vector.shape_cast %195 : vector<1x128x128xf32> to vector<128x128xf32>
    %cst_208 = arith.constant dense<0.000000e+00> : vector<4x128xf32>
    %197 = tpu.matmul %194, %196, %cst_208 {dimension_numbers = #tpu.dot_dimension_numbers<[1], [0], [0], [1], [0, 0, 1, 1], [], []>} : vector<4x128xf32>, vector<128x128xf32>, vector<4x128xf32> -> vector<4x128xf32>
    %c0_209 = arith.constant 0 : index
    %c0_210 = arith.constant 0 : index
    %c0_211 = arith.constant 0 : index
    %198 = vector.load %arg6[%c0_209, %c0_210, %c0_211] : memref<4x8x4xf32, #tpu.memory_space<vmem>>, vector<1x8x4xf32>
    %199 = vector.shape_cast %198 : vector<1x8x4xf32> to vector<8x4xf32>
    %cst_212 = arith.constant dense<0.000000e+00> : vector<8x128xf32>
    %200 = tpu.matmul %199, %197, %cst_212 {dimension_numbers = #tpu.dot_dimension_numbers<[1], [0], [0], [1], [0, 0, 1, 1], [], []>} : vector<8x4xf32>, vector<4x128xf32>, vector<8x128xf32> -> vector<8x128xf32>
    %c1_213 = arith.constant 1 : index
    %c0_214 = arith.constant 0 : index
    %c0_215 = arith.constant 0 : index
    %201 = vector.load %arg5[%c1_213, %c0_214, %c0_215] : memref<4x128x128xf32, #tpu.memory_space<vmem>>, vector<1x128x128xf32>
    %202 = vector.shape_cast %201 : vector<1x128x128xf32> to vector<128x128xf32>
    %cst_216 = arith.constant dense<0.000000e+00> : vector<4x128xf32>
    %203 = tpu.matmul %194, %202, %cst_216 {dimension_numbers = #tpu.dot_dimension_numbers<[1], [0], [0], [1], [0, 0, 1, 1], [], []>} : vector<4x128xf32>, vector<128x128xf32>, vector<4x128xf32> -> vector<4x128xf32>
    %c1_217 = arith.constant 1 : index
    %c0_218 = arith.constant 0 : index
    %c0_219 = arith.constant 0 : index
    %204 = vector.load %arg6[%c1_217, %c0_218, %c0_219] : memref<4x8x4xf32, #tpu.memory_space<vmem>>, vector<1x8x4xf32>
    %205 = vector.shape_cast %204 : vector<1x8x4xf32> to vector<8x4xf32>
    %cst_220 = arith.constant dense<0.000000e+00> : vector<8x128xf32>
    %206 = tpu.matmul %205, %203, %cst_220 {dimension_numbers = #tpu.dot_dimension_numbers<[1], [0], [0], [1], [0, 0, 1, 1], [], []>} : vector<8x4xf32>, vector<4x128xf32>, vector<8x128xf32> -> vector<8x128xf32>
    %207 = arith.addf %200, %206 : vector<8x128xf32>
    %c2_221 = arith.constant 2 : index
    %c0_222 = arith.constant 0 : index
    %c0_223 = arith.constant 0 : index
    %208 = vector.load %arg5[%c2_221, %c0_222, %c0_223] : memref<4x128x128xf32, #tpu.memory_space<vmem>>, vector<1x128x128xf32>
    %209 = vector.shape_cast %208 : vector<1x128x128xf32> to vector<128x128xf32>
    %cst_224 = arith.constant dense<0.000000e+00> : vector<4x128xf32>
    %210 = tpu.matmul %194, %209, %cst_224 {dimension_numbers = #tpu.dot_dimension_numbers<[1], [0], [0], [1], [0, 0, 1, 1], [], []>} : vector<4x128xf32>, vector<128x128xf32>, vector<4x128xf32> -> vector<4x128xf32>
    %c2_225 = arith.constant 2 : index
    %c0_226 = arith.constant 0 : index
    %c0_227 = arith.constant 0 : index
    %211 = vector.load %arg6[%c2_225, %c0_226, %c0_227] : memref<4x8x4xf32, #tpu.memory_space<vmem>>, vector<1x8x4xf32>
    %212 = vector.shape_cast %211 : vector<1x8x4xf32> to vector<8x4xf32>
    %cst_228 = arith.constant dense<0.000000e+00> : vector<8x128xf32>
    %213 = tpu.matmul %212, %210, %cst_228 {dimension_numbers = #tpu.dot_dimension_numbers<[1], [0], [0], [1], [0, 0, 1, 1], [], []>} : vector<8x4xf32>, vector<4x128xf32>, vector<8x128xf32> -> vector<8x128xf32>
    %214 = arith.addf %207, %213 : vector<8x128xf32>
    %c3_229 = arith.constant 3 : index
    %c0_230 = arith.constant 0 : index
    %c0_231 = arith.constant 0 : index
    %215 = vector.load %arg5[%c3_229, %c0_230, %c0_231] : memref<4x128x128xf32, #tpu.memory_space<vmem>>, vector<1x128x128xf32>
    %216 = vector.shape_cast %215 : vector<1x128x128xf32> to vector<128x128xf32>
    %cst_232 = arith.constant dense<0.000000e+00> : vector<4x128xf32>
    %217 = tpu.matmul %194, %216, %cst_232 {dimension_numbers = #tpu.dot_dimension_numbers<[1], [0], [0], [1], [0, 0, 1, 1], [], []>} : vector<4x128xf32>, vector<128x128xf32>, vector<4x128xf32> -> vector<4x128xf32>
    %c3_233 = arith.constant 3 : index
    %c0_234 = arith.constant 0 : index
    %c0_235 = arith.constant 0 : index
    %218 = vector.load %arg6[%c3_233, %c0_234, %c0_235] : memref<4x8x4xf32, #tpu.memory_space<vmem>>, vector<1x8x4xf32>
    %219 = vector.shape_cast %218 : vector<1x8x4xf32> to vector<8x4xf32>
    %cst_236 = arith.constant dense<0.000000e+00> : vector<8x128xf32>
    %220 = tpu.matmul %219, %217, %cst_236 {dimension_numbers = #tpu.dot_dimension_numbers<[1], [0], [0], [1], [0, 0, 1, 1], [], []>} : vector<8x4xf32>, vector<4x128xf32>, vector<8x128xf32> -> vector<8x128xf32>
    %221 = arith.addf %214, %220 : vector<8x128xf32>
    %c0_237 = arith.constant 0 : index
    %c0_238 = arith.constant 0 : index
    %222 = vector.load %arg7[%c0_237, %c0_238] : memref<1x128xf32, #tpu.memory_space<vmem>>, vector<1x128xf32>
    %223 = vector.broadcast %222 : vector<1x128xf32> to vector<8x128xf32>
    %224 = arith.addf %221, %223 : vector<8x128xf32>
    %cst_239 = arith.constant 0.000000e+00 : f32
    %225 = vector.broadcast %cst_239 : f32 to vector<8x128xf32>
    %226 = arith.maximumf %224, %225 : vector<8x128xf32>
    %c0_240 = arith.constant 0 : index
    %c0_241 = arith.constant 0 : index
    %c0_242 = arith.constant 0 : index
    %227 = vector.load %arg8[%c0_240, %c0_241, %c0_242] : memref<4x128x128xf32, #tpu.memory_space<vmem>>, vector<1x128x128xf32>
    %228 = vector.shape_cast %227 : vector<1x128x128xf32> to vector<128x128xf32>
    %cst_243 = arith.constant dense<0.000000e+00> : vector<8x128xf32>
    %229 = tpu.matmul %226, %228, %cst_243 {dimension_numbers = #tpu.dot_dimension_numbers<[1], [0], [0], [1], [0, 0, 1, 1], [], []>} : vector<8x128xf32>, vector<128x128xf32>, vector<8x128xf32> -> vector<8x128xf32>
    %c0_244 = arith.constant 0 : index
    %c0_245 = arith.constant 0 : index
    %c0_246 = arith.constant 0 : index
    %230 = vector.load %arg9[%c0_244, %c0_245, %c0_246] : memref<4x16x8xf32, #tpu.memory_space<vmem>>, vector<1x16x8xf32>
    %231 = vector.shape_cast %230 : vector<1x16x8xf32> to vector<16x8xf32>
    %cst_247 = arith.constant dense<0.000000e+00> : vector<16x128xf32>
    %232 = tpu.matmul %231, %229, %cst_247 {dimension_numbers = #tpu.dot_dimension_numbers<[1], [0], [0], [1], [0, 0, 1, 1], [], []>} : vector<16x8xf32>, vector<8x128xf32>, vector<16x128xf32> -> vector<16x128xf32>
    %c1_248 = arith.constant 1 : index
    %c0_249 = arith.constant 0 : index
    %c0_250 = arith.constant 0 : index
    %233 = vector.load %arg8[%c1_248, %c0_249, %c0_250] : memref<4x128x128xf32, #tpu.memory_space<vmem>>, vector<1x128x128xf32>
    %234 = vector.shape_cast %233 : vector<1x128x128xf32> to vector<128x128xf32>
    %cst_251 = arith.constant dense<0.000000e+00> : vector<8x128xf32>
    %235 = tpu.matmul %226, %234, %cst_251 {dimension_numbers = #tpu.dot_dimension_numbers<[1], [0], [0], [1], [0, 0, 1, 1], [], []>} : vector<8x128xf32>, vector<128x128xf32>, vector<8x128xf32> -> vector<8x128xf32>
    %c1_252 = arith.constant 1 : index
    %c0_253 = arith.constant 0 : index
    %c0_254 = arith.constant 0 : index
    %236 = vector.load %arg9[%c1_252, %c0_253, %c0_254] : memref<4x16x8xf32, #tpu.memory_space<vmem>>, vector<1x16x8xf32>
    %237 = vector.shape_cast %236 : vector<1x16x8xf32> to vector<16x8xf32>
    %cst_255 = arith.constant dense<0.000000e+00> : vector<16x128xf32>
    %238 = tpu.matmul %237, %235, %cst_255 {dimension_numbers = #tpu.dot_dimension_numbers<[1], [0], [0], [1], [0, 0, 1, 1], [], []>} : vector<16x8xf32>, vector<8x128xf32>, vector<16x128xf32> -> vector<16x128xf32>
    %239 = arith.addf %232, %238 : vector<16x128xf32>
    %c2_256 = arith.constant 2 : index
    %c0_257 = arith.constant 0 : index
    %c0_258 = arith.constant 0 : index
    %240 = vector.load %arg8[%c2_256, %c0_257, %c0_258] : memref<4x128x128xf32, #tpu.memory_space<vmem>>, vector<1x128x128xf32>
    %241 = vector.shape_cast %240 : vector<1x128x128xf32> to vector<128x128xf32>
    %cst_259 = arith.constant dense<0.000000e+00> : vector<8x128xf32>
    %242 = tpu.matmul %226, %241, %cst_259 {dimension_numbers = #tpu.dot_dimension_numbers<[1], [0], [0], [1], [0, 0, 1, 1], [], []>} : vector<8x128xf32>, vector<128x128xf32>, vector<8x128xf32> -> vector<8x128xf32>
    %c2_260 = arith.constant 2 : index
    %c0_261 = arith.constant 0 : index
    %c0_262 = arith.constant 0 : index
    %243 = vector.load %arg9[%c2_260, %c0_261, %c0_262] : memref<4x16x8xf32, #tpu.memory_space<vmem>>, vector<1x16x8xf32>
    %244 = vector.shape_cast %243 : vector<1x16x8xf32> to vector<16x8xf32>
    %cst_263 = arith.constant dense<0.000000e+00> : vector<16x128xf32>
    %245 = tpu.matmul %244, %242, %cst_263 {dimension_numbers = #tpu.dot_dimension_numbers<[1], [0], [0], [1], [0, 0, 1, 1], [], []>} : vector<16x8xf32>, vector<8x128xf32>, vector<16x128xf32> -> vector<16x128xf32>
    %246 = arith.addf %239, %245 : vector<16x128xf32>
    %c3_264 = arith.constant 3 : index
    %c0_265 = arith.constant 0 : index
    %c0_266 = arith.constant 0 : index
    %247 = vector.load %arg8[%c3_264, %c0_265, %c0_266] : memref<4x128x128xf32, #tpu.memory_space<vmem>>, vector<1x128x128xf32>
    %248 = vector.shape_cast %247 : vector<1x128x128xf32> to vector<128x128xf32>
    %cst_267 = arith.constant dense<0.000000e+00> : vector<8x128xf32>
    %249 = tpu.matmul %226, %248, %cst_267 {dimension_numbers = #tpu.dot_dimension_numbers<[1], [0], [0], [1], [0, 0, 1, 1], [], []>} : vector<8x128xf32>, vector<128x128xf32>, vector<8x128xf32> -> vector<8x128xf32>
    %c3_268 = arith.constant 3 : index
    %c0_269 = arith.constant 0 : index
    %c0_270 = arith.constant 0 : index
    %250 = vector.load %arg9[%c3_268, %c0_269, %c0_270] : memref<4x16x8xf32, #tpu.memory_space<vmem>>, vector<1x16x8xf32>
    %251 = vector.shape_cast %250 : vector<1x16x8xf32> to vector<16x8xf32>
    %cst_271 = arith.constant dense<0.000000e+00> : vector<16x128xf32>
    %252 = tpu.matmul %251, %249, %cst_271 {dimension_numbers = #tpu.dot_dimension_numbers<[1], [0], [0], [1], [0, 0, 1, 1], [], []>} : vector<16x8xf32>, vector<8x128xf32>, vector<16x128xf32> -> vector<16x128xf32>
    %253 = arith.addf %246, %252 : vector<16x128xf32>
    %c0_272 = arith.constant 0 : index
    %c0_273 = arith.constant 0 : index
    %254 = vector.load %arg10[%c0_272, %c0_273] : memref<1x128xf32, #tpu.memory_space<vmem>>, vector<1x128xf32>
    %255 = vector.broadcast %254 : vector<1x128xf32> to vector<16x128xf32>
    %256 = arith.addf %253, %255 : vector<16x128xf32>
    %cst_274 = arith.constant 0.000000e+00 : f32
    %257 = vector.broadcast %cst_274 : f32 to vector<16x128xf32>
    %258 = arith.maximumf %256, %257 : vector<16x128xf32>
    %c0_275 = arith.constant 0 : index
    %c0_276 = arith.constant 0 : index
    %c0_277 = arith.constant 0 : index
    %259 = vector.load %arg11[%c0_275, %c0_276, %c0_277] : memref<4x128x128xf32, #tpu.memory_space<vmem>>, vector<1x128x128xf32>
    %260 = vector.shape_cast %259 : vector<1x128x128xf32> to vector<128x128xf32>
    %cst_278 = arith.constant dense<0.000000e+00> : vector<16x128xf32>
    %261 = tpu.matmul %258, %260, %cst_278 {dimension_numbers = #tpu.dot_dimension_numbers<[1], [0], [0], [1], [0, 0, 1, 1], [], []>} : vector<16x128xf32>, vector<128x128xf32>, vector<16x128xf32> -> vector<16x128xf32>
    %c0_279 = arith.constant 0 : index
    %c0_280 = arith.constant 0 : index
    %c0_281 = arith.constant 0 : index
    %262 = vector.load %arg12[%c0_279, %c0_280, %c0_281] : memref<4x32x16xf32, #tpu.memory_space<vmem>>, vector<1x32x16xf32>
    %263 = vector.shape_cast %262 : vector<1x32x16xf32> to vector<32x16xf32>
    %cst_282 = arith.constant dense<0.000000e+00> : vector<32x128xf32>
    %264 = tpu.matmul %263, %261, %cst_282 {dimension_numbers = #tpu.dot_dimension_numbers<[1], [0], [0], [1], [0, 0, 1, 1], [], []>} : vector<32x16xf32>, vector<16x128xf32>, vector<32x128xf32> -> vector<32x128xf32>
    %c1_283 = arith.constant 1 : index
    %c0_284 = arith.constant 0 : index
    %c0_285 = arith.constant 0 : index
    %265 = vector.load %arg11[%c1_283, %c0_284, %c0_285] : memref<4x128x128xf32, #tpu.memory_space<vmem>>, vector<1x128x128xf32>
    %266 = vector.shape_cast %265 : vector<1x128x128xf32> to vector<128x128xf32>
    %cst_286 = arith.constant dense<0.000000e+00> : vector<16x128xf32>
    %267 = tpu.matmul %258, %266, %cst_286 {dimension_numbers = #tpu.dot_dimension_numbers<[1], [0], [0], [1], [0, 0, 1, 1], [], []>} : vector<16x128xf32>, vector<128x128xf32>, vector<16x128xf32> -> vector<16x128xf32>
    %c1_287 = arith.constant 1 : index
    %c0_288 = arith.constant 0 : index
    %c0_289 = arith.constant 0 : index
    %268 = vector.load %arg12[%c1_287, %c0_288, %c0_289] : memref<4x32x16xf32, #tpu.memory_space<vmem>>, vector<1x32x16xf32>
    %269 = vector.shape_cast %268 : vector<1x32x16xf32> to vector<32x16xf32>
    %cst_290 = arith.constant dense<0.000000e+00> : vector<32x128xf32>
    %270 = tpu.matmul %269, %267, %cst_290 {dimension_numbers = #tpu.dot_dimension_numbers<[1], [0], [0], [1], [0, 0, 1, 1], [], []>} : vector<32x16xf32>, vector<16x128xf32>, vector<32x128xf32> -> vector<32x128xf32>
    %271 = arith.addf %264, %270 : vector<32x128xf32>
    %c2_291 = arith.constant 2 : index
    %c0_292 = arith.constant 0 : index
    %c0_293 = arith.constant 0 : index
    %272 = vector.load %arg11[%c2_291, %c0_292, %c0_293] : memref<4x128x128xf32, #tpu.memory_space<vmem>>, vector<1x128x128xf32>
    %273 = vector.shape_cast %272 : vector<1x128x128xf32> to vector<128x128xf32>
    %cst_294 = arith.constant dense<0.000000e+00> : vector<16x128xf32>
    %274 = tpu.matmul %258, %273, %cst_294 {dimension_numbers = #tpu.dot_dimension_numbers<[1], [0], [0], [1], [0, 0, 1, 1], [], []>} : vector<16x128xf32>, vector<128x128xf32>, vector<16x128xf32> -> vector<16x128xf32>
    %c2_295 = arith.constant 2 : index
    %c0_296 = arith.constant 0 : index
    %c0_297 = arith.constant 0 : index
    %275 = vector.load %arg12[%c2_295, %c0_296, %c0_297] : memref<4x32x16xf32, #tpu.memory_space<vmem>>, vector<1x32x16xf32>
    %276 = vector.shape_cast %275 : vector<1x32x16xf32> to vector<32x16xf32>
    %cst_298 = arith.constant dense<0.000000e+00> : vector<32x128xf32>
    %277 = tpu.matmul %276, %274, %cst_298 {dimension_numbers = #tpu.dot_dimension_numbers<[1], [0], [0], [1], [0, 0, 1, 1], [], []>} : vector<32x16xf32>, vector<16x128xf32>, vector<32x128xf32> -> vector<32x128xf32>
    %278 = arith.addf %271, %277 : vector<32x128xf32>
    %c3_299 = arith.constant 3 : index
    %c0_300 = arith.constant 0 : index
    %c0_301 = arith.constant 0 : index
    %279 = vector.load %arg11[%c3_299, %c0_300, %c0_301] : memref<4x128x128xf32, #tpu.memory_space<vmem>>, vector<1x128x128xf32>
    %280 = vector.shape_cast %279 : vector<1x128x128xf32> to vector<128x128xf32>
    %cst_302 = arith.constant dense<0.000000e+00> : vector<16x128xf32>
    %281 = tpu.matmul %258, %280, %cst_302 {dimension_numbers = #tpu.dot_dimension_numbers<[1], [0], [0], [1], [0, 0, 1, 1], [], []>} : vector<16x128xf32>, vector<128x128xf32>, vector<16x128xf32> -> vector<16x128xf32>
    %c3_303 = arith.constant 3 : index
    %c0_304 = arith.constant 0 : index
    %c0_305 = arith.constant 0 : index
    %282 = vector.load %arg12[%c3_303, %c0_304, %c0_305] : memref<4x32x16xf32, #tpu.memory_space<vmem>>, vector<1x32x16xf32>
    %283 = vector.shape_cast %282 : vector<1x32x16xf32> to vector<32x16xf32>
    %cst_306 = arith.constant dense<0.000000e+00> : vector<32x128xf32>
    %284 = tpu.matmul %283, %281, %cst_306 {dimension_numbers = #tpu.dot_dimension_numbers<[1], [0], [0], [1], [0, 0, 1, 1], [], []>} : vector<32x16xf32>, vector<16x128xf32>, vector<32x128xf32> -> vector<32x128xf32>
    %285 = arith.addf %278, %284 : vector<32x128xf32>
    %c0_307 = arith.constant 0 : index
    %c0_308 = arith.constant 0 : index
    %286 = vector.load %arg13[%c0_307, %c0_308] : memref<1x128xf32, #tpu.memory_space<vmem>>, vector<1x128xf32>
    %287 = vector.broadcast %286 : vector<1x128xf32> to vector<32x128xf32>
    %288 = arith.addf %285, %287 : vector<32x128xf32>
    %cst_309 = arith.constant 0.000000e+00 : f32
    %289 = vector.broadcast %cst_309 : f32 to vector<32x128xf32>
    %290 = arith.maximumf %288, %289 : vector<32x128xf32>
    %c0_310 = arith.constant 0 : index
    %c0_311 = arith.constant 0 : index
    %c0_312 = arith.constant 0 : index
    %291 = vector.load %arg14[%c0_310, %c0_311, %c0_312] : memref<4x128x128xf32, #tpu.memory_space<vmem>>, vector<1x128x128xf32>
    %292 = vector.shape_cast %291 : vector<1x128x128xf32> to vector<128x128xf32>
    %cst_313 = arith.constant dense<0.000000e+00> : vector<32x128xf32>
    %293 = tpu.matmul %290, %292, %cst_313 {dimension_numbers = #tpu.dot_dimension_numbers<[1], [0], [0], [1], [0, 0, 1, 1], [], []>} : vector<32x128xf32>, vector<128x128xf32>, vector<32x128xf32> -> vector<32x128xf32>
    %c0_314 = arith.constant 0 : index
    %c0_315 = arith.constant 0 : index
    %c0_316 = arith.constant 0 : index
    %294 = vector.load %arg15[%c0_314, %c0_315, %c0_316] : memref<4x64x32xf32, #tpu.memory_space<vmem>>, vector<1x64x32xf32>
    %295 = vector.shape_cast %294 : vector<1x64x32xf32> to vector<64x32xf32>
    %cst_317 = arith.constant dense<0.000000e+00> : vector<64x128xf32>
    %296 = tpu.matmul %295, %293, %cst_317 {dimension_numbers = #tpu.dot_dimension_numbers<[1], [0], [0], [1], [0, 0, 1, 1], [], []>} : vector<64x32xf32>, vector<32x128xf32>, vector<64x128xf32> -> vector<64x128xf32>
    %c1_318 = arith.constant 1 : index
    %c0_319 = arith.constant 0 : index
    %c0_320 = arith.constant 0 : index
    %297 = vector.load %arg14[%c1_318, %c0_319, %c0_320] : memref<4x128x128xf32, #tpu.memory_space<vmem>>, vector<1x128x128xf32>
    %298 = vector.shape_cast %297 : vector<1x128x128xf32> to vector<128x128xf32>
    %cst_321 = arith.constant dense<0.000000e+00> : vector<32x128xf32>
    %299 = tpu.matmul %290, %298, %cst_321 {dimension_numbers = #tpu.dot_dimension_numbers<[1], [0], [0], [1], [0, 0, 1, 1], [], []>} : vector<32x128xf32>, vector<128x128xf32>, vector<32x128xf32> -> vector<32x128xf32>
    %c1_322 = arith.constant 1 : index
    %c0_323 = arith.constant 0 : index
    %c0_324 = arith.constant 0 : index
    %300 = vector.load %arg15[%c1_322, %c0_323, %c0_324] : memref<4x64x32xf32, #tpu.memory_space<vmem>>, vector<1x64x32xf32>
    %301 = vector.shape_cast %300 : vector<1x64x32xf32> to vector<64x32xf32>
    %cst_325 = arith.constant dense<0.000000e+00> : vector<64x128xf32>
    %302 = tpu.matmul %301, %299, %cst_325 {dimension_numbers = #tpu.dot_dimension_numbers<[1], [0], [0], [1], [0, 0, 1, 1], [], []>} : vector<64x32xf32>, vector<32x128xf32>, vector<64x128xf32> -> vector<64x128xf32>
    %303 = arith.addf %296, %302 : vector<64x128xf32>
    %c2_326 = arith.constant 2 : index
    %c0_327 = arith.constant 0 : index
    %c0_328 = arith.constant 0 : index
    %304 = vector.load %arg14[%c2_326, %c0_327, %c0_328] : memref<4x128x128xf32, #tpu.memory_space<vmem>>, vector<1x128x128xf32>
    %305 = vector.shape_cast %304 : vector<1x128x128xf32> to vector<128x128xf32>
    %cst_329 = arith.constant dense<0.000000e+00> : vector<32x128xf32>
    %306 = tpu.matmul %290, %305, %cst_329 {dimension_numbers = #tpu.dot_dimension_numbers<[1], [0], [0], [1], [0, 0, 1, 1], [], []>} : vector<32x128xf32>, vector<128x128xf32>, vector<32x128xf32> -> vector<32x128xf32>
    %c2_330 = arith.constant 2 : index
    %c0_331 = arith.constant 0 : index
    %c0_332 = arith.constant 0 : index
    %307 = vector.load %arg15[%c2_330, %c0_331, %c0_332] : memref<4x64x32xf32, #tpu.memory_space<vmem>>, vector<1x64x32xf32>
    %308 = vector.shape_cast %307 : vector<1x64x32xf32> to vector<64x32xf32>
    %cst_333 = arith.constant dense<0.000000e+00> : vector<64x128xf32>
    %309 = tpu.matmul %308, %306, %cst_333 {dimension_numbers = #tpu.dot_dimension_numbers<[1], [0], [0], [1], [0, 0, 1, 1], [], []>} : vector<64x32xf32>, vector<32x128xf32>, vector<64x128xf32> -> vector<64x128xf32>
    %310 = arith.addf %303, %309 : vector<64x128xf32>
    %c3_334 = arith.constant 3 : index
    %c0_335 = arith.constant 0 : index
    %c0_336 = arith.constant 0 : index
    %311 = vector.load %arg14[%c3_334, %c0_335, %c0_336] : memref<4x128x128xf32, #tpu.memory_space<vmem>>, vector<1x128x128xf32>
    %312 = vector.shape_cast %311 : vector<1x128x128xf32> to vector<128x128xf32>
    %cst_337 = arith.constant dense<0.000000e+00> : vector<32x128xf32>
    %313 = tpu.matmul %290, %312, %cst_337 {dimension_numbers = #tpu.dot_dimension_numbers<[1], [0], [0], [1], [0, 0, 1, 1], [], []>} : vector<32x128xf32>, vector<128x128xf32>, vector<32x128xf32> -> vector<32x128xf32>
    %c3_338 = arith.constant 3 : index
    %c0_339 = arith.constant 0 : index
    %c0_340 = arith.constant 0 : index
    %314 = vector.load %arg15[%c3_338, %c0_339, %c0_340] : memref<4x64x32xf32, #tpu.memory_space<vmem>>, vector<1x64x32xf32>
    %315 = vector.shape_cast %314 : vector<1x64x32xf32> to vector<64x32xf32>
    %cst_341 = arith.constant dense<0.000000e+00> : vector<64x128xf32>
    %316 = tpu.matmul %315, %313, %cst_341 {dimension_numbers = #tpu.dot_dimension_numbers<[1], [0], [0], [1], [0, 0, 1, 1], [], []>} : vector<64x32xf32>, vector<32x128xf32>, vector<64x128xf32> -> vector<64x128xf32>
    %317 = arith.addf %310, %316 : vector<64x128xf32>
    %c0_342 = arith.constant 0 : index
    %c0_343 = arith.constant 0 : index
    %318 = vector.load %arg16[%c0_342, %c0_343] : memref<1x128xf32, #tpu.memory_space<vmem>>, vector<1x128xf32>
    %319 = vector.broadcast %318 : vector<1x128xf32> to vector<64x128xf32>
    %320 = arith.addf %317, %319 : vector<64x128xf32>
    %cst_344 = arith.constant 0.000000e+00 : f32
    %321 = vector.broadcast %cst_344 : f32 to vector<64x128xf32>
    %322 = arith.maximumf %320, %321 : vector<64x128xf32>
    %c0_345 = arith.constant 0 : index
    %c0_346 = arith.constant 0 : index
    %c0_347 = arith.constant 0 : index
    %323 = vector.load %arg17[%c0_345, %c0_346, %c0_347] : memref<4x128x64xf32, #tpu.memory_space<vmem>>, vector<1x128x64xf32>
    %324 = vector.shape_cast %323 : vector<1x128x64xf32> to vector<128x64xf32>
    %cst_348 = arith.constant dense<0.000000e+00> : vector<64x64xf32>
    %325 = tpu.matmul %322, %324, %cst_348 {dimension_numbers = #tpu.dot_dimension_numbers<[1], [0], [0], [1], [0, 0, 1, 1], [], []>} : vector<64x128xf32>, vector<128x64xf32>, vector<64x64xf32> -> vector<64x64xf32>
    %c0_349 = arith.constant 0 : index
    %c0_350 = arith.constant 0 : index
    %c0_351 = arith.constant 0 : index
    %326 = vector.load %arg18[%c0_349, %c0_350, %c0_351] : memref<4x128x64xf32, #tpu.memory_space<vmem>>, vector<1x128x64xf32>
    %327 = vector.shape_cast %326 : vector<1x128x64xf32> to vector<128x64xf32>
    %cst_352 = arith.constant dense<0.000000e+00> : vector<128x64xf32>
    %328 = tpu.matmul %327, %325, %cst_352 {dimension_numbers = #tpu.dot_dimension_numbers<[1], [0], [0], [1], [0, 0, 1, 1], [], []>} : vector<128x64xf32>, vector<64x64xf32>, vector<128x64xf32> -> vector<128x64xf32>
    %c1_353 = arith.constant 1 : index
    %c0_354 = arith.constant 0 : index
    %c0_355 = arith.constant 0 : index
    %329 = vector.load %arg17[%c1_353, %c0_354, %c0_355] : memref<4x128x64xf32, #tpu.memory_space<vmem>>, vector<1x128x64xf32>
    %330 = vector.shape_cast %329 : vector<1x128x64xf32> to vector<128x64xf32>
    %cst_356 = arith.constant dense<0.000000e+00> : vector<64x64xf32>
    %331 = tpu.matmul %322, %330, %cst_356 {dimension_numbers = #tpu.dot_dimension_numbers<[1], [0], [0], [1], [0, 0, 1, 1], [], []>} : vector<64x128xf32>, vector<128x64xf32>, vector<64x64xf32> -> vector<64x64xf32>
    %c1_357 = arith.constant 1 : index
    %c0_358 = arith.constant 0 : index
    %c0_359 = arith.constant 0 : index
    %332 = vector.load %arg18[%c1_357, %c0_358, %c0_359] : memref<4x128x64xf32, #tpu.memory_space<vmem>>, vector<1x128x64xf32>
    %333 = vector.shape_cast %332 : vector<1x128x64xf32> to vector<128x64xf32>
    %cst_360 = arith.constant dense<0.000000e+00> : vector<128x64xf32>
    %334 = tpu.matmul %333, %331, %cst_360 {dimension_numbers = #tpu.dot_dimension_numbers<[1], [0], [0], [1], [0, 0, 1, 1], [], []>} : vector<128x64xf32>, vector<64x64xf32>, vector<128x64xf32> -> vector<128x64xf32>
    %335 = arith.addf %328, %334 : vector<128x64xf32>
    %c2_361 = arith.constant 2 : index
    %c0_362 = arith.constant 0 : index
    %c0_363 = arith.constant 0 : index
    %336 = vector.load %arg17[%c2_361, %c0_362, %c0_363] : memref<4x128x64xf32, #tpu.memory_space<vmem>>, vector<1x128x64xf32>
    %337 = vector.shape_cast %336 : vector<1x128x64xf32> to vector<128x64xf32>
    %cst_364 = arith.constant dense<0.000000e+00> : vector<64x64xf32>
    %338 = tpu.matmul %322, %337, %cst_364 {dimension_numbers = #tpu.dot_dimension_numbers<[1], [0], [0], [1], [0, 0, 1, 1], [], []>} : vector<64x128xf32>, vector<128x64xf32>, vector<64x64xf32> -> vector<64x64xf32>
    %c2_365 = arith.constant 2 : index
    %c0_366 = arith.constant 0 : index
    %c0_367 = arith.constant 0 : index
    %339 = vector.load %arg18[%c2_365, %c0_366, %c0_367] : memref<4x128x64xf32, #tpu.memory_space<vmem>>, vector<1x128x64xf32>
    %340 = vector.shape_cast %339 : vector<1x128x64xf32> to vector<128x64xf32>
    %cst_368 = arith.constant dense<0.000000e+00> : vector<128x64xf32>
    %341 = tpu.matmul %340, %338, %cst_368 {dimension_numbers = #tpu.dot_dimension_numbers<[1], [0], [0], [1], [0, 0, 1, 1], [], []>} : vector<128x64xf32>, vector<64x64xf32>, vector<128x64xf32> -> vector<128x64xf32>
    %342 = arith.addf %335, %341 : vector<128x64xf32>
    %c3_369 = arith.constant 3 : index
    %c0_370 = arith.constant 0 : index
    %c0_371 = arith.constant 0 : index
    %343 = vector.load %arg17[%c3_369, %c0_370, %c0_371] : memref<4x128x64xf32, #tpu.memory_space<vmem>>, vector<1x128x64xf32>
    %344 = vector.shape_cast %343 : vector<1x128x64xf32> to vector<128x64xf32>
    %cst_372 = arith.constant dense<0.000000e+00> : vector<64x64xf32>
    %345 = tpu.matmul %322, %344, %cst_372 {dimension_numbers = #tpu.dot_dimension_numbers<[1], [0], [0], [1], [0, 0, 1, 1], [], []>} : vector<64x128xf32>, vector<128x64xf32>, vector<64x64xf32> -> vector<64x64xf32>
    %c3_373 = arith.constant 3 : index
    %c0_374 = arith.constant 0 : index
    %c0_375 = arith.constant 0 : index
    %346 = vector.load %arg18[%c3_373, %c0_374, %c0_375] : memref<4x128x64xf32, #tpu.memory_space<vmem>>, vector<1x128x64xf32>
    %347 = vector.shape_cast %346 : vector<1x128x64xf32> to vector<128x64xf32>
    %cst_376 = arith.constant dense<0.000000e+00> : vector<128x64xf32>
    %348 = tpu.matmul %347, %345, %cst_376 {dimension_numbers = #tpu.dot_dimension_numbers<[1], [0], [0], [1], [0, 0, 1, 1], [], []>} : vector<128x64xf32>, vector<64x64xf32>, vector<128x64xf32> -> vector<128x64xf32>
    %349 = arith.addf %342, %348 : vector<128x64xf32>
    %c0_377 = arith.constant 0 : index
    %c0_378 = arith.constant 0 : index
    %350 = vector.load %arg19[%c0_377, %c0_378] : memref<1x64xf32, #tpu.memory_space<vmem>>, vector<1x64xf32>
    %351 = vector.broadcast %350 : vector<1x64xf32> to vector<128x64xf32>
    %352 = arith.addf %349, %351 : vector<128x64xf32>
    %cst_379 = arith.constant 0.000000e+00 : f32
    %353 = vector.broadcast %cst_379 : f32 to vector<128x64xf32>
    %354 = arith.maximumf %352, %353 : vector<128x64xf32>
    %c0_380 = arith.constant 0 : index
    %c0_381 = arith.constant 0 : index
    %355 = vector.load %arg42[%c0_380, %c0_381] : memref<128x64xf32, #tpu.memory_space<vmem>>, vector<128x64xf32>
    tpu.vector_store %arg42[%c0_380, %c0_381], %354 {strides = array<i32>} : memref<128x64xf32, #tpu.memory_space<vmem>>, vector<128x64xf32>,
    return
  }
  func.func @transform_0(%arg0: i32) -> (i32, i32) {
    %c0_i32 = arith.constant 0 : i32
    %c0_i32_0 = arith.constant 0 : i32
    %c0_i32_1 = arith.constant 0 : i32
    return %c0_i32, %c0_i32_0 : i32, i32
  }
  func.func @transform_1(%arg0: i32) -> (i32, i32, i32) {
    %c0_i32 = arith.constant 0 : i32
    %c0_i32_0 = arith.constant 0 : i32
    %c0_i32_1 = arith.constant 0 : i32
    %c0_i32_2 = arith.constant 0 : i32
    return %c0_i32, %c0_i32_0, %c0_i32_1 : i32, i32, i32
  }
  func.func @transform_2(%arg0: i32) -> (i32, i32, i32) {
    %c0_i32 = arith.constant 0 : i32
    %c0_i32_0 = arith.constant 0 : i32
    %c0_i32_1 = arith.constant 0 : i32
    %c0_i32_2 = arith.constant 0 : i32
    return %c0_i32, %c0_i32_0, %c0_i32_1 : i32, i32, i32
  }
  func.func @transform_3(%arg0: i32) -> (i32, i32) {
    %c0_i32 = arith.constant 0 : i32
    %c0_i32_0 = arith.constant 0 : i32
    %c0_i32_1 = arith.constant 0 : i32
    return %c0_i32, %c0_i32_0 : i32, i32
  }
  func.func @transform_4(%arg0: i32) -> (i32, i32, i32) {
    %c0_i32 = arith.constant 0 : i32
    %c0_i32_0 = arith.constant 0 : i32
    %c0_i32_1 = arith.constant 0 : i32
    %c0_i32_2 = arith.constant 0 : i32
    return %c0_i32, %c0_i32_0, %c0_i32_1 : i32, i32, i32
  }
  func.func @transform_5(%arg0: i32) -> (i32, i32, i32) {
    %c0_i32 = arith.constant 0 : i32
    %c0_i32_0 = arith.constant 0 : i32
    %c0_i32_1 = arith.constant 0 : i32
    %c0_i32_2 = arith.constant 0 : i32
    return %c0_i32, %c0_i32_0, %c0_i32_1 : i32, i32, i32
  }
  func.func @transform_6(%arg0: i32) -> (i32, i32) {
    %c0_i32 = arith.constant 0 : i32
    %c0_i32_0 = arith.constant 0 : i32
    %c0_i32_1 = arith.constant 0 : i32
    return %c0_i32, %c0_i32_0 : i32, i32
  }
  func.func @transform_7(%arg0: i32) -> (i32, i32, i32) {
    %c0_i32 = arith.constant 0 : i32
    %c0_i32_0 = arith.constant 0 : i32
    %c0_i32_1 = arith.constant 0 : i32
    %c0_i32_2 = arith.constant 0 : i32
    return %c0_i32, %c0_i32_0, %c0_i32_1 : i32, i32, i32
  }
  func.func @transform_8(%arg0: i32) -> (i32, i32, i32) {
    %c0_i32 = arith.constant 0 : i32
    %c0_i32_0 = arith.constant 0 : i32
    %c0_i32_1 = arith.constant 0 : i32
    %c0_i32_2 = arith.constant 0 : i32
    return %c0_i32, %c0_i32_0, %c0_i32_1 : i32, i32, i32
  }
  func.func @transform_9(%arg0: i32) -> (i32, i32) {
    %c0_i32 = arith.constant 0 : i32
    %c0_i32_0 = arith.constant 0 : i32
    %c0_i32_1 = arith.constant 0 : i32
    return %c0_i32, %c0_i32_0 : i32, i32
  }
  func.func @transform_10(%arg0: i32) -> (i32, i32, i32) {
    %c0_i32 = arith.constant 0 : i32
    %c0_i32_0 = arith.constant 0 : i32
    %c0_i32_1 = arith.constant 0 : i32
    %c0_i32_2 = arith.constant 0 : i32
    return %c0_i32, %c0_i32_0, %c0_i32_1 : i32, i32, i32
  }
  func.func @transform_11(%arg0: i32) -> (i32, i32, i32) {
    %c0_i32 = arith.constant 0 : i32
    %c0_i32_0 = arith.constant 0 : i32
    %c0_i32_1 = arith.constant 0 : i32
    %c0_i32_2 = arith.constant 0 : i32
    return %c0_i32, %c0_i32_0, %c0_i32_1 : i32, i32, i32
  }
  func.func @transform_12(%arg0: i32) -> (i32, i32) {
    %c0_i32 = arith.constant 0 : i32
    %c0_i32_0 = arith.constant 0 : i32
    %c0_i32_1 = arith.constant 0 : i32
    return %c0_i32, %c0_i32_0 : i32, i32
  }
  func.func @transform_13(%arg0: i32) -> (i32, i32, i32) {
    %c0_i32 = arith.constant 0 : i32
    %c0_i32_0 = arith.constant 0 : i32
    %c0_i32_1 = arith.constant 0 : i32
    %c0_i32_2 = arith.constant 0 : i32
    return %c0_i32, %c0_i32_0, %c0_i32_1 : i32, i32, i32
  }
  func.func @transform_14(%arg0: i32) -> (i32, i32, i32) {
    %c0_i32 = arith.constant 0 : i32
    %c0_i32_0 = arith.constant 0 : i32
    %c0_i32_1 = arith.constant 0 : i32
    %c0_i32_2 = arith.constant 0 : i32
    return %c0_i32, %c0_i32_0, %c0_i32_1 : i32, i32, i32
  }
  func.func @transform_15(%arg0: i32) -> (i32, i32) {
    %c0_i32 = arith.constant 0 : i32
    %c0_i32_0 = arith.constant 0 : i32
    %c0_i32_1 = arith.constant 0 : i32
    return %c0_i32, %c0_i32_0 : i32, i32
  }
  func.func @transform_16(%arg0: i32) -> (i32, i32, i32) {
    %c0_i32 = arith.constant 0 : i32
    %c0_i32_0 = arith.constant 0 : i32
    %c0_i32_1 = arith.constant 0 : i32
    %c0_i32_2 = arith.constant 0 : i32
    return %c0_i32, %c0_i32_0, %c0_i32_1 : i32, i32, i32
  }
  func.func @transform_17(%arg0: i32) -> (i32, i32, i32) {
    %c0_i32 = arith.constant 0 : i32
    %c0_i32_0 = arith.constant 0 : i32
    %c0_i32_1 = arith.constant 0 : i32
    %c0_i32_2 = arith.constant 0 : i32
    return %c0_i32, %c0_i32_0, %c0_i32_1 : i32, i32, i32
  }
  func.func @transform_18(%arg0: i32) -> (i32, i32) {
    %c0_i32 = arith.constant 0 : i32
    %c0_i32_0 = arith.constant 0 : i32
    %c0_i32_1 = arith.constant 0 : i32
    return %c0_i32, %c0_i32_0 : i32, i32
  }
  func.func @transform_19(%arg0: i32) -> (i32, i32, i32) {
    %c0_i32 = arith.constant 0 : i32
    %c0_i32_0 = arith.constant 0 : i32
    %c0_i32_1 = arith.constant 0 : i32
    %c0_i32_2 = arith.constant 0 : i32
    return %c0_i32, %c0_i32_0, %c0_i32_1 : i32, i32, i32
  }
  func.func @transform_20(%arg0: i32) -> (i32, i32, i32) {
    %c0_i32 = arith.constant 0 : i32
    %c0_i32_0 = arith.constant 0 : i32
    %c0_i32_1 = arith.constant 0 : i32
    %c0_i32_2 = arith.constant 0 : i32
    return %c0_i32, %c0_i32_0, %c0_i32_1 : i32, i32, i32
  }
  func.func @transform_21(%arg0: i32) -> (i32, i32) {
    %c0_i32 = arith.constant 0 : i32
    %c0_i32_0 = arith.constant 0 : i32
    %c0_i32_1 = arith.constant 0 : i32
    return %c0_i32, %c0_i32_0 : i32, i32
  }
  func.func @transform_22(%arg0: i32) -> (i32, i32, i32) {
    %c0_i32 = arith.constant 0 : i32
    %c0_i32_0 = arith.constant 0 : i32
    %c0_i32_1 = arith.constant 0 : i32
    %c0_i32_2 = arith.constant 0 : i32
    return %c0_i32, %c0_i32_0, %c0_i32_1 : i32, i32, i32
  }
  func.func @transform_23(%arg0: i32) -> (i32, i32, i32) {
    %c0_i32 = arith.constant 0 : i32
    %c0_i32_0 = arith.constant 0 : i32
    %c0_i32_1 = arith.constant 0 : i32
    %c0_i32_2 = arith.constant 0 : i32
    return %c0_i32, %c0_i32_0, %c0_i32_1 : i32, i32, i32
  }
  func.func @transform_24(%arg0: i32) -> (i32, i32) {
    %c0_i32 = arith.constant 0 : i32
    %c0_i32_0 = arith.constant 0 : i32
    %c0_i32_1 = arith.constant 0 : i32
    return %c0_i32, %c0_i32_0 : i32, i32
  }
  func.func @transform_25(%arg0: i32) -> (i32, i32, i32) {
    %c0_i32 = arith.constant 0 : i32
    %c0_i32_0 = arith.constant 0 : i32
    %c0_i32_1 = arith.constant 0 : i32
    %c0_i32_2 = arith.constant 0 : i32
    return %c0_i32, %c0_i32_0, %c0_i32_1 : i32, i32, i32
  }
  func.func @transform_26(%arg0: i32) -> (i32, i32, i32) {
    %c0_i32 = arith.constant 0 : i32
    %c0_i32_0 = arith.constant 0 : i32
    %c0_i32_1 = arith.constant 0 : i32
    %c0_i32_2 = arith.constant 0 : i32
    return %c0_i32, %c0_i32_0, %c0_i32_1 : i32, i32, i32
  }
  func.func @transform_27(%arg0: i32) -> (i32, i32) {
    %c0_i32 = arith.constant 0 : i32
    %c0_i32_0 = arith.constant 0 : i32
    %c0_i32_1 = arith.constant 0 : i32
    return %c0_i32, %c0_i32_0 : i32, i32
  }
  func.func @transform_28(%arg0: i32) -> (i32, i32, i32) {
    %c0_i32 = arith.constant 0 : i32
    %c0_i32_0 = arith.constant 0 : i32
    %c0_i32_1 = arith.constant 0 : i32
    %c0_i32_2 = arith.constant 0 : i32
    return %c0_i32, %c0_i32_0, %c0_i32_1 : i32, i32, i32
  }
  func.func @transform_29(%arg0: i32) -> (i32, i32, i32) {
    %c0_i32 = arith.constant 0 : i32
    %c0_i32_0 = arith.constant 0 : i32
    %c0_i32_1 = arith.constant 0 : i32
    %c0_i32_2 = arith.constant 0 : i32
    return %c0_i32, %c0_i32_0, %c0_i32_1 : i32, i32, i32
  }
  func.func @transform_30(%arg0: i32) -> (i32, i32) {
    %c0_i32 = arith.constant 0 : i32
    %c0_i32_0 = arith.constant 0 : i32
    %c0_i32_1 = arith.constant 0 : i32
    return %c0_i32, %c0_i32_0 : i32, i32
  }
  func.func @transform_31(%arg0: i32) -> (i32, i32, i32) {
    %c0_i32 = arith.constant 0 : i32
    %c0_i32_0 = arith.constant 0 : i32
    %c0_i32_1 = arith.constant 0 : i32
    %c0_i32_2 = arith.constant 0 : i32
    return %c0_i32, %c0_i32_0, %c0_i32_1 : i32, i32, i32
  }
  func.func @transform_32(%arg0: i32) -> (i32, i32, i32) {
    %c0_i32 = arith.constant 0 : i32
    %c0_i32_0 = arith.constant 0 : i32
    %c0_i32_1 = arith.constant 0 : i32
    %c0_i32_2 = arith.constant 0 : i32
    return %c0_i32, %c0_i32_0, %c0_i32_1 : i32, i32, i32
  }
  func.func @transform_33(%arg0: i32) -> (i32, i32) {
    %c0_i32 = arith.constant 0 : i32
    %c0_i32_0 = arith.constant 0 : i32
    %c0_i32_1 = arith.constant 0 : i32
    return %c0_i32, %c0_i32_0 : i32, i32
  }
  func.func @transform_34(%arg0: i32) -> (i32, i32, i32) {
    %c0_i32 = arith.constant 0 : i32
    %c0_i32_0 = arith.constant 0 : i32
    %c0_i32_1 = arith.constant 0 : i32
    %c0_i32_2 = arith.constant 0 : i32
    return %c0_i32, %c0_i32_0, %c0_i32_1 : i32, i32, i32
  }
  func.func @transform_35(%arg0: i32) -> (i32, i32, i32) {
    %c0_i32 = arith.constant 0 : i32
    %c0_i32_0 = arith.constant 0 : i32
    %c0_i32_1 = arith.constant 0 : i32
    %c0_i32_2 = arith.constant 0 : i32
    return %c0_i32, %c0_i32_0, %c0_i32_1 : i32, i32, i32
  }
  func.func @transform_36(%arg0: i32) -> (i32, i32) {
    %c0_i32 = arith.constant 0 : i32
    %c0_i32_0 = arith.constant 0 : i32
    %c0_i32_1 = arith.constant 0 : i32
    return %c0_i32, %c0_i32_0 : i32, i32
  }
  func.func @transform_37(%arg0: i32) -> (i32, i32) {
    %c0_i32 = arith.constant 0 : i32
    %c0_i32_0 = arith.constant 0 : i32
    %c0_i32_1 = arith.constant 0 : i32
    return %c0_i32, %c0_i32_0 : i32, i32
  }
  func.func @transform_38(%arg0: i32) -> (i32, i32) {
    %c0_i32 = arith.constant 0 : i32
    %c0_i32_0 = arith.constant 0 : i32
    %c0_i32_1 = arith.constant 0 : i32
    return %c0_i32, %c0_i32_0 : i32, i32
  }
  func.func @transform_39(%arg0: i32) -> (i32, i32) {
    %c0_i32 = arith.constant 0 : i32
    %c0_i32_0 = arith.constant 0 : i32
    %c0_i32_1 = arith.constant 0 : i32
    return %c0_i32, %c0_i32_0 : i32, i32
  }
  func.func @transform_40(%arg0: i32) -> (i32, i32) {
    %c0_i32 = arith.constant 0 : i32
    %c0_i32_0 = arith.constant 0 : i32
    %c0_i32_1 = arith.constant 0 : i32
    return %c0_i32, %c0_i32_0 : i32, i32
  }
  func.func @transform_41(%arg0: i32) -> (i32, i32) {
    %c0_i32 = arith.constant 0 : i32
    %c0_i32_0 = arith.constant 0 : i32
    %c0_i32_1 = arith.constant 0 : i32
    return %c0_i32, %c0_i32_0 : i32, i32
  }
}

</mosaic_0001>

<llo_original>
// kernel: image_reconstructor_forward.1
$region0: #{image_reconstructor_forward.1}
  #allocation0 [shape = 'u32[]', space=smem, size = 0x4, offset = 0x4, fixed_abs, tag = 'smem constant byte address 0x4 - core index']
  #allocation1 [shape = 'u32[144,128]{1,0:T(1,128)}', space=vmem, size = 0x12000, scoped, tag = 'internal scratch']
  %s0 = inlined_call_operand.smem [shape: u32[42], index: -1, kind: input, shape index: {}]
  %s1 = sld [smem:[%s0]]
  %s2 = scalar_lea.smem %s0, 1
  %s3 = sld [smem:[%s2]]
  %s4 = scalar_lea.smem %s0, 2
  %s5 = sld [smem:[%s4]]
  %s6 = scalar_lea.smem %s0, 3
  %s7 = sld [smem:[%s6]]
  %s8 = scalar_lea.smem %s0, 4
  %s9 = sld [smem:[%s8]]
  %s10 = scalar_lea.smem %s0, 5
  %s11 = sld [smem:[%s10]]
  %s12 = scalar_lea.smem %s0, 6
  %s13 = sld [smem:[%s12]]
  %s14 = scalar_lea.smem %s0, 7
  %s15 = sld [smem:[%s14]]
  %s16 = scalar_lea.smem %s0, 8
  %s17 = sld [smem:[%s16]]
  %s18 = scalar_lea.smem %s0, 9
  %s19 = sld [smem:[%s18]]
  %s20 = scalar_lea.smem %s0, 10
  %s21 = sld [smem:[%s20]]
  %s22 = scalar_lea.smem %s0, 11
  %s23 = sld [smem:[%s22]]
  %s24 = scalar_lea.smem %s0, 12
  %s25 = sld [smem:[%s24]]
  %s26 = scalar_lea.smem %s0, 13
  %s27 = sld [smem:[%s26]]
  %s28 = scalar_lea.smem %s0, 14
  %s29 = sld [smem:[%s28]]
  %s30 = scalar_lea.smem %s0, 15
  %s31 = sld [smem:[%s30]]
  %s32 = scalar_lea.smem %s0, 16
  %s33 = sld [smem:[%s32]]
  %s34 = scalar_lea.smem %s0, 17
  %s35 = sld [smem:[%s34]]
  %s36 = scalar_lea.smem %s0, 18
  %s37 = sld [smem:[%s36]]
  %s38 = scalar_lea.smem %s0, 19
  %s39 = sld [smem:[%s38]]
  %s40 = scalar_lea.smem %s0, 20
  %s41 = sld [smem:[%s40]]
  %s42 = scalar_lea.smem %s0, 21
  %s43 = sld [smem:[%s42]]
  %s44 = scalar_lea.smem %s0, 22
  %s45 = sld [smem:[%s44]]
  %s46 = scalar_lea.smem %s0, 23
  %s47 = sld [smem:[%s46]]
  %s48 = scalar_lea.smem %s0, 24
  %s49 = sld [smem:[%s48]]
  %s50 = scalar_lea.smem %s0, 25
  %s51 = sld [smem:[%s50]]
  %s52 = scalar_lea.smem %s0, 26
  %s53 = sld [smem:[%s52]]
  %s54 = scalar_lea.smem %s0, 27
  %s55 = sld [smem:[%s54]]
  %s56 = scalar_lea.smem %s0, 28
  %s57 = sld [smem:[%s56]]
  %s58 = scalar_lea.smem %s0, 29
  %s59 = sld [smem:[%s58]]
  %s60 = scalar_lea.smem %s0, 30
  %s61 = sld [smem:[%s60]]
  %s62 = scalar_lea.smem %s0, 31
  %s63 = sld [smem:[%s62]]
  %s64 = scalar_lea.smem %s0, 32
  %s65 = sld [smem:[%s64]]
  %s66 = scalar_lea.smem %s0, 33
  %s67 = sld [smem:[%s66]]
  %s68 = scalar_lea.smem %s0, 34
  %s69 = sld [smem:[%s68]]
  %s70 = scalar_lea.smem %s0, 35
  %s71 = sld [smem:[%s70]]
  %s72 = scalar_lea.smem %s0, 36
  %s73 = sld [smem:[%s72]]
  %s74 = scalar_lea.smem %s0, 37
  %s75 = sld [smem:[%s74]]
  %s76 = scalar_lea.smem %s0, 38
  %s77 = sld [smem:[%s76]]
  %s78 = scalar_lea.smem %s0, 39
  %s79 = sld [smem:[%s78]]
  %s80 = scalar_lea.smem %s0, 40
  %s81 = sld [smem:[%s80]]
  %s82 = scalar_lea.smem %s0, 41
  %s83 = sld [smem:[%s82]]
  %s84 = sld [smem:[#allocation0]]
  $region258: #{image_reconstructor_forward.1} parent=0
    _
  %s86 = ssub.s32 1, %s84
  %s87 = scalar_select 0, %s86, %s84
  $region1: #{image_reconstructor_forward.1} parent=0
    #allocation2 [shape = 'u8[65536]{0}', space=vmem, size = 0x10000, scoped, tag = 'input window, operand 0, single buffered']
    #allocation3 [shape = 's32[1]{0}', space=sflag, size = 0x4, scoped, tag = 'scoped memory for image_reconstructor_forward.1']
    #allocation4 [shape = 's32[1]{0}', space=sflag, size = 0x4, scoped, tag = 'scoped memory for image_reconstructor_forward.1']
    #allocation5 [shape = 'u8[512]{0}', space=vmem, size = 0x400, scoped, tag = 'input window, operand 3, single buffered']
    #allocation6 [shape = 's32[1]{0}', space=sflag, size = 0x4, scoped, tag = 'scoped memory for image_reconstructor_forward.1']
    #allocation7 [shape = 'u8[512]{0}', space=vmem, size = 0x400, scoped, tag = 'input window, operand 6, single buffered']
    #allocation8 [shape = 'u8[512]{0}', space=vmem, size = 0x400, scoped, tag = 'input window, operand 9, single buffered']
    #allocation9 [shape = 's32[1]{0}', space=sflag, size = 0x4, scoped, tag = 'scoped memory for image_reconstructor_forward.1']
    #allocation10 [shape = 'u8[512]{0}', space=vmem, size = 0x400, scoped, tag = 'input window, operand 12, single buffered']
    #allocation11 [shape = 'u8[262144]{0}', space=vmem, size = 0x40000, scoped, tag = 'input window, operand 13, single buffered']
    #allocation12 [shape = 's32[1]{0}', space=sflag, size = 0x4, scoped, tag = 'scoped memory for image_reconstructor_forward.1']
    #allocation13 [shape = 'u8[512]{0}', space=vmem, size = 0x400, scoped, tag = 'input window, operand 15, single buffered']
    #allocation14 [shape = 'u8[512]{0}', space=vmem, size = 0x400, scoped, tag = 'input window, operand 18, single buffered']
    #allocation15 [shape = 's32[1]{0}', space=sflag, size = 0x4, scoped, tag = 'scoped memory for image_reconstructor_forward.1']
    #allocation16 [shape = 'u8[98304]{0}', space=vmem, size = 0x18000, scoped, tag = 'input window, operand 19, single buffered']
    #allocation17 [shape = 'u8[98304]{0}', space=vmem, size = 0x18000, scoped, tag = 'input window, operand 20, single buffered']
    #allocation18 [shape = 's32[1]{0}', space=sflag, size = 0x4, scoped, tag = 'scoped memory for image_reconstructor_forward.1']
    #allocation19 [shape = 'u8[196608]{0}', space=vmem, size = 0x30000, scoped, tag = 'input window, operand 25, single buffered']
    #allocation20 [shape = 'u8[24576]{0}', space=vmem, size = 0x6000, scoped, tag = 'input window, operand 26, single buffered']
    #allocation21 [shape = 's32[1]{0}', space=sflag, size = 0x4, scoped, tag = 'scoped memory for image_reconstructor_forward.1']
    #allocation22 [shape = 'u8[196608]{0}', space=vmem, size = 0x30000, scoped, tag = 'input window, operand 28, single buffered']
    #allocation23 [shape = 'u8[12288]{0}', space=vmem, size = 0x3000, scoped, tag = 'input window, operand 29, single buffered']
    #allocation24 [shape = 's32[1]{0}', space=sflag, size = 0x4, scoped, tag = 'scoped memory for image_reconstructor_forward.1']
    #allocation25 [shape = 'u8[196608]{0}', space=vmem, size = 0x30000, scoped, tag = 'input window, operand 31, single buffered']
    #allocation26 [shape = 'u8[512]{0}', space=vmem, size = 0x400, scoped, tag = 'input window, operand 33, single buffered']
    #allocation27 [shape = 's32[1]{0}', space=sflag, size = 0x4, scoped, tag = 'scoped memory for image_reconstructor_forward.1']
    #allocation28 [shape = 'u8[196608]{0}', space=vmem, size = 0x30000, scoped, tag = 'input window, operand 34, single buffered']
    #allocation29 [shape = 'u8[3072]{0}', space=vmem, size = 0xc00, scoped, tag = 'input window, operand 35, single buffered']
    #allocation30 [shape = 's32[1]{0}', space=sflag, size = 0x4, scoped, tag = 'scoped memory for image_reconstructor_forward.1']
    #allocation31 [shape = 'u8[512]{0}', space=vmem, size = 0x400, scoped, tag = 'input window, operand 36, single buffered']
    #allocation32 [shape = 'u8[512]{0}', space=vmem, size = 0x400, scoped, tag = 'input window, operand 38, single buffered']
    #allocation33 [shape = 's32[1]{0}', space=sflag, size = 0x4, scoped, tag = 'scoped memory for image_reconstructor_forward.1']
    #allocation34 [shape = 'u8[512]{0}', space=vmem, size = 0x400, scoped, tag = 'input window, operand 40, single buffered']
    #allocation35 [shape = 'u8[65536]{0}', space=vmem, size = 0x10000, scoped, tag = 'output window, operand 0, single buffered']
    %88 = vsyncpa [#allocation3], 0
    %89 = vsyncpa [#allocation6], 0
    %90 = vsyncpa [#allocation9], 0
    %91 = vsyncpa [#allocation12], 0
    %92 = vsyncpa [#allocation15], 0
    %93 = vsyncpa [#allocation18], 0
    %94 = vsyncpa [#allocation21], 0
    %95 = vsyncpa [#allocation24], 0
    %96 = vsyncpa [#allocation27], 0
    %97 = vsyncpa [#allocation30], 0
    %98 = vsyncpa [#allocation33], 0
    %99 = vsyncpa [#allocation4], 0
    // Predicated region
    $region2: #{image_reconstructor_forward.1} parent=1 // pred_check
      _
    $region3: #{image_reconstructor_forward.1} parent=1 // pred_check_branch
      %101 = sbr.rel (0) target = $region5
    $region4: #{image_reconstructor_forward.1} parent=1 // pred_region
      %s103 = ssub.s32 2048, 2048
      %104 = vsyncadd [#allocation3], %s103
      %s105 = sshll.u32 [#allocation2], 4
      %s106 = int_to_ptr.vmem [resolvable:$true] %s105
      %111 = dma.hbm_to_vmem [thread:$0]  %s1, 2048, %s106, [#allocation3], 128, 128, 8
    $region5: #{image_reconstructor_forward.1} parent=1 // pred_fallthru
      _
    // Predicated region
    $region6: #{image_reconstructor_forward.1} parent=1 // pred_check
      _
    $region7: #{image_reconstructor_forward.1} parent=1 // pred_check_branch
      %113 = sbr.rel (0) target = $region9
    $region8: #{image_reconstructor_forward.1} parent=1 // pred_region
      _
    $region9: #{image_reconstructor_forward.1} parent=1 // pred_fallthru
      _
    // Predicated region
    $region10: #{image_reconstructor_forward.1} parent=1 // pred_check
      _
    $region11: #{image_reconstructor_forward.1} parent=1 // pred_check_branch
      %115 = sbr.rel (0) target = $region13
    $region12: #{image_reconstructor_forward.1} parent=1 // pred_region
      _
    $region13: #{image_reconstructor_forward.1} parent=1 // pred_fallthru
      _
    // Predicated region
    $region14: #{image_reconstructor_forward.1} parent=1 // pred_check
      _
    $region15: #{image_reconstructor_forward.1} parent=1 // pred_check_branch
      %117 = sbr.rel (0) target = $region17
    $region16: #{image_reconstructor_forward.1} parent=1 // pred_region
      %s119 = ssub.s32 16, 16
      %120 = vsyncadd [#allocation6], %s119
      %s122 = sshll.u32 [#allocation5], 4
      %s123 = int_to_ptr.vmem [resolvable:$true] %s122
      %125 = dma.hbm_to_vmem [thread:$0]  %s7, 16, %s123, [#allocation6]
    $region17: #{image_reconstructor_forward.1} parent=1 // pred_fallthru
      _
    // Predicated region
    $region18: #{image_reconstructor_forward.1} parent=1 // pred_check
      _
    $region19: #{image_reconstructor_forward.1} parent=1 // pred_check_branch
      %127 = sbr.rel (0) target = $region21
    $region20: #{image_reconstructor_forward.1} parent=1 // pred_region
      _
    $region21: #{image_reconstructor_forward.1} parent=1 // pred_fallthru
      _
    // Predicated region
    $region22: #{image_reconstructor_forward.1} parent=1 // pred_check
      _
    $region23: #{image_reconstructor_forward.1} parent=1 // pred_check_branch
      %129 = sbr.rel (0) target = $region25
    $region24: #{image_reconstructor_forward.1} parent=1 // pred_region
      _
    $region25: #{image_reconstructor_forward.1} parent=1 // pred_fallthru
      _
    // Predicated region
    $region26: #{image_reconstructor_forward.1} parent=1 // pred_check
      _
    $region27: #{image_reconstructor_forward.1} parent=1 // pred_check_branch
      %131 = sbr.rel (0) target = $region29
    $region28: #{image_reconstructor_forward.1} parent=1 // pred_region
      %s133 = ssub.s32 16, 16
      %134 = vsyncadd [#allocation6], %s133
      %s136 = sshll.u32 [#allocation7], 4
      %s137 = int_to_ptr.vmem [resolvable:$true] %s136
      %139 = dma.hbm_to_vmem [thread:$0]  %s13, 16, %s137, [#allocation6]
    $region29: #{image_reconstructor_forward.1} parent=1 // pred_fallthru
      _
    // Predicated region
    $region30: #{image_reconstructor_forward.1} parent=1 // pred_check
      _
    $region31: #{image_reconstructor_forward.1} parent=1 // pred_check_branch
      %141 = sbr.rel (0) target = $region33
    $region32: #{image_reconstructor_forward.1} parent=1 // pred_region
      _
    $region33: #{image_reconstructor_forward.1} parent=1 // pred_fallthru
      _
    // Predicated region
    $region34: #{image_reconstructor_forward.1} parent=1 // pred_check
      _
    $region35: #{image_reconstructor_forward.1} parent=1 // pred_check_branch
      %143 = sbr.rel (0) target = $region37
    $region36: #{image_reconstructor_forward.1} parent=1 // pred_region
      _
    $region37: #{image_reconstructor_forward.1} parent=1 // pred_fallthru
      _
    // Predicated region
    $region38: #{image_reconstructor_forward.1} parent=1 // pred_check
      _
    $region39: #{image_reconstructor_forward.1} parent=1 // pred_check_branch
      %145 = sbr.rel (0) target = $region41
    $region40: #{image_reconstructor_forward.1} parent=1 // pred_region
      %s147 = ssub.s32 16, 16
      %148 = vsyncadd [#allocation9], %s147
      %s150 = sshll.u32 [#allocation8], 4
      %s151 = int_to_ptr.vmem [resolvable:$true] %s150
      %153 = dma.hbm_to_vmem [thread:$0]  %s19, 16, %s151, [#allocation9]
    $region41: #{image_reconstructor_forward.1} parent=1 // pred_fallthru
      _
    // Predicated region
    $region42: #{image_reconstructor_forward.1} parent=1 // pred_check
      _
    $region43: #{image_reconstructor_forward.1} parent=1 // pred_check_branch
      %155 = sbr.rel (0) target = $region45
    $region44: #{image_reconstructor_forward.1} parent=1 // pred_region
      _
    $region45: #{image_reconstructor_forward.1} parent=1 // pred_fallthru
      _
    // Predicated region
    $region46: #{image_reconstructor_forward.1} parent=1 // pred_check
      _
    $region47: #{image_reconstructor_forward.1} parent=1 // pred_check_branch
      %157 = sbr.rel (0) target = $region49
    $region48: #{image_reconstructor_forward.1} parent=1 // pred_region
      _
    $region49: #{image_reconstructor_forward.1} parent=1 // pred_fallthru
      _
    // Predicated region
    $region50: #{image_reconstructor_forward.1} parent=1 // pred_check
      _
    $region51: #{image_reconstructor_forward.1} parent=1 // pred_check_branch
      %159 = sbr.rel (0) target = $region53
    $region52: #{image_reconstructor_forward.1} parent=1 // pred_region
      %s161 = ssub.s32 16, 16
      %162 = vsyncadd [#allocation9], %s161
      %s164 = sshll.u32 [#allocation10], 4
      %s165 = int_to_ptr.vmem [resolvable:$true] %s164
      %167 = dma.hbm_to_vmem [thread:$0]  %s25, 16, %s165, [#allocation9]
    $region53: #{image_reconstructor_forward.1} parent=1 // pred_fallthru
      _
    // Predicated region
    $region54: #{image_reconstructor_forward.1} parent=1 // pred_check
      _
    $region55: #{image_reconstructor_forward.1} parent=1 // pred_check_branch
      %169 = sbr.rel (0) target = $region57
    $region56: #{image_reconstructor_forward.1} parent=1 // pred_region
      %s171 = ssub.s32 8192, 8192
      %172 = vsyncadd [#allocation12], %s171
      %s173 = sshll.u32 [#allocation11], 4
      %s174 = int_to_ptr.vmem [resolvable:$true] %s173
      %179 = dma.hbm_to_vmem [thread:$0]  %s27, 8192, %s174, [#allocation12], 128, 128, 8
    $region57: #{image_reconstructor_forward.1} parent=1 // pred_fallthru
      _
    // Predicated region
    $region58: #{image_reconstructor_forward.1} parent=1 // pred_check
      _
    $region59: #{image_reconstructor_forward.1} parent=1 // pred_check_branch
      %181 = sbr.rel (0) target = $region61
    $region60: #{image_reconstructor_forward.1} parent=1 // pred_region
      _
    $region61: #{image_reconstructor_forward.1} parent=1 // pred_fallthru
      _
    // Predicated region
    $region62: #{image_reconstructor_forward.1} parent=1 // pred_check
      _
    $region63: #{image_reconstructor_forward.1} parent=1 // pred_check_branch
      %183 = sbr.rel (0) target = $region65
    $region64: #{image_reconstructor_forward.1} parent=1 // pred_region
      %s185 = ssub.s32 16, 16
      %186 = vsyncadd [#allocation12], %s185
      %s188 = sshll.u32 [#allocation13], 4
      %s189 = int_to_ptr.vmem [resolvable:$true] %s188
      %191 = dma.hbm_to_vmem [thread:$0]  %s31, 16, %s189, [#allocation12]
    $region65: #{image_reconstructor_forward.1} parent=1 // pred_fallthru
      _
    // Predicated region
    $region66: #{image_reconstructor_forward.1} parent=1 // pred_check
      _
    $region67: #{image_reconstructor_forward.1} parent=1 // pred_check_branch
      %193 = sbr.rel (0) target = $region69
    $region68: #{image_reconstructor_forward.1} parent=1 // pred_region
      _
    $region69: #{image_reconstructor_forward.1} parent=1 // pred_fallthru
      _
    // Predicated region
    $region70: #{image_reconstructor_forward.1} parent=1 // pred_check
      _
    $region71: #{image_reconstructor_forward.1} parent=1 // pred_check_branch
      %195 = sbr.rel (0) target = $region73
    $region72: #{image_reconstructor_forward.1} parent=1 // pred_region
      _
    $region73: #{image_reconstructor_forward.1} parent=1 // pred_fallthru
      _
    // Predicated region
    $region74: #{image_reconstructor_forward.1} parent=1 // pred_check
      _
    $region75: #{image_reconstructor_forward.1} parent=1 // pred_check_branch
      %197 = sbr.rel (0) target = $region77
    $region76: #{image_reconstructor_forward.1} parent=1 // pred_region
      %s199 = ssub.s32 16, 16
      %200 = vsyncadd [#allocation15], %s199
      %s202 = sshll.u32 [#allocation14], 4
      %s203 = int_to_ptr.vmem [resolvable:$true] %s202
      %205 = dma.hbm_to_vmem [thread:$0]  %s37, 16, %s203, [#allocation15]
    $region77: #{image_reconstructor_forward.1} parent=1 // pred_fallthru
      _
    // Predicated region
    $region78: #{image_reconstructor_forward.1} parent=1 // pred_check
      _
    $region79: #{image_reconstructor_forward.1} parent=1 // pred_check_branch
      %207 = sbr.rel (0) target = $region81
    $region80: #{image_reconstructor_forward.1} parent=1 // pred_region
      %s209 = ssub.s32 3072, 3072
      %210 = vsyncadd [#allocation15], %s209
      %s211 = sshll.u32 [#allocation16], 4
      %s212 = int_to_ptr.vmem [resolvable:$true] %s211
      %217 = dma.hbm_to_vmem [thread:$0]  %s39, 3072, %s212, [#allocation15], 128, 128, 8
    $region81: #{image_reconstructor_forward.1} parent=1 // pred_fallthru
      _
    // Predicated region
    $region82: #{image_reconstructor_forward.1} parent=1 // pred_check
      _
    $region83: #{image_reconstructor_forward.1} parent=1 // pred_check_branch
      %219 = sbr.rel (0) target = $region85
    $region84: #{image_reconstructor_forward.1} parent=1 // pred_region
      %s221 = ssub.s32 3072, 3072
      %222 = vsyncadd [#allocation18], %s221
      %s223 = sshll.u32 [#allocation17], 4
      %s224 = int_to_ptr.vmem [resolvable:$true] %s223
      %229 = dma.hbm_to_vmem [thread:$0]  %s41, 3072, %s224, [#allocation18], 128, 128, 8
    $region85: #{image_reconstructor_forward.1} parent=1 // pred_fallthru
      _
    // Predicated region
    $region86: #{image_reconstructor_forward.1} parent=1 // pred_check
      _
    $region87: #{image_reconstructor_forward.1} parent=1 // pred_check_branch
      %231 = sbr.rel (0) target = $region89
    $region88: #{image_reconstructor_forward.1} parent=1 // pred_region
      _
    $region89: #{image_reconstructor_forward.1} parent=1 // pred_fallthru
      _
    // Predicated region
    $region90: #{image_reconstructor_forward.1} parent=1 // pred_check
      _
    $region91: #{image_reconstructor_forward.1} parent=1 // pred_check_branch
      %233 = sbr.rel (0) target = $region93
    $region92: #{image_reconstructor_forward.1} parent=1 // pred_region
      _
    $region93: #{image_reconstructor_forward.1} parent=1 // pred_fallthru
      _
    // Predicated region
    $region94: #{image_reconstructor_forward.1} parent=1 // pred_check
      _
    $region95: #{image_reconstructor_forward.1} parent=1 // pred_check_branch
      %235 = sbr.rel (0) target = $region97
    $region96: #{image_reconstructor_forward.1} parent=1 // pred_region
      _
    $region97: #{image_reconstructor_forward.1} parent=1 // pred_fallthru
      _
    // Predicated region
    $region98: #{image_reconstructor_forward.1} parent=1 // pred_check
      _
    $region99: #{image_reconstructor_forward.1} parent=1 // pred_check_branch
      %237 = sbr.rel (0) target = $region101
    $region100: #{image_reconstructor_forward.1} parent=1 // pred_region
      _
    $region101: #{image_reconstructor_forward.1} parent=1 // pred_fallthru
      _
    // Predicated region
    $region102: #{image_reconstructor_forward.1} parent=1 // pred_check
      _
    $region103: #{image_reconstructor_forward.1} parent=1 // pred_check_branch
      %239 = sbr.rel (0) target = $region105
    $region104: #{image_reconstructor_forward.1} parent=1 // pred_region
      %s241 = ssub.s32 6144, 6144
      %242 = vsyncadd [#allocation18], %s241
      %s243 = sshll.u32 [#allocation19], 4
      %s244 = int_to_ptr.vmem [resolvable:$true] %s243
      %249 = dma.hbm_to_vmem [thread:$0]  %s51, 6144, %s244, [#allocation18], 128, 128, 8
    $region105: #{image_reconstructor_forward.1} parent=1 // pred_fallthru
      _
    // Predicated region
    $region106: #{image_reconstructor_forward.1} parent=1 // pred_check
      _
    $region107: #{image_reconstructor_forward.1} parent=1 // pred_check_branch
      %251 = sbr.rel (0) target = $region109
    $region108: #{image_reconstructor_forward.1} parent=1 // pred_region
      %s253 = ssub.s32 768, 768
      %254 = vsyncadd [#allocation21], %s253
      %s255 = sshll.u32 [#allocation20], 4
      %s256 = int_to_ptr.vmem [resolvable:$true] %s255
      %261 = dma.hbm_to_vmem [thread:$0]  %s53, 768, %s256, [#allocation21], 128, 128, 8
    $region109: #{image_reconstructor_forward.1} parent=1 // pred_fallthru
      _
    // Predicated region
    $region110: #{image_reconstructor_forward.1} parent=1 // pred_check
      _
    $region111: #{image_reconstructor_forward.1} parent=1 // pred_check_branch
      %263 = sbr.rel (0) target = $region113
    $region112: #{image_reconstructor_forward.1} parent=1 // pred_region
      _
    $region113: #{image_reconstructor_forward.1} parent=1 // pred_fallthru
      _
    // Predicated region
    $region114: #{image_reconstructor_forward.1} parent=1 // pred_check
      _
    $region115: #{image_reconstructor_forward.1} parent=1 // pred_check_branch
      %265 = sbr.rel (0) target = $region117
    $region116: #{image_reconstructor_forward.1} parent=1 // pred_region
      %s267 = ssub.s32 6144, 6144
      %268 = vsyncadd [#allocation21], %s267
      %s269 = sshll.u32 [#allocation22], 4
      %s270 = int_to_ptr.vmem [resolvable:$true] %s269
      %275 = dma.hbm_to_vmem [thread:$0]  %s57, 6144, %s270, [#allocation21], 128, 128, 8
    $region117: #{image_reconstructor_forward.1} parent=1 // pred_fallthru
      _
    // Predicated region
    $region118: #{image_reconstructor_forward.1} parent=1 // pred_check
      _
    $region119: #{image_reconstructor_forward.1} parent=1 // pred_check_branch
      %277 = sbr.rel (0) target = $region121
    $region120: #{image_reconstructor_forward.1} parent=1 // pred_region
      %s279 = ssub.s32 384, 384
      %280 = vsyncadd [#allocation24], %s279
      %s281 = sshll.u32 [#allocation23], 4
      %s282 = int_to_ptr.vmem [resolvable:$true] %s281
      %287 = dma.hbm_to_vmem [thread:$0]  %s59, 384, %s282, [#allocation24], 128, 128, 8
    $region121: #{image_reconstructor_forward.1} parent=1 // pred_fallthru
      _
    // Predicated region
    $region122: #{image_reconstructor_forward.1} parent=1 // pred_check
      _
    $region123: #{image_reconstructor_forward.1} parent=1 // pred_check_branch
      %289 = sbr.rel (0) target = $region125
    $region124: #{image_reconstructor_forward.1} parent=1 // pred_region
      _
    $region125: #{image_reconstructor_forward.1} parent=1 // pred_fallthru
      _
    // Predicated region
    $region126: #{image_reconstructor_forward.1} parent=1 // pred_check
      _
    $region127: #{image_reconstructor_forward.1} parent=1 // pred_check_branch
      %291 = sbr.rel (0) target = $region129
    $region128: #{image_reconstructor_forward.1} parent=1 // pred_region
      %s293 = ssub.s32 6144, 6144
      %294 = vsyncadd [#allocation24], %s293
      %s295 = sshll.u32 [#allocation25], 4
      %s296 = int_to_ptr.vmem [resolvable:$true] %s295
      %301 = dma.hbm_to_vmem [thread:$0]  %s63, 6144, %s296, [#allocation24], 128, 128, 8
    $region129: #{image_reconstructor_forward.1} parent=1 // pred_fallthru
      _
    // Predicated region
    $region130: #{image_reconstructor_forward.1} parent=1 // pred_check
      _
    $region131: #{image_reconstructor_forward.1} parent=1 // pred_check_branch
      %303 = sbr.rel (0) target = $region133
    $region132: #{image_reconstructor_forward.1} parent=1 // pred_region
      _
    $region133: #{image_reconstructor_forward.1} parent=1 // pred_fallthru
      _
    // Predicated region
    $region134: #{image_reconstructor_forward.1} parent=1 // pred_check
      _
    $region135: #{image_reconstructor_forward.1} parent=1 // pred_check_branch
      %305 = sbr.rel (0) target = $region137
    $region136: #{image_reconstructor_forward.1} parent=1 // pred_region
      %s307 = ssub.s32 16, 16
      %308 = vsyncadd [#allocation27], %s307
      %s310 = sshll.u32 [#allocation26], 4
      %s311 = int_to_ptr.vmem [resolvable:$true] %s310
      %313 = dma.hbm_to_vmem [thread:$0]  %s67, 16, %s311, [#allocation27]
    $region137: #{image_reconstructor_forward.1} parent=1 // pred_fallthru
      _
    // Predicated region
    $region138: #{image_reconstructor_forward.1} parent=1 // pred_check
      _
    $region139: #{image_reconstructor_forward.1} parent=1 // pred_check_branch
      %315 = sbr.rel (0) target = $region141
    $region140: #{image_reconstructor_forward.1} parent=1 // pred_region
      %s317 = ssub.s32 6144, 6144
      %318 = vsyncadd [#allocation27], %s317
      %s319 = sshll.u32 [#allocation28], 4
      %s320 = int_to_ptr.vmem [resolvable:$true] %s319
      %325 = dma.hbm_to_vmem [thread:$0]  %s69, 6144, %s320, [#allocation27], 128, 128, 8
    $region141: #{image_reconstructor_forward.1} parent=1 // pred_fallthru
      _
    // Predicated region
    $region142: #{image_reconstructor_forward.1} parent=1 // pred_check
      _
    $region143: #{image_reconstructor_forward.1} parent=1 // pred_check_branch
      %327 = sbr.rel (0) target = $region145
    $region144: #{image_reconstructor_forward.1} parent=1 // pred_region
      %s329 = ssub.s32 96, 96
      %330 = vsyncadd [#allocation30], %s329
      %s331 = sshll.u32 [#allocation29], 4
      %s332 = int_to_ptr.vmem [resolvable:$true] %s331
      %337 = dma.hbm_to_vmem [thread:$0]  %s71, 96, %s332, [#allocation30], 32, 32, 2
    $region145: #{image_reconstructor_forward.1} parent=1 // pred_fallthru
      _
    // Predicated region
    $region146: #{image_reconstructor_forward.1} parent=1 // pred_check
      _
    $region147: #{image_reconstructor_forward.1} parent=1 // pred_check_branch
      %339 = sbr.rel (0) target = $region149
    $region148: #{image_reconstructor_forward.1} parent=1 // pred_region
      %s341 = ssub.s32 16, 16
      %342 = vsyncadd [#allocation30], %s341
      %s344 = sshll.u32 [#allocation31], 4
      %s345 = int_to_ptr.vmem [resolvable:$true] %s344
      %347 = dma.hbm_to_vmem [thread:$0]  %s73, 16, %s345, [#allocation30]
    $region149: #{image_reconstructor_forward.1} parent=1 // pred_fallthru
      _
    // Predicated region
    $region150: #{image_reconstructor_forward.1} parent=1 // pred_check
      _
    $region151: #{image_reconstructor_forward.1} parent=1 // pred_check_branch
      %349 = sbr.rel (0) target = $region153
    $region152: #{image_reconstructor_forward.1} parent=1 // pred_region
      _
    $region153: #{image_reconstructor_forward.1} parent=1 // pred_fallthru
      _
    // Predicated region
    $region154: #{image_reconstructor_forward.1} parent=1 // pred_check
      _
    $region155: #{image_reconstructor_forward.1} parent=1 // pred_check_branch
      %351 = sbr.rel (0) target = $region157
    $region156: #{image_reconstructor_forward.1} parent=1 // pred_region
      %s353 = ssub.s32 16, 16
      %354 = vsyncadd [#allocation33], %s353
      %s356 = sshll.u32 [#allocation32], 4
      %s357 = int_to_ptr.vmem [resolvable:$true] %s356
      %359 = dma.hbm_to_vmem [thread:$0]  %s77, 16, %s357, [#allocation33]
    $region157: #{image_reconstructor_forward.1} parent=1 // pred_fallthru
      _
    // Predicated region
    $region158: #{image_reconstructor_forward.1} parent=1 // pred_check
      _
    $region159: #{image_reconstructor_forward.1} parent=1 // pred_check_branch
      %361 = sbr.rel (0) target = $region161
    $region160: #{image_reconstructor_forward.1} parent=1 // pred_region
      _
    $region161: #{image_reconstructor_forward.1} parent=1 // pred_fallthru
      _
    // Predicated region
    $region162: #{image_reconstructor_forward.1} parent=1 // pred_check
      _
    $region163: #{image_reconstructor_forward.1} parent=1 // pred_check_branch
      %363 = sbr.rel (0) target = $region165
    $region164: #{image_reconstructor_forward.1} parent=1 // pred_region
      %s365 = ssub.s32 16, 16
      %366 = vsyncadd [#allocation33], %s365
      %s368 = sshll.u32 [#allocation34], 4
      %s369 = int_to_ptr.vmem [resolvable:$true] %s368
      %371 = dma.hbm_to_vmem [thread:$0]  %s81, 16, %s369, [#allocation33]
    $region165: #{image_reconstructor_forward.1} parent=1 // pred_fallthru
      _
    // Predicated region
    $region166: #{image_reconstructor_forward.1} parent=1 // pred_check
      _
    $region167: #{image_reconstructor_forward.1} parent=1 // pred_check_branch
      %373 = sbr.rel (0) target = $region169
    $region168: #{image_reconstructor_forward.1} parent=1 // pred_region
      %374 = dma.done [#allocation3], 2048
    $region169: #{image_reconstructor_forward.1} parent=1 // pred_fallthru
      _
    // Predicated region
    $region170: #{image_reconstructor_forward.1} parent=1 // pred_check
      _
    $region171: #{image_reconstructor_forward.1} parent=1 // pred_check_branch
      %376 = sbr.rel (0) target = $region173
    $region172: #{image_reconstructor_forward.1} parent=1 // pred_region
      %377 = dma.done [#allocation6], 16
    $region173: #{image_reconstructor_forward.1} parent=1 // pred_fallthru
      _
    // Predicated region
    $region174: #{image_reconstructor_forward.1} parent=1 // pred_check
      _
    $region175: #{image_reconstructor_forward.1} parent=1 // pred_check_branch
      %379 = sbr.rel (0) target = $region177
    $region176: #{image_reconstructor_forward.1} parent=1 // pred_region
      %380 = dma.done [#allocation6], 16
    $region177: #{image_reconstructor_forward.1} parent=1 // pred_fallthru
      _
    // Predicated region
    $region178: #{image_reconstructor_forward.1} parent=1 // pred_check
      _
    $region179: #{image_reconstructor_forward.1} parent=1 // pred_check_branch
      %382 = sbr.rel (0) target = $region181
    $region180: #{image_reconstructor_forward.1} parent=1 // pred_region
      %383 = dma.done [#allocation9], 16
    $region181: #{image_reconstructor_forward.1} parent=1 // pred_fallthru
      _
    // Predicated region
    $region182: #{image_reconstructor_forward.1} parent=1 // pred_check
      _
    $region183: #{image_reconstructor_forward.1} parent=1 // pred_check_branch
      %385 = sbr.rel (0) target = $region185
    $region184: #{image_reconstructor_forward.1} parent=1 // pred_region
      %386 = dma.done [#allocation9], 16
    $region185: #{image_reconstructor_forward.1} parent=1 // pred_fallthru
      _
    // Predicated region
    $region186: #{image_reconstructor_forward.1} parent=1 // pred_check
      _
    $region187: #{image_reconstructor_forward.1} parent=1 // pred_check_branch
      %388 = sbr.rel (0) target = $region189
    $region188: #{image_reconstructor_forward.1} parent=1 // pred_region
      %389 = dma.done [#allocation12], 8192
    $region189: #{image_reconstructor_forward.1} parent=1 // pred_fallthru
      _
    // Predicated region
    $region190: #{image_reconstructor_forward.1} parent=1 // pred_check
      _
    $region191: #{image_reconstructor_forward.1} parent=1 // pred_check_branch
      %391 = sbr.rel (0) target = $region193
    $region192: #{image_reconstructor_forward.1} parent=1 // pred_region
      %392 = dma.done [#allocation12], 16
    $region193: #{image_reconstructor_forward.1} parent=1 // pred_fallthru
      _
    // Predicated region
    $region194: #{image_reconstructor_forward.1} parent=1 // pred_check
      _
    $region195: #{image_reconstructor_forward.1} parent=1 // pred_check_branch
      %394 = sbr.rel (0) target = $region197
    $region196: #{image_reconstructor_forward.1} parent=1 // pred_region
      %395 = dma.done [#allocation15], 16
    $region197: #{image_reconstructor_forward.1} parent=1 // pred_fallthru
      _
    // Predicated region
    $region198: #{image_reconstructor_forward.1} parent=1 // pred_check
      _
    $region199: #{image_reconstructor_forward.1} parent=1 // pred_check_branch
      %397 = sbr.rel (0) target = $region201
    $region200: #{image_reconstructor_forward.1} parent=1 // pred_region
      %398 = dma.done [#allocation15], 3072
    $region201: #{image_reconstructor_forward.1} parent=1 // pred_fallthru
      _
    // Predicated region
    $region202: #{image_reconstructor_forward.1} parent=1 // pred_check
      _
    $region203: #{image_reconstructor_forward.1} parent=1 // pred_check_branch
      %400 = sbr.rel (0) target = $region205
    $region204: #{image_reconstructor_forward.1} parent=1 // pred_region
      %401 = dma.done [#allocation18], 3072
    $region205: #{image_reconstructor_forward.1} parent=1 // pred_fallthru
      _
    // Predicated region
    $region206: #{image_reconstructor_forward.1} parent=1 // pred_check
      _
    $region207: #{image_reconstructor_forward.1} parent=1 // pred_check_branch
      %403 = sbr.rel (0) target = $region209
    $region208: #{image_reconstructor_forward.1} parent=1 // pred_region
      %404 = dma.done [#allocation18], 6144
    $region209: #{image_reconstructor_forward.1} parent=1 // pred_fallthru
      _
    // Predicated region
    $region210: #{image_reconstructor_forward.1} parent=1 // pred_check
      _
    $region211: #{image_reconstructor_forward.1} parent=1 // pred_check_branch
      %406 = sbr.rel (0) target = $region213
    $region212: #{image_reconstructor_forward.1} parent=1 // pred_region
      %407 = dma.done [#allocation21], 768
    $region213: #{image_reconstructor_forward.1} parent=1 // pred_fallthru
      _
    // Predicated region
    $region214: #{image_reconstructor_forward.1} parent=1 // pred_check
      _
    $region215: #{image_reconstructor_forward.1} parent=1 // pred_check_branch
      %409 = sbr.rel (0) target = $region217
    $region216: #{image_reconstructor_forward.1} parent=1 // pred_region
      %410 = dma.done [#allocation21], 6144
    $region217: #{image_reconstructor_forward.1} parent=1 // pred_fallthru
      _
    // Predicated region
    $region218: #{image_reconstructor_forward.1} parent=1 // pred_check
      _
    $region219: #{image_reconstructor_forward.1} parent=1 // pred_check_branch
      %412 = sbr.rel (0) target = $region221
    $region220: #{image_reconstructor_forward.1} parent=1 // pred_region
      %413 = dma.done [#allocation24], 384
    $region221: #{image_reconstructor_forward.1} parent=1 // pred_fallthru
      _
    // Predicated region
    $region222: #{image_reconstructor_forward.1} parent=1 // pred_check
      _
    $region223: #{image_reconstructor_forward.1} parent=1 // pred_check_branch
      %415 = sbr.rel (0) target = $region225
    $region224: #{image_reconstructor_forward.1} parent=1 // pred_region
      %416 = dma.done [#allocation24], 6144
    $region225: #{image_reconstructor_forward.1} parent=1 // pred_fallthru
      _
    // Predicated region
    $region226: #{image_reconstructor_forward.1} parent=1 // pred_check
      _
    $region227: #{image_reconstructor_forward.1} parent=1 // pred_check_branch
      %418 = sbr.rel (0) target = $region229
    $region228: #{image_reconstructor_forward.1} parent=1 // pred_region
      %419 = dma.done [#allocation27], 16
    $region229: #{image_reconstructor_forward.1} parent=1 // pred_fallthru
      _
    // Predicated region
    $region230: #{image_reconstructor_forward.1} parent=1 // pred_check
      _
    $region231: #{image_reconstructor_forward.1} parent=1 // pred_check_branch
      %421 = sbr.rel (0) target = $region233
    $region232: #{image_reconstructor_forward.1} parent=1 // pred_region
      %422 = dma.done [#allocation27], 6144
    $region233: #{image_reconstructor_forward.1} parent=1 // pred_fallthru
      _
    // Predicated region
    $region234: #{image_reconstructor_forward.1} parent=1 // pred_check
      _
    $region235: #{image_reconstructor_forward.1} parent=1 // pred_check_branch
      %424 = sbr.rel (0) target = $region237
    $region236: #{image_reconstructor_forward.1} parent=1 // pred_region
      %425 = dma.done [#allocation30], 96
    $region237: #{image_reconstructor_forward.1} parent=1 // pred_fallthru
      _
    // Predicated region
    $region238: #{image_reconstructor_forward.1} parent=1 // pred_check
      _
    $region239: #{image_reconstructor_forward.1} parent=1 // pred_check_branch
      %427 = sbr.rel (0) target = $region241
    $region240: #{image_reconstructor_forward.1} parent=1 // pred_region
      %428 = dma.done [#allocation30], 16
    $region241: #{image_reconstructor_forward.1} parent=1 // pred_fallthru
      _
    // Predicated region
    $region242: #{image_reconstructor_forward.1} parent=1 // pred_check
      _
    $region243: #{image_reconstructor_forward.1} parent=1 // pred_check_branch
      %430 = sbr.rel (0) target = $region245
    $region244: #{image_reconstructor_forward.1} parent=1 // pred_region
      %431 = dma.done [#allocation33], 16
    $region245: #{image_reconstructor_forward.1} parent=1 // pred_fallthru
      _
    // Predicated region
    $region246: #{image_reconstructor_forward.1} parent=1 // pred_check
      _
    $region247: #{image_reconstructor_forward.1} parent=1 // pred_check_branch
      %433 = sbr.rel (0) target = $region249
    $region248: #{image_reconstructor_forward.1} parent=1 // pred_region
      %434 = dma.done [#allocation33], 16
    $region249: #{image_reconstructor_forward.1} parent=1 // pred_fallthru
      _
    %v435 = vld [vmem:[#allocation2] sm:$0xff]
    %v436 = vld [vmem:[#allocation2 + $0x8] sm:$0xff]
    %v437 = vld [vmem:[#allocation2 + $0x10] sm:$0xff]
    %v438 = vld [vmem:[#allocation2 + $0x18] sm:$0xff]
    %v439 = vld [vmem:[#allocation2 + $0x20] sm:$0xff]
    %v440 = vld [vmem:[#allocation2 + $0x28] sm:$0xff]
    %v441 = vld [vmem:[#allocation2 + $0x30] sm:$0xff]
    %v442 = vld [vmem:[#allocation2 + $0x38] sm:$0xff]
    %v443 = vld [vmem:[#allocation2 + $0x40] sm:$0xff]
    %v444 = vld [vmem:[#allocation2 + $0x48] sm:$0xff]
    %v445 = vld [vmem:[#allocation2 + $0x50] sm:$0xff]
    %v446 = vld [vmem:[#allocation2 + $0x58] sm:$0xff]
    %v447 = vld [vmem:[#allocation2 + $0x60] sm:$0xff]
    %v448 = vld [vmem:[#allocation2 + $0x68] sm:$0xff]
    %v449 = vld [vmem:[#allocation2 + $0x70] sm:$0xff]
    %v450 = vld [vmem:[#allocation2 + $0x78] sm:$0xff]
    %v451 = vld [vmem:[#allocation17] sm:$0xff]
    %v452 = vld [vmem:[#allocation17 + $0x8] sm:$0xff]
    %v453 = vld [vmem:[#allocation17 + $0x10] sm:$0xff]
    %v454 = vld [vmem:[#allocation17 + $0x18] sm:$0xff]
    %v455 = vld [vmem:[#allocation17 + $0x20] sm:$0xff]
    %v456 = vld [vmem:[#allocation17 + $0x28] sm:$0xff]
    %v457 = vld [vmem:[#allocation17 + $0x30] sm:$0xff]
    %v458 = vld [vmem:[#allocation17 + $0x38] sm:$0xff]
    %459 = vmatprep.subr.mxu0 0.0
    %460 = vmatpush1.msra.mxu0 %v435
    %461 = vmatprep.subr.mxu0 0.0
    %462 = vmatpush1.msra.mxu0 %v436
    %463 = vmatprep.subr.mxu0 0.0
    %464 = vmatpush1.msra.mxu0 %v437
    %465 = vmatprep.subr.mxu0 0.0
    %466 = vmatpush1.msra.mxu0 %v438
    %467 = vmatprep.subr.mxu0 0.0
    %468 = vmatpush1.msra.mxu0 %v439
    %469 = vmatprep.subr.mxu0 0.0
    %470 = vmatpush1.msra.mxu0 %v440
    %471 = vmatprep.subr.mxu0 0.0
    %472 = vmatpush1.msra.mxu0 %v441
    %473 = vmatprep.subr.mxu0 0.0
    %474 = vmatpush1.msra.mxu0 %v442
    %475 = vmatprep.subr.mxu0 0.0
    %476 = vmatpush1.msra.mxu0 %v443
    %477 = vmatprep.subr.mxu0 0.0
    %478 = vmatpush1.msra.mxu0 %v444
    %479 = vmatprep.subr.mxu0 0.0
    %480 = vmatpush1.msra.mxu0 %v445
    %481 = vmatprep.subr.mxu0 0.0
    %482 = vmatpush1.msra.mxu0 %v446
    %483 = vmatprep.subr.mxu0 0.0
    %484 = vmatpush1.msra.mxu0 %v447
    %485 = vmatprep.subr.mxu0 0.0
    %486 = vmatpush1.msra.mxu0 %v448
    %487 = vmatprep.subr.mxu0 0.0
    %488 = vmatpush1.msra.mxu0 %v449
    %489 = vmatprep.subr.mxu0 0.0
    %490 = vmatpush1.msra.mxu0 %v450
    %491 = vmatprep.subr.mxu0 0.0
    %492 = vmatpush1.msra.mxu0 0.0
    %493 = vmatprep.subr.mxu0 0.0
    %494 = vmatpush1.msra.mxu0 0.0
    %495 = vmatprep.subr.mxu0 0.0
    %496 = vmatpush1.msra.mxu0 0.0
    %497 = vmatprep.subr.mxu0 0.0
    %498 = vmatpush1.msra.mxu0 0.0
    %499 = vmatprep.subr.mxu0 0.0
    %500 = vmatpush1.msra.mxu0 0.0
    %501 = vmatprep.subr.mxu0 0.0
    %502 = vmatpush1.msra.mxu0 0.0
    %503 = vmatprep.subr.mxu0 0.0
    %504 = vmatpush1.msra.mxu0 0.0
    %505 = vmatprep.subr.mxu0 0.0
    %506 = vmatpush1.msra.mxu0 0.0
    %507 = vmatprep.subr.mxu0 0.0
    %508 = vmatpush1.msra.mxu0 0.0
    %509 = vmatprep.subr.mxu0 0.0
    %510 = vmatpush1.msra.mxu0 0.0
    %511 = vmatprep.subr.mxu0 0.0
    %512 = vmatpush1.msra.mxu0 0.0
    %513 = vmatprep.subr.mxu0 0.0
    %514 = vmatpush1.msra.mxu0 0.0
    %515 = vmatprep.subr.mxu0 0.0
    %516 = vmatpush1.msra.mxu0 0.0
    %517 = vmatprep.subr.mxu0 0.0
    %518 = vmatpush1.msra.mxu0 0.0
    %519 = vmatprep.subr.mxu0 0.0
    %520 = vmatpush1.msra.mxu0 0.0
    %521 = vmatprep.subr.mxu0 0.0
    %522 = vmatpush1.msra.mxu0 0.0
    %523 = vmatprep.mubr.f32.mxu0 0.0
    %524 = vmatmul.mubr.f32.gmra.mrb[0].mxu0 %v451
    %v525 = vpop.f32.mrb[0].mxu0
    %v526 = vadd.f32 0.0, %v525
    %v527 = vpop.f32.mrb[0].mxu0
    %528 = vmatprep.mubr.f32.mxu0 0.0
    %529 = vmatmul.mubr.f32.gmra.mrb[0].mxu0 %v452
    %v530 = vpop.f32.mrb[0].mxu0
    %v531 = vadd.f32 0.0, %v530
    %v532 = vpop.f32.mrb[0].mxu0
    %533 = vmatprep.mubr.f32.mxu0 0.0
    %534 = vmatmul.mubr.f32.gmra.mrb[0].mxu0 %v453
    %v535 = vpop.f32.mrb[0].mxu0
    %v536 = vadd.f32 0.0, %v535
    %v537 = vpop.f32.mrb[0].mxu0
    %538 = vmatprep.mubr.f32.mxu0 0.0
    %539 = vmatmul.mubr.f32.gmra.mrb[0].mxu0 %v454
    %v540 = vpop.f32.mrb[0].mxu0
    %v541 = vadd.f32 0.0, %v540
    %v542 = vpop.f32.mrb[0].mxu0
    %543 = vmatprep.mubr.f32.mxu0 0.0
    %544 = vmatmul.mubr.f32.gmra.mrb[0].mxu0 %v455
    %v545 = vpop.f32.mrb[0].mxu0
    %v546 = vadd.f32 0.0, %v545
    %v547 = vpop.f32.mrb[0].mxu0
    %548 = vmatprep.mubr.f32.mxu0 0.0
    %549 = vmatmul.mubr.f32.gmra.mrb[0].mxu0 %v456
    %v550 = vpop.f32.mrb[0].mxu0
    %v551 = vadd.f32 0.0, %v550
    %v552 = vpop.f32.mrb[0].mxu0
    %553 = vmatprep.mubr.f32.mxu0 0.0
    %554 = vmatmul.mubr.f32.gmra.mrb[0].mxu0 %v457
    %v555 = vpop.f32.mrb[0].mxu0
    %v556 = vadd.f32 0.0, %v555
    %v557 = vpop.f32.mrb[0].mxu0
    %558 = vmatprep.mubr.f32.mxu0 0.0
    %559 = vmatmul.mubr.f32.gmra.mrb[0].mxu0 %v458
    %v560 = vpop.f32.mrb[0].mxu0
    %v561 = vadd.f32 0.0, %v560
    %v562 = vpop.f32.mrb[0].mxu0
    %563 = vdwg.mxu0
    %v564 = vld [vmem:[#allocation16] sm:$0xff]
    %v565 = vld [vmem:[#allocation16 + $0x8] sm:$0xff]
    %v566 = vld [vmem:[#allocation16 + $0x10] sm:$0xff]
    %v567 = vld [vmem:[#allocation16 + $0x18] sm:$0xff]
    %v568 = vld [vmem:[#allocation16 + $0x20] sm:$0xff]
    %v569 = vld [vmem:[#allocation16 + $0x28] sm:$0xff]
    %v570 = vld [vmem:[#allocation16 + $0x30] sm:$0xff]
    %v571 = vld [vmem:[#allocation16 + $0x38] sm:$0xff]
    %s572 = scalar_lea.vmem [#allocation17], 64
    %v573 = vld [vmem:[%s572] sm:$0xff]
    %v574 = vld [vmem:[%s572 + $0x8] sm:$0xff]
    %v575 = vld [vmem:[%s572 + $0x10] sm:$0xff]
    %v576 = vld [vmem:[%s572 + $0x18] sm:$0xff]
    %v577 = vld [vmem:[%s572 + $0x20] sm:$0xff]
    %v578 = vld [vmem:[%s572 + $0x28] sm:$0xff]
    %v579 = vld [vmem:[%s572 + $0x30] sm:$0xff]
    %v580 = vld [vmem:[%s572 + $0x38] sm:$0xff]
    %581 = vmatprep.subr.mxu0 0.0
    %582 = vmatpush1.msra.mxu0 %v435
    %583 = vmatprep.subr.mxu0 0.0
    %584 = vmatpush1.msra.mxu0 %v436
    %585 = vmatprep.subr.mxu0 0.0
    %586 = vmatpush1.msra.mxu0 %v437
    %587 = vmatprep.subr.mxu0 0.0
    %588 = vmatpush1.msra.mxu0 %v438
    %589 = vmatprep.subr.mxu0 0.0
    %590 = vmatpush1.msra.mxu0 %v439
    %591 = vmatprep.subr.mxu0 0.0
    %592 = vmatpush1.msra.mxu0 %v440
    %593 = vmatprep.subr.mxu0 0.0
    %594 = vmatpush1.msra.mxu0 %v441
    %595 = vmatprep.subr.mxu0 0.0
    %596 = vmatpush1.msra.mxu0 %v442
    %597 = vmatprep.subr.mxu0 0.0
    %598 = vmatpush1.msra.mxu0 %v443
    %599 = vmatprep.subr.mxu0 0.0
    %600 = vmatpush1.msra.mxu0 %v444
    %601 = vmatprep.subr.mxu0 0.0
    %602 = vmatpush1.msra.mxu0 %v445
    %603 = vmatprep.subr.mxu0 0.0
    %604 = vmatpush1.msra.mxu0 %v446
    %605 = vmatprep.subr.mxu0 0.0
    %606 = vmatpush1.msra.mxu0 %v447
    %607 = vmatprep.subr.mxu0 0.0
    %608 = vmatpush1.msra.mxu0 %v448
    %609 = vmatprep.subr.mxu0 0.0
    %610 = vmatpush1.msra.mxu0 %v449
    %611 = vmatprep.subr.mxu0 0.0
    %612 = vmatpush1.msra.mxu0 %v450
    %613 = vmatprep.subr.mxu0 0.0
    %614 = vmatpush1.msra.mxu0 0.0
    %615 = vmatprep.subr.mxu0 0.0
    %616 = vmatpush1.msra.mxu0 0.0
    %617 = vmatprep.subr.mxu0 0.0
    %618 = vmatpush1.msra.mxu0 0.0
    %619 = vmatprep.subr.mxu0 0.0
    %620 = vmatpush1.msra.mxu0 0.0
    %621 = vmatprep.subr.mxu0 0.0
    %622 = vmatpush1.msra.mxu0 0.0
    %623 = vmatprep.subr.mxu0 0.0
    %624 = vmatpush1.msra.mxu0 0.0
    %625 = vmatprep.subr.mxu0 0.0
    %626 = vmatpush1.msra.mxu0 0.0
    %627 = vmatprep.subr.mxu0 0.0
    %628 = vmatpush1.msra.mxu0 0.0
    %629 = vmatprep.subr.mxu0 0.0
    %630 = vmatpush1.msra.mxu0 0.0
    %631 = vmatprep.subr.mxu0 0.0
    %632 = vmatpush1.msra.mxu0 0.0
    %633 = vmatprep.subr.mxu0 0.0
    %634 = vmatpush1.msra.mxu0 0.0
    %635 = vmatprep.subr.mxu0 0.0
    %636 = vmatpush1.msra.mxu0 0.0
    %637 = vmatprep.subr.mxu0 0.0
    %638 = vmatpush1.msra.mxu0 0.0
    %639 = vmatprep.subr.mxu0 0.0
    %640 = vmatpush1.msra.mxu0 0.0
    %641 = vmatprep.subr.mxu0 0.0
    %642 = vmatpush1.msra.mxu0 0.0
    %643 = vmatprep.subr.mxu0 0.0
    %644 = vmatpush1.msra.mxu0 0.0
    %645 = vmatprep.mubr.f32.mxu0 0.0
    %646 = vmatmul.mubr.f32.gmra.mrb[0].mxu0 %v573
    %v647 = vpop.f32.mrb[0].mxu0
    %v648 = vadd.f32 0.0, %v647
    %v649 = vpop.f32.mrb[0].mxu0
    %650 = vmatprep.mubr.f32.mxu0 0.0
    %651 = vmatmul.mubr.f32.gmra.mrb[0].mxu0 %v574
    %v652 = vpop.f32.mrb[0].mxu0
    %v653 = vadd.f32 0.0, %v652
    %v654 = vpop.f32.mrb[0].mxu0
    %655 = vmatprep.mubr.f32.mxu0 0.0
    %656 = vmatmul.mubr.f32.gmra.mrb[0].mxu0 %v575
    %v657 = vpop.f32.mrb[0].mxu0
    %v658 = vadd.f32 0.0, %v657
    %v659 = vpop.f32.mrb[0].mxu0
    %660 = vmatprep.mubr.f32.mxu0 0.0
    %661 = vmatmul.mubr.f32.gmra.mrb[0].mxu0 %v576
    %v662 = vpop.f32.mrb[0].mxu0
    %v663 = vadd.f32 0.0, %v662
    %v664 = vpop.f32.mrb[0].mxu0
    %665 = vmatprep.mubr.f32.mxu0 0.0
    %666 = vmatmul.mubr.f32.gmra.mrb[0].mxu0 %v577
    %v667 = vpop.f32.mrb[0].mxu0
    %v668 = vadd.f32 0.0, %v667
    %v669 = vpop.f32.mrb[0].mxu0
    %670 = vmatprep.mubr.f32.mxu0 0.0
    %671 = vmatmul.mubr.f32.gmra.mrb[0].mxu0 %v578
    %v672 = vpop.f32.mrb[0].mxu0
    %v673 = vadd.f32 0.0, %v672
    %v674 = vpop.f32.mrb[0].mxu0
    %675 = vmatprep.mubr.f32.mxu0 0.0
    %676 = vmatmul.mubr.f32.gmra.mrb[0].mxu0 %v579
    %v677 = vpop.f32.mrb[0].mxu0
    %v678 = vadd.f32 0.0, %v677
    %v679 = vpop.f32.mrb[0].mxu0
    %680 = vmatprep.mubr.f32.mxu0 0.0
    %681 = vmatmul.mubr.f32.gmra.mrb[0].mxu0 %v580
    %v682 = vpop.f32.mrb[0].mxu0
    %v683 = vadd.f32 0.0, %v682
    %v684 = vpop.f32.mrb[0].mxu0
    %685 = vdwg.mxu0
    %s686 = scalar_lea.vmem [#allocation16], 64
    %v687 = vld [vmem:[%s686] sm:$0xff]
    %v688 = vld [vmem:[%s686 + $0x8] sm:$0xff]
    %v689 = vld [vmem:[%s686 + $0x10] sm:$0xff]
    %v690 = vld [vmem:[%s686 + $0x18] sm:$0xff]
    %v691 = vld [vmem:[%s686 + $0x20] sm:$0xff]
    %v692 = vld [vmem:[%s686 + $0x28] sm:$0xff]
    %v693 = vld [vmem:[%s686 + $0x30] sm:$0xff]
    %v694 = vld [vmem:[%s686 + $0x38] sm:$0xff]
    %vm695 = vcmask 523264
    %v697 = vsel %vm695, %v648, 0
    %v700 = vsel %vm695, %v653, 0
    %v703 = vsel %vm695, %v658, 0
    %v706 = vsel %vm695, %v663, 0
    %v709 = vsel %vm695, %v668, 0
    %v712 = vsel %vm695, %v673, 0
    %v715 = vsel %vm695, %v678, 0
    %v718 = vsel %vm695, %v683, 0
    %720 = vmatprep.subr.mxu0 0.0
    %721 = vmatpush1.msra.mxu0 %v687
    %722 = vmatprep.subr.mxu0 0.0
    %723 = vmatpush1.msra.mxu0 %v688
    %724 = vmatprep.subr.mxu0 0.0
    %725 = vmatpush1.msra.mxu0 %v689
    %726 = vmatprep.subr.mxu0 0.0
    %727 = vmatpush1.msra.mxu0 %v690
    %728 = vmatprep.subr.mxu0 0.0
    %729 = vmatpush1.msra.mxu0 %v691
    %730 = vmatprep.subr.mxu0 0.0
    %731 = vmatpush1.msra.mxu0 %v692
    %732 = vmatprep.subr.mxu0 0.0
    %733 = vmatpush1.msra.mxu0 %v693
    %734 = vmatprep.subr.mxu0 0.0
    %735 = vmatpush1.msra.mxu0 %v694
    %736 = vmatprep.subr.mxu0 0.0
    %737 = vmatpush1.msra.mxu0 0.0
    %738 = vmatprep.subr.mxu0 0.0
    %739 = vmatpush1.msra.mxu0 0.0
    %740 = vmatprep.subr.mxu0 0.0
    %741 = vmatpush1.msra.mxu0 0.0
    %742 = vmatprep.subr.mxu0 0.0
    %743 = vmatpush1.msra.mxu0 0.0
    %744 = vmatprep.subr.mxu0 0.0
    %745 = vmatpush1.msra.mxu0 0.0
    %746 = vmatprep.subr.mxu0 0.0
    %747 = vmatpush1.msra.mxu0 0.0
    %748 = vmatprep.subr.mxu0 0.0
    %749 = vmatpush1.msra.mxu0 0.0
    %750 = vmatprep.subr.mxu0 0.0
    %751 = vmatpush1.msra.mxu0 0.0
    %752 = vmatprep.subr.mxu0 0.0
    %753 = vmatpush1.msra.mxu0 0.0
    %754 = vmatprep.subr.mxu0 0.0
    %755 = vmatpush1.msra.mxu0 0.0
    %756 = vmatprep.subr.mxu0 0.0
    %757 = vmatpush1.msra.mxu0 0.0
    %758 = vmatprep.subr.mxu0 0.0
    %759 = vmatpush1.msra.mxu0 0.0
    %760 = vmatprep.subr.mxu0 0.0
    %761 = vmatpush1.msra.mxu0 0.0
    %762 = vmatprep.subr.mxu0 0.0
    %763 = vmatpush1.msra.mxu0 0.0
    %764 = vmatprep.subr.mxu0 0.0
    %765 = vmatpush1.msra.mxu0 0.0
    %766 = vmatprep.subr.mxu0 0.0
    %767 = vmatpush1.msra.mxu0 0.0
    %768 = vmatprep.subr.mxu0 0.0
    %769 = vmatpush1.msra.mxu0 0.0
    %770 = vmatprep.subr.mxu0 0.0
    %771 = vmatpush1.msra.mxu0 0.0
    %772 = vmatprep.subr.mxu0 0.0
    %773 = vmatpush1.msra.mxu0 0.0
    %774 = vmatprep.subr.mxu0 0.0
    %775 = vmatpush1.msra.mxu0 0.0
    %776 = vmatprep.subr.mxu0 0.0
    %777 = vmatpush1.msra.mxu0 0.0
    %778 = vmatprep.subr.mxu0 0.0
    %779 = vmatpush1.msra.mxu0 0.0
    %780 = vmatprep.subr.mxu0 0.0
    %781 = vmatpush1.msra.mxu0 0.0
    %782 = vmatprep.subr.mxu0 0.0
    %783 = vmatpush1.msra.mxu0 0.0
    %784 = vmatprep.mubr.f32.mxu0 0.0
    %785 = vmatmul.mubr.f32.gmra.mrb[0].mxu0 %v697
    %v786 = vpop.f32.mrb[0].mxu0
    %v787 = vadd.f32 0.0, %v786
    %v788 = vpop.f32.mrb[0].mxu0
    %789 = vmatprep.mubr.f32.mxu0 0.0
    %790 = vmatmul.mubr.f32.gmra.mrb[0].mxu0 %v700
    %v791 = vpop.f32.mrb[0].mxu0
    %v792 = vadd.f32 0.0, %v791
    %v793 = vpop.f32.mrb[0].mxu0
    %794 = vmatprep.mubr.f32.mxu0 0.0
    %795 = vmatmul.mubr.f32.gmra.mrb[0].mxu0 %v703
    %v796 = vpop.f32.mrb[0].mxu0
    %v797 = vadd.f32 0.0, %v796
    %v798 = vpop.f32.mrb[0].mxu0
    %799 = vmatprep.mubr.f32.mxu0 0.0
    %800 = vmatmul.mubr.f32.gmra.mrb[0].mxu0 %v706
    %v801 = vpop.f32.mrb[0].mxu0
    %v802 = vadd.f32 0.0, %v801
    %v803 = vpop.f32.mrb[0].mxu0
    %804 = vmatprep.mubr.f32.mxu0 0.0
    %805 = vmatmul.mubr.f32.gmra.mrb[0].mxu0 %v709
    %v806 = vpop.f32.mrb[0].mxu0
    %v807 = vadd.f32 0.0, %v806
    %v808 = vpop.f32.mrb[0].mxu0
    %809 = vmatprep.mubr.f32.mxu0 0.0
    %810 = vmatmul.mubr.f32.gmra.mrb[0].mxu0 %v712
    %v811 = vpop.f32.mrb[0].mxu0
    %v812 = vadd.f32 0.0, %v811
    %v813 = vpop.f32.mrb[0].mxu0
    %814 = vmatprep.mubr.f32.mxu0 0.0
    %815 = vmatmul.mubr.f32.gmra.mrb[0].mxu0 %v715
    %v816 = vpop.f32.mrb[0].mxu0
    %v817 = vadd.f32 0.0, %v816
    %v818 = vpop.f32.mrb[0].mxu0
    %819 = vmatprep.mubr.f32.mxu0 0.0
    %820 = vmatmul.mubr.f32.gmra.mrb[0].mxu0 %v718
    %v821 = vpop.f32.mrb[0].mxu0
    %v822 = vadd.f32 0.0, %v821
    %v823 = vpop.f32.mrb[0].mxu0
    %824 = vdwg.mxu0
    %v826 = vsel %vm695, %v526, 0
    %v829 = vsel %vm695, %v531, 0
    %v832 = vsel %vm695, %v536, 0
    %v835 = vsel %vm695, %v541, 0
    %v838 = vsel %vm695, %v546, 0
    %v841 = vsel %vm695, %v551, 0
    %v844 = vsel %vm695, %v556, 0
    %v847 = vsel %vm695, %v561, 0
    %849 = vmatprep.subr.mxu0 0.0
    %850 = vmatpush1.msra.mxu0 %v564
    %851 = vmatprep.subr.mxu0 0.0
    %852 = vmatpush1.msra.mxu0 %v565
    %853 = vmatprep.subr.mxu0 0.0
    %854 = vmatpush1.msra.mxu0 %v566
    %855 = vmatprep.subr.mxu0 0.0
    %856 = vmatpush1.msra.mxu0 %v567
    %857 = vmatprep.subr.mxu0 0.0
    %858 = vmatpush1.msra.mxu0 %v568
    %859 = vmatprep.subr.mxu0 0.0
    %860 = vmatpush1.msra.mxu0 %v569
    %861 = vmatprep.subr.mxu0 0.0
    %862 = vmatpush1.msra.mxu0 %v570
    %863 = vmatprep.subr.mxu0 0.0
    %864 = vmatpush1.msra.mxu0 %v571
    %865 = vmatprep.subr.mxu0 0.0
    %866 = vmatpush1.msra.mxu0 0.0
    %867 = vmatprep.subr.mxu0 0.0
    %868 = vmatpush1.msra.mxu0 0.0
    %869 = vmatprep.subr.mxu0 0.0
    %870 = vmatpush1.msra.mxu0 0.0
    %871 = vmatprep.subr.mxu0 0.0
    %872 = vmatpush1.msra.mxu0 0.0
    %873 = vmatprep.subr.mxu0 0.0
    %874 = vmatpush1.msra.mxu0 0.0
    %875 = vmatprep.subr.mxu0 0.0
    %876 = vmatpush1.msra.mxu0 0.0
    %877 = vmatprep.subr.mxu0 0.0
    %878 = vmatpush1.msra.mxu0 0.0
    %879 = vmatprep.subr.mxu0 0.0
    %880 = vmatpush1.msra.mxu0 0.0
    %881 = vmatprep.subr.mxu0 0.0
    %882 = vmatpush1.msra.mxu0 0.0
    %883 = vmatprep.subr.mxu0 0.0
    %884 = vmatpush1.msra.mxu0 0.0
    %885 = vmatprep.subr.mxu0 0.0
    %886 = vmatpush1.msra.mxu0 0.0
    %887 = vmatprep.subr.mxu0 0.0
    %888 = vmatpush1.msra.mxu0 0.0
    %889 = vmatprep.subr.mxu0 0.0
    %890 = vmatpush1.msra.mxu0 0.0
    %891 = vmatprep.subr.mxu0 0.0
    %892 = vmatpush1.msra.mxu0 0.0
    %893 = vmatprep.subr.mxu0 0.0
    %894 = vmatpush1.msra.mxu0 0.0
    %895 = vmatprep.subr.mxu0 0.0
    %896 = vmatpush1.msra.mxu0 0.0
    %897 = vmatprep.subr.mxu0 0.0
    %898 = vmatpush1.msra.mxu0 0.0
    %899 = vmatprep.subr.mxu0 0.0
    %900 = vmatpush1.msra.mxu0 0.0
    %901 = vmatprep.subr.mxu0 0.0
    %902 = vmatpush1.msra.mxu0 0.0
    %903 = vmatprep.subr.mxu0 0.0
    %904 = vmatpush1.msra.mxu0 0.0
    %905 = vmatprep.subr.mxu0 0.0
    %906 = vmatpush1.msra.mxu0 0.0
    %907 = vmatprep.subr.mxu0 0.0
    %908 = vmatpush1.msra.mxu0 0.0
    %909 = vmatprep.subr.mxu0 0.0
    %910 = vmatpush1.msra.mxu0 0.0
    %911 = vmatprep.subr.mxu0 0.0
    %912 = vmatpush1.msra.mxu0 0.0
    %913 = vmatprep.mubr.f32.mxu0 0.0
    %914 = vmatmul.mubr.f32.gmra.mrb[0].mxu0 %v826
    %v915 = vpop.f32.mrb[0].mxu0
    %v916 = vadd.f32 %v787, %v915
    %v917 = vpop.f32.mrb[0].mxu0
    %918 = vmatprep.mubr.f32.mxu0 0.0
    %919 = vmatmul.mubr.f32.gmra.mrb[0].mxu0 %v829
    %v920 = vpop.f32.mrb[0].mxu0
    %v921 = vadd.f32 %v792, %v920
    %v922 = vpop.f32.mrb[0].mxu0
    %923 = vmatprep.mubr.f32.mxu0 0.0
    %924 = vmatmul.mubr.f32.gmra.mrb[0].mxu0 %v832
    %v925 = vpop.f32.mrb[0].mxu0
    %v926 = vadd.f32 %v797, %v925
    %v927 = vpop.f32.mrb[0].mxu0
    %928 = vmatprep.mubr.f32.mxu0 0.0
    %929 = vmatmul.mubr.f32.gmra.mrb[0].mxu0 %v835
    %v930 = vpop.f32.mrb[0].mxu0
    %v931 = vadd.f32 %v802, %v930
    %v932 = vpop.f32.mrb[0].mxu0
    %933 = vmatprep.mubr.f32.mxu0 0.0
    %934 = vmatmul.mubr.f32.gmra.mrb[0].mxu0 %v838
    %v935 = vpop.f32.mrb[0].mxu0
    %v936 = vadd.f32 %v807, %v935
    %v937 = vpop.f32.mrb[0].mxu0
    %938 = vmatprep.mubr.f32.mxu0 0.0
    %939 = vmatmul.mubr.f32.gmra.mrb[0].mxu0 %v841
    %v940 = vpop.f32.mrb[0].mxu0
    %v941 = vadd.f32 %v812, %v940
    %v942 = vpop.f32.mrb[0].mxu0
    %943 = vmatprep.mubr.f32.mxu0 0.0
    %944 = vmatmul.mubr.f32.gmra.mrb[0].mxu0 %v844
    %v945 = vpop.f32.mrb[0].mxu0
    %v946 = vadd.f32 %v817, %v945
    %v947 = vpop.f32.mrb[0].mxu0
    %948 = vmatprep.mubr.f32.mxu0 0.0
    %949 = vmatmul.mubr.f32.gmra.mrb[0].mxu0 %v847
    %v950 = vpop.f32.mrb[0].mxu0
    %v951 = vadd.f32 %v822, %v950
    %v952 = vpop.f32.mrb[0].mxu0
    %953 = vdwg.mxu0
    %s954 = scalar_lea.vmem [#allocation17], 128
    %v955 = vld [vmem:[%s954] sm:$0xff]
    %v956 = vld [vmem:[%s954 + $0x8] sm:$0xff]
    %v957 = vld [vmem:[%s954 + $0x10] sm:$0xff]
    %v958 = vld [vmem:[%s954 + $0x18] sm:$0xff]
    %v959 = vld [vmem:[%s954 + $0x20] sm:$0xff]
    %v960 = vld [vmem:[%s954 + $0x28] sm:$0xff]
    %v961 = vld [vmem:[%s954 + $0x30] sm:$0xff]
    %v962 = vld [vmem:[%s954 + $0x38] sm:$0xff]
    %963 = vmatprep.subr.mxu0 0.0
    %964 = vmatpush1.msra.mxu0 %v435
    %965 = vmatprep.subr.mxu0 0.0
    %966 = vmatpush1.msra.mxu0 %v436
    %967 = vmatprep.subr.mxu0 0.0
    %968 = vmatpush1.msra.mxu0 %v437
    %969 = vmatprep.subr.mxu0 0.0
    %970 = vmatpush1.msra.mxu0 %v438
    %971 = vmatprep.subr.mxu0 0.0
    %972 = vmatpush1.msra.mxu0 %v439
    %973 = vmatprep.subr.mxu0 0.0
    %974 = vmatpush1.msra.mxu0 %v440
    %975 = vmatprep.subr.mxu0 0.0
    %976 = vmatpush1.msra.mxu0 %v441
    %977 = vmatprep.subr.mxu0 0.0
    %978 = vmatpush1.msra.mxu0 %v442
    %979 = vmatprep.subr.mxu0 0.0
    %980 = vmatpush1.msra.mxu0 %v443
    %981 = vmatprep.subr.mxu0 0.0
    %982 = vmatpush1.msra.mxu0 %v444
    %983 = vmatprep.subr.mxu0 0.0
    %984 = vmatpush1.msra.mxu0 %v445
    %985 = vmatprep.subr.mxu0 0.0
    %986 = vmatpush1.msra.mxu0 %v446
    %987 = vmatprep.subr.mxu0 0.0
    %988 = vmatpush1.msra.mxu0 %v447
    %989 = vmatprep.subr.mxu0 0.0
    %990 = vmatpush1.msra.mxu0 %v448
    %991 = vmatprep.subr.mxu0 0.0
    %992 = vmatpush1.msra.mxu0 %v449
    %993 = vmatprep.subr.mxu0 0.0
    %994 = vmatpush1.msra.mxu0 %v450
    %995 = vmatprep.subr.mxu0 0.0
    %996 = vmatpush1.msra.mxu0 0.0
    %997 = vmatprep.subr.mxu0 0.0
    %998 = vmatpush1.msra.mxu0 0.0
    %999 = vmatprep.subr.mxu0 0.0
    %1000 = vmatpush1.msra.mxu0 0.0
    %1001 = vmatprep.subr.mxu0 0.0
    %1002 = vmatpush1.msra.mxu0 0.0
    %1003 = vmatprep.subr.mxu0 0.0
    %1004 = vmatpush1.msra.mxu0 0.0
    %1005 = vmatprep.subr.mxu0 0.0
    %1006 = vmatpush1.msra.mxu0 0.0
    %1007 = vmatprep.subr.mxu0 0.0
    %1008 = vmatpush1.msra.mxu0 0.0
    %1009 = vmatprep.subr.mxu0 0.0
    %1010 = vmatpush1.msra.mxu0 0.0
    %1011 = vmatprep.subr.mxu0 0.0
    %1012 = vmatpush1.msra.mxu0 0.0
    %1013 = vmatprep.subr.mxu0 0.0
    %1014 = vmatpush1.msra.mxu0 0.0
    %1015 = vmatprep.subr.mxu0 0.0
    %1016 = vmatpush1.msra.mxu0 0.0
    %1017 = vmatprep.subr.mxu0 0.0
    %1018 = vmatpush1.msra.mxu0 0.0
    %1019 = vmatprep.subr.mxu0 0.0
    %1020 = vmatpush1.msra.mxu0 0.0
    %1021 = vmatprep.subr.mxu0 0.0
    %1022 = vmatpush1.msra.mxu0 0.0
    %1023 = vmatprep.subr.mxu0 0.0
    %1024 = vmatpush1.msra.mxu0 0.0
    %1025 = vmatprep.subr.mxu0 0.0
    %1026 = vmatpush1.msra.mxu0 0.0
    %1027 = vmatprep.mubr.f32.mxu0 0.0
    %1028 = vmatmul.mubr.f32.gmra.mrb[0].mxu0 %v955
    %v1029 = vpop.f32.mrb[0].mxu0
    %v1030 = vadd.f32 0.0, %v1029
    %v1031 = vpop.f32.mrb[0].mxu0
    %1032 = vmatprep.mubr.f32.mxu0 0.0
    %1033 = vmatmul.mubr.f32.gmra.mrb[0].mxu0 %v956
    %v1034 = vpop.f32.mrb[0].mxu0
    %v1035 = vadd.f32 0.0, %v1034
    %v1036 = vpop.f32.mrb[0].mxu0
    %1037 = vmatprep.mubr.f32.mxu0 0.0
    %1038 = vmatmul.mubr.f32.gmra.mrb[0].mxu0 %v957
    %v1039 = vpop.f32.mrb[0].mxu0
    %v1040 = vadd.f32 0.0, %v1039
    %v1041 = vpop.f32.mrb[0].mxu0
    %1042 = vmatprep.mubr.f32.mxu0 0.0
    %1043 = vmatmul.mubr.f32.gmra.mrb[0].mxu0 %v958
    %v1044 = vpop.f32.mrb[0].mxu0
    %v1045 = vadd.f32 0.0, %v1044
    %v1046 = vpop.f32.mrb[0].mxu0
    %1047 = vmatprep.mubr.f32.mxu0 0.0
    %1048 = vmatmul.mubr.f32.gmra.mrb[0].mxu0 %v959
    %v1049 = vpop.f32.mrb[0].mxu0
    %v1050 = vadd.f32 0.0, %v1049
    %v1051 = vpop.f32.mrb[0].mxu0
    %1052 = vmatprep.mubr.f32.mxu0 0.0
    %1053 = vmatmul.mubr.f32.gmra.mrb[0].mxu0 %v960
    %v1054 = vpop.f32.mrb[0].mxu0
    %v1055 = vadd.f32 0.0, %v1054
    %v1056 = vpop.f32.mrb[0].mxu0
    %1057 = vmatprep.mubr.f32.mxu0 0.0
    %1058 = vmatmul.mubr.f32.gmra.mrb[0].mxu0 %v961
    %v1059 = vpop.f32.mrb[0].mxu0
    %v1060 = vadd.f32 0.0, %v1059
    %v1061 = vpop.f32.mrb[0].mxu0
    %1062 = vmatprep.mubr.f32.mxu0 0.0
    %1063 = vmatmul.mubr.f32.gmra.mrb[0].mxu0 %v962
    %v1064 = vpop.f32.mrb[0].mxu0
    %v1065 = vadd.f32 0.0, %v1064
    %v1066 = vpop.f32.mrb[0].mxu0
    %1067 = vdwg.mxu0
    %s1068 = scalar_lea.vmem [#allocation16], 128
    %v1069 = vld [vmem:[%s1068] sm:$0xff]
    %v1070 = vld [vmem:[%s1068 + $0x8] sm:$0xff]
    %v1071 = vld [vmem:[%s1068 + $0x10] sm:$0xff]
    %v1072 = vld [vmem:[%s1068 + $0x18] sm:$0xff]
    %v1073 = vld [vmem:[%s1068 + $0x20] sm:$0xff]
    %v1074 = vld [vmem:[%s1068 + $0x28] sm:$0xff]
    %v1075 = vld [vmem:[%s1068 + $0x30] sm:$0xff]
    %v1076 = vld [vmem:[%s1068 + $0x38] sm:$0xff]
    %v1078 = vsel %vm695, %v1030, 0
    %v1081 = vsel %vm695, %v1035, 0
    %v1084 = vsel %vm695, %v1040, 0
    %v1087 = vsel %vm695, %v1045, 0
    %v1090 = vsel %vm695, %v1050, 0
    %v1093 = vsel %vm695, %v1055, 0
    %v1096 = vsel %vm695, %v1060, 0
    %v1099 = vsel %vm695, %v1065, 0
    %1101 = vmatprep.subr.mxu0 0.0
    %1102 = vmatpush1.msra.mxu0 %v1069
    %1103 = vmatprep.subr.mxu0 0.0
    %1104 = vmatpush1.msra.mxu0 %v1070
    %1105 = vmatprep.subr.mxu0 0.0
    %1106 = vmatpush1.msra.mxu0 %v1071
    %1107 = vmatprep.subr.mxu0 0.0
    %1108 = vmatpush1.msra.mxu0 %v1072
    %1109 = vmatprep.subr.mxu0 0.0
    %1110 = vmatpush1.msra.mxu0 %v1073
    %1111 = vmatprep.subr.mxu0 0.0
    %1112 = vmatpush1.msra.mxu0 %v1074
    %1113 = vmatprep.subr.mxu0 0.0
    %1114 = vmatpush1.msra.mxu0 %v1075
    %1115 = vmatprep.subr.mxu0 0.0
    %1116 = vmatpush1.msra.mxu0 %v1076
    %1117 = vmatprep.subr.mxu0 0.0
    %1118 = vmatpush1.msra.mxu0 0.0
    %1119 = vmatprep.subr.mxu0 0.0
    %1120 = vmatpush1.msra.mxu0 0.0
    %1121 = vmatprep.subr.mxu0 0.0
    %1122 = vmatpush1.msra.mxu0 0.0
    %1123 = vmatprep.subr.mxu0 0.0
    %1124 = vmatpush1.msra.mxu0 0.0
    %1125 = vmatprep.subr.mxu0 0.0
    %1126 = vmatpush1.msra.mxu0 0.0
    %1127 = vmatprep.subr.mxu0 0.0
    %1128 = vmatpush1.msra.mxu0 0.0
    %1129 = vmatprep.subr.mxu0 0.0
    %1130 = vmatpush1.msra.mxu0 0.0
    %1131 = vmatprep.subr.mxu0 0.0
    %1132 = vmatpush1.msra.mxu0 0.0
    %1133 = vmatprep.subr.mxu0 0.0
    %1134 = vmatpush1.msra.mxu0 0.0
    %1135 = vmatprep.subr.mxu0 0.0
    %1136 = vmatpush1.msra.mxu0 0.0
    %1137 = vmatprep.subr.mxu0 0.0
    %1138 = vmatpush1.msra.mxu0 0.0
    %1139 = vmatprep.subr.mxu0 0.0
    %1140 = vmatpush1.msra.mxu0 0.0
    %1141 = vmatprep.subr.mxu0 0.0
    %1142 = vmatpush1.msra.mxu0 0.0
    %1143 = vmatprep.subr.mxu0 0.0
    %1144 = vmatpush1.msra.mxu0 0.0
    %1145 = vmatprep.subr.mxu0 0.0
    %1146 = vmatpush1.msra.mxu0 0.0
    %1147 = vmatprep.subr.mxu0 0.0
    %1148 = vmatpush1.msra.mxu0 0.0
    %1149 = vmatprep.subr.mxu0 0.0
    %1150 = vmatpush1.msra.mxu0 0.0
    %1151 = vmatprep.subr.mxu0 0.0
    %1152 = vmatpush1.msra.mxu0 0.0
    %1153 = vmatprep.subr.mxu0 0.0
    %1154 = vmatpush1.msra.mxu0 0.0
    %1155 = vmatprep.subr.mxu0 0.0
    %1156 = vmatpush1.msra.mxu0 0.0
    %1157 = vmatprep.subr.mxu0 0.0
    %1158 = vmatpush1.msra.mxu0 0.0
    %1159 = vmatprep.subr.mxu0 0.0
    %1160 = vmatpush1.msra.mxu0 0.0
    %1161 = vmatprep.subr.mxu0 0.0
    %1162 = vmatpush1.msra.mxu0 0.0
    %1163 = vmatprep.subr.mxu0 0.0
    %1164 = vmatpush1.msra.mxu0 0.0
    %1165 = vmatprep.mubr.f32.mxu0 0.0
    %1166 = vmatmul.mubr.f32.gmra.mrb[0].mxu0 %v1078
    %v1167 = vpop.f32.mrb[0].mxu0
    %v1168 = vadd.f32 0.0, %v1167
    %v1169 = vpop.f32.mrb[0].mxu0
    %1170 = vmatprep.mubr.f32.mxu0 0.0
    %1171 = vmatmul.mubr.f32.gmra.mrb[0].mxu0 %v1081
    %v1172 = vpop.f32.mrb[0].mxu0
    %v1173 = vadd.f32 0.0, %v1172
    %v1174 = vpop.f32.mrb[0].mxu0
    %1175 = vmatprep.mubr.f32.mxu0 0.0
    %1176 = vmatmul.mubr.f32.gmra.mrb[0].mxu0 %v1084
    %v1177 = vpop.f32.mrb[0].mxu0
    %v1178 = vadd.f32 0.0, %v1177
    %v1179 = vpop.f32.mrb[0].mxu0
    %1180 = vmatprep.mubr.f32.mxu0 0.0
    %1181 = vmatmul.mubr.f32.gmra.mrb[0].mxu0 %v1087
    %v1182 = vpop.f32.mrb[0].mxu0
    %v1183 = vadd.f32 0.0, %v1182
    %v1184 = vpop.f32.mrb[0].mxu0
    %1185 = vmatprep.mubr.f32.mxu0 0.0
    %1186 = vmatmul.mubr.f32.gmra.mrb[0].mxu0 %v1090
    %v1187 = vpop.f32.mrb[0].mxu0
    %v1188 = vadd.f32 0.0, %v1187
    %v1189 = vpop.f32.mrb[0].mxu0
    %1190 = vmatprep.mubr.f32.mxu0 0.0
    %1191 = vmatmul.mubr.f32.gmra.mrb[0].mxu0 %v1093
    %v1192 = vpop.f32.mrb[0].mxu0
    %v1193 = vadd.f32 0.0, %v1192
    %v1194 = vpop.f32.mrb[0].mxu0
    %1195 = vmatprep.mubr.f32.mxu0 0.0
    %1196 = vmatmul.mubr.f32.gmra.mrb[0].mxu0 %v1096
    %v1197 = vpop.f32.mrb[0].mxu0
    %v1198 = vadd.f32 0.0, %v1197
    %v1199 = vpop.f32.mrb[0].mxu0
    %1200 = vmatprep.mubr.f32.mxu0 0.0
    %1201 = vmatmul.mubr.f32.gmra.mrb[0].mxu0 %v1099
    %v1202 = vpop.f32.mrb[0].mxu0
    %v1203 = vadd.f32 0.0, %v1202
    %v1204 = vpop.f32.mrb[0].mxu0
    %1205 = vdwg.mxu0
    %v1206 = vadd.f32 %v916, %v1168
    %v1207 = vadd.f32 %v921, %v1173
    %v1208 = vadd.f32 %v926, %v1178
    %v1209 = vadd.f32 %v931, %v1183
    %v1210 = vadd.f32 %v936, %v1188
    %v1211 = vadd.f32 %v941, %v1193
    %v1212 = vadd.f32 %v946, %v1198
    %v1213 = vadd.f32 %v951, %v1203
    %v1214 = vld [vmem:[%s43] sm:$0x1]
    %v1216 = vlaneseq
    %v1217 = vshrl.u32 %v1216, 7
    %v1218 = vsub.s32 0, %v1217
    %v1219 = vrot.slane %v1214, %v1218
    %v1221 = vadd.f32 %v1206, %v1219
    %v1222 = vadd.f32 %v1207, %v1219
    %v1223 = vadd.f32 %v1208, %v1219
    %v1224 = vadd.f32 %v1209, %v1219
    %v1225 = vadd.f32 %v1210, %v1219
    %v1226 = vadd.f32 %v1211, %v1219
    %v1227 = vadd.f32 %v1212, %v1219
    %v1228 = vadd.f32 %v1213, %v1219
    %v1229 = vmax.f32 %v1221, 0.0
    %v1230 = vmax.f32 %v1222, 0.0
    %v1231 = vmax.f32 %v1223, 0.0
    %v1232 = vmax.f32 %v1224, 0.0
    %v1233 = vmax.f32 %v1225, 0.0
    %v1234 = vmax.f32 %v1226, 0.0
    %v1235 = vmax.f32 %v1227, 0.0
    %v1236 = vmax.f32 %v1228, 0.0
    %v1237 = vld [vmem:[%s47] sm:$0xff]
    %v1238 = vld [vmem:[%s47 + $0x8] sm:$0xff]
    %v1239 = vld [vmem:[%s47 + $0x10] sm:$0xff]
    %v1240 = vld [vmem:[%s47 + $0x18] sm:$0xff]
    %v1242 = vsel %vm695, %v1237, 0
    %v1245 = vsel %vm695, %v1238, 0
    %v1248 = vsel %vm695, %v1239, 0
    %v1251 = vsel %vm695, %v1240, 0
    %1253 = vmatprep.subr.mxu0 0.0
    %1254 = vmatpush1.msra.mxu0 %v1229
    %1255 = vmatprep.subr.mxu0 0.0
    %1256 = vmatpush1.msra.mxu0 %v1230
    %1257 = vmatprep.subr.mxu0 0.0
    %1258 = vmatpush1.msra.mxu0 %v1231
    %1259 = vmatprep.subr.mxu0 0.0
    %1260 = vmatpush1.msra.mxu0 %v1232
    %1261 = vmatprep.subr.mxu0 0.0
    %1262 = vmatpush1.msra.mxu0 %v1233
    %1263 = vmatprep.subr.mxu0 0.0
    %1264 = vmatpush1.msra.mxu0 %v1234
    %1265 = vmatprep.subr.mxu0 0.0
    %1266 = vmatpush1.msra.mxu0 %v1235
    %1267 = vmatprep.subr.mxu0 0.0
    %1268 = vmatpush1.msra.mxu0 %v1236
    %1269 = vmatprep.subr.mxu0 0.0
    %1270 = vmatpush1.msra.mxu0 0.0
    %1271 = vmatprep.subr.mxu0 0.0
    %1272 = vmatpush1.msra.mxu0 0.0
    %1273 = vmatprep.subr.mxu0 0.0
    %1274 = vmatpush1.msra.mxu0 0.0
    %1275 = vmatprep.subr.mxu0 0.0
    %1276 = vmatpush1.msra.mxu0 0.0
    %1277 = vmatprep.subr.mxu0 0.0
    %1278 = vmatpush1.msra.mxu0 0.0
    %1279 = vmatprep.subr.mxu0 0.0
    %1280 = vmatpush1.msra.mxu0 0.0
    %1281 = vmatprep.subr.mxu0 0.0
    %1282 = vmatpush1.msra.mxu0 0.0
    %1283 = vmatprep.subr.mxu0 0.0
    %1284 = vmatpush1.msra.mxu0 0.0
    %1285 = vmatprep.subr.mxu0 0.0
    %1286 = vmatpush1.msra.mxu0 0.0
    %1287 = vmatprep.subr.mxu0 0.0
    %1288 = vmatpush1.msra.mxu0 0.0
    %1289 = vmatprep.subr.mxu0 0.0
    %1290 = vmatpush1.msra.mxu0 0.0
    %1291 = vmatprep.subr.mxu0 0.0
    %1292 = vmatpush1.msra.mxu0 0.0
    %1293 = vmatprep.subr.mxu0 0.0
    %1294 = vmatpush1.msra.mxu0 0.0
    %1295 = vmatprep.subr.mxu0 0.0
    %1296 = vmatpush1.msra.mxu0 0.0
    %1297 = vmatprep.subr.mxu0 0.0
    %1298 = vmatpush1.msra.mxu0 0.0
    %1299 = vmatprep.subr.mxu0 0.0
    %1300 = vmatpush1.msra.mxu0 0.0
    %1301 = vmatprep.subr.mxu0 0.0
    %1302 = vmatpush1.msra.mxu0 0.0
    %1303 = vmatprep.subr.mxu0 0.0
    %1304 = vmatpush1.msra.mxu0 0.0
    %1305 = vmatprep.subr.mxu0 0.0
    %1306 = vmatpush1.msra.mxu0 0.0
    %1307 = vmatprep.subr.mxu0 0.0
    %1308 = vmatpush1.msra.mxu0 0.0
    %1309 = vmatprep.subr.mxu0 0.0
    %1310 = vmatpush1.msra.mxu0 0.0
    %1311 = vmatprep.subr.mxu0 0.0
    %1312 = vmatpush1.msra.mxu0 0.0
    %1313 = vmatprep.subr.mxu0 0.0
    %1314 = vmatpush1.msra.mxu0 0.0
    %1315 = vmatprep.subr.mxu0 0.0
    %1316 = vmatpush1.msra.mxu0 0.0
    %1317 = vmatprep.mubr.f32.mxu0 0.0
    %1318 = vmatmul.mubr.f32.gmra.mrb[0].mxu0 %v1242
    %v1319 = vpop.f32.mrb[0].mxu0
    %v1320 = vadd.f32 0.0, %v1319
    %v1321 = vpop.f32.mrb[0].mxu0
    %1322 = vmatprep.mubr.f32.mxu0 0.0
    %1323 = vmatmul.mubr.f32.gmra.mrb[0].mxu0 %v1245
    %v1324 = vpop.f32.mrb[0].mxu0
    %v1325 = vadd.f32 0.0, %v1324
    %v1326 = vpop.f32.mrb[0].mxu0
    %1327 = vmatprep.mubr.f32.mxu0 0.0
    %1328 = vmatmul.mubr.f32.gmra.mrb[0].mxu0 %v1248
    %v1329 = vpop.f32.mrb[0].mxu0
    %v1330 = vadd.f32 0.0, %v1329
    %v1331 = vpop.f32.mrb[0].mxu0
    %1332 = vmatprep.mubr.f32.mxu0 0.0
    %1333 = vmatmul.mubr.f32.gmra.mrb[0].mxu0 %v1251
    %v1334 = vpop.f32.mrb[0].mxu0
    %v1335 = vadd.f32 0.0, %v1334
    %v1336 = vpop.f32.mrb[0].mxu0
    %1337 = vdwg.mxu0
    %v1338 = vld [vmem:[%s45] sm:$0xff]
    %v1339 = vld [vmem:[%s45 + $0x8] sm:$0xff]
    %v1340 = vld [vmem:[%s45 + $0x10] sm:$0xff]
    %v1341 = vld [vmem:[%s45 + $0x18] sm:$0xff]
    %v1342 = vld [vmem:[%s45 + $0x20] sm:$0xff]
    %v1343 = vld [vmem:[%s45 + $0x28] sm:$0xff]
    %v1344 = vld [vmem:[%s45 + $0x30] sm:$0xff]
    %v1345 = vld [vmem:[%s45 + $0x38] sm:$0xff]
    %v1346 = vld [vmem:[%s45 + $0x40] sm:$0xff]
    %v1347 = vld [vmem:[%s45 + $0x48] sm:$0xff]
    %v1348 = vld [vmem:[%s45 + $0x50] sm:$0xff]
    %v1349 = vld [vmem:[%s45 + $0x58] sm:$0xff]
    %v1350 = vld [vmem:[%s45 + $0x60] sm:$0xff]
    %v1351 = vld [vmem:[%s45 + $0x68] sm:$0xff]
    %v1352 = vld [vmem:[%s45 + $0x70] sm:$0xff]
    %v1353 = vld [vmem:[%s45 + $0x78] sm:$0xff]
    %s1354 = scalar_lea.vmem %s47, 32
    %v1355 = vld [vmem:[%s1354] sm:$0xff]
    %v1356 = vld [vmem:[%s1354 + $0x8] sm:$0xff]
    %v1357 = vld [vmem:[%s1354 + $0x10] sm:$0xff]
    %v1358 = vld [vmem:[%s1354 + $0x18] sm:$0xff]
    %v1360 = vsel %vm695, %v1355, 0
    %v1363 = vsel %vm695, %v1356, 0
    %v1366 = vsel %vm695, %v1357, 0
    %v1369 = vsel %vm695, %v1358, 0
    %1371 = vmatprep.subr.mxu0 0.0
    %1372 = vmatpush1.msra.mxu0 %v1229
    %1373 = vmatprep.subr.mxu0 0.0
    %1374 = vmatpush1.msra.mxu0 %v1230
    %1375 = vmatprep.subr.mxu0 0.0
    %1376 = vmatpush1.msra.mxu0 %v1231
    %1377 = vmatprep.subr.mxu0 0.0
    %1378 = vmatpush1.msra.mxu0 %v1232
    %1379 = vmatprep.subr.mxu0 0.0
    %1380 = vmatpush1.msra.mxu0 %v1233
    %1381 = vmatprep.subr.mxu0 0.0
    %1382 = vmatpush1.msra.mxu0 %v1234
    %1383 = vmatprep.subr.mxu0 0.0
    %1384 = vmatpush1.msra.mxu0 %v1235
    %1385 = vmatprep.subr.mxu0 0.0
    %1386 = vmatpush1.msra.mxu0 %v1236
    %1387 = vmatprep.subr.mxu0 0.0
    %1388 = vmatpush1.msra.mxu0 0.0
    %1389 = vmatprep.subr.mxu0 0.0
    %1390 = vmatpush1.msra.mxu0 0.0
    %1391 = vmatprep.subr.mxu0 0.0
    %1392 = vmatpush1.msra.mxu0 0.0
    %1393 = vmatprep.subr.mxu0 0.0
    %1394 = vmatpush1.msra.mxu0 0.0
    %1395 = vmatprep.subr.mxu0 0.0
    %1396 = vmatpush1.msra.mxu0 0.0
    %1397 = vmatprep.subr.mxu0 0.0
    %1398 = vmatpush1.msra.mxu0 0.0
    %1399 = vmatprep.subr.mxu0 0.0
    %1400 = vmatpush1.msra.mxu0 0.0
    %1401 = vmatprep.subr.mxu0 0.0
    %1402 = vmatpush1.msra.mxu0 0.0
    %1403 = vmatprep.subr.mxu0 0.0
    %1404 = vmatpush1.msra.mxu0 0.0
    %1405 = vmatprep.subr.mxu0 0.0
    %1406 = vmatpush1.msra.mxu0 0.0
    %1407 = vmatprep.subr.mxu0 0.0
    %1408 = vmatpush1.msra.mxu0 0.0
    %1409 = vmatprep.subr.mxu0 0.0
    %1410 = vmatpush1.msra.mxu0 0.0
    %1411 = vmatprep.subr.mxu0 0.0
    %1412 = vmatpush1.msra.mxu0 0.0
    %1413 = vmatprep.subr.mxu0 0.0
    %1414 = vmatpush1.msra.mxu0 0.0
    %1415 = vmatprep.subr.mxu0 0.0
    %1416 = vmatpush1.msra.mxu0 0.0
    %1417 = vmatprep.subr.mxu0 0.0
    %1418 = vmatpush1.msra.mxu0 0.0
    %1419 = vmatprep.subr.mxu0 0.0
    %1420 = vmatpush1.msra.mxu0 0.0
    %1421 = vmatprep.subr.mxu0 0.0
    %1422 = vmatpush1.msra.mxu0 0.0
    %1423 = vmatprep.subr.mxu0 0.0
    %1424 = vmatpush1.msra.mxu0 0.0
    %1425 = vmatprep.subr.mxu0 0.0
    %1426 = vmatpush1.msra.mxu0 0.0
    %1427 = vmatprep.subr.mxu0 0.0
    %1428 = vmatpush1.msra.mxu0 0.0
    %1429 = vmatprep.subr.mxu0 0.0
    %1430 = vmatpush1.msra.mxu0 0.0
    %1431 = vmatprep.subr.mxu0 0.0
    %1432 = vmatpush1.msra.mxu0 0.0
    %1433 = vmatprep.subr.mxu0 0.0
    %1434 = vmatpush1.msra.mxu0 0.0
    %1435 = vmatprep.mubr.f32.mxu0 0.0
    %1436 = vmatmul.mubr.f32.gmra.mrb[0].mxu0 %v1360
    %v1437 = vpop.f32.mrb[0].mxu0
    %v1438 = vadd.f32 0.0, %v1437
    %v1439 = vpop.f32.mrb[0].mxu0
    %1440 = vmatprep.mubr.f32.mxu0 0.0
    %1441 = vmatmul.mubr.f32.gmra.mrb[0].mxu0 %v1363
    %v1442 = vpop.f32.mrb[0].mxu0
    %v1443 = vadd.f32 0.0, %v1442
    %v1444 = vpop.f32.mrb[0].mxu0
    %1445 = vmatprep.mubr.f32.mxu0 0.0
    %1446 = vmatmul.mubr.f32.gmra.mrb[0].mxu0 %v1366
    %v1447 = vpop.f32.mrb[0].mxu0
    %v1448 = vadd.f32 0.0, %v1447
    %v1449 = vpop.f32.mrb[0].mxu0
    %1450 = vmatprep.mubr.f32.mxu0 0.0
    %1451 = vmatmul.mubr.f32.gmra.mrb[0].mxu0 %v1369
    %v1452 = vpop.f32.mrb[0].mxu0
    %v1453 = vadd.f32 0.0, %v1452
    %v1454 = vpop.f32.mrb[0].mxu0
    %1455 = vdwg.mxu0
    %s1456 = scalar_lea.vmem %s45, 128
    %v1457 = vld [vmem:[%s1456] sm:$0xff]
    %v1458 = vld [vmem:[%s1456 + $0x8] sm:$0xff]
    %v1459 = vld [vmem:[%s1456 + $0x10] sm:$0xff]
    %v1460 = vld [vmem:[%s1456 + $0x18] sm:$0xff]
    %v1461 = vld [vmem:[%s1456 + $0x20] sm:$0xff]
    %v1462 = vld [vmem:[%s1456 + $0x28] sm:$0xff]
    %v1463 = vld [vmem:[%s1456 + $0x30] sm:$0xff]
    %v1464 = vld [vmem:[%s1456 + $0x38] sm:$0xff]
    %v1465 = vld [vmem:[%s1456 + $0x40] sm:$0xff]
    %v1466 = vld [vmem:[%s1456 + $0x48] sm:$0xff]
    %v1467 = vld [vmem:[%s1456 + $0x50] sm:$0xff]
    %v1468 = vld [vmem:[%s1456 + $0x58] sm:$0xff]
    %v1469 = vld [vmem:[%s1456 + $0x60] sm:$0xff]
    %v1470 = vld [vmem:[%s1456 + $0x68] sm:$0xff]
    %v1471 = vld [vmem:[%s1456 + $0x70] sm:$0xff]
    %v1472 = vld [vmem:[%s1456 + $0x78] sm:$0xff]
    %1473 = vmatprep.subr.mxu0 0.0
    %1474 = vmatpush1.msra.mxu0 %v1457
    %1475 = vmatprep.subr.mxu0 0.0
    %1476 = vmatpush1.msra.mxu0 %v1458
    %1477 = vmatprep.subr.mxu0 0.0
    %1478 = vmatpush1.msra.mxu0 %v1459
    %1479 = vmatprep.subr.mxu0 0.0
    %1480 = vmatpush1.msra.mxu0 %v1460
    %1481 = vmatprep.subr.mxu0 0.0
    %1482 = vmatpush1.msra.mxu0 %v1461
    %1483 = vmatprep.subr.mxu0 0.0
    %1484 = vmatpush1.msra.mxu0 %v1462
    %1485 = vmatprep.subr.mxu0 0.0
    %1486 = vmatpush1.msra.mxu0 %v1463
    %1487 = vmatprep.subr.mxu0 0.0
    %1488 = vmatpush1.msra.mxu0 %v1464
    %1489 = vmatprep.subr.mxu0 0.0
    %1490 = vmatpush1.msra.mxu0 %v1465
    %1491 = vmatprep.subr.mxu0 0.0
    %1492 = vmatpush1.msra.mxu0 %v1466
    %1493 = vmatprep.subr.mxu0 0.0
    %1494 = vmatpush1.msra.mxu0 %v1467
    %1495 = vmatprep.subr.mxu0 0.0
    %1496 = vmatpush1.msra.mxu0 %v1468
    %1497 = vmatprep.subr.mxu0 0.0
    %1498 = vmatpush1.msra.mxu0 %v1469
    %1499 = vmatprep.subr.mxu0 0.0
    %1500 = vmatpush1.msra.mxu0 %v1470
    %1501 = vmatprep.subr.mxu0 0.0
    %1502 = vmatpush1.msra.mxu0 %v1471
    %1503 = vmatprep.subr.mxu0 0.0
    %1504 = vmatpush1.msra.mxu0 %v1472
    %1505 = vmatprep.subr.mxu0 0.0
    %1506 = vmatpush1.msra.mxu0 0.0
    %1507 = vmatprep.subr.mxu0 0.0
    %1508 = vmatpush1.msra.mxu0 0.0
    %1509 = vmatprep.subr.mxu0 0.0
    %1510 = vmatpush1.msra.mxu0 0.0
    %1511 = vmatprep.subr.mxu0 0.0
    %1512 = vmatpush1.msra.mxu0 0.0
    %1513 = vmatprep.subr.mxu0 0.0
    %1514 = vmatpush1.msra.mxu0 0.0
    %1515 = vmatprep.subr.mxu0 0.0
    %1516 = vmatpush1.msra.mxu0 0.0
    %1517 = vmatprep.subr.mxu0 0.0
    %1518 = vmatpush1.msra.mxu0 0.0
    %1519 = vmatprep.subr.mxu0 0.0
    %1520 = vmatpush1.msra.mxu0 0.0
    %1521 = vmatprep.subr.mxu0 0.0
    %1522 = vmatpush1.msra.mxu0 0.0
    %1523 = vmatprep.subr.mxu0 0.0
    %1524 = vmatpush1.msra.mxu0 0.0
    %1525 = vmatprep.subr.mxu0 0.0
    %1526 = vmatpush1.msra.mxu0 0.0
    %1527 = vmatprep.subr.mxu0 0.0
    %1528 = vmatpush1.msra.mxu0 0.0
    %1529 = vmatprep.subr.mxu0 0.0
    %1530 = vmatpush1.msra.mxu0 0.0
    %1531 = vmatprep.subr.mxu0 0.0
    %1532 = vmatpush1.msra.mxu0 0.0
    %1533 = vmatprep.subr.mxu0 0.0
    %1534 = vmatpush1.msra.mxu0 0.0
    %1535 = vmatprep.subr.mxu0 0.0
    %1536 = vmatpush1.msra.mxu0 0.0
    %1537 = vmatprep.mubr.f32.mxu0 0.0
    %1538 = vmatmul.mubr.f32.gmra.mrb[0].mxu0 %v1438
    %v1539 = vpop.f32.mrb[0].mxu0
    %v1540 = vadd.f32 0.0, %v1539
    %v1541 = vpop.f32.mrb[0].mxu0
    %1542 = vmatprep.mubr.f32.mxu0 0.0
    %1543 = vmatmul.mubr.f32.gmra.mrb[0].mxu0 %v1443
    %v1544 = vpop.f32.mrb[0].mxu0
    %v1545 = vadd.f32 0.0, %v1544
    %v1546 = vpop.f32.mrb[0].mxu0
    %1547 = vmatprep.mubr.f32.mxu0 0.0
    %1548 = vmatmul.mubr.f32.gmra.mrb[0].mxu0 %v1448
    %v1549 = vpop.f32.mrb[0].mxu0
    %v1550 = vadd.f32 0.0, %v1549
    %v1551 = vpop.f32.mrb[0].mxu0
    %1552 = vmatprep.mubr.f32.mxu0 0.0
    %1553 = vmatmul.mubr.f32.gmra.mrb[0].mxu0 %v1453
    %v1554 = vpop.f32.mrb[0].mxu0
    %v1555 = vadd.f32 0.0, %v1554
    %v1556 = vpop.f32.mrb[0].mxu0
    %1557 = vdwg.mxu0
    %1558 = vmatprep.subr.mxu0 0.0
    %1559 = vmatpush1.msra.mxu0 %v1338
    %1560 = vmatprep.subr.mxu0 0.0
    %1561 = vmatpush1.msra.mxu0 %v1339
    %1562 = vmatprep.subr.mxu0 0.0
    %1563 = vmatpush1.msra.mxu0 %v1340
    %1564 = vmatprep.subr.mxu0 0.0
    %1565 = vmatpush1.msra.mxu0 %v1341
    %1566 = vmatprep.subr.mxu0 0.0
    %1567 = vmatpush1.msra.mxu0 %v1342
    %1568 = vmatprep.subr.mxu0 0.0
    %1569 = vmatpush1.msra.mxu0 %v1343
    %1570 = vmatprep.subr.mxu0 0.0
    %1571 = vmatpush1.msra.mxu0 %v1344
    %1572 = vmatprep.subr.mxu0 0.0
    %1573 = vmatpush1.msra.mxu0 %v1345
    %1574 = vmatprep.subr.mxu0 0.0
    %1575 = vmatpush1.msra.mxu0 %v1346
    %1576 = vmatprep.subr.mxu0 0.0
    %1577 = vmatpush1.msra.mxu0 %v1347
    %1578 = vmatprep.subr.mxu0 0.0
    %1579 = vmatpush1.msra.mxu0 %v1348
    %1580 = vmatprep.subr.mxu0 0.0
    %1581 = vmatpush1.msra.mxu0 %v1349
    %1582 = vmatprep.subr.mxu0 0.0
    %1583 = vmatpush1.msra.mxu0 %v1350
    %1584 = vmatprep.subr.mxu0 0.0
    %1585 = vmatpush1.msra.mxu0 %v1351
    %1586 = vmatprep.subr.mxu0 0.0
    %1587 = vmatpush1.msra.mxu0 %v1352
    %1588 = vmatprep.subr.mxu0 0.0
    %1589 = vmatpush1.msra.mxu0 %v1353
    %1590 = vmatprep.subr.mxu0 0.0
    %1591 = vmatpush1.msra.mxu0 0.0
    %1592 = vmatprep.subr.mxu0 0.0
    %1593 = vmatpush1.msra.mxu0 0.0
    %1594 = vmatprep.subr.mxu0 0.0
    %1595 = vmatpush1.msra.mxu0 0.0
    %1596 = vmatprep.subr.mxu0 0.0
    %1597 = vmatpush1.msra.mxu0 0.0
    %1598 = vmatprep.subr.mxu0 0.0
    %1599 = vmatpush1.msra.mxu0 0.0
    %1600 = vmatprep.subr.mxu0 0.0
    %1601 = vmatpush1.msra.mxu0 0.0
    %1602 = vmatprep.subr.mxu0 0.0
    %1603 = vmatpush1.msra.mxu0 0.0
    %1604 = vmatprep.subr.mxu0 0.0
    %1605 = vmatpush1.msra.mxu0 0.0
    %1606 = vmatprep.subr.mxu0 0.0
    %1607 = vmatpush1.msra.mxu0 0.0
    %1608 = vmatprep.subr.mxu0 0.0
    %1609 = vmatpush1.msra.mxu0 0.0
    %1610 = vmatprep.subr.mxu0 0.0
    %1611 = vmatpush1.msra.mxu0 0.0
    %1612 = vmatprep.subr.mxu0 0.0
    %1613 = vmatpush1.msra.mxu0 0.0
    %1614 = vmatprep.subr.mxu0 0.0
    %1615 = vmatpush1.msra.mxu0 0.0
    %1616 = vmatprep.subr.mxu0 0.0
    %1617 = vmatpush1.msra.mxu0 0.0
    %1618 = vmatprep.subr.mxu0 0.0
    %1619 = vmatpush1.msra.mxu0 0.0
    %1620 = vmatprep.subr.mxu0 0.0
    %1621 = vmatpush1.msra.mxu0 0.0
    %1622 = vmatprep.mubr.f32.mxu0 0.0
    %1623 = vmatmul.mubr.f32.gmra.mrb[0].mxu0 %v1320
    %v1624 = vpop.f32.mrb[0].mxu0
    %v1625 = vadd.f32 %v1540, %v1624
    %v1626 = vpop.f32.mrb[0].mxu0
    %1627 = vmatprep.mubr.f32.mxu0 0.0
    %1628 = vmatmul.mubr.f32.gmra.mrb[0].mxu0 %v1325
    %v1629 = vpop.f32.mrb[0].mxu0
    %v1630 = vadd.f32 %v1545, %v1629
    %v1631 = vpop.f32.mrb[0].mxu0
    %1632 = vmatprep.mubr.f32.mxu0 0.0
    %1633 = vmatmul.mubr.f32.gmra.mrb[0].mxu0 %v1330
    %v1634 = vpop.f32.mrb[0].mxu0
    %v1635 = vadd.f32 %v1550, %v1634
    %v1636 = vpop.f32.mrb[0].mxu0
    %1637 = vmatprep.mubr.f32.mxu0 0.0
    %1638 = vmatmul.mubr.f32.gmra.mrb[0].mxu0 %v1335
    %v1639 = vpop.f32.mrb[0].mxu0
    %v1640 = vadd.f32 %v1555, %v1639
    %v1641 = vpop.f32.mrb[0].mxu0
    %1642 = vdwg.mxu0
    %s1643 = scalar_lea.vmem %s47, 64
    %v1644 = vld [vmem:[%s1643] sm:$0xff]
    %v1645 = vld [vmem:[%s1643 + $0x8] sm:$0xff]
    %v1646 = vld [vmem:[%s1643 + $0x10] sm:$0xff]
    %v1647 = vld [vmem:[%s1643 + $0x18] sm:$0xff]
    %v1649 = vsel %vm695, %v1644, 0
    %v1652 = vsel %vm695, %v1645, 0
    %v1655 = vsel %vm695, %v1646, 0
    %v1658 = vsel %vm695, %v1647, 0
    %1660 = vmatprep.subr.mxu0 0.0
    %1661 = vmatpush1.msra.mxu0 %v1229
    %1662 = vmatprep.subr.mxu0 0.0
    %1663 = vmatpush1.msra.mxu0 %v1230
    %1664 = vmatprep.subr.mxu0 0.0
    %1665 = vmatpush1.msra.mxu0 %v1231
    %1666 = vmatprep.subr.mxu0 0.0
    %1667 = vmatpush1.msra.mxu0 %v1232
    %1668 = vmatprep.subr.mxu0 0.0
    %1669 = vmatpush1.msra.mxu0 %v1233
    %1670 = vmatprep.subr.mxu0 0.0
    %1671 = vmatpush1.msra.mxu0 %v1234
    %1672 = vmatprep.subr.mxu0 0.0
    %1673 = vmatpush1.msra.mxu0 %v1235
    %1674 = vmatprep.subr.mxu0 0.0
    %1675 = vmatpush1.msra.mxu0 %v1236
    %1676 = vmatprep.subr.mxu0 0.0
    %1677 = vmatpush1.msra.mxu0 0.0
    %1678 = vmatprep.subr.mxu0 0.0
    %1679 = vmatpush1.msra.mxu0 0.0
    %1680 = vmatprep.subr.mxu0 0.0
    %1681 = vmatpush1.msra.mxu0 0.0
    %1682 = vmatprep.subr.mxu0 0.0
    %1683 = vmatpush1.msra.mxu0 0.0
    %1684 = vmatprep.subr.mxu0 0.0
    %1685 = vmatpush1.msra.mxu0 0.0
    %1686 = vmatprep.subr.mxu0 0.0
    %1687 = vmatpush1.msra.mxu0 0.0
    %1688 = vmatprep.subr.mxu0 0.0
    %1689 = vmatpush1.msra.mxu0 0.0
    %1690 = vmatprep.subr.mxu0 0.0
    %1691 = vmatpush1.msra.mxu0 0.0
    %1692 = vmatprep.subr.mxu0 0.0
    %1693 = vmatpush1.msra.mxu0 0.0
    %1694 = vmatprep.subr.mxu0 0.0
    %1695 = vmatpush1.msra.mxu0 0.0
    %1696 = vmatprep.subr.mxu0 0.0
    %1697 = vmatpush1.msra.mxu0 0.0
    %1698 = vmatprep.subr.mxu0 0.0
    %1699 = vmatpush1.msra.mxu0 0.0
    %1700 = vmatprep.subr.mxu0 0.0
    %1701 = vmatpush1.msra.mxu0 0.0
    %1702 = vmatprep.subr.mxu0 0.0
    %1703 = vmatpush1.msra.mxu0 0.0
    %1704 = vmatprep.subr.mxu0 0.0
    %1705 = vmatpush1.msra.mxu0 0.0
    %1706 = vmatprep.subr.mxu0 0.0
    %1707 = vmatpush1.msra.mxu0 0.0
    %1708 = vmatprep.subr.mxu0 0.0
    %1709 = vmatpush1.msra.mxu0 0.0
    %1710 = vmatprep.subr.mxu0 0.0
    %1711 = vmatpush1.msra.mxu0 0.0
    %1712 = vmatprep.subr.mxu0 0.0
    %1713 = vmatpush1.msra.mxu0 0.0
    %1714 = vmatprep.subr.mxu0 0.0
    %1715 = vmatpush1.msra.mxu0 0.0
    %1716 = vmatprep.subr.mxu0 0.0
    %1717 = vmatpush1.msra.mxu0 0.0
    %1718 = vmatprep.subr.mxu0 0.0
    %1719 = vmatpush1.msra.mxu0 0.0
    %1720 = vmatprep.subr.mxu0 0.0
    %1721 = vmatpush1.msra.mxu0 0.0
    %1722 = vmatprep.subr.mxu0 0.0
    %1723 = vmatpush1.msra.mxu0 0.0
    %1724 = vmatprep.mubr.f32.mxu0 0.0
    %1725 = vmatmul.mubr.f32.gmra.mrb[0].mxu0 %v1649
    %v1726 = vpop.f32.mrb[0].mxu0
    %v1727 = vadd.f32 0.0, %v1726
    %v1728 = vpop.f32.mrb[0].mxu0
    %1729 = vmatprep.mubr.f32.mxu0 0.0
    %1730 = vmatmul.mubr.f32.gmra.mrb[0].mxu0 %v1652
    %v1731 = vpop.f32.mrb[0].mxu0
    %v1732 = vadd.f32 0.0, %v1731
    %v1733 = vpop.f32.mrb[0].mxu0
    %1734 = vmatprep.mubr.f32.mxu0 0.0
    %1735 = vmatmul.mubr.f32.gmra.mrb[0].mxu0 %v1655
    %v1736 = vpop.f32.mrb[0].mxu0
    %v1737 = vadd.f32 0.0, %v1736
    %v1738 = vpop.f32.mrb[0].mxu0
    %1739 = vmatprep.mubr.f32.mxu0 0.0
    %1740 = vmatmul.mubr.f32.gmra.mrb[0].mxu0 %v1658
    %v1741 = vpop.f32.mrb[0].mxu0
    %v1742 = vadd.f32 0.0, %v1741
    %v1743 = vpop.f32.mrb[0].mxu0
    %1744 = vdwg.mxu0
    %s1745 = scalar_lea.vmem %s45, 256
    %v1746 = vld [vmem:[%s1745] sm:$0xff]
    %v1747 = vld [vmem:[%s1745 + $0x8] sm:$0xff]
    %v1748 = vld [vmem:[%s1745 + $0x10] sm:$0xff]
    %v1749 = vld [vmem:[%s1745 + $0x18] sm:$0xff]
    %v1750 = vld [vmem:[%s1745 + $0x20] sm:$0xff]
    %v1751 = vld [vmem:[%s1745 + $0x28] sm:$0xff]
    %v1752 = vld [vmem:[%s1745 + $0x30] sm:$0xff]
    %v1753 = vld [vmem:[%s1745 + $0x38] sm:$0xff]
    %v1754 = vld [vmem:[%s1745 + $0x40] sm:$0xff]
    %v1755 = vld [vmem:[%s1745 + $0x48] sm:$0xff]
    %v1756 = vld [vmem:[%s1745 + $0x50] sm:$0xff]
    %v1757 = vld [vmem:[%s1745 + $0x58] sm:$0xff]
    %v1758 = vld [vmem:[%s1745 + $0x60] sm:$0xff]
    %v1759 = vld [vmem:[%s1745 + $0x68] sm:$0xff]
    %v1760 = vld [vmem:[%s1745 + $0x70] sm:$0xff]
    %v1761 = vld [vmem:[%s1745 + $0x78] sm:$0xff]
    %1762 = vmatprep.subr.mxu0 0.0
    %1763 = vmatpush1.msra.mxu0 %v1746
    %1764 = vmatprep.subr.mxu0 0.0
    %1765 = vmatpush1.msra.mxu0 %v1747
    %1766 = vmatprep.subr.mxu0 0.0
    %1767 = vmatpush1.msra.mxu0 %v1748
    %1768 = vmatprep.subr.mxu0 0.0
    %1769 = vmatpush1.msra.mxu0 %v1749
    %1770 = vmatprep.subr.mxu0 0.0
    %1771 = vmatpush1.msra.mxu0 %v1750
    %1772 = vmatprep.subr.mxu0 0.0
    %1773 = vmatpush1.msra.mxu0 %v1751
    %1774 = vmatprep.subr.mxu0 0.0
    %1775 = vmatpush1.msra.mxu0 %v1752
    %1776 = vmatprep.subr.mxu0 0.0
    %1777 = vmatpush1.msra.mxu0 %v1753
    %1778 = vmatprep.subr.mxu0 0.0
    %1779 = vmatpush1.msra.mxu0 %v1754
    %1780 = vmatprep.subr.mxu0 0.0
    %1781 = vmatpush1.msra.mxu0 %v1755
    %1782 = vmatprep.subr.mxu0 0.0
    %1783 = vmatpush1.msra.mxu0 %v1756
    %1784 = vmatprep.subr.mxu0 0.0
    %1785 = vmatpush1.msra.mxu0 %v1757
    %1786 = vmatprep.subr.mxu0 0.0
    %1787 = vmatpush1.msra.mxu0 %v1758
    %1788 = vmatprep.subr.mxu0 0.0
    %1789 = vmatpush1.msra.mxu0 %v1759
    %1790 = vmatprep.subr.mxu0 0.0
    %1791 = vmatpush1.msra.mxu0 %v1760
    %1792 = vmatprep.subr.mxu0 0.0
    %1793 = vmatpush1.msra.mxu0 %v1761
    %1794 = vmatprep.subr.mxu0 0.0
    %1795 = vmatpush1.msra.mxu0 0.0
    %1796 = vmatprep.subr.mxu0 0.0
    %1797 = vmatpush1.msra.mxu0 0.0
    %1798 = vmatprep.subr.mxu0 0.0
    %1799 = vmatpush1.msra.mxu0 0.0
    %1800 = vmatprep.subr.mxu0 0.0
    %1801 = vmatpush1.msra.mxu0 0.0
    %1802 = vmatprep.subr.mxu0 0.0
    %1803 = vmatpush1.msra.mxu0 0.0
    %1804 = vmatprep.subr.mxu0 0.0
    %1805 = vmatpush1.msra.mxu0 0.0
    %1806 = vmatprep.subr.mxu0 0.0
    %1807 = vmatpush1.msra.mxu0 0.0
    %1808 = vmatprep.subr.mxu0 0.0
    %1809 = vmatpush1.msra.mxu0 0.0
    %1810 = vmatprep.subr.mxu0 0.0
    %1811 = vmatpush1.msra.mxu0 0.0
    %1812 = vmatprep.subr.mxu0 0.0
    %1813 = vmatpush1.msra.mxu0 0.0
    %1814 = vmatprep.subr.mxu0 0.0
    %1815 = vmatpush1.msra.mxu0 0.0
    %1816 = vmatprep.subr.mxu0 0.0
    %1817 = vmatpush1.msra.mxu0 0.0
    %1818 = vmatprep.subr.mxu0 0.0
    %1819 = vmatpush1.msra.mxu0 0.0
    %1820 = vmatprep.subr.mxu0 0.0
    %1821 = vmatpush1.msra.mxu0 0.0
    %1822 = vmatprep.subr.mxu0 0.0
    %1823 = vmatpush1.msra.mxu0 0.0
    %1824 = vmatprep.subr.mxu0 0.0
    %1825 = vmatpush1.msra.mxu0 0.0
    %1826 = vmatprep.mubr.f32.mxu0 0.0
    %1827 = vmatmul.mubr.f32.gmra.mrb[0].mxu0 %v1727
    %v1828 = vpop.f32.mrb[0].mxu0
    %v1829 = vadd.f32 0.0, %v1828
    %v1830 = vpop.f32.mrb[0].mxu0
    %1831 = vmatprep.mubr.f32.mxu0 0.0
    %1832 = vmatmul.mubr.f32.gmra.mrb[0].mxu0 %v1732
    %v1833 = vpop.f32.mrb[0].mxu0
    %v1834 = vadd.f32 0.0, %v1833
    %v1835 = vpop.f32.mrb[0].mxu0
    %1836 = vmatprep.mubr.f32.mxu0 0.0
    %1837 = vmatmul.mubr.f32.gmra.mrb[0].mxu0 %v1737
    %v1838 = vpop.f32.mrb[0].mxu0
    %v1839 = vadd.f32 0.0, %v1838
    %v1840 = vpop.f32.mrb[0].mxu0
    %1841 = vmatprep.mubr.f32.mxu0 0.0
    %1842 = vmatmul.mubr.f32.gmra.mrb[0].mxu0 %v1742
    %v1843 = vpop.f32.mrb[0].mxu0
    %v1844 = vadd.f32 0.0, %v1843
    %v1845 = vpop.f32.mrb[0].mxu0
    %1846 = vdwg.mxu0
    %v1847 = vadd.f32 %v1625, %v1829
    %v1848 = vadd.f32 %v1630, %v1834
    %v1849 = vadd.f32 %v1635, %v1839
    %v1850 = vadd.f32 %v1640, %v1844
    %v1851 = vld [vmem:[%s49] sm:$0x1]
    %v1853 = vlaneseq
    %v1854 = vshrl.u32 %v1853, 7
    %v1855 = vsub.s32 0, %v1854
    %v1856 = vrot.slane %v1851, %v1855
    %v1858 = vadd.f32 %v1847, %v1856
    %v1859 = vadd.f32 %v1848, %v1856
    %v1860 = vadd.f32 %v1849, %v1856
    %v1861 = vadd.f32 %v1850, %v1856
    %v1862 = vmax.f32 %v1858, 0.0
    %v1863 = vmax.f32 %v1859, 0.0
    %v1864 = vmax.f32 %v1860, 0.0
    %v1865 = vmax.f32 %v1861, 0.0
    %v1866 = vld [vmem:[#allocation20] sm:$0xff]
    %v1867 = vld [vmem:[#allocation20 + $0x8] sm:$0xff]
    %vm1868 = vcmask 261120
    %v1870 = vsel %vm1868, %v1866, 0
    %v1873 = vsel %vm1868, %v1867, 0
    %1875 = vmatprep.subr.mxu0 0.0
    %1876 = vmatpush1.msra.mxu0 %v1862
    %1877 = vmatprep.subr.mxu0 0.0
    %1878 = vmatpush1.msra.mxu0 %v1863
    %1879 = vmatprep.subr.mxu0 0.0
    %1880 = vmatpush1.msra.mxu0 %v1864
    %1881 = vmatprep.subr.mxu0 0.0
    %1882 = vmatpush1.msra.mxu0 %v1865
    %1883 = vmatprep.subr.mxu0 0.0
    %1884 = vmatpush1.msra.mxu0 0.0
    %1885 = vmatprep.subr.mxu0 0.0
    %1886 = vmatpush1.msra.mxu0 0.0
    %1887 = vmatprep.subr.mxu0 0.0
    %1888 = vmatpush1.msra.mxu0 0.0
    %1889 = vmatprep.subr.mxu0 0.0
    %1890 = vmatpush1.msra.mxu0 0.0
    %1891 = vmatprep.subr.mxu0 0.0
    %1892 = vmatpush1.msra.mxu0 0.0
    %1893 = vmatprep.subr.mxu0 0.0
    %1894 = vmatpush1.msra.mxu0 0.0
    %1895 = vmatprep.subr.mxu0 0.0
    %1896 = vmatpush1.msra.mxu0 0.0
    %1897 = vmatprep.subr.mxu0 0.0
    %1898 = vmatpush1.msra.mxu0 0.0
    %1899 = vmatprep.subr.mxu0 0.0
    %1900 = vmatpush1.msra.mxu0 0.0
    %1901 = vmatprep.subr.mxu0 0.0
    %1902 = vmatpush1.msra.mxu0 0.0
    %1903 = vmatprep.subr.mxu0 0.0
    %1904 = vmatpush1.msra.mxu0 0.0
    %1905 = vmatprep.subr.mxu0 0.0
    %1906 = vmatpush1.msra.mxu0 0.0
    %1907 = vmatprep.subr.mxu0 0.0
    %1908 = vmatpush1.msra.mxu0 0.0
    %1909 = vmatprep.subr.mxu0 0.0
    %1910 = vmatpush1.msra.mxu0 0.0
    %1911 = vmatprep.subr.mxu0 0.0
    %1912 = vmatpush1.msra.mxu0 0.0
    %1913 = vmatprep.subr.mxu0 0.0
    %1914 = vmatpush1.msra.mxu0 0.0
    %1915 = vmatprep.subr.mxu0 0.0
    %1916 = vmatpush1.msra.mxu0 0.0
    %1917 = vmatprep.subr.mxu0 0.0
    %1918 = vmatpush1.msra.mxu0 0.0
    %1919 = vmatprep.subr.mxu0 0.0
    %1920 = vmatpush1.msra.mxu0 0.0
    %1921 = vmatprep.subr.mxu0 0.0
    %1922 = vmatpush1.msra.mxu0 0.0
    %1923 = vmatprep.subr.mxu0 0.0
    %1924 = vmatpush1.msra.mxu0 0.0
    %1925 = vmatprep.subr.mxu0 0.0
    %1926 = vmatpush1.msra.mxu0 0.0
    %1927 = vmatprep.subr.mxu0 0.0
    %1928 = vmatpush1.msra.mxu0 0.0
    %1929 = vmatprep.subr.mxu0 0.0
    %1930 = vmatpush1.msra.mxu0 0.0
    %1931 = vmatprep.subr.mxu0 0.0
    %1932 = vmatpush1.msra.mxu0 0.0
    %1933 = vmatprep.subr.mxu0 0.0
    %1934 = vmatpush1.msra.mxu0 0.0
    %1935 = vmatprep.subr.mxu0 0.0
    %1936 = vmatpush1.msra.mxu0 0.0
    %1937 = vmatprep.subr.mxu0 0.0
    %1938 = vmatpush1.msra.mxu0 0.0
    %1939 = vmatprep.mubr.f32.mxu0 0.0
    %1940 = vmatmul.mubr.f32.gmra.mrb[0].mxu0 %v1870
    %v1941 = vpop.f32.mrb[0].mxu0
    %v1942 = vadd.f32 0.0, %v1941
    %v1943 = vpop.f32.mrb[0].mxu0
    %1944 = vmatprep.mubr.f32.mxu0 0.0
    %1945 = vmatmul.mubr.f32.gmra.mrb[0].mxu0 %v1873
    %v1946 = vpop.f32.mrb[0].mxu0
    %v1947 = vadd.f32 0.0, %v1946
    %v1948 = vpop.f32.mrb[0].mxu0
    %1949 = vdwg.mxu0
    %v1950 = vld [vmem:[#allocation19] sm:$0xff]
    %v1951 = vld [vmem:[#allocation19 + $0x8] sm:$0xff]
    %v1952 = vld [vmem:[#allocation19 + $0x10] sm:$0xff]
    %v1953 = vld [vmem:[#allocation19 + $0x18] sm:$0xff]
    %v1954 = vld [vmem:[#allocation19 + $0x20] sm:$0xff]
    %v1955 = vld [vmem:[#allocation19 + $0x28] sm:$0xff]
    %v1956 = vld [vmem:[#allocation19 + $0x30] sm:$0xff]
    %v1957 = vld [vmem:[#allocation19 + $0x38] sm:$0xff]
    %v1958 = vld [vmem:[#allocation19 + $0x40] sm:$0xff]
    %v1959 = vld [vmem:[#allocation19 + $0x48] sm:$0xff]
    %v1960 = vld [vmem:[#allocation19 + $0x50] sm:$0xff]
    %v1961 = vld [vmem:[#allocation19 + $0x58] sm:$0xff]
    %v1962 = vld [vmem:[#allocation19 + $0x60] sm:$0xff]
    %v1963 = vld [vmem:[#allocation19 + $0x68] sm:$0xff]
    %v1964 = vld [vmem:[#allocation19 + $0x70] sm:$0xff]
    %v1965 = vld [vmem:[#allocation19 + $0x78] sm:$0xff]
    %s1966 = scalar_lea.vmem [#allocation20], 16
    %v1967 = vld [vmem:[%s1966] sm:$0xff]
    %v1968 = vld [vmem:[%s1966 + $0x8] sm:$0xff]
    %v1970 = vsel %vm1868, %v1967, 0
    %v1973 = vsel %vm1868, %v1968, 0
    %1975 = vmatprep.subr.mxu0 0.0
    %1976 = vmatpush1.msra.mxu0 %v1862
    %1977 = vmatprep.subr.mxu0 0.0
    %1978 = vmatpush1.msra.mxu0 %v1863
    %1979 = vmatprep.subr.mxu0 0.0
    %1980 = vmatpush1.msra.mxu0 %v1864
    %1981 = vmatprep.subr.mxu0 0.0
    %1982 = vmatpush1.msra.mxu0 %v1865
    %1983 = vmatprep.subr.mxu0 0.0
    %1984 = vmatpush1.msra.mxu0 0.0
    %1985 = vmatprep.subr.mxu0 0.0
    %1986 = vmatpush1.msra.mxu0 0.0
    %1987 = vmatprep.subr.mxu0 0.0
    %1988 = vmatpush1.msra.mxu0 0.0
    %1989 = vmatprep.subr.mxu0 0.0
    %1990 = vmatpush1.msra.mxu0 0.0
    %1991 = vmatprep.subr.mxu0 0.0
    %1992 = vmatpush1.msra.mxu0 0.0
    %1993 = vmatprep.subr.mxu0 0.0
    %1994 = vmatpush1.msra.mxu0 0.0
    %1995 = vmatprep.subr.mxu0 0.0
    %1996 = vmatpush1.msra.mxu0 0.0
    %1997 = vmatprep.subr.mxu0 0.0
    %1998 = vmatpush1.msra.mxu0 0.0
    %1999 = vmatprep.subr.mxu0 0.0
    %2000 = vmatpush1.msra.mxu0 0.0
    %2001 = vmatprep.subr.mxu0 0.0
    %2002 = vmatpush1.msra.mxu0 0.0
    %2003 = vmatprep.subr.mxu0 0.0
    %2004 = vmatpush1.msra.mxu0 0.0
    %2005 = vmatprep.subr.mxu0 0.0
    %2006 = vmatpush1.msra.mxu0 0.0
    %2007 = vmatprep.subr.mxu0 0.0
    %2008 = vmatpush1.msra.mxu0 0.0
    %2009 = vmatprep.subr.mxu0 0.0
    %2010 = vmatpush1.msra.mxu0 0.0
    %2011 = vmatprep.subr.mxu0 0.0
    %2012 = vmatpush1.msra.mxu0 0.0
    %2013 = vmatprep.subr.mxu0 0.0
    %2014 = vmatpush1.msra.mxu0 0.0
    %2015 = vmatprep.subr.mxu0 0.0
    %2016 = vmatpush1.msra.mxu0 0.0
    %2017 = vmatprep.subr.mxu0 0.0
    %2018 = vmatpush1.msra.mxu0 0.0
    %2019 = vmatprep.subr.mxu0 0.0
    %2020 = vmatpush1.msra.mxu0 0.0
    %2021 = vmatprep.subr.mxu0 0.0
    %2022 = vmatpush1.msra.mxu0 0.0
    %2023 = vmatprep.subr.mxu0 0.0
    %2024 = vmatpush1.msra.mxu0 0.0
    %2025 = vmatprep.subr.mxu0 0.0
    %2026 = vmatpush1.msra.mxu0 0.0
    %2027 = vmatprep.subr.mxu0 0.0
    %2028 = vmatpush1.msra.mxu0 0.0
    %2029 = vmatprep.subr.mxu0 0.0
    %2030 = vmatpush1.msra.mxu0 0.0
    %2031 = vmatprep.subr.mxu0 0.0
    %2032 = vmatpush1.msra.mxu0 0.0
    %2033 = vmatprep.subr.mxu0 0.0
    %2034 = vmatpush1.msra.mxu0 0.0
    %2035 = vmatprep.subr.mxu0 0.0
    %2036 = vmatpush1.msra.mxu0 0.0
    %2037 = vmatprep.subr.mxu0 0.0
    %2038 = vmatpush1.msra.mxu0 0.0
    %2039 = vmatprep.mubr.f32.mxu0 0.0
    %2040 = vmatmul.mubr.f32.gmra.mrb[0].mxu0 %v1970
    %v2041 = vpop.f32.mrb[0].mxu0
    %v2042 = vadd.f32 0.0, %v2041
    %v2043 = vpop.f32.mrb[0].mxu0
    %2044 = vmatprep.mubr.f32.mxu0 0.0
    %2045 = vmatmul.mubr.f32.gmra.mrb[0].mxu0 %v1973
    %v2046 = vpop.f32.mrb[0].mxu0
    %v2047 = vadd.f32 0.0, %v2046
    %v2048 = vpop.f32.mrb[0].mxu0
    %2049 = vdwg.mxu0
    %s2050 = scalar_lea.vmem [#allocation19], 128
    %v2051 = vld [vmem:[%s2050] sm:$0xff]
    %v2052 = vld [vmem:[%s2050 + $0x8] sm:$0xff]
    %v2053 = vld [vmem:[%s2050 + $0x10] sm:$0xff]
    %v2054 = vld [vmem:[%s2050 + $0x18] sm:$0xff]
    %v2055 = vld [vmem:[%s2050 + $0x20] sm:$0xff]
    %v2056 = vld [vmem:[%s2050 + $0x28] sm:$0xff]
    %v2057 = vld [vmem:[%s2050 + $0x30] sm:$0xff]
    %v2058 = vld [vmem:[%s2050 + $0x38] sm:$0xff]
    %v2059 = vld [vmem:[%s2050 + $0x40] sm:$0xff]
    %v2060 = vld [vmem:[%s2050 + $0x48] sm:$0xff]
    %v2061 = vld [vmem:[%s2050 + $0x50] sm:$0xff]
    %v2062 = vld [vmem:[%s2050 + $0x58] sm:$0xff]
    %v2063 = vld [vmem:[%s2050 + $0x60] sm:$0xff]
    %v2064 = vld [vmem:[%s2050 + $0x68] sm:$0xff]
    %v2065 = vld [vmem:[%s2050 + $0x70] sm:$0xff]
    %v2066 = vld [vmem:[%s2050 + $0x78] sm:$0xff]
    %2067 = vmatprep.subr.mxu0 0.0
    %2068 = vmatpush1.msra.mxu0 %v2051
    %2069 = vmatprep.subr.mxu0 0.0
    %2070 = vmatpush1.msra.mxu0 %v2052
    %2071 = vmatprep.subr.mxu0 0.0
    %2072 = vmatpush1.msra.mxu0 %v2053
    %2073 = vmatprep.subr.mxu0 0.0
    %2074 = vmatpush1.msra.mxu0 %v2054
    %2075 = vmatprep.subr.mxu0 0.0
    %2076 = vmatpush1.msra.mxu0 %v2055
    %2077 = vmatprep.subr.mxu0 0.0
    %2078 = vmatpush1.msra.mxu0 %v2056
    %2079 = vmatprep.subr.mxu0 0.0
    %2080 = vmatpush1.msra.mxu0 %v2057
    %2081 = vmatprep.subr.mxu0 0.0
    %2082 = vmatpush1.msra.mxu0 %v2058
    %2083 = vmatprep.subr.mxu0 0.0
    %2084 = vmatpush1.msra.mxu0 %v2059
    %2085 = vmatprep.subr.mxu0 0.0
    %2086 = vmatpush1.msra.mxu0 %v2060
    %2087 = vmatprep.subr.mxu0 0.0
    %2088 = vmatpush1.msra.mxu0 %v2061
    %2089 = vmatprep.subr.mxu0 0.0
    %2090 = vmatpush1.msra.mxu0 %v2062
    %2091 = vmatprep.subr.mxu0 0.0
    %2092 = vmatpush1.msra.mxu0 %v2063
    %2093 = vmatprep.subr.mxu0 0.0
    %2094 = vmatpush1.msra.mxu0 %v2064
    %2095 = vmatprep.subr.mxu0 0.0
    %2096 = vmatpush1.msra.mxu0 %v2065
    %2097 = vmatprep.subr.mxu0 0.0
    %2098 = vmatpush1.msra.mxu0 %v2066
    %2099 = vmatprep.subr.mxu0 0.0
    %2100 = vmatpush1.msra.mxu0 0.0
    %2101 = vmatprep.subr.mxu0 0.0
    %2102 = vmatpush1.msra.mxu0 0.0
    %2103 = vmatprep.subr.mxu0 0.0
    %2104 = vmatpush1.msra.mxu0 0.0
    %2105 = vmatprep.subr.mxu0 0.0
    %2106 = vmatpush1.msra.mxu0 0.0
    %2107 = vmatprep.subr.mxu0 0.0
    %2108 = vmatpush1.msra.mxu0 0.0
    %2109 = vmatprep.subr.mxu0 0.0
    %2110 = vmatpush1.msra.mxu0 0.0
    %2111 = vmatprep.subr.mxu0 0.0
    %2112 = vmatpush1.msra.mxu0 0.0
    %2113 = vmatprep.subr.mxu0 0.0
    %2114 = vmatpush1.msra.mxu0 0.0
    %2115 = vmatprep.subr.mxu0 0.0
    %2116 = vmatpush1.msra.mxu0 0.0
    %2117 = vmatprep.subr.mxu0 0.0
    %2118 = vmatpush1.msra.mxu0 0.0
    %2119 = vmatprep.subr.mxu0 0.0
    %2120 = vmatpush1.msra.mxu0 0.0
    %2121 = vmatprep.subr.mxu0 0.0
    %2122 = vmatpush1.msra.mxu0 0.0
    %2123 = vmatprep.subr.mxu0 0.0
    %2124 = vmatpush1.msra.mxu0 0.0
    %2125 = vmatprep.subr.mxu0 0.0
    %2126 = vmatpush1.msra.mxu0 0.0
    %2127 = vmatprep.subr.mxu0 0.0
    %2128 = vmatpush1.msra.mxu0 0.0
    %2129 = vmatprep.subr.mxu0 0.0
    %2130 = vmatpush1.msra.mxu0 0.0
    %2131 = vmatprep.mubr.f32.mxu0 0.0
    %2132 = vmatmul.mubr.f32.gmra.mrb[0].mxu0 %v2042
    %v2133 = vpop.f32.mrb[0].mxu0
    %v2134 = vadd.f32 0.0, %v2133
    %v2135 = vpop.f32.mrb[0].mxu0
    %2136 = vmatprep.mubr.f32.mxu0 0.0
    %2137 = vmatmul.mubr.f32.gmra.mrb[0].mxu0 %v2047
    %v2138 = vpop.f32.mrb[0].mxu0
    %v2139 = vadd.f32 0.0, %v2138
    %v2140 = vpop.f32.mrb[0].mxu0
    %2141 = vdwg.mxu0
    %2142 = vmatprep.subr.mxu0 0.0
    %2143 = vmatpush1.msra.mxu0 %v1950
    %2144 = vmatprep.subr.mxu0 0.0
    %2145 = vmatpush1.msra.mxu0 %v1951
    %2146 = vmatprep.subr.mxu0 0.0
    %2147 = vmatpush1.msra.mxu0 %v1952
    %2148 = vmatprep.subr.mxu0 0.0
    %2149 = vmatpush1.msra.mxu0 %v1953
    %2150 = vmatprep.subr.mxu0 0.0
    %2151 = vmatpush1.msra.mxu0 %v1954
    %2152 = vmatprep.subr.mxu0 0.0
    %2153 = vmatpush1.msra.mxu0 %v1955
    %2154 = vmatprep.subr.mxu0 0.0
    %2155 = vmatpush1.msra.mxu0 %v1956
    %2156 = vmatprep.subr.mxu0 0.0
    %2157 = vmatpush1.msra.mxu0 %v1957
    %2158 = vmatprep.subr.mxu0 0.0
    %2159 = vmatpush1.msra.mxu0 %v1958
    %2160 = vmatprep.subr.mxu0 0.0
    %2161 = vmatpush1.msra.mxu0 %v1959
    %2162 = vmatprep.subr.mxu0 0.0
    %2163 = vmatpush1.msra.mxu0 %v1960
    %2164 = vmatprep.subr.mxu0 0.0
    %2165 = vmatpush1.msra.mxu0 %v1961
    %2166 = vmatprep.subr.mxu0 0.0
    %2167 = vmatpush1.msra.mxu0 %v1962
    %2168 = vmatprep.subr.mxu0 0.0
    %2169 = vmatpush1.msra.mxu0 %v1963
    %2170 = vmatprep.subr.mxu0 0.0
    %2171 = vmatpush1.msra.mxu0 %v1964
    %2172 = vmatprep.subr.mxu0 0.0
    %2173 = vmatpush1.msra.mxu0 %v1965
    %2174 = vmatprep.subr.mxu0 0.0
    %2175 = vmatpush1.msra.mxu0 0.0
    %2176 = vmatprep.subr.mxu0 0.0
    %2177 = vmatpush1.msra.mxu0 0.0
    %2178 = vmatprep.subr.mxu0 0.0
    %2179 = vmatpush1.msra.mxu0 0.0
    %2180 = vmatprep.subr.mxu0 0.0
    %2181 = vmatpush1.msra.mxu0 0.0
    %2182 = vmatprep.subr.mxu0 0.0
    %2183 = vmatpush1.msra.mxu0 0.0
    %2184 = vmatprep.subr.mxu0 0.0
    %2185 = vmatpush1.msra.mxu0 0.0
    %2186 = vmatprep.subr.mxu0 0.0
    %2187 = vmatpush1.msra.mxu0 0.0
    %2188 = vmatprep.subr.mxu0 0.0
    %2189 = vmatpush1.msra.mxu0 0.0
    %2190 = vmatprep.subr.mxu0 0.0
    %2191 = vmatpush1.msra.mxu0 0.0
    %2192 = vmatprep.subr.mxu0 0.0
    %2193 = vmatpush1.msra.mxu0 0.0
    %2194 = vmatprep.subr.mxu0 0.0
    %2195 = vmatpush1.msra.mxu0 0.0
    %2196 = vmatprep.subr.mxu0 0.0
    %2197 = vmatpush1.msra.mxu0 0.0
    %2198 = vmatprep.subr.mxu0 0.0
    %2199 = vmatpush1.msra.mxu0 0.0
    %2200 = vmatprep.subr.mxu0 0.0
    %2201 = vmatpush1.msra.mxu0 0.0
    %2202 = vmatprep.subr.mxu0 0.0
    %2203 = vmatpush1.msra.mxu0 0.0
    %2204 = vmatprep.subr.mxu0 0.0
    %2205 = vmatpush1.msra.mxu0 0.0
    %2206 = vmatprep.mubr.f32.mxu0 0.0
    %2207 = vmatmul.mubr.f32.gmra.mrb[0].mxu0 %v1942
    %v2208 = vpop.f32.mrb[0].mxu0
    %v2209 = vadd.f32 %v2134, %v2208
    %v2210 = vpop.f32.mrb[0].mxu0
    %2211 = vmatprep.mubr.f32.mxu0 0.0
    %2212 = vmatmul.mubr.f32.gmra.mrb[0].mxu0 %v1947
    %v2213 = vpop.f32.mrb[0].mxu0
    %v2214 = vadd.f32 %v2139, %v2213
    %v2215 = vpop.f32.mrb[0].mxu0
    %2216 = vdwg.mxu0
    %s2217 = scalar_lea.vmem [#allocation20], 32
    %v2218 = vld [vmem:[%s2217] sm:$0xff]
    %v2219 = vld [vmem:[%s2217 + $0x8] sm:$0xff]
    %v2221 = vsel %vm1868, %v2218, 0
    %v2224 = vsel %vm1868, %v2219, 0
    %2226 = vmatprep.subr.mxu0 0.0
    %2227 = vmatpush1.msra.mxu0 %v1862
    %2228 = vmatprep.subr.mxu0 0.0
    %2229 = vmatpush1.msra.mxu0 %v1863
    %2230 = vmatprep.subr.mxu0 0.0
    %2231 = vmatpush1.msra.mxu0 %v1864
    %2232 = vmatprep.subr.mxu0 0.0
    %2233 = vmatpush1.msra.mxu0 %v1865
    %2234 = vmatprep.subr.mxu0 0.0
    %2235 = vmatpush1.msra.mxu0 0.0
    %2236 = vmatprep.subr.mxu0 0.0
    %2237 = vmatpush1.msra.mxu0 0.0
    %2238 = vmatprep.subr.mxu0 0.0
    %2239 = vmatpush1.msra.mxu0 0.0
    %2240 = vmatprep.subr.mxu0 0.0
    %2241 = vmatpush1.msra.mxu0 0.0
    %2242 = vmatprep.subr.mxu0 0.0
    %2243 = vmatpush1.msra.mxu0 0.0
    %2244 = vmatprep.subr.mxu0 0.0
    %2245 = vmatpush1.msra.mxu0 0.0
    %2246 = vmatprep.subr.mxu0 0.0
    %2247 = vmatpush1.msra.mxu0 0.0
    %2248 = vmatprep.subr.mxu0 0.0
    %2249 = vmatpush1.msra.mxu0 0.0
    %2250 = vmatprep.subr.mxu0 0.0
    %2251 = vmatpush1.msra.mxu0 0.0
    %2252 = vmatprep.subr.mxu0 0.0
    %2253 = vmatpush1.msra.mxu0 0.0
    %2254 = vmatprep.subr.mxu0 0.0
    %2255 = vmatpush1.msra.mxu0 0.0
    %2256 = vmatprep.subr.mxu0 0.0
    %2257 = vmatpush1.msra.mxu0 0.0
    %2258 = vmatprep.subr.mxu0 0.0
    %2259 = vmatpush1.msra.mxu0 0.0
    %2260 = vmatprep.subr.mxu0 0.0
    %2261 = vmatpush1.msra.mxu0 0.0
    %2262 = vmatprep.subr.mxu0 0.0
    %2263 = vmatpush1.msra.mxu0 0.0
    %2264 = vmatprep.subr.mxu0 0.0
    %2265 = vmatpush1.msra.mxu0 0.0
    %2266 = vmatprep.subr.mxu0 0.0
    %2267 = vmatpush1.msra.mxu0 0.0
    %2268 = vmatprep.subr.mxu0 0.0
    %2269 = vmatpush1.msra.mxu0 0.0
    %2270 = vmatprep.subr.mxu0 0.0
    %2271 = vmatpush1.msra.mxu0 0.0
    %2272 = vmatprep.subr.mxu0 0.0
    %2273 = vmatpush1.msra.mxu0 0.0
    %2274 = vmatprep.subr.mxu0 0.0
    %2275 = vmatpush1.msra.mxu0 0.0
    %2276 = vmatprep.subr.mxu0 0.0
    %2277 = vmatpush1.msra.mxu0 0.0
    %2278 = vmatprep.subr.mxu0 0.0
    %2279 = vmatpush1.msra.mxu0 0.0
    %2280 = vmatprep.subr.mxu0 0.0
    %2281 = vmatpush1.msra.mxu0 0.0
    %2282 = vmatprep.subr.mxu0 0.0
    %2283 = vmatpush1.msra.mxu0 0.0
    %2284 = vmatprep.subr.mxu0 0.0
    %2285 = vmatpush1.msra.mxu0 0.0
    %2286 = vmatprep.subr.mxu0 0.0
    %2287 = vmatpush1.msra.mxu0 0.0
    %2288 = vmatprep.subr.mxu0 0.0
    %2289 = vmatpush1.msra.mxu0 0.0
    %2290 = vmatprep.mubr.f32.mxu0 0.0
    %2291 = vmatmul.mubr.f32.gmra.mrb[0].mxu0 %v2221
    %v2292 = vpop.f32.mrb[0].mxu0
    %v2293 = vadd.f32 0.0, %v2292
    %v2294 = vpop.f32.mrb[0].mxu0
    %2295 = vmatprep.mubr.f32.mxu0 0.0
    %2296 = vmatmul.mubr.f32.gmra.mrb[0].mxu0 %v2224
    %v2297 = vpop.f32.mrb[0].mxu0
    %v2298 = vadd.f32 0.0, %v2297
    %v2299 = vpop.f32.mrb[0].mxu0
    %2300 = vdwg.mxu0
    %s2301 = scalar_lea.vmem [#allocation19], 256
    %v2302 = vld [vmem:[%s2301] sm:$0xff]
    %v2303 = vld [vmem:[%s2301 + $0x8] sm:$0xff]
    %v2304 = vld [vmem:[%s2301 + $0x10] sm:$0xff]
    %v2305 = vld [vmem:[%s2301 + $0x18] sm:$0xff]
    %v2306 = vld [vmem:[%s2301 + $0x20] sm:$0xff]
    %v2307 = vld [vmem:[%s2301 + $0x28] sm:$0xff]
    %v2308 = vld [vmem:[%s2301 + $0x30] sm:$0xff]
    %v2309 = vld [vmem:[%s2301 + $0x38] sm:$0xff]
    %v2310 = vld [vmem:[%s2301 + $0x40] sm:$0xff]
    %v2311 = vld [vmem:[%s2301 + $0x48] sm:$0xff]
    %v2312 = vld [vmem:[%s2301 + $0x50] sm:$0xff]
    %v2313 = vld [vmem:[%s2301 + $0x58] sm:$0xff]
    %v2314 = vld [vmem:[%s2301 + $0x60] sm:$0xff]
    %v2315 = vld [vmem:[%s2301 + $0x68] sm:$0xff]
    %v2316 = vld [vmem:[%s2301 + $0x70] sm:$0xff]
    %v2317 = vld [vmem:[%s2301 + $0x78] sm:$0xff]
    %2318 = vmatprep.subr.mxu0 0.0
    %2319 = vmatpush1.msra.mxu0 %v2302
    %2320 = vmatprep.subr.mxu0 0.0
    %2321 = vmatpush1.msra.mxu0 %v2303
    %2322 = vmatprep.subr.mxu0 0.0
    %2323 = vmatpush1.msra.mxu0 %v2304
    %2324 = vmatprep.subr.mxu0 0.0
    %2325 = vmatpush1.msra.mxu0 %v2305
    %2326 = vmatprep.subr.mxu0 0.0
    %2327 = vmatpush1.msra.mxu0 %v2306
    %2328 = vmatprep.subr.mxu0 0.0
    %2329 = vmatpush1.msra.mxu0 %v2307
    %2330 = vmatprep.subr.mxu0 0.0
    %2331 = vmatpush1.msra.mxu0 %v2308
    %2332 = vmatprep.subr.mxu0 0.0
    %2333 = vmatpush1.msra.mxu0 %v2309
    %2334 = vmatprep.subr.mxu0 0.0
    %2335 = vmatpush1.msra.mxu0 %v2310
    %2336 = vmatprep.subr.mxu0 0.0
    %2337 = vmatpush1.msra.mxu0 %v2311
    %2338 = vmatprep.subr.mxu0 0.0
    %2339 = vmatpush1.msra.mxu0 %v2312
    %2340 = vmatprep.subr.mxu0 0.0
    %2341 = vmatpush1.msra.mxu0 %v2313
    %2342 = vmatprep.subr.mxu0 0.0
    %2343 = vmatpush1.msra.mxu0 %v2314
    %2344 = vmatprep.subr.mxu0 0.0
    %2345 = vmatpush1.msra.mxu0 %v2315
    %2346 = vmatprep.subr.mxu0 0.0
    %2347 = vmatpush1.msra.mxu0 %v2316
    %2348 = vmatprep.subr.mxu0 0.0
    %2349 = vmatpush1.msra.mxu0 %v2317
    %2350 = vmatprep.subr.mxu0 0.0
    %2351 = vmatpush1.msra.mxu0 0.0
    %2352 = vmatprep.subr.mxu0 0.0
    %2353 = vmatpush1.msra.mxu0 0.0
    %2354 = vmatprep.subr.mxu0 0.0
    %2355 = vmatpush1.msra.mxu0 0.0
    %2356 = vmatprep.subr.mxu0 0.0
    %2357 = vmatpush1.msra.mxu0 0.0
    %2358 = vmatprep.subr.mxu0 0.0
    %2359 = vmatpush1.msra.mxu0 0.0
    %2360 = vmatprep.subr.mxu0 0.0
    %2361 = vmatpush1.msra.mxu0 0.0
    %2362 = vmatprep.subr.mxu0 0.0
    %2363 = vmatpush1.msra.mxu0 0.0
    %2364 = vmatprep.subr.mxu0 0.0
    %2365 = vmatpush1.msra.mxu0 0.0
    %2366 = vmatprep.subr.mxu0 0.0
    %2367 = vmatpush1.msra.mxu0 0.0
    %2368 = vmatprep.subr.mxu0 0.0
    %2369 = vmatpush1.msra.mxu0 0.0
    %2370 = vmatprep.subr.mxu0 0.0
    %2371 = vmatpush1.msra.mxu0 0.0
    %2372 = vmatprep.subr.mxu0 0.0
    %2373 = vmatpush1.msra.mxu0 0.0
    %2374 = vmatprep.subr.mxu0 0.0
    %2375 = vmatpush1.msra.mxu0 0.0
    %2376 = vmatprep.subr.mxu0 0.0
    %2377 = vmatpush1.msra.mxu0 0.0
    %2378 = vmatprep.subr.mxu0 0.0
    %2379 = vmatpush1.msra.mxu0 0.0
    %2380 = vmatprep.subr.mxu0 0.0
    %2381 = vmatpush1.msra.mxu0 0.0
    %2382 = vmatprep.mubr.f32.mxu0 0.0
    %2383 = vmatmul.mubr.f32.gmra.mrb[0].mxu0 %v2293
    %v2384 = vpop.f32.mrb[0].mxu0
    %v2385 = vadd.f32 0.0, %v2384
    %v2386 = vpop.f32.mrb[0].mxu0
    %2387 = vmatprep.mubr.f32.mxu0 0.0
    %2388 = vmatmul.mubr.f32.gmra.mrb[0].mxu0 %v2298
    %v2389 = vpop.f32.mrb[0].mxu0
    %v2390 = vadd.f32 0.0, %v2389
    %v2391 = vpop.f32.mrb[0].mxu0
    %2392 = vdwg.mxu0
    %v2393 = vadd.f32 %v2209, %v2385
    %v2394 = vadd.f32 %v2214, %v2390
    %v2395 = vld [vmem:[%s55] sm:$0x1]
    %v2397 = vlaneseq
    %v2398 = vshrl.u32 %v2397, 7
    %v2399 = vsub.s32 0, %v2398
    %v2400 = vrot.slane %v2395, %v2399
    %v2402 = vadd.f32 %v2393, %v2400
    %v2403 = vadd.f32 %v2394, %v2400
    %v2404 = vmax.f32 %v2402, 0.0
    %v2405 = vmax.f32 %v2403, 0.0
    %v2406 = vld [vmem:[#allocation23] sm:$0xff]
    %vm2407 = vcmask 130048
    %v2409 = vsel %vm2407, %v2406, 0
    %2411 = vmatprep.subr.mxu0 0.0
    %2412 = vmatpush1.msra.mxu0 %v2404
    %2413 = vmatprep.subr.mxu0 0.0
    %2414 = vmatpush1.msra.mxu0 %v2405
    %2415 = vmatprep.subr.mxu0 0.0
    %2416 = vmatpush1.msra.mxu0 0.0
    %2417 = vmatprep.subr.mxu0 0.0
    %2418 = vmatpush1.msra.mxu0 0.0
    %2419 = vmatprep.subr.mxu0 0.0
    %2420 = vmatpush1.msra.mxu0 0.0
    %2421 = vmatprep.subr.mxu0 0.0
    %2422 = vmatpush1.msra.mxu0 0.0
    %2423 = vmatprep.subr.mxu0 0.0
    %2424 = vmatpush1.msra.mxu0 0.0
    %2425 = vmatprep.subr.mxu0 0.0
    %2426 = vmatpush1.msra.mxu0 0.0
    %2427 = vmatprep.subr.mxu0 0.0
    %2428 = vmatpush1.msra.mxu0 0.0
    %2429 = vmatprep.subr.mxu0 0.0
    %2430 = vmatpush1.msra.mxu0 0.0
    %2431 = vmatprep.subr.mxu0 0.0
    %2432 = vmatpush1.msra.mxu0 0.0
    %2433 = vmatprep.subr.mxu0 0.0
    %2434 = vmatpush1.msra.mxu0 0.0
    %2435 = vmatprep.subr.mxu0 0.0
    %2436 = vmatpush1.msra.mxu0 0.0
    %2437 = vmatprep.subr.mxu0 0.0
    %2438 = vmatpush1.msra.mxu0 0.0
    %2439 = vmatprep.subr.mxu0 0.0
    %2440 = vmatpush1.msra.mxu0 0.0
    %2441 = vmatprep.subr.mxu0 0.0
    %2442 = vmatpush1.msra.mxu0 0.0
    %2443 = vmatprep.subr.mxu0 0.0
    %2444 = vmatpush1.msra.mxu0 0.0
    %2445 = vmatprep.subr.mxu0 0.0
    %2446 = vmatpush1.msra.mxu0 0.0
    %2447 = vmatprep.subr.mxu0 0.0
    %2448 = vmatpush1.msra.mxu0 0.0
    %2449 = vmatprep.subr.mxu0 0.0
    %2450 = vmatpush1.msra.mxu0 0.0
    %2451 = vmatprep.subr.mxu0 0.0
    %2452 = vmatpush1.msra.mxu0 0.0
    %2453 = vmatprep.subr.mxu0 0.0
    %2454 = vmatpush1.msra.mxu0 0.0
    %2455 = vmatprep.subr.mxu0 0.0
    %2456 = vmatpush1.msra.mxu0 0.0
    %2457 = vmatprep.subr.mxu0 0.0
    %2458 = vmatpush1.msra.mxu0 0.0
    %2459 = vmatprep.subr.mxu0 0.0
    %2460 = vmatpush1.msra.mxu0 0.0
    %2461 = vmatprep.subr.mxu0 0.0
    %2462 = vmatpush1.msra.mxu0 0.0
    %2463 = vmatprep.subr.mxu0 0.0
    %2464 = vmatpush1.msra.mxu0 0.0
    %2465 = vmatprep.subr.mxu0 0.0
    %2466 = vmatpush1.msra.mxu0 0.0
    %2467 = vmatprep.subr.mxu0 0.0
    %2468 = vmatpush1.msra.mxu0 0.0
    %2469 = vmatprep.subr.mxu0 0.0
    %2470 = vmatpush1.msra.mxu0 0.0
    %2471 = vmatprep.subr.mxu0 0.0
    %2472 = vmatpush1.msra.mxu0 0.0
    %2473 = vmatprep.subr.mxu0 0.0
    %2474 = vmatpush1.msra.mxu0 0.0
    %2475 = vmatprep.mubr.f32.mxu0 0.0
    %2476 = vmatmul.mubr.f32.gmra.mrb[0].mxu0 %v2409
    %v2477 = vpop.f32.mrb[0].mxu0
    %v2478 = vadd.f32 0.0, %v2477
    %v2479 = vpop.f32.mrb[0].mxu0
    %2480 = vdwg.mxu0
    %v2481 = vld [vmem:[#allocation22] sm:$0xff]
    %v2482 = vld [vmem:[#allocation22 + $0x8] sm:$0xff]
    %v2483 = vld [vmem:[#allocation22 + $0x10] sm:$0xff]
    %v2484 = vld [vmem:[#allocation22 + $0x18] sm:$0xff]
    %v2485 = vld [vmem:[#allocation22 + $0x20] sm:$0xff]
    %v2486 = vld [vmem:[#allocation22 + $0x28] sm:$0xff]
    %v2487 = vld [vmem:[#allocation22 + $0x30] sm:$0xff]
    %v2488 = vld [vmem:[#allocation22 + $0x38] sm:$0xff]
    %v2489 = vld [vmem:[#allocation22 + $0x40] sm:$0xff]
    %v2490 = vld [vmem:[#allocation22 + $0x48] sm:$0xff]
    %v2491 = vld [vmem:[#allocation22 + $0x50] sm:$0xff]
    %v2492 = vld [vmem:[#allocation22 + $0x58] sm:$0xff]
    %v2493 = vld [vmem:[#allocation22 + $0x60] sm:$0xff]
    %v2494 = vld [vmem:[#allocation22 + $0x68] sm:$0xff]
    %v2495 = vld [vmem:[#allocation22 + $0x70] sm:$0xff]
    %v2496 = vld [vmem:[#allocation22 + $0x78] sm:$0xff]
    %s2497 = scalar_lea.vmem [#allocation23], 8
    %v2498 = vld [vmem:[%s2497] sm:$0xff]
    %v2500 = vsel %vm2407, %v2498, 0
    %2502 = vmatprep.subr.mxu0 0.0
    %2503 = vmatpush1.msra.mxu0 %v2404
    %2504 = vmatprep.subr.mxu0 0.0
    %2505 = vmatpush1.msra.mxu0 %v2405
    %2506 = vmatprep.subr.mxu0 0.0
    %2507 = vmatpush1.msra.mxu0 0.0
    %2508 = vmatprep.subr.mxu0 0.0
    %2509 = vmatpush1.msra.mxu0 0.0
    %2510 = vmatprep.subr.mxu0 0.0
    %2511 = vmatpush1.msra.mxu0 0.0
    %2512 = vmatprep.subr.mxu0 0.0
    %2513 = vmatpush1.msra.mxu0 0.0
    %2514 = vmatprep.subr.mxu0 0.0
    %2515 = vmatpush1.msra.mxu0 0.0
    %2516 = vmatprep.subr.mxu0 0.0
    %2517 = vmatpush1.msra.mxu0 0.0
    %2518 = vmatprep.subr.mxu0 0.0
    %2519 = vmatpush1.msra.mxu0 0.0
    %2520 = vmatprep.subr.mxu0 0.0
    %2521 = vmatpush1.msra.mxu0 0.0
    %2522 = vmatprep.subr.mxu0 0.0
    %2523 = vmatpush1.msra.mxu0 0.0
    %2524 = vmatprep.subr.mxu0 0.0
    %2525 = vmatpush1.msra.mxu0 0.0
    %2526 = vmatprep.subr.mxu0 0.0
    %2527 = vmatpush1.msra.mxu0 0.0
    %2528 = vmatprep.subr.mxu0 0.0
    %2529 = vmatpush1.msra.mxu0 0.0
    %2530 = vmatprep.subr.mxu0 0.0
    %2531 = vmatpush1.msra.mxu0 0.0
    %2532 = vmatprep.subr.mxu0 0.0
    %2533 = vmatpush1.msra.mxu0 0.0
    %2534 = vmatprep.subr.mxu0 0.0
    %2535 = vmatpush1.msra.mxu0 0.0
    %2536 = vmatprep.subr.mxu0 0.0
    %2537 = vmatpush1.msra.mxu0 0.0
    %2538 = vmatprep.subr.mxu0 0.0
    %2539 = vmatpush1.msra.mxu0 0.0
    %2540 = vmatprep.subr.mxu0 0.0
    %2541 = vmatpush1.msra.mxu0 0.0
    %2542 = vmatprep.subr.mxu0 0.0
    %2543 = vmatpush1.msra.mxu0 0.0
    %2544 = vmatprep.subr.mxu0 0.0
    %2545 = vmatpush1.msra.mxu0 0.0
    %2546 = vmatprep.subr.mxu0 0.0
    %2547 = vmatpush1.msra.mxu0 0.0
    %2548 = vmatprep.subr.mxu0 0.0
    %2549 = vmatpush1.msra.mxu0 0.0
    %2550 = vmatprep.subr.mxu0 0.0
    %2551 = vmatpush1.msra.mxu0 0.0
    %2552 = vmatprep.subr.mxu0 0.0
    %2553 = vmatpush1.msra.mxu0 0.0
    %2554 = vmatprep.subr.mxu0 0.0
    %2555 = vmatpush1.msra.mxu0 0.0
    %2556 = vmatprep.subr.mxu0 0.0
    %2557 = vmatpush1.msra.mxu0 0.0
    %2558 = vmatprep.subr.mxu0 0.0
    %2559 = vmatpush1.msra.mxu0 0.0
    %2560 = vmatprep.subr.mxu0 0.0
    %2561 = vmatpush1.msra.mxu0 0.0
    %2562 = vmatprep.subr.mxu0 0.0
    %2563 = vmatpush1.msra.mxu0 0.0
    %2564 = vmatprep.subr.mxu0 0.0
    %2565 = vmatpush1.msra.mxu0 0.0
    %2566 = vmatprep.mubr.f32.mxu0 0.0
    %2567 = vmatmul.mubr.f32.gmra.mrb[0].mxu0 %v2500
    %v2568 = vpop.f32.mrb[0].mxu0
    %v2569 = vadd.f32 0.0, %v2568
    %v2570 = vpop.f32.mrb[0].mxu0
    %2571 = vdwg.mxu0
    %s2572 = scalar_lea.vmem [#allocation22], 128
    %v2573 = vld [vmem:[%s2572] sm:$0xff]
    %v2574 = vld [vmem:[%s2572 + $0x8] sm:$0xff]
    %v2575 = vld [vmem:[%s2572 + $0x10] sm:$0xff]
    %v2576 = vld [vmem:[%s2572 + $0x18] sm:$0xff]
    %v2577 = vld [vmem:[%s2572 + $0x20] sm:$0xff]
    %v2578 = vld [vmem:[%s2572 + $0x28] sm:$0xff]
    %v2579 = vld [vmem:[%s2572 + $0x30] sm:$0xff]
    %v2580 = vld [vmem:[%s2572 + $0x38] sm:$0xff]
    %v2581 = vld [vmem:[%s2572 + $0x40] sm:$0xff]
    %v2582 = vld [vmem:[%s2572 + $0x48] sm:$0xff]
    %v2583 = vld [vmem:[%s2572 + $0x50] sm:$0xff]
    %v2584 = vld [vmem:[%s2572 + $0x58] sm:$0xff]
    %v2585 = vld [vmem:[%s2572 + $0x60] sm:$0xff]
    %v2586 = vld [vmem:[%s2572 + $0x68] sm:$0xff]
    %v2587 = vld [vmem:[%s2572 + $0x70] sm:$0xff]
    %v2588 = vld [vmem:[%s2572 + $0x78] sm:$0xff]
    %2589 = vmatprep.subr.mxu0 0.0
    %2590 = vmatpush1.msra.mxu0 %v2573
    %2591 = vmatprep.subr.mxu0 0.0
    %2592 = vmatpush1.msra.mxu0 %v2574
    %2593 = vmatprep.subr.mxu0 0.0
    %2594 = vmatpush1.msra.mxu0 %v2575
    %2595 = vmatprep.subr.mxu0 0.0
    %2596 = vmatpush1.msra.mxu0 %v2576
    %2597 = vmatprep.subr.mxu0 0.0
    %2598 = vmatpush1.msra.mxu0 %v2577
    %2599 = vmatprep.subr.mxu0 0.0
    %2600 = vmatpush1.msra.mxu0 %v2578
    %2601 = vmatprep.subr.mxu0 0.0
    %2602 = vmatpush1.msra.mxu0 %v2579
    %2603 = vmatprep.subr.mxu0 0.0
    %2604 = vmatpush1.msra.mxu0 %v2580
    %2605 = vmatprep.subr.mxu0 0.0
    %2606 = vmatpush1.msra.mxu0 %v2581
    %2607 = vmatprep.subr.mxu0 0.0
    %2608 = vmatpush1.msra.mxu0 %v2582
    %2609 = vmatprep.subr.mxu0 0.0
    %2610 = vmatpush1.msra.mxu0 %v2583
    %2611 = vmatprep.subr.mxu0 0.0
    %2612 = vmatpush1.msra.mxu0 %v2584
    %2613 = vmatprep.subr.mxu0 0.0
    %2614 = vmatpush1.msra.mxu0 %v2585
    %2615 = vmatprep.subr.mxu0 0.0
    %2616 = vmatpush1.msra.mxu0 %v2586
    %2617 = vmatprep.subr.mxu0 0.0
    %2618 = vmatpush1.msra.mxu0 %v2587
    %2619 = vmatprep.subr.mxu0 0.0
    %2620 = vmatpush1.msra.mxu0 %v2588
    %2621 = vmatprep.subr.mxu0 0.0
    %2622 = vmatpush1.msra.mxu0 0.0
    %2623 = vmatprep.subr.mxu0 0.0
    %2624 = vmatpush1.msra.mxu0 0.0
    %2625 = vmatprep.subr.mxu0 0.0
    %2626 = vmatpush1.msra.mxu0 0.0
    %2627 = vmatprep.subr.mxu0 0.0
    %2628 = vmatpush1.msra.mxu0 0.0
    %2629 = vmatprep.subr.mxu0 0.0
    %2630 = vmatpush1.msra.mxu0 0.0
    %2631 = vmatprep.subr.mxu0 0.0
    %2632 = vmatpush1.msra.mxu0 0.0
    %2633 = vmatprep.subr.mxu0 0.0
    %2634 = vmatpush1.msra.mxu0 0.0
    %2635 = vmatprep.subr.mxu0 0.0
    %2636 = vmatpush1.msra.mxu0 0.0
    %2637 = vmatprep.subr.mxu0 0.0
    %2638 = vmatpush1.msra.mxu0 0.0
    %2639 = vmatprep.subr.mxu0 0.0
    %2640 = vmatpush1.msra.mxu0 0.0
    %2641 = vmatprep.subr.mxu0 0.0
    %2642 = vmatpush1.msra.mxu0 0.0
    %2643 = vmatprep.subr.mxu0 0.0
    %2644 = vmatpush1.msra.mxu0 0.0
    %2645 = vmatprep.subr.mxu0 0.0
    %2646 = vmatpush1.msra.mxu0 0.0
    %2647 = vmatprep.subr.mxu0 0.0
    %2648 = vmatpush1.msra.mxu0 0.0
    %2649 = vmatprep.subr.mxu0 0.0
    %2650 = vmatpush1.msra.mxu0 0.0
    %2651 = vmatprep.subr.mxu0 0.0
    %2652 = vmatpush1.msra.mxu0 0.0
    %2653 = vmatprep.mubr.f32.mxu0 0.0
    %2654 = vmatmul.mubr.f32.gmra.mrb[0].mxu0 %v2569
    %v2655 = vpop.f32.mrb[0].mxu0
    %v2656 = vadd.f32 0.0, %v2655
    %v2657 = vpop.f32.mrb[0].mxu0
    %2658 = vdwg.mxu0
    %2659 = vmatprep.subr.mxu0 0.0
    %2660 = vmatpush1.msra.mxu0 %v2481
    %2661 = vmatprep.subr.mxu0 0.0
    %2662 = vmatpush1.msra.mxu0 %v2482
    %2663 = vmatprep.subr.mxu0 0.0
    %2664 = vmatpush1.msra.mxu0 %v2483
    %2665 = vmatprep.subr.mxu0 0.0
    %2666 = vmatpush1.msra.mxu0 %v2484
    %2667 = vmatprep.subr.mxu0 0.0
    %2668 = vmatpush1.msra.mxu0 %v2485
    %2669 = vmatprep.subr.mxu0 0.0
    %2670 = vmatpush1.msra.mxu0 %v2486
    %2671 = vmatprep.subr.mxu0 0.0
    %2672 = vmatpush1.msra.mxu0 %v2487
    %2673 = vmatprep.subr.mxu0 0.0
    %2674 = vmatpush1.msra.mxu0 %v2488
    %2675 = vmatprep.subr.mxu0 0.0
    %2676 = vmatpush1.msra.mxu0 %v2489
    %2677 = vmatprep.subr.mxu0 0.0
    %2678 = vmatpush1.msra.mxu0 %v2490
    %2679 = vmatprep.subr.mxu0 0.0
    %2680 = vmatpush1.msra.mxu0 %v2491
    %2681 = vmatprep.subr.mxu0 0.0
    %2682 = vmatpush1.msra.mxu0 %v2492
    %2683 = vmatprep.subr.mxu0 0.0
    %2684 = vmatpush1.msra.mxu0 %v2493
    %2685 = vmatprep.subr.mxu0 0.0
    %2686 = vmatpush1.msra.mxu0 %v2494
    %2687 = vmatprep.subr.mxu0 0.0
    %2688 = vmatpush1.msra.mxu0 %v2495
    %2689 = vmatprep.subr.mxu0 0.0
    %2690 = vmatpush1.msra.mxu0 %v2496
    %2691 = vmatprep.subr.mxu0 0.0
    %2692 = vmatpush1.msra.mxu0 0.0
    %2693 = vmatprep.subr.mxu0 0.0
    %2694 = vmatpush1.msra.mxu0 0.0
    %2695 = vmatprep.subr.mxu0 0.0
    %2696 = vmatpush1.msra.mxu0 0.0
    %2697 = vmatprep.subr.mxu0 0.0
    %2698 = vmatpush1.msra.mxu0 0.0
    %2699 = vmatprep.subr.mxu0 0.0
    %2700 = vmatpush1.msra.mxu0 0.0
    %2701 = vmatprep.subr.mxu0 0.0
    %2702 = vmatpush1.msra.mxu0 0.0
    %2703 = vmatprep.subr.mxu0 0.0
    %2704 = vmatpush1.msra.mxu0 0.0
    %2705 = vmatprep.subr.mxu0 0.0
    %2706 = vmatpush1.msra.mxu0 0.0
    %2707 = vmatprep.subr.mxu0 0.0
    %2708 = vmatpush1.msra.mxu0 0.0
    %2709 = vmatprep.subr.mxu0 0.0
    %2710 = vmatpush1.msra.mxu0 0.0
    %2711 = vmatprep.subr.mxu0 0.0
    %2712 = vmatpush1.msra.mxu0 0.0
    %2713 = vmatprep.subr.mxu0 0.0
    %2714 = vmatpush1.msra.mxu0 0.0
    %2715 = vmatprep.subr.mxu0 0.0
    %2716 = vmatpush1.msra.mxu0 0.0
    %2717 = vmatprep.subr.mxu0 0.0
    %2718 = vmatpush1.msra.mxu0 0.0
    %2719 = vmatprep.subr.mxu0 0.0
    %2720 = vmatpush1.msra.mxu0 0.0
    %2721 = vmatprep.subr.mxu0 0.0
    %2722 = vmatpush1.msra.mxu0 0.0
    %2723 = vmatprep.mubr.f32.mxu0 0.0
    %2724 = vmatmul.mubr.f32.gmra.mrb[0].mxu0 %v2478
    %v2725 = vpop.f32.mrb[0].mxu0
    %v2726 = vadd.f32 %v2656, %v2725
    %v2727 = vpop.f32.mrb[0].mxu0
    %2728 = vdwg.mxu0
    %s2729 = scalar_lea.vmem [#allocation23], 16
    %v2730 = vld [vmem:[%s2729] sm:$0xff]
    %v2732 = vsel %vm2407, %v2730, 0
    %2734 = vmatprep.subr.mxu0 0.0
    %2735 = vmatpush1.msra.mxu0 %v2404
    %2736 = vmatprep.subr.mxu0 0.0
    %2737 = vmatpush1.msra.mxu0 %v2405
    %2738 = vmatprep.subr.mxu0 0.0
    %2739 = vmatpush1.msra.mxu0 0.0
    %2740 = vmatprep.subr.mxu0 0.0
    %2741 = vmatpush1.msra.mxu0 0.0
    %2742 = vmatprep.subr.mxu0 0.0
    %2743 = vmatpush1.msra.mxu0 0.0
    %2744 = vmatprep.subr.mxu0 0.0
    %2745 = vmatpush1.msra.mxu0 0.0
    %2746 = vmatprep.subr.mxu0 0.0
    %2747 = vmatpush1.msra.mxu0 0.0
    %2748 = vmatprep.subr.mxu0 0.0
    %2749 = vmatpush1.msra.mxu0 0.0
    %2750 = vmatprep.subr.mxu0 0.0
    %2751 = vmatpush1.msra.mxu0 0.0
    %2752 = vmatprep.subr.mxu0 0.0
    %2753 = vmatpush1.msra.mxu0 0.0
    %2754 = vmatprep.subr.mxu0 0.0
    %2755 = vmatpush1.msra.mxu0 0.0
    %2756 = vmatprep.subr.mxu0 0.0
    %2757 = vmatpush1.msra.mxu0 0.0
    %2758 = vmatprep.subr.mxu0 0.0
    %2759 = vmatpush1.msra.mxu0 0.0
    %2760 = vmatprep.subr.mxu0 0.0
    %2761 = vmatpush1.msra.mxu0 0.0
    %2762 = vmatprep.subr.mxu0 0.0
    %2763 = vmatpush1.msra.mxu0 0.0
    %2764 = vmatprep.subr.mxu0 0.0
    %2765 = vmatpush1.msra.mxu0 0.0
    %2766 = vmatprep.subr.mxu0 0.0
    %2767 = vmatpush1.msra.mxu0 0.0
    %2768 = vmatprep.subr.mxu0 0.0
    %2769 = vmatpush1.msra.mxu0 0.0
    %2770 = vmatprep.subr.mxu0 0.0
    %2771 = vmatpush1.msra.mxu0 0.0
    %2772 = vmatprep.subr.mxu0 0.0
    %2773 = vmatpush1.msra.mxu0 0.0
    %2774 = vmatprep.subr.mxu0 0.0
    %2775 = vmatpush1.msra.mxu0 0.0
    %2776 = vmatprep.subr.mxu0 0.0
    %2777 = vmatpush1.msra.mxu0 0.0
    %2778 = vmatprep.subr.mxu0 0.0
    %2779 = vmatpush1.msra.mxu0 0.0
    %2780 = vmatprep.subr.mxu0 0.0
    %2781 = vmatpush1.msra.mxu0 0.0
    %2782 = vmatprep.subr.mxu0 0.0
    %2783 = vmatpush1.msra.mxu0 0.0
    %2784 = vmatprep.subr.mxu0 0.0
    %2785 = vmatpush1.msra.mxu0 0.0
    %2786 = vmatprep.subr.mxu0 0.0
    %2787 = vmatpush1.msra.mxu0 0.0
    %2788 = vmatprep.subr.mxu0 0.0
    %2789 = vmatpush1.msra.mxu0 0.0
    %2790 = vmatprep.subr.mxu0 0.0
    %2791 = vmatpush1.msra.mxu0 0.0
    %2792 = vmatprep.subr.mxu0 0.0
    %2793 = vmatpush1.msra.mxu0 0.0
    %2794 = vmatprep.subr.mxu0 0.0
    %2795 = vmatpush1.msra.mxu0 0.0
    %2796 = vmatprep.subr.mxu0 0.0
    %2797 = vmatpush1.msra.mxu0 0.0
    %2798 = vmatprep.mubr.f32.mxu0 0.0
    %2799 = vmatmul.mubr.f32.gmra.mrb[0].mxu0 %v2732
    %v2800 = vpop.f32.mrb[0].mxu0
    %v2801 = vadd.f32 0.0, %v2800
    %v2802 = vpop.f32.mrb[0].mxu0
    %2803 = vdwg.mxu0
    %s2804 = scalar_lea.vmem [#allocation22], 256
    %v2805 = vld [vmem:[%s2804] sm:$0xff]
    %v2806 = vld [vmem:[%s2804 + $0x8] sm:$0xff]
    %v2807 = vld [vmem:[%s2804 + $0x10] sm:$0xff]
    %v2808 = vld [vmem:[%s2804 + $0x18] sm:$0xff]
    %v2809 = vld [vmem:[%s2804 + $0x20] sm:$0xff]
    %v2810 = vld [vmem:[%s2804 + $0x28] sm:$0xff]
    %v2811 = vld [vmem:[%s2804 + $0x30] sm:$0xff]
    %v2812 = vld [vmem:[%s2804 + $0x38] sm:$0xff]
    %v2813 = vld [vmem:[%s2804 + $0x40] sm:$0xff]
    %v2814 = vld [vmem:[%s2804 + $0x48] sm:$0xff]
    %v2815 = vld [vmem:[%s2804 + $0x50] sm:$0xff]
    %v2816 = vld [vmem:[%s2804 + $0x58] sm:$0xff]
    %v2817 = vld [vmem:[%s2804 + $0x60] sm:$0xff]
    %v2818 = vld [vmem:[%s2804 + $0x68] sm:$0xff]
    %v2819 = vld [vmem:[%s2804 + $0x70] sm:$0xff]
    %v2820 = vld [vmem:[%s2804 + $0x78] sm:$0xff]
    %2821 = vmatprep.subr.mxu0 0.0
    %2822 = vmatpush1.msra.mxu0 %v2805
    %2823 = vmatprep.subr.mxu0 0.0
    %2824 = vmatpush1.msra.mxu0 %v2806
    %2825 = vmatprep.subr.mxu0 0.0
    %2826 = vmatpush1.msra.mxu0 %v2807
    %2827 = vmatprep.subr.mxu0 0.0
    %2828 = vmatpush1.msra.mxu0 %v2808
    %2829 = vmatprep.subr.mxu0 0.0
    %2830 = vmatpush1.msra.mxu0 %v2809
    %2831 = vmatprep.subr.mxu0 0.0
    %2832 = vmatpush1.msra.mxu0 %v2810
    %2833 = vmatprep.subr.mxu0 0.0
    %2834 = vmatpush1.msra.mxu0 %v2811
    %2835 = vmatprep.subr.mxu0 0.0
    %2836 = vmatpush1.msra.mxu0 %v2812
    %2837 = vmatprep.subr.mxu0 0.0
    %2838 = vmatpush1.msra.mxu0 %v2813
    %2839 = vmatprep.subr.mxu0 0.0
    %2840 = vmatpush1.msra.mxu0 %v2814
    %2841 = vmatprep.subr.mxu0 0.0
    %2842 = vmatpush1.msra.mxu0 %v2815
    %2843 = vmatprep.subr.mxu0 0.0
    %2844 = vmatpush1.msra.mxu0 %v2816
    %2845 = vmatprep.subr.mxu0 0.0
    %2846 = vmatpush1.msra.mxu0 %v2817
    %2847 = vmatprep.subr.mxu0 0.0
    %2848 = vmatpush1.msra.mxu0 %v2818
    %2849 = vmatprep.subr.mxu0 0.0
    %2850 = vmatpush1.msra.mxu0 %v2819
    %2851 = vmatprep.subr.mxu0 0.0
    %2852 = vmatpush1.msra.mxu0 %v2820
    %2853 = vmatprep.subr.mxu0 0.0
    %2854 = vmatpush1.msra.mxu0 0.0
    %2855 = vmatprep.subr.mxu0 0.0
    %2856 = vmatpush1.msra.mxu0 0.0
    %2857 = vmatprep.subr.mxu0 0.0
    %2858 = vmatpush1.msra.mxu0 0.0
    %2859 = vmatprep.subr.mxu0 0.0
    %2860 = vmatpush1.msra.mxu0 0.0
    %2861 = vmatprep.subr.mxu0 0.0
    %2862 = vmatpush1.msra.mxu0 0.0
    %2863 = vmatprep.subr.mxu0 0.0
    %2864 = vmatpush1.msra.mxu0 0.0
    %2865 = vmatprep.subr.mxu0 0.0
    %2866 = vmatpush1.msra.mxu0 0.0
    %2867 = vmatprep.subr.mxu0 0.0
    %2868 = vmatpush1.msra.mxu0 0.0
    %2869 = vmatprep.subr.mxu0 0.0
    %2870 = vmatpush1.msra.mxu0 0.0
    %2871 = vmatprep.subr.mxu0 0.0
    %2872 = vmatpush1.msra.mxu0 0.0
    %2873 = vmatprep.subr.mxu0 0.0
    %2874 = vmatpush1.msra.mxu0 0.0
    %2875 = vmatprep.subr.mxu0 0.0
    %2876 = vmatpush1.msra.mxu0 0.0
    %2877 = vmatprep.subr.mxu0 0.0
    %2878 = vmatpush1.msra.mxu0 0.0
    %2879 = vmatprep.subr.mxu0 0.0
    %2880 = vmatpush1.msra.mxu0 0.0
    %2881 = vmatprep.subr.mxu0 0.0
    %2882 = vmatpush1.msra.mxu0 0.0
    %2883 = vmatprep.subr.mxu0 0.0
    %2884 = vmatpush1.msra.mxu0 0.0
    %2885 = vmatprep.mubr.f32.mxu0 0.0
    %2886 = vmatmul.mubr.f32.gmra.mrb[0].mxu0 %v2801
    %v2887 = vpop.f32.mrb[0].mxu0
    %v2888 = vadd.f32 0.0, %v2887
    %v2889 = vpop.f32.mrb[0].mxu0
    %2890 = vdwg.mxu0
    %v2891 = vadd.f32 %v2726, %v2888
    %v2892 = vld [vmem:[%s61] sm:$0x1]
    %v2894 = vlaneseq
    %v2895 = vshrl.u32 %v2894, 7
    %v2896 = vsub.s32 0, %v2895
    %v2897 = vrot.slane %v2892, %v2896
    %v2899 = vadd.f32 %v2891, %v2897
    %v2900 = vmax.f32 %v2899, 0.0
    %v2901 = vld [vmem:[%s65] sm:$0xf]
    %vm2902 = vcmask 64512
    %v2904 = vsel %vm2902, %v2901, 0
    %2906 = vmatprep.subr.mxu0 0.0
    %2907 = vmatpush1.msra.mxu0 %v2900
    %2908 = vmatprep.subr.mxu0 0.0
    %2909 = vmatpush1.msra.mxu0 0.0
    %2910 = vmatprep.subr.mxu0 0.0
    %2911 = vmatpush1.msra.mxu0 0.0
    %2912 = vmatprep.subr.mxu0 0.0
    %2913 = vmatpush1.msra.mxu0 0.0
    %2914 = vmatprep.subr.mxu0 0.0
    %2915 = vmatpush1.msra.mxu0 0.0
    %2916 = vmatprep.subr.mxu0 0.0
    %2917 = vmatpush1.msra.mxu0 0.0
    %2918 = vmatprep.subr.mxu0 0.0
    %2919 = vmatpush1.msra.mxu0 0.0
    %2920 = vmatprep.subr.mxu0 0.0
    %2921 = vmatpush1.msra.mxu0 0.0
    %2922 = vmatprep.subr.mxu0 0.0
    %2923 = vmatpush1.msra.mxu0 0.0
    %2924 = vmatprep.subr.mxu0 0.0
    %2925 = vmatpush1.msra.mxu0 0.0
    %2926 = vmatprep.subr.mxu0 0.0
    %2927 = vmatpush1.msra.mxu0 0.0
    %2928 = vmatprep.subr.mxu0 0.0
    %2929 = vmatpush1.msra.mxu0 0.0
    %2930 = vmatprep.subr.mxu0 0.0
    %2931 = vmatpush1.msra.mxu0 0.0
    %2932 = vmatprep.subr.mxu0 0.0
    %2933 = vmatpush1.msra.mxu0 0.0
    %2934 = vmatprep.subr.mxu0 0.0
    %2935 = vmatpush1.msra.mxu0 0.0
    %2936 = vmatprep.subr.mxu0 0.0
    %2937 = vmatpush1.msra.mxu0 0.0
    %2938 = vmatprep.subr.mxu0 0.0
    %2939 = vmatpush1.msra.mxu0 0.0
    %2940 = vmatprep.subr.mxu0 0.0
    %2941 = vmatpush1.msra.mxu0 0.0
    %2942 = vmatprep.subr.mxu0 0.0
    %2943 = vmatpush1.msra.mxu0 0.0
    %2944 = vmatprep.subr.mxu0 0.0
    %2945 = vmatpush1.msra.mxu0 0.0
    %2946 = vmatprep.subr.mxu0 0.0
    %2947 = vmatpush1.msra.mxu0 0.0
    %2948 = vmatprep.subr.mxu0 0.0
    %2949 = vmatpush1.msra.mxu0 0.0
    %2950 = vmatprep.subr.mxu0 0.0
    %2951 = vmatpush1.msra.mxu0 0.0
    %2952 = vmatprep.subr.mxu0 0.0
    %2953 = vmatpush1.msra.mxu0 0.0
    %2954 = vmatprep.subr.mxu0 0.0
    %2955 = vmatpush1.msra.mxu0 0.0
    %2956 = vmatprep.subr.mxu0 0.0
    %2957 = vmatpush1.msra.mxu0 0.0
    %2958 = vmatprep.subr.mxu0 0.0
    %2959 = vmatpush1.msra.mxu0 0.0
    %2960 = vmatprep.subr.mxu0 0.0
    %2961 = vmatpush1.msra.mxu0 0.0
    %2962 = vmatprep.subr.mxu0 0.0
    %2963 = vmatpush1.msra.mxu0 0.0
    %2964 = vmatprep.subr.mxu0 0.0
    %2965 = vmatpush1.msra.mxu0 0.0
    %2966 = vmatprep.subr.mxu0 0.0
    %2967 = vmatpush1.msra.mxu0 0.0
    %2968 = vmatprep.subr.mxu0 0.0
    %2969 = vmatpush1.msra.mxu0 0.0
    %2970 = vmatprep.mubr.f32.mxu0 0.0
    %2971 = vmatmul.mubr.f32.gmra.mrb[0].mxu0 %v2904
    %v2972 = vpop.f32.mrb[0].mxu0
    %v2973 = vadd.f32 0.0, %v2972
    %v2974 = vpop.f32.mrb[0].mxu0
    %2975 = vdwg.mxu0
    %v2976 = vld [vmem:[#allocation25] sm:$0xff]
    %v2977 = vld [vmem:[#allocation25 + $0x8] sm:$0xff]
    %v2978 = vld [vmem:[#allocation25 + $0x10] sm:$0xff]
    %v2979 = vld [vmem:[#allocation25 + $0x18] sm:$0xff]
    %v2980 = vld [vmem:[#allocation25 + $0x20] sm:$0xff]
    %v2981 = vld [vmem:[#allocation25 + $0x28] sm:$0xff]
    %v2982 = vld [vmem:[#allocation25 + $0x30] sm:$0xff]
    %v2983 = vld [vmem:[#allocation25 + $0x38] sm:$0xff]
    %v2984 = vld [vmem:[#allocation25 + $0x40] sm:$0xff]
    %v2985 = vld [vmem:[#allocation25 + $0x48] sm:$0xff]
    %v2986 = vld [vmem:[#allocation25 + $0x50] sm:$0xff]
    %v2987 = vld [vmem:[#allocation25 + $0x58] sm:$0xff]
    %v2988 = vld [vmem:[#allocation25 + $0x60] sm:$0xff]
    %v2989 = vld [vmem:[#allocation25 + $0x68] sm:$0xff]
    %v2990 = vld [vmem:[#allocation25 + $0x70] sm:$0xff]
    %v2991 = vld [vmem:[#allocation25 + $0x78] sm:$0xff]
    %s2992 = scalar_lea.vmem %s65, 4
    %v2993 = vld [vmem:[%s2992] sm:$0xf]
    %v2995 = vsel %vm2902, %v2993, 0
    %2997 = vmatprep.subr.mxu0 0.0
    %2998 = vmatpush1.msra.mxu0 %v2900
    %2999 = vmatprep.subr.mxu0 0.0
    %3000 = vmatpush1.msra.mxu0 0.0
    %3001 = vmatprep.subr.mxu0 0.0
    %3002 = vmatpush1.msra.mxu0 0.0
    %3003 = vmatprep.subr.mxu0 0.0
    %3004 = vmatpush1.msra.mxu0 0.0
    %3005 = vmatprep.subr.mxu0 0.0
    %3006 = vmatpush1.msra.mxu0 0.0
    %3007 = vmatprep.subr.mxu0 0.0
    %3008 = vmatpush1.msra.mxu0 0.0
    %3009 = vmatprep.subr.mxu0 0.0
    %3010 = vmatpush1.msra.mxu0 0.0
    %3011 = vmatprep.subr.mxu0 0.0
    %3012 = vmatpush1.msra.mxu0 0.0
    %3013 = vmatprep.subr.mxu0 0.0
    %3014 = vmatpush1.msra.mxu0 0.0
    %3015 = vmatprep.subr.mxu0 0.0
    %3016 = vmatpush1.msra.mxu0 0.0
    %3017 = vmatprep.subr.mxu0 0.0
    %3018 = vmatpush1.msra.mxu0 0.0
    %3019 = vmatprep.subr.mxu0 0.0
    %3020 = vmatpush1.msra.mxu0 0.0
    %3021 = vmatprep.subr.mxu0 0.0
    %3022 = vmatpush1.msra.mxu0 0.0
    %3023 = vmatprep.subr.mxu0 0.0
    %3024 = vmatpush1.msra.mxu0 0.0
    %3025 = vmatprep.subr.mxu0 0.0
    %3026 = vmatpush1.msra.mxu0 0.0
    %3027 = vmatprep.subr.mxu0 0.0
    %3028 = vmatpush1.msra.mxu0 0.0
    %3029 = vmatprep.subr.mxu0 0.0
    %3030 = vmatpush1.msra.mxu0 0.0
    %3031 = vmatprep.subr.mxu0 0.0
    %3032 = vmatpush1.msra.mxu0 0.0
    %3033 = vmatprep.subr.mxu0 0.0
    %3034 = vmatpush1.msra.mxu0 0.0
    %3035 = vmatprep.subr.mxu0 0.0
    %3036 = vmatpush1.msra.mxu0 0.0
    %3037 = vmatprep.subr.mxu0 0.0
    %3038 = vmatpush1.msra.mxu0 0.0
    %3039 = vmatprep.subr.mxu0 0.0
    %3040 = vmatpush1.msra.mxu0 0.0
    %3041 = vmatprep.subr.mxu0 0.0
    %3042 = vmatpush1.msra.mxu0 0.0
    %3043 = vmatprep.subr.mxu0 0.0
    %3044 = vmatpush1.msra.mxu0 0.0
    %3045 = vmatprep.subr.mxu0 0.0
    %3046 = vmatpush1.msra.mxu0 0.0
    %3047 = vmatprep.subr.mxu0 0.0
    %3048 = vmatpush1.msra.mxu0 0.0
    %3049 = vmatprep.subr.mxu0 0.0
    %3050 = vmatpush1.msra.mxu0 0.0
    %3051 = vmatprep.subr.mxu0 0.0
    %3052 = vmatpush1.msra.mxu0 0.0
    %3053 = vmatprep.subr.mxu0 0.0
    %3054 = vmatpush1.msra.mxu0 0.0
    %3055 = vmatprep.subr.mxu0 0.0
    %3056 = vmatpush1.msra.mxu0 0.0
    %3057 = vmatprep.subr.mxu0 0.0
    %3058 = vmatpush1.msra.mxu0 0.0
    %3059 = vmatprep.subr.mxu0 0.0
    %3060 = vmatpush1.msra.mxu0 0.0
    %3061 = vmatprep.mubr.f32.mxu0 0.0
    %3062 = vmatmul.mubr.f32.gmra.mrb[0].mxu0 %v2995
    %v3063 = vpop.f32.mrb[0].mxu0
    %v3064 = vadd.f32 0.0, %v3063
    %v3065 = vpop.f32.mrb[0].mxu0
    %3066 = vdwg.mxu0
    %s3067 = scalar_lea.vmem [#allocation25], 128
    %v3068 = vld [vmem:[%s3067] sm:$0xff]
    %v3069 = vld [vmem:[%s3067 + $0x8] sm:$0xff]
    %v3070 = vld [vmem:[%s3067 + $0x10] sm:$0xff]
    %v3071 = vld [vmem:[%s3067 + $0x18] sm:$0xff]
    %v3072 = vld [vmem:[%s3067 + $0x20] sm:$0xff]
    %v3073 = vld [vmem:[%s3067 + $0x28] sm:$0xff]
    %v3074 = vld [vmem:[%s3067 + $0x30] sm:$0xff]
    %v3075 = vld [vmem:[%s3067 + $0x38] sm:$0xff]
    %v3076 = vld [vmem:[%s3067 + $0x40] sm:$0xff]
    %v3077 = vld [vmem:[%s3067 + $0x48] sm:$0xff]
    %v3078 = vld [vmem:[%s3067 + $0x50] sm:$0xff]
    %v3079 = vld [vmem:[%s3067 + $0x58] sm:$0xff]
    %v3080 = vld [vmem:[%s3067 + $0x60] sm:$0xff]
    %v3081 = vld [vmem:[%s3067 + $0x68] sm:$0xff]
    %v3082 = vld [vmem:[%s3067 + $0x70] sm:$0xff]
    %v3083 = vld [vmem:[%s3067 + $0x78] sm:$0xff]
    %3084 = vmatprep.subr.mxu0 0.0
    %3085 = vmatpush1.msra.mxu0 %v3068
    %3086 = vmatprep.subr.mxu0 0.0
    %3087 = vmatpush1.msra.mxu0 %v3069
    %3088 = vmatprep.subr.mxu0 0.0
    %3089 = vmatpush1.msra.mxu0 %v3070
    %3090 = vmatprep.subr.mxu0 0.0
    %3091 = vmatpush1.msra.mxu0 %v3071
    %3092 = vmatprep.subr.mxu0 0.0
    %3093 = vmatpush1.msra.mxu0 %v3072
    %3094 = vmatprep.subr.mxu0 0.0
    %3095 = vmatpush1.msra.mxu0 %v3073
    %3096 = vmatprep.subr.mxu0 0.0
    %3097 = vmatpush1.msra.mxu0 %v3074
    %3098 = vmatprep.subr.mxu0 0.0
    %3099 = vmatpush1.msra.mxu0 %v3075
    %3100 = vmatprep.subr.mxu0 0.0
    %3101 = vmatpush1.msra.mxu0 %v3076
    %3102 = vmatprep.subr.mxu0 0.0
    %3103 = vmatpush1.msra.mxu0 %v3077
    %3104 = vmatprep.subr.mxu0 0.0
    %3105 = vmatpush1.msra.mxu0 %v3078
    %3106 = vmatprep.subr.mxu0 0.0
    %3107 = vmatpush1.msra.mxu0 %v3079
    %3108 = vmatprep.subr.mxu0 0.0
    %3109 = vmatpush1.msra.mxu0 %v3080
    %3110 = vmatprep.subr.mxu0 0.0
    %3111 = vmatpush1.msra.mxu0 %v3081
    %3112 = vmatprep.subr.mxu0 0.0
    %3113 = vmatpush1.msra.mxu0 %v3082
    %3114 = vmatprep.subr.mxu0 0.0
    %3115 = vmatpush1.msra.mxu0 %v3083
    %3116 = vmatprep.subr.mxu0 0.0
    %3117 = vmatpush1.msra.mxu0 0.0
    %3118 = vmatprep.subr.mxu0 0.0
    %3119 = vmatpush1.msra.mxu0 0.0
    %3120 = vmatprep.subr.mxu0 0.0
    %3121 = vmatpush1.msra.mxu0 0.0
    %3122 = vmatprep.subr.mxu0 0.0
    %3123 = vmatpush1.msra.mxu0 0.0
    %3124 = vmatprep.subr.mxu0 0.0
    %3125 = vmatpush1.msra.mxu0 0.0
    %3126 = vmatprep.subr.mxu0 0.0
    %3127 = vmatpush1.msra.mxu0 0.0
    %3128 = vmatprep.subr.mxu0 0.0
    %3129 = vmatpush1.msra.mxu0 0.0
    %3130 = vmatprep.subr.mxu0 0.0
    %3131 = vmatpush1.msra.mxu0 0.0
    %3132 = vmatprep.subr.mxu0 0.0
    %3133 = vmatpush1.msra.mxu0 0.0
    %3134 = vmatprep.subr.mxu0 0.0
    %3135 = vmatpush1.msra.mxu0 0.0
    %3136 = vmatprep.subr.mxu0 0.0
    %3137 = vmatpush1.msra.mxu0 0.0
    %3138 = vmatprep.subr.mxu0 0.0
    %3139 = vmatpush1.msra.mxu0 0.0
    %3140 = vmatprep.subr.mxu0 0.0
    %3141 = vmatpush1.msra.mxu0 0.0
    %3142 = vmatprep.subr.mxu0 0.0
    %3143 = vmatpush1.msra.mxu0 0.0
    %3144 = vmatprep.subr.mxu0 0.0
    %3145 = vmatpush1.msra.mxu0 0.0
    %3146 = vmatprep.subr.mxu0 0.0
    %3147 = vmatpush1.msra.mxu0 0.0
    %3148 = vmatprep.mubr.f32.mxu0 0.0
    %3149 = vmatmul.mubr.f32.gmra.mrb[0].mxu0 %v3064
    %v3150 = vpop.f32.mrb[0].mxu0
    %v3151 = vadd.f32 0.0, %v3150
    %v3152 = vpop.f32.mrb[0].mxu0
    %3153 = vdwg.mxu0
    %3154 = vmatprep.subr.mxu0 0.0
    %3155 = vmatpush1.msra.mxu0 %v2976
    %3156 = vmatprep.subr.mxu0 0.0
    %3157 = vmatpush1.msra.mxu0 %v2977
    %3158 = vmatprep.subr.mxu0 0.0
    %3159 = vmatpush1.msra.mxu0 %v2978
    %3160 = vmatprep.subr.mxu0 0.0
    %3161 = vmatpush1.msra.mxu0 %v2979
    %3162 = vmatprep.subr.mxu0 0.0
    %3163 = vmatpush1.msra.mxu0 %v2980
    %3164 = vmatprep.subr.mxu0 0.0
    %3165 = vmatpush1.msra.mxu0 %v2981
    %3166 = vmatprep.subr.mxu0 0.0
    %3167 = vmatpush1.msra.mxu0 %v2982
    %3168 = vmatprep.subr.mxu0 0.0
    %3169 = vmatpush1.msra.mxu0 %v2983
    %3170 = vmatprep.subr.mxu0 0.0
    %3171 = vmatpush1.msra.mxu0 %v2984
    %3172 = vmatprep.subr.mxu0 0.0
    %3173 = vmatpush1.msra.mxu0 %v2985
    %3174 = vmatprep.subr.mxu0 0.0
    %3175 = vmatpush1.msra.mxu0 %v2986
    %3176 = vmatprep.subr.mxu0 0.0
    %3177 = vmatpush1.msra.mxu0 %v2987
    %3178 = vmatprep.subr.mxu0 0.0
    %3179 = vmatpush1.msra.mxu0 %v2988
    %3180 = vmatprep.subr.mxu0 0.0
    %3181 = vmatpush1.msra.mxu0 %v2989
    %3182 = vmatprep.subr.mxu0 0.0
    %3183 = vmatpush1.msra.mxu0 %v2990
    %3184 = vmatprep.subr.mxu0 0.0
    %3185 = vmatpush1.msra.mxu0 %v2991
    %3186 = vmatprep.subr.mxu0 0.0
    %3187 = vmatpush1.msra.mxu0 0.0
    %3188 = vmatprep.subr.mxu0 0.0
    %3189 = vmatpush1.msra.mxu0 0.0
    %3190 = vmatprep.subr.mxu0 0.0
    %3191 = vmatpush1.msra.mxu0 0.0
    %3192 = vmatprep.subr.mxu0 0.0
    %3193 = vmatpush1.msra.mxu0 0.0
    %3194 = vmatprep.subr.mxu0 0.0
    %3195 = vmatpush1.msra.mxu0 0.0
    %3196 = vmatprep.subr.mxu0 0.0
    %3197 = vmatpush1.msra.mxu0 0.0
    %3198 = vmatprep.subr.mxu0 0.0
    %3199 = vmatpush1.msra.mxu0 0.0
    %3200 = vmatprep.subr.mxu0 0.0
    %3201 = vmatpush1.msra.mxu0 0.0
    %3202 = vmatprep.subr.mxu0 0.0
    %3203 = vmatpush1.msra.mxu0 0.0
    %3204 = vmatprep.subr.mxu0 0.0
    %3205 = vmatpush1.msra.mxu0 0.0
    %3206 = vmatprep.subr.mxu0 0.0
    %3207 = vmatpush1.msra.mxu0 0.0
    %3208 = vmatprep.subr.mxu0 0.0
    %3209 = vmatpush1.msra.mxu0 0.0
    %3210 = vmatprep.subr.mxu0 0.0
    %3211 = vmatpush1.msra.mxu0 0.0
    %3212 = vmatprep.subr.mxu0 0.0
    %3213 = vmatpush1.msra.mxu0 0.0
    %3214 = vmatprep.subr.mxu0 0.0
    %3215 = vmatpush1.msra.mxu0 0.0
    %3216 = vmatprep.subr.mxu0 0.0
    %3217 = vmatpush1.msra.mxu0 0.0
    %3218 = vmatprep.mubr.f32.mxu0 0.0
    %3219 = vmatmul.mubr.f32.gmra.mrb[0].mxu0 %v2973
    %v3220 = vpop.f32.mrb[0].mxu0
    %v3221 = vadd.f32 %v3151, %v3220
    %v3222 = vpop.f32.mrb[0].mxu0
    %3223 = vdwg.mxu0
    %s3224 = scalar_lea.vmem %s65, 8
    %v3225 = vld [vmem:[%s3224] sm:$0xf]
    %v3227 = vsel %vm2902, %v3225, 0
    %3229 = vmatprep.subr.mxu0 0.0
    %3230 = vmatpush1.msra.mxu0 %v2900
    %3231 = vmatprep.subr.mxu0 0.0
    %3232 = vmatpush1.msra.mxu0 0.0
    %3233 = vmatprep.subr.mxu0 0.0
    %3234 = vmatpush1.msra.mxu0 0.0
    %3235 = vmatprep.subr.mxu0 0.0
    %3236 = vmatpush1.msra.mxu0 0.0
    %3237 = vmatprep.subr.mxu0 0.0
    %3238 = vmatpush1.msra.mxu0 0.0
    %3239 = vmatprep.subr.mxu0 0.0
    %3240 = vmatpush1.msra.mxu0 0.0
    %3241 = vmatprep.subr.mxu0 0.0
    %3242 = vmatpush1.msra.mxu0 0.0
    %3243 = vmatprep.subr.mxu0 0.0
    %3244 = vmatpush1.msra.mxu0 0.0
    %3245 = vmatprep.subr.mxu0 0.0
    %3246 = vmatpush1.msra.mxu0 0.0
    %3247 = vmatprep.subr.mxu0 0.0
    %3248 = vmatpush1.msra.mxu0 0.0
    %3249 = vmatprep.subr.mxu0 0.0
    %3250 = vmatpush1.msra.mxu0 0.0
    %3251 = vmatprep.subr.mxu0 0.0
    %3252 = vmatpush1.msra.mxu0 0.0
    %3253 = vmatprep.subr.mxu0 0.0
    %3254 = vmatpush1.msra.mxu0 0.0
    %3255 = vmatprep.subr.mxu0 0.0
    %3256 = vmatpush1.msra.mxu0 0.0
    %3257 = vmatprep.subr.mxu0 0.0
    %3258 = vmatpush1.msra.mxu0 0.0
    %3259 = vmatprep.subr.mxu0 0.0
    %3260 = vmatpush1.msra.mxu0 0.0
    %3261 = vmatprep.subr.mxu0 0.0
    %3262 = vmatpush1.msra.mxu0 0.0
    %3263 = vmatprep.subr.mxu0 0.0
    %3264 = vmatpush1.msra.mxu0 0.0
    %3265 = vmatprep.subr.mxu0 0.0
    %3266 = vmatpush1.msra.mxu0 0.0
    %3267 = vmatprep.subr.mxu0 0.0
    %3268 = vmatpush1.msra.mxu0 0.0
    %3269 = vmatprep.subr.mxu0 0.0
    %3270 = vmatpush1.msra.mxu0 0.0
    %3271 = vmatprep.subr.mxu0 0.0
    %3272 = vmatpush1.msra.mxu0 0.0
    %3273 = vmatprep.subr.mxu0 0.0
    %3274 = vmatpush1.msra.mxu0 0.0
    %3275 = vmatprep.subr.mxu0 0.0
    %3276 = vmatpush1.msra.mxu0 0.0
    %3277 = vmatprep.subr.mxu0 0.0
    %3278 = vmatpush1.msra.mxu0 0.0
    %3279 = vmatprep.subr.mxu0 0.0
    %3280 = vmatpush1.msra.mxu0 0.0
    %3281 = vmatprep.subr.mxu0 0.0
    %3282 = vmatpush1.msra.mxu0 0.0
    %3283 = vmatprep.subr.mxu0 0.0
    %3284 = vmatpush1.msra.mxu0 0.0
    %3285 = vmatprep.subr.mxu0 0.0
    %3286 = vmatpush1.msra.mxu0 0.0
    %3287 = vmatprep.subr.mxu0 0.0
    %3288 = vmatpush1.msra.mxu0 0.0
    %3289 = vmatprep.subr.mxu0 0.0
    %3290 = vmatpush1.msra.mxu0 0.0
    %3291 = vmatprep.subr.mxu0 0.0
    %3292 = vmatpush1.msra.mxu0 0.0
    %3293 = vmatprep.mubr.f32.mxu0 0.0
    %3294 = vmatmul.mubr.f32.gmra.mrb[0].mxu0 %v3227
    %v3295 = vpop.f32.mrb[0].mxu0
    %v3296 = vadd.f32 0.0, %v3295
    %v3297 = vpop.f32.mrb[0].mxu0
    %3298 = vdwg.mxu0
    %s3299 = scalar_lea.vmem [#allocation25], 256
    %v3300 = vld [vmem:[%s3299] sm:$0xff]
    %v3301 = vld [vmem:[%s3299 + $0x8] sm:$0xff]
    %v3302 = vld [vmem:[%s3299 + $0x10] sm:$0xff]
    %v3303 = vld [vmem:[%s3299 + $0x18] sm:$0xff]
    %v3304 = vld [vmem:[%s3299 + $0x20] sm:$0xff]
    %v3305 = vld [vmem:[%s3299 + $0x28] sm:$0xff]
    %v3306 = vld [vmem:[%s3299 + $0x30] sm:$0xff]
    %v3307 = vld [vmem:[%s3299 + $0x38] sm:$0xff]
    %v3308 = vld [vmem:[%s3299 + $0x40] sm:$0xff]
    %v3309 = vld [vmem:[%s3299 + $0x48] sm:$0xff]
    %v3310 = vld [vmem:[%s3299 + $0x50] sm:$0xff]
    %v3311 = vld [vmem:[%s3299 + $0x58] sm:$0xff]
    %v3312 = vld [vmem:[%s3299 + $0x60] sm:$0xff]
    %v3313 = vld [vmem:[%s3299 + $0x68] sm:$0xff]
    %v3314 = vld [vmem:[%s3299 + $0x70] sm:$0xff]
    %v3315 = vld [vmem:[%s3299 + $0x78] sm:$0xff]
    %3316 = vmatprep.subr.mxu0 0.0
    %3317 = vmatpush1.msra.mxu0 %v3300
    %3318 = vmatprep.subr.mxu0 0.0
    %3319 = vmatpush1.msra.mxu0 %v3301
    %3320 = vmatprep.subr.mxu0 0.0
    %3321 = vmatpush1.msra.mxu0 %v3302
    %3322 = vmatprep.subr.mxu0 0.0
    %3323 = vmatpush1.msra.mxu0 %v3303
    %3324 = vmatprep.subr.mxu0 0.0
    %3325 = vmatpush1.msra.mxu0 %v3304
    %3326 = vmatprep.subr.mxu0 0.0
    %3327 = vmatpush1.msra.mxu0 %v3305
    %3328 = vmatprep.subr.mxu0 0.0
    %3329 = vmatpush1.msra.mxu0 %v3306
    %3330 = vmatprep.subr.mxu0 0.0
    %3331 = vmatpush1.msra.mxu0 %v3307
    %3332 = vmatprep.subr.mxu0 0.0
    %3333 = vmatpush1.msra.mxu0 %v3308
    %3334 = vmatprep.subr.mxu0 0.0
    %3335 = vmatpush1.msra.mxu0 %v3309
    %3336 = vmatprep.subr.mxu0 0.0
    %3337 = vmatpush1.msra.mxu0 %v3310
    %3338 = vmatprep.subr.mxu0 0.0
    %3339 = vmatpush1.msra.mxu0 %v3311
    %3340 = vmatprep.subr.mxu0 0.0
    %3341 = vmatpush1.msra.mxu0 %v3312
    %3342 = vmatprep.subr.mxu0 0.0
    %3343 = vmatpush1.msra.mxu0 %v3313
    %3344 = vmatprep.subr.mxu0 0.0
    %3345 = vmatpush1.msra.mxu0 %v3314
    %3346 = vmatprep.subr.mxu0 0.0
    %3347 = vmatpush1.msra.mxu0 %v3315
    %3348 = vmatprep.subr.mxu0 0.0
    %3349 = vmatpush1.msra.mxu0 0.0
    %3350 = vmatprep.subr.mxu0 0.0
    %3351 = vmatpush1.msra.mxu0 0.0
    %3352 = vmatprep.subr.mxu0 0.0
    %3353 = vmatpush1.msra.mxu0 0.0
    %3354 = vmatprep.subr.mxu0 0.0
    %3355 = vmatpush1.msra.mxu0 0.0
    %3356 = vmatprep.subr.mxu0 0.0
    %3357 = vmatpush1.msra.mxu0 0.0
    %3358 = vmatprep.subr.mxu0 0.0
    %3359 = vmatpush1.msra.mxu0 0.0
    %3360 = vmatprep.subr.mxu0 0.0
    %3361 = vmatpush1.msra.mxu0 0.0
    %3362 = vmatprep.subr.mxu0 0.0
    %3363 = vmatpush1.msra.mxu0 0.0
    %3364 = vmatprep.subr.mxu0 0.0
    %3365 = vmatpush1.msra.mxu0 0.0
    %3366 = vmatprep.subr.mxu0 0.0
    %3367 = vmatpush1.msra.mxu0 0.0
    %3368 = vmatprep.subr.mxu0 0.0
    %3369 = vmatpush1.msra.mxu0 0.0
    %3370 = vmatprep.subr.mxu0 0.0
    %3371 = vmatpush1.msra.mxu0 0.0
    %3372 = vmatprep.subr.mxu0 0.0
    %3373 = vmatpush1.msra.mxu0 0.0
    %3374 = vmatprep.subr.mxu0 0.0
    %3375 = vmatpush1.msra.mxu0 0.0
    %3376 = vmatprep.subr.mxu0 0.0
    %3377 = vmatpush1.msra.mxu0 0.0
    %3378 = vmatprep.subr.mxu0 0.0
    %3379 = vmatpush1.msra.mxu0 0.0
    %3380 = vmatprep.mubr.f32.mxu0 0.0
    %3381 = vmatmul.mubr.f32.gmra.mrb[0].mxu0 %v3296
    %v3382 = vpop.f32.mrb[0].mxu0
    %v3383 = vadd.f32 0.0, %v3382
    %v3384 = vpop.f32.mrb[0].mxu0
    %3385 = vdwg.mxu0
    %v3386 = vadd.f32 %v3221, %v3383
    %v3387 = vld [vmem:[#allocation26] sm:$0x1]
    %v3389 = vlaneseq
    %v3390 = vshrl.u32 %v3389, 7
    %v3391 = vsub.s32 0, %v3390
    %v3392 = vrot.slane %v3387, %v3391
    %v3394 = vadd.f32 %v3386, %v3392
    %v3395 = vmax.f32 %v3394, 0.0
    %v3396 = vld [vmem:[#allocation29] sm:$0x3]
    %vm3397 = vcmask 31744
    %v3399 = vsel %vm3397, %v3396, 0
    %vm3401 = vcmask 1043456
    %v3403 = vsel %vm3401, %v3395, 0
    %3405 = vmatprep.subr.mxu0 0.0
    %3406 = vmatpush1.msra.mxu0 %v3403
    %3407 = vmatprep.subr.mxu0 0.0
    %3408 = vmatpush1.msra.mxu0 0.0
    %3409 = vmatprep.subr.mxu0 0.0
    %3410 = vmatpush1.msra.mxu0 0.0
    %3411 = vmatprep.subr.mxu0 0.0
    %3412 = vmatpush1.msra.mxu0 0.0
    %3413 = vmatprep.subr.mxu0 0.0
    %3414 = vmatpush1.msra.mxu0 0.0
    %3415 = vmatprep.subr.mxu0 0.0
    %3416 = vmatpush1.msra.mxu0 0.0
    %3417 = vmatprep.subr.mxu0 0.0
    %3418 = vmatpush1.msra.mxu0 0.0
    %3419 = vmatprep.subr.mxu0 0.0
    %3420 = vmatpush1.msra.mxu0 0.0
    %3421 = vmatprep.subr.mxu0 0.0
    %3422 = vmatpush1.msra.mxu0 0.0
    %3423 = vmatprep.subr.mxu0 0.0
    %3424 = vmatpush1.msra.mxu0 0.0
    %3425 = vmatprep.subr.mxu0 0.0
    %3426 = vmatpush1.msra.mxu0 0.0
    %3427 = vmatprep.subr.mxu0 0.0
    %3428 = vmatpush1.msra.mxu0 0.0
    %3429 = vmatprep.subr.mxu0 0.0
    %3430 = vmatpush1.msra.mxu0 0.0
    %3431 = vmatprep.subr.mxu0 0.0
    %3432 = vmatpush1.msra.mxu0 0.0
    %3433 = vmatprep.subr.mxu0 0.0
    %3434 = vmatpush1.msra.mxu0 0.0
    %3435 = vmatprep.subr.mxu0 0.0
    %3436 = vmatpush1.msra.mxu0 0.0
    %3437 = vmatprep.subr.mxu0 0.0
    %3438 = vmatpush1.msra.mxu0 0.0
    %3439 = vmatprep.subr.mxu0 0.0
    %3440 = vmatpush1.msra.mxu0 0.0
    %3441 = vmatprep.subr.mxu0 0.0
    %3442 = vmatpush1.msra.mxu0 0.0
    %3443 = vmatprep.subr.mxu0 0.0
    %3444 = vmatpush1.msra.mxu0 0.0
    %3445 = vmatprep.subr.mxu0 0.0
    %3446 = vmatpush1.msra.mxu0 0.0
    %3447 = vmatprep.subr.mxu0 0.0
    %3448 = vmatpush1.msra.mxu0 0.0
    %3449 = vmatprep.subr.mxu0 0.0
    %3450 = vmatpush1.msra.mxu0 0.0
    %3451 = vmatprep.subr.mxu0 0.0
    %3452 = vmatpush1.msra.mxu0 0.0
    %3453 = vmatprep.subr.mxu0 0.0
    %3454 = vmatpush1.msra.mxu0 0.0
    %3455 = vmatprep.subr.mxu0 0.0
    %3456 = vmatpush1.msra.mxu0 0.0
    %3457 = vmatprep.subr.mxu0 0.0
    %3458 = vmatpush1.msra.mxu0 0.0
    %3459 = vmatprep.subr.mxu0 0.0
    %3460 = vmatpush1.msra.mxu0 0.0
    %3461 = vmatprep.subr.mxu0 0.0
    %3462 = vmatpush1.msra.mxu0 0.0
    %3463 = vmatprep.subr.mxu0 0.0
    %3464 = vmatpush1.msra.mxu0 0.0
    %3465 = vmatprep.subr.mxu0 0.0
    %3466 = vmatpush1.msra.mxu0 0.0
    %3467 = vmatprep.subr.mxu0 0.0
    %3468 = vmatpush1.msra.mxu0 0.0
    %3469 = vmatprep.mubr.f32.mxu0 0.0
    %3470 = vmatmul.mubr.f32.gmra.mrb[0].mxu0 %v3399
    %v3471 = vpop.f32.mrb[0].mxu0
    %v3472 = vadd.f32 0.0, %v3471
    %v3473 = vpop.f32.mrb[0].mxu0
    %3474 = vdwg.mxu0
    %v3475 = vld [vmem:[#allocation28] sm:$0xff]
    %v3476 = vld [vmem:[#allocation28 + $0x8] sm:$0xff]
    %v3477 = vld [vmem:[#allocation28 + $0x10] sm:$0xff]
    %v3478 = vld [vmem:[#allocation28 + $0x18] sm:$0xff]
    %v3479 = vld [vmem:[#allocation28 + $0x20] sm:$0xff]
    %v3480 = vld [vmem:[#allocation28 + $0x28] sm:$0xff]
    %v3481 = vld [vmem:[#allocation28 + $0x30] sm:$0xff]
    %v3482 = vld [vmem:[#allocation28 + $0x38] sm:$0xff]
    %v3483 = vld [vmem:[#allocation28 + $0x40] sm:$0xff]
    %v3484 = vld [vmem:[#allocation28 + $0x48] sm:$0xff]
    %v3485 = vld [vmem:[#allocation28 + $0x50] sm:$0xff]
    %v3486 = vld [vmem:[#allocation28 + $0x58] sm:$0xff]
    %v3487 = vld [vmem:[#allocation28 + $0x60] sm:$0xff]
    %v3488 = vld [vmem:[#allocation28 + $0x68] sm:$0xff]
    %v3489 = vld [vmem:[#allocation28 + $0x70] sm:$0xff]
    %v3490 = vld [vmem:[#allocation28 + $0x78] sm:$0xff]
    %s3491 = scalar_lea.vmem [#allocation29], 2
    %v3492 = vld [vmem:[%s3491] sm:$0x3]
    %v3494 = vsel %vm3397, %v3492, 0
    %3496 = vmatprep.subr.mxu0 0.0
    %3497 = vmatpush1.msra.mxu0 %v3403
    %3498 = vmatprep.subr.mxu0 0.0
    %3499 = vmatpush1.msra.mxu0 0.0
    %3500 = vmatprep.subr.mxu0 0.0
    %3501 = vmatpush1.msra.mxu0 0.0
    %3502 = vmatprep.subr.mxu0 0.0
    %3503 = vmatpush1.msra.mxu0 0.0
    %3504 = vmatprep.subr.mxu0 0.0
    %3505 = vmatpush1.msra.mxu0 0.0
    %3506 = vmatprep.subr.mxu0 0.0
    %3507 = vmatpush1.msra.mxu0 0.0
    %3508 = vmatprep.subr.mxu0 0.0
    %3509 = vmatpush1.msra.mxu0 0.0
    %3510 = vmatprep.subr.mxu0 0.0
    %3511 = vmatpush1.msra.mxu0 0.0
    %3512 = vmatprep.subr.mxu0 0.0
    %3513 = vmatpush1.msra.mxu0 0.0
    %3514 = vmatprep.subr.mxu0 0.0
    %3515 = vmatpush1.msra.mxu0 0.0
    %3516 = vmatprep.subr.mxu0 0.0
    %3517 = vmatpush1.msra.mxu0 0.0
    %3518 = vmatprep.subr.mxu0 0.0
    %3519 = vmatpush1.msra.mxu0 0.0
    %3520 = vmatprep.subr.mxu0 0.0
    %3521 = vmatpush1.msra.mxu0 0.0
    %3522 = vmatprep.subr.mxu0 0.0
    %3523 = vmatpush1.msra.mxu0 0.0
    %3524 = vmatprep.subr.mxu0 0.0
    %3525 = vmatpush1.msra.mxu0 0.0
    %3526 = vmatprep.subr.mxu0 0.0
    %3527 = vmatpush1.msra.mxu0 0.0
    %3528 = vmatprep.subr.mxu0 0.0
    %3529 = vmatpush1.msra.mxu0 0.0
    %3530 = vmatprep.subr.mxu0 0.0
    %3531 = vmatpush1.msra.mxu0 0.0
    %3532 = vmatprep.subr.mxu0 0.0
    %3533 = vmatpush1.msra.mxu0 0.0
    %3534 = vmatprep.subr.mxu0 0.0
    %3535 = vmatpush1.msra.mxu0 0.0
    %3536 = vmatprep.subr.mxu0 0.0
    %3537 = vmatpush1.msra.mxu0 0.0
    %3538 = vmatprep.subr.mxu0 0.0
    %3539 = vmatpush1.msra.mxu0 0.0
    %3540 = vmatprep.subr.mxu0 0.0
    %3541 = vmatpush1.msra.mxu0 0.0
    %3542 = vmatprep.subr.mxu0 0.0
    %3543 = vmatpush1.msra.mxu0 0.0
    %3544 = vmatprep.subr.mxu0 0.0
    %3545 = vmatpush1.msra.mxu0 0.0
    %3546 = vmatprep.subr.mxu0 0.0
    %3547 = vmatpush1.msra.mxu0 0.0
    %3548 = vmatprep.subr.mxu0 0.0
    %3549 = vmatpush1.msra.mxu0 0.0
    %3550 = vmatprep.subr.mxu0 0.0
    %3551 = vmatpush1.msra.mxu0 0.0
    %3552 = vmatprep.subr.mxu0 0.0
    %3553 = vmatpush1.msra.mxu0 0.0
    %3554 = vmatprep.subr.mxu0 0.0
    %3555 = vmatpush1.msra.mxu0 0.0
    %3556 = vmatprep.subr.mxu0 0.0
    %3557 = vmatpush1.msra.mxu0 0.0
    %3558 = vmatprep.subr.mxu0 0.0
    %3559 = vmatpush1.msra.mxu0 0.0
    %3560 = vmatprep.mubr.f32.mxu0 0.0
    %3561 = vmatmul.mubr.f32.gmra.mrb[0].mxu0 %v3494
    %v3562 = vpop.f32.mrb[0].mxu0
    %v3563 = vadd.f32 0.0, %v3562
    %v3564 = vpop.f32.mrb[0].mxu0
    %3565 = vdwg.mxu0
    %s3566 = scalar_lea.vmem [#allocation28], 128
    %v3567 = vld [vmem:[%s3566] sm:$0xff]
    %v3568 = vld [vmem:[%s3566 + $0x8] sm:$0xff]
    %v3569 = vld [vmem:[%s3566 + $0x10] sm:$0xff]
    %v3570 = vld [vmem:[%s3566 + $0x18] sm:$0xff]
    %v3571 = vld [vmem:[%s3566 + $0x20] sm:$0xff]
    %v3572 = vld [vmem:[%s3566 + $0x28] sm:$0xff]
    %v3573 = vld [vmem:[%s3566 + $0x30] sm:$0xff]
    %v3574 = vld [vmem:[%s3566 + $0x38] sm:$0xff]
    %v3575 = vld [vmem:[%s3566 + $0x40] sm:$0xff]
    %v3576 = vld [vmem:[%s3566 + $0x48] sm:$0xff]
    %v3577 = vld [vmem:[%s3566 + $0x50] sm:$0xff]
    %v3578 = vld [vmem:[%s3566 + $0x58] sm:$0xff]
    %v3579 = vld [vmem:[%s3566 + $0x60] sm:$0xff]
    %v3580 = vld [vmem:[%s3566 + $0x68] sm:$0xff]
    %v3581 = vld [vmem:[%s3566 + $0x70] sm:$0xff]
    %v3582 = vld [vmem:[%s3566 + $0x78] sm:$0xff]
    %3583 = vmatprep.subr.mxu0 0.0
    %3584 = vmatpush1.msra.mxu0 %v3567
    %3585 = vmatprep.subr.mxu0 0.0
    %3586 = vmatpush1.msra.mxu0 %v3568
    %3587 = vmatprep.subr.mxu0 0.0
    %3588 = vmatpush1.msra.mxu0 %v3569
    %3589 = vmatprep.subr.mxu0 0.0
    %3590 = vmatpush1.msra.mxu0 %v3570
    %3591 = vmatprep.subr.mxu0 0.0
    %3592 = vmatpush1.msra.mxu0 %v3571
    %3593 = vmatprep.subr.mxu0 0.0
    %3594 = vmatpush1.msra.mxu0 %v3572
    %3595 = vmatprep.subr.mxu0 0.0
    %3596 = vmatpush1.msra.mxu0 %v3573
    %3597 = vmatprep.subr.mxu0 0.0
    %3598 = vmatpush1.msra.mxu0 %v3574
    %3599 = vmatprep.subr.mxu0 0.0
    %3600 = vmatpush1.msra.mxu0 %v3575
    %3601 = vmatprep.subr.mxu0 0.0
    %3602 = vmatpush1.msra.mxu0 %v3576
    %3603 = vmatprep.subr.mxu0 0.0
    %3604 = vmatpush1.msra.mxu0 %v3577
    %3605 = vmatprep.subr.mxu0 0.0
    %3606 = vmatpush1.msra.mxu0 %v3578
    %3607 = vmatprep.subr.mxu0 0.0
    %3608 = vmatpush1.msra.mxu0 %v3579
    %3609 = vmatprep.subr.mxu0 0.0
    %3610 = vmatpush1.msra.mxu0 %v3580
    %3611 = vmatprep.subr.mxu0 0.0
    %3612 = vmatpush1.msra.mxu0 %v3581
    %3613 = vmatprep.subr.mxu0 0.0
    %3614 = vmatpush1.msra.mxu0 %v3582
    %3615 = vmatprep.subr.mxu0 0.0
    %3616 = vmatpush1.msra.mxu0 0.0
    %3617 = vmatprep.subr.mxu0 0.0
    %3618 = vmatpush1.msra.mxu0 0.0
    %3619 = vmatprep.subr.mxu0 0.0
    %3620 = vmatpush1.msra.mxu0 0.0
    %3621 = vmatprep.subr.mxu0 0.0
    %3622 = vmatpush1.msra.mxu0 0.0
    %3623 = vmatprep.subr.mxu0 0.0
    %3624 = vmatpush1.msra.mxu0 0.0
    %3625 = vmatprep.subr.mxu0 0.0
    %3626 = vmatpush1.msra.mxu0 0.0
    %3627 = vmatprep.subr.mxu0 0.0
    %3628 = vmatpush1.msra.mxu0 0.0
    %3629 = vmatprep.subr.mxu0 0.0
    %3630 = vmatpush1.msra.mxu0 0.0
    %3631 = vmatprep.subr.mxu0 0.0
    %3632 = vmatpush1.msra.mxu0 0.0
    %3633 = vmatprep.subr.mxu0 0.0
    %3634 = vmatpush1.msra.mxu0 0.0
    %3635 = vmatprep.subr.mxu0 0.0
    %3636 = vmatpush1.msra.mxu0 0.0
    %3637 = vmatprep.subr.mxu0 0.0
    %3638 = vmatpush1.msra.mxu0 0.0
    %3639 = vmatprep.subr.mxu0 0.0
    %3640 = vmatpush1.msra.mxu0 0.0
    %3641 = vmatprep.subr.mxu0 0.0
    %3642 = vmatpush1.msra.mxu0 0.0
    %3643 = vmatprep.subr.mxu0 0.0
    %3644 = vmatpush1.msra.mxu0 0.0
    %3645 = vmatprep.subr.mxu0 0.0
    %3646 = vmatpush1.msra.mxu0 0.0
    %3647 = vmatprep.mubr.f32.mxu0 0.0
    %3648 = vmatmul.mubr.f32.gmra.mrb[0].mxu0 %v3563
    %v3649 = vpop.f32.mrb[0].mxu0
    %v3650 = vadd.f32 0.0, %v3649
    %v3651 = vpop.f32.mrb[0].mxu0
    %3652 = vdwg.mxu0
    %3653 = vmatprep.subr.mxu0 0.0
    %3654 = vmatpush1.msra.mxu0 %v3475
    %3655 = vmatprep.subr.mxu0 0.0
    %3656 = vmatpush1.msra.mxu0 %v3476
    %3657 = vmatprep.subr.mxu0 0.0
    %3658 = vmatpush1.msra.mxu0 %v3477
    %3659 = vmatprep.subr.mxu0 0.0
    %3660 = vmatpush1.msra.mxu0 %v3478
    %3661 = vmatprep.subr.mxu0 0.0
    %3662 = vmatpush1.msra.mxu0 %v3479
    %3663 = vmatprep.subr.mxu0 0.0
    %3664 = vmatpush1.msra.mxu0 %v3480
    %3665 = vmatprep.subr.mxu0 0.0
    %3666 = vmatpush1.msra.mxu0 %v3481
    %3667 = vmatprep.subr.mxu0 0.0
    %3668 = vmatpush1.msra.mxu0 %v3482
    %3669 = vmatprep.subr.mxu0 0.0
    %3670 = vmatpush1.msra.mxu0 %v3483
    %3671 = vmatprep.subr.mxu0 0.0
    %3672 = vmatpush1.msra.mxu0 %v3484
    %3673 = vmatprep.subr.mxu0 0.0
    %3674 = vmatpush1.msra.mxu0 %v3485
    %3675 = vmatprep.subr.mxu0 0.0
    %3676 = vmatpush1.msra.mxu0 %v3486
    %3677 = vmatprep.subr.mxu0 0.0
    %3678 = vmatpush1.msra.mxu0 %v3487
    %3679 = vmatprep.subr.mxu0 0.0
    %3680 = vmatpush1.msra.mxu0 %v3488
    %3681 = vmatprep.subr.mxu0 0.0
    %3682 = vmatpush1.msra.mxu0 %v3489
    %3683 = vmatprep.subr.mxu0 0.0
    %3684 = vmatpush1.msra.mxu0 %v3490
    %3685 = vmatprep.subr.mxu0 0.0
    %3686 = vmatpush1.msra.mxu0 0.0
    %3687 = vmatprep.subr.mxu0 0.0
    %3688 = vmatpush1.msra.mxu0 0.0
    %3689 = vmatprep.subr.mxu0 0.0
    %3690 = vmatpush1.msra.mxu0 0.0
    %3691 = vmatprep.subr.mxu0 0.0
    %3692 = vmatpush1.msra.mxu0 0.0
    %3693 = vmatprep.subr.mxu0 0.0
    %3694 = vmatpush1.msra.mxu0 0.0
    %3695 = vmatprep.subr.mxu0 0.0
    %3696 = vmatpush1.msra.mxu0 0.0
    %3697 = vmatprep.subr.mxu0 0.0
    %3698 = vmatpush1.msra.mxu0 0.0
    %3699 = vmatprep.subr.mxu0 0.0
    %3700 = vmatpush1.msra.mxu0 0.0
    %3701 = vmatprep.subr.mxu0 0.0
    %3702 = vmatpush1.msra.mxu0 0.0
    %3703 = vmatprep.subr.mxu0 0.0
    %3704 = vmatpush1.msra.mxu0 0.0
    %3705 = vmatprep.subr.mxu0 0.0
    %3706 = vmatpush1.msra.mxu0 0.0
    %3707 = vmatprep.subr.mxu0 0.0
    %3708 = vmatpush1.msra.mxu0 0.0
    %3709 = vmatprep.subr.mxu0 0.0
    %3710 = vmatpush1.msra.mxu0 0.0
    %3711 = vmatprep.subr.mxu0 0.0
    %3712 = vmatpush1.msra.mxu0 0.0
    %3713 = vmatprep.subr.mxu0 0.0
    %3714 = vmatpush1.msra.mxu0 0.0
    %3715 = vmatprep.subr.mxu0 0.0
    %3716 = vmatpush1.msra.mxu0 0.0
    %3717 = vmatprep.mubr.f32.mxu0 0.0
    %3718 = vmatmul.mubr.f32.gmra.mrb[0].mxu0 %v3472
    %v3719 = vpop.f32.mrb[0].mxu0
    %v3720 = vadd.f32 %v3650, %v3719
    %v3721 = vpop.f32.mrb[0].mxu0
    %3722 = vdwg.mxu0
    %s3723 = scalar_lea.vmem [#allocation29], 4
    %v3724 = vld [vmem:[%s3723] sm:$0x3]
    %v3726 = vsel %vm3397, %v3724, 0
    %3728 = vmatprep.subr.mxu0 0.0
    %3729 = vmatpush1.msra.mxu0 %v3403
    %3730 = vmatprep.subr.mxu0 0.0
    %3731 = vmatpush1.msra.mxu0 0.0
    %3732 = vmatprep.subr.mxu0 0.0
    %3733 = vmatpush1.msra.mxu0 0.0
    %3734 = vmatprep.subr.mxu0 0.0
    %3735 = vmatpush1.msra.mxu0 0.0
    %3736 = vmatprep.subr.mxu0 0.0
    %3737 = vmatpush1.msra.mxu0 0.0
    %3738 = vmatprep.subr.mxu0 0.0
    %3739 = vmatpush1.msra.mxu0 0.0
    %3740 = vmatprep.subr.mxu0 0.0
    %3741 = vmatpush1.msra.mxu0 0.0
    %3742 = vmatprep.subr.mxu0 0.0
    %3743 = vmatpush1.msra.mxu0 0.0
    %3744 = vmatprep.subr.mxu0 0.0
    %3745 = vmatpush1.msra.mxu0 0.0
    %3746 = vmatprep.subr.mxu0 0.0
    %3747 = vmatpush1.msra.mxu0 0.0
    %3748 = vmatprep.subr.mxu0 0.0
    %3749 = vmatpush1.msra.mxu0 0.0
    %3750 = vmatprep.subr.mxu0 0.0
    %3751 = vmatpush1.msra.mxu0 0.0
    %3752 = vmatprep.subr.mxu0 0.0
    %3753 = vmatpush1.msra.mxu0 0.0
    %3754 = vmatprep.subr.mxu0 0.0
    %3755 = vmatpush1.msra.mxu0 0.0
    %3756 = vmatprep.subr.mxu0 0.0
    %3757 = vmatpush1.msra.mxu0 0.0
    %3758 = vmatprep.subr.mxu0 0.0
    %3759 = vmatpush1.msra.mxu0 0.0
    %3760 = vmatprep.subr.mxu0 0.0
    %3761 = vmatpush1.msra.mxu0 0.0
    %3762 = vmatprep.subr.mxu0 0.0
    %3763 = vmatpush1.msra.mxu0 0.0
    %3764 = vmatprep.subr.mxu0 0.0
    %3765 = vmatpush1.msra.mxu0 0.0
    %3766 = vmatprep.subr.mxu0 0.0
    %3767 = vmatpush1.msra.mxu0 0.0
    %3768 = vmatprep.subr.mxu0 0.0
    %3769 = vmatpush1.msra.mxu0 0.0
    %3770 = vmatprep.subr.mxu0 0.0
    %3771 = vmatpush1.msra.mxu0 0.0
    %3772 = vmatprep.subr.mxu0 0.0
    %3773 = vmatpush1.msra.mxu0 0.0
    %3774 = vmatprep.subr.mxu0 0.0
    %3775 = vmatpush1.msra.mxu0 0.0
    %3776 = vmatprep.subr.mxu0 0.0
    %3777 = vmatpush1.msra.mxu0 0.0
    %3778 = vmatprep.subr.mxu0 0.0
    %3779 = vmatpush1.msra.mxu0 0.0
    %3780 = vmatprep.subr.mxu0 0.0
    %3781 = vmatpush1.msra.mxu0 0.0
    %3782 = vmatprep.subr.mxu0 0.0
    %3783 = vmatpush1.msra.mxu0 0.0
    %3784 = vmatprep.subr.mxu0 0.0
    %3785 = vmatpush1.msra.mxu0 0.0
    %3786 = vmatprep.subr.mxu0 0.0
    %3787 = vmatpush1.msra.mxu0 0.0
    %3788 = vmatprep.subr.mxu0 0.0
    %3789 = vmatpush1.msra.mxu0 0.0
    %3790 = vmatprep.subr.mxu0 0.0
    %3791 = vmatpush1.msra.mxu0 0.0
    %3792 = vmatprep.mubr.f32.mxu0 0.0
    %3793 = vmatmul.mubr.f32.gmra.mrb[0].mxu0 %v3726
    %v3794 = vpop.f32.mrb[0].mxu0
    %v3795 = vadd.f32 0.0, %v3794
    %v3796 = vpop.f32.mrb[0].mxu0
    %3797 = vdwg.mxu0
    %s3798 = scalar_lea.vmem [#allocation28], 256
    %v3799 = vld [vmem:[%s3798] sm:$0xff]
    %v3800 = vld [vmem:[%s3798 + $0x8] sm:$0xff]
    %v3801 = vld [vmem:[%s3798 + $0x10] sm:$0xff]
    %v3802 = vld [vmem:[%s3798 + $0x18] sm:$0xff]
    %v3803 = vld [vmem:[%s3798 + $0x20] sm:$0xff]
    %v3804 = vld [vmem:[%s3798 + $0x28] sm:$0xff]
    %v3805 = vld [vmem:[%s3798 + $0x30] sm:$0xff]
    %v3806 = vld [vmem:[%s3798 + $0x38] sm:$0xff]
    %v3807 = vld [vmem:[%s3798 + $0x40] sm:$0xff]
    %v3808 = vld [vmem:[%s3798 + $0x48] sm:$0xff]
    %v3809 = vld [vmem:[%s3798 + $0x50] sm:$0xff]
    %v3810 = vld [vmem:[%s3798 + $0x58] sm:$0xff]
    %v3811 = vld [vmem:[%s3798 + $0x60] sm:$0xff]
    %v3812 = vld [vmem:[%s3798 + $0x68] sm:$0xff]
    %v3813 = vld [vmem:[%s3798 + $0x70] sm:$0xff]
    %v3814 = vld [vmem:[%s3798 + $0x78] sm:$0xff]
    %3815 = vmatprep.subr.mxu0 0.0
    %3816 = vmatpush1.msra.mxu0 %v3799
    %3817 = vmatprep.subr.mxu0 0.0
    %3818 = vmatpush1.msra.mxu0 %v3800
    %3819 = vmatprep.subr.mxu0 0.0
    %3820 = vmatpush1.msra.mxu0 %v3801
    %3821 = vmatprep.subr.mxu0 0.0
    %3822 = vmatpush1.msra.mxu0 %v3802
    %3823 = vmatprep.subr.mxu0 0.0
    %3824 = vmatpush1.msra.mxu0 %v3803
    %3825 = vmatprep.subr.mxu0 0.0
    %3826 = vmatpush1.msra.mxu0 %v3804
    %3827 = vmatprep.subr.mxu0 0.0
    %3828 = vmatpush1.msra.mxu0 %v3805
    %3829 = vmatprep.subr.mxu0 0.0
    %3830 = vmatpush1.msra.mxu0 %v3806
    %3831 = vmatprep.subr.mxu0 0.0
    %3832 = vmatpush1.msra.mxu0 %v3807
    %3833 = vmatprep.subr.mxu0 0.0
    %3834 = vmatpush1.msra.mxu0 %v3808
    %3835 = vmatprep.subr.mxu0 0.0
    %3836 = vmatpush1.msra.mxu0 %v3809
    %3837 = vmatprep.subr.mxu0 0.0
    %3838 = vmatpush1.msra.mxu0 %v3810
    %3839 = vmatprep.subr.mxu0 0.0
    %3840 = vmatpush1.msra.mxu0 %v3811
    %3841 = vmatprep.subr.mxu0 0.0
    %3842 = vmatpush1.msra.mxu0 %v3812
    %3843 = vmatprep.subr.mxu0 0.0
    %3844 = vmatpush1.msra.mxu0 %v3813
    %3845 = vmatprep.subr.mxu0 0.0
    %3846 = vmatpush1.msra.mxu0 %v3814
    %3847 = vmatprep.subr.mxu0 0.0
    %3848 = vmatpush1.msra.mxu0 0.0
    %3849 = vmatprep.subr.mxu0 0.0
    %3850 = vmatpush1.msra.mxu0 0.0
    %3851 = vmatprep.subr.mxu0 0.0
    %3852 = vmatpush1.msra.mxu0 0.0
    %3853 = vmatprep.subr.mxu0 0.0
    %3854 = vmatpush1.msra.mxu0 0.0
    %3855 = vmatprep.subr.mxu0 0.0
    %3856 = vmatpush1.msra.mxu0 0.0
    %3857 = vmatprep.subr.mxu0 0.0
    %3858 = vmatpush1.msra.mxu0 0.0
    %3859 = vmatprep.subr.mxu0 0.0
    %3860 = vmatpush1.msra.mxu0 0.0
    %3861 = vmatprep.subr.mxu0 0.0
    %3862 = vmatpush1.msra.mxu0 0.0
    %3863 = vmatprep.subr.mxu0 0.0
    %3864 = vmatpush1.msra.mxu0 0.0
    %3865 = vmatprep.subr.mxu0 0.0
    %3866 = vmatpush1.msra.mxu0 0.0
    %3867 = vmatprep.subr.mxu0 0.0
    %3868 = vmatpush1.msra.mxu0 0.0
    %3869 = vmatprep.subr.mxu0 0.0
    %3870 = vmatpush1.msra.mxu0 0.0
    %3871 = vmatprep.subr.mxu0 0.0
    %3872 = vmatpush1.msra.mxu0 0.0
    %3873 = vmatprep.subr.mxu0 0.0
    %3874 = vmatpush1.msra.mxu0 0.0
    %3875 = vmatprep.subr.mxu0 0.0
    %3876 = vmatpush1.msra.mxu0 0.0
    %3877 = vmatprep.subr.mxu0 0.0
    %3878 = vmatpush1.msra.mxu0 0.0
    %3879 = vmatprep.mubr.f32.mxu0 0.0
    %3880 = vmatmul.mubr.f32.gmra.mrb[0].mxu0 %v3795
    %v3881 = vpop.f32.mrb[0].mxu0
    %v3882 = vadd.f32 0.0, %v3881
    %v3883 = vpop.f32.mrb[0].mxu0
    %3884 = vdwg.mxu0
    %v3885 = vadd.f32 %v3720, %v3882
    %v3886 = vld [vmem:[#allocation31] sm:$0x1]
    %v3888 = vlaneseq
    %v3889 = vshrl.u32 %v3888, 7
    %v3890 = vsub.s32 0, %v3889
    %v3891 = vrot.slane %v3886, %v3890
    %v3893 = vadd.f32 %v3885, %v3891
    %v3894 = vmax.f32 %v3893, 0.0
    %v3895 = vld [vmem:[%s75] sm:$0xff]
    %v3896 = vld [vmem:[%s75 + $0x8] sm:$0xff]
    %v3897 = vld [vmem:[%s75 + $0x10] sm:$0xff]
    %v3898 = vld [vmem:[%s75 + $0x18] sm:$0xff]
    %v3899 = vld [vmem:[%s75 + $0x20] sm:$0xff]
    %v3900 = vld [vmem:[%s75 + $0x28] sm:$0xff]
    %v3901 = vld [vmem:[%s75 + $0x30] sm:$0xff]
    %v3902 = vld [vmem:[%s75 + $0x38] sm:$0xff]
    %v3903 = vld [vmem:[%s75 + $0x40] sm:$0xff]
    %v3904 = vld [vmem:[%s75 + $0x48] sm:$0xff]
    %v3905 = vld [vmem:[%s75 + $0x50] sm:$0xff]
    %v3906 = vld [vmem:[%s75 + $0x58] sm:$0xff]
    %v3907 = vld [vmem:[%s75 + $0x60] sm:$0xff]
    %v3908 = vld [vmem:[%s75 + $0x68] sm:$0xff]
    %v3909 = vld [vmem:[%s75 + $0x70] sm:$0xff]
    %v3910 = vld [vmem:[%s75 + $0x78] sm:$0xff]
    %v3911 = vld [vmem:[#allocation32] sm:$0x1]
    %v3913 = vlaneseq
    %v3914 = vshrl.u32 %v3913, 7
    %v3915 = vsub.s32 0, %v3914
    %v3916 = vrot.slane %v3911, %v3915
    %3918 = vmatprep.subr.mxu0 0.0
    %3919 = vmatpush1.msra.mxu0 %v3895
    %3920 = vmatprep.subr.mxu0 0.0
    %3921 = vmatpush1.msra.mxu0 %v3896
    %3922 = vmatprep.subr.mxu0 0.0
    %3923 = vmatpush1.msra.mxu0 %v3897
    %3924 = vmatprep.subr.mxu0 0.0
    %3925 = vmatpush1.msra.mxu0 %v3898
    %3926 = vmatprep.subr.mxu0 0.0
    %3927 = vmatpush1.msra.mxu0 %v3899
    %3928 = vmatprep.subr.mxu0 0.0
    %3929 = vmatpush1.msra.mxu0 %v3900
    %3930 = vmatprep.subr.mxu0 0.0
    %3931 = vmatpush1.msra.mxu0 %v3901
    %3932 = vmatprep.subr.mxu0 0.0
    %3933 = vmatpush1.msra.mxu0 %v3902
    %3934 = vmatprep.subr.mxu0 0.0
    %3935 = vmatpush1.msra.mxu0 %v3903
    %3936 = vmatprep.subr.mxu0 0.0
    %3937 = vmatpush1.msra.mxu0 %v3904
    %3938 = vmatprep.subr.mxu0 0.0
    %3939 = vmatpush1.msra.mxu0 %v3905
    %3940 = vmatprep.subr.mxu0 0.0
    %3941 = vmatpush1.msra.mxu0 %v3906
    %3942 = vmatprep.subr.mxu0 0.0
    %3943 = vmatpush1.msra.mxu0 %v3907
    %3944 = vmatprep.subr.mxu0 0.0
    %3945 = vmatpush1.msra.mxu0 %v3908
    %3946 = vmatprep.subr.mxu0 0.0
    %3947 = vmatpush1.msra.mxu0 %v3909
    %3948 = vmatprep.subr.mxu0 0.0
    %3949 = vmatpush1.msra.mxu0 %v3910
    %3950 = vmatprep.subr.mxu0 0.0
    %3951 = vmatpush1.msra.mxu0 0.0
    %3952 = vmatprep.subr.mxu0 0.0
    %3953 = vmatpush1.msra.mxu0 0.0
    %3954 = vmatprep.subr.mxu0 0.0
    %3955 = vmatpush1.msra.mxu0 0.0
    %3956 = vmatprep.subr.mxu0 0.0
    %3957 = vmatpush1.msra.mxu0 0.0
    %3958 = vmatprep.subr.mxu0 0.0
    %3959 = vmatpush1.msra.mxu0 0.0
    %3960 = vmatprep.subr.mxu0 0.0
    %3961 = vmatpush1.msra.mxu0 0.0
    %3962 = vmatprep.subr.mxu0 0.0
    %3963 = vmatpush1.msra.mxu0 0.0
    %3964 = vmatprep.subr.mxu0 0.0
    %3965 = vmatpush1.msra.mxu0 0.0
    %3966 = vmatprep.subr.mxu0 0.0
    %3967 = vmatpush1.msra.mxu0 0.0
    %3968 = vmatprep.subr.mxu0 0.0
    %3969 = vmatpush1.msra.mxu0 0.0
    %3970 = vmatprep.subr.mxu0 0.0
    %3971 = vmatpush1.msra.mxu0 0.0
    %3972 = vmatprep.subr.mxu0 0.0
    %3973 = vmatpush1.msra.mxu0 0.0
    %3974 = vmatprep.subr.mxu0 0.0
    %3975 = vmatpush1.msra.mxu0 0.0
    %3976 = vmatprep.subr.mxu0 0.0
    %3977 = vmatpush1.msra.mxu0 0.0
    %3978 = vmatprep.subr.mxu0 0.0
    %3979 = vmatpush1.msra.mxu0 0.0
    %3980 = vmatprep.subr.mxu0 0.0
    %3981 = vmatpush1.msra.mxu0 0.0
    %3982 = vmatprep.mubr.f32.mxu0 0.0
    %3983 = vmatmul.mubr.f32.gmra.mrb[0].mxu0 %v3894
    %v3984 = vpop.f32.mrb[0].mxu0
    %v3985 = vadd.f32 %v3916, %v3984
    %v3986 = vpop.f32.mrb[0].mxu0
    %3987 = vdwg.mxu0
    %v3988 = vld [vmem:[%s79] sm:$0xff]
    %v3989 = vld [vmem:[%s79 + $0x8] sm:$0xff]
    %v3990 = vld [vmem:[%s79 + $0x10] sm:$0xff]
    %v3991 = vld [vmem:[%s79 + $0x18] sm:$0xff]
    %v3992 = vld [vmem:[%s79 + $0x20] sm:$0xff]
    %v3993 = vld [vmem:[%s79 + $0x28] sm:$0xff]
    %v3994 = vld [vmem:[%s79 + $0x30] sm:$0xff]
    %v3995 = vld [vmem:[%s79 + $0x38] sm:$0xff]
    %v3996 = vld [vmem:[#allocation34] sm:$0x1]
    %v3998 = vlaneseq
    %v3999 = vshrl.u32 %v3998, 7
    %v4000 = vsub.s32 0, %v3999
    %v4001 = vrot.slane %v3996, %v4000
    %v4004 = vsel %vm695, %v3985, 0
    %4006 = vmatprep.subr.mxu0 0.0
    %4007 = vmatpush1.msra.mxu0 %v3988
    %4008 = vmatprep.subr.mxu0 0.0
    %4009 = vmatpush1.msra.mxu0 %v3989
    %4010 = vmatprep.subr.mxu0 0.0
    %4011 = vmatpush1.msra.mxu0 %v3990
    %4012 = vmatprep.subr.mxu0 0.0
    %4013 = vmatpush1.msra.mxu0 %v3991
    %4014 = vmatprep.subr.mxu0 0.0
    %4015 = vmatpush1.msra.mxu0 %v3992
    %4016 = vmatprep.subr.mxu0 0.0
    %4017 = vmatpush1.msra.mxu0 %v3993
    %4018 = vmatprep.subr.mxu0 0.0
    %4019 = vmatpush1.msra.mxu0 %v3994
    %4020 = vmatprep.subr.mxu0 0.0
    %4021 = vmatpush1.msra.mxu0 %v3995
    %4022 = vmatprep.subr.mxu0 0.0
    %4023 = vmatpush1.msra.mxu0 0.0
    %4024 = vmatprep.subr.mxu0 0.0
    %4025 = vmatpush1.msra.mxu0 0.0
    %4026 = vmatprep.subr.mxu0 0.0
    %4027 = vmatpush1.msra.mxu0 0.0
    %4028 = vmatprep.subr.mxu0 0.0
    %4029 = vmatpush1.msra.mxu0 0.0
    %4030 = vmatprep.subr.mxu0 0.0
    %4031 = vmatpush1.msra.mxu0 0.0
    %4032 = vmatprep.subr.mxu0 0.0
    %4033 = vmatpush1.msra.mxu0 0.0
    %4034 = vmatprep.subr.mxu0 0.0
    %4035 = vmatpush1.msra.mxu0 0.0
    %4036 = vmatprep.subr.mxu0 0.0
    %4037 = vmatpush1.msra.mxu0 0.0
    %4038 = vmatprep.subr.mxu0 0.0
    %4039 = vmatpush1.msra.mxu0 0.0
    %4040 = vmatprep.subr.mxu0 0.0
    %4041 = vmatpush1.msra.mxu0 0.0
    %4042 = vmatprep.subr.mxu0 0.0
    %4043 = vmatpush1.msra.mxu0 0.0
    %4044 = vmatprep.subr.mxu0 0.0
    %4045 = vmatpush1.msra.mxu0 0.0
    %4046 = vmatprep.subr.mxu0 0.0
    %4047 = vmatpush1.msra.mxu0 0.0
    %4048 = vmatprep.subr.mxu0 0.0
    %4049 = vmatpush1.msra.mxu0 0.0
    %4050 = vmatprep.subr.mxu0 0.0
    %4051 = vmatpush1.msra.mxu0 0.0
    %4052 = vmatprep.subr.mxu0 0.0
    %4053 = vmatpush1.msra.mxu0 0.0
    %4054 = vmatprep.subr.mxu0 0.0
    %4055 = vmatpush1.msra.mxu0 0.0
    %4056 = vmatprep.subr.mxu0 0.0
    %4057 = vmatpush1.msra.mxu0 0.0
    %4058 = vmatprep.subr.mxu0 0.0
    %4059 = vmatpush1.msra.mxu0 0.0
    %4060 = vmatprep.subr.mxu0 0.0
    %4061 = vmatpush1.msra.mxu0 0.0
    %4062 = vmatprep.subr.mxu0 0.0
    %4063 = vmatpush1.msra.mxu0 0.0
    %4064 = vmatprep.subr.mxu0 0.0
    %4065 = vmatpush1.msra.mxu0 0.0
    %4066 = vmatprep.subr.mxu0 0.0
    %4067 = vmatpush1.msra.mxu0 0.0
    %4068 = vmatprep.subr.mxu0 0.0
    %4069 = vmatpush1.msra.mxu0 0.0
    %4070 = vmatprep.mubr.f32.mxu0 0.0
    %4071 = vmatmul.mubr.f32.gmra.mrb[0].mxu0 %v4004
    %v4072 = vpop.f32.mrb[0].mxu0
    %v4073 = vadd.f32 %v4001, %v4072
    %v4074 = vpop.f32.mrb[0].mxu0
    %4075 = vdwg.mxu0
    %v4076 = vmax.f32 %v4073, 0.0
    %v4077 = vld [vmem:[%s3] sm:$0xff]
    %v4078 = vld [vmem:[%s3 + $0x8] sm:$0xff]
    %v4079 = vld [vmem:[%s3 + $0x10] sm:$0xff]
    %v4080 = vld [vmem:[%s3 + $0x18] sm:$0xff]
    %v4081 = vld [vmem:[%s3 + $0x20] sm:$0xff]
    %v4082 = vld [vmem:[%s3 + $0x28] sm:$0xff]
    %v4083 = vld [vmem:[%s3 + $0x30] sm:$0xff]
    %v4084 = vld [vmem:[%s3 + $0x38] sm:$0xff]
    %v4085 = vld [vmem:[%s3 + $0x40] sm:$0xff]
    %v4086 = vld [vmem:[%s3 + $0x48] sm:$0xff]
    %v4087 = vld [vmem:[%s3 + $0x50] sm:$0xff]
    %v4088 = vld [vmem:[%s3 + $0x58] sm:$0xff]
    %v4089 = vld [vmem:[%s3 + $0x60] sm:$0xff]
    %v4090 = vld [vmem:[%s3 + $0x68] sm:$0xff]
    %v4091 = vld [vmem:[%s3 + $0x70] sm:$0xff]
    %v4092 = vld [vmem:[%s3 + $0x78] sm:$0xff]
    %4093 = vmatprep.subr.mxu0 0.0
    %4094 = vmatpush1.msra.mxu0 %v4077
    %4095 = vmatprep.subr.mxu0 0.0
    %4096 = vmatpush1.msra.mxu0 %v4078
    %4097 = vmatprep.subr.mxu0 0.0
    %4098 = vmatpush1.msra.mxu0 %v4079
    %4099 = vmatprep.subr.mxu0 0.0
    %4100 = vmatpush1.msra.mxu0 %v4080
    %4101 = vmatprep.subr.mxu0 0.0
    %4102 = vmatpush1.msra.mxu0 %v4081
    %4103 = vmatprep.subr.mxu0 0.0
    %4104 = vmatpush1.msra.mxu0 %v4082
    %4105 = vmatprep.subr.mxu0 0.0
    %4106 = vmatpush1.msra.mxu0 %v4083
    %4107 = vmatprep.subr.mxu0 0.0
    %4108 = vmatpush1.msra.mxu0 %v4084
    %4109 = vmatprep.subr.mxu0 0.0
    %4110 = vmatpush1.msra.mxu0 %v4085
    %4111 = vmatprep.subr.mxu0 0.0
    %4112 = vmatpush1.msra.mxu0 %v4086
    %4113 = vmatprep.subr.mxu0 0.0
    %4114 = vmatpush1.msra.mxu0 %v4087
    %4115 = vmatprep.subr.mxu0 0.0
    %4116 = vmatpush1.msra.mxu0 %v4088
    %4117 = vmatprep.subr.mxu0 0.0
    %4118 = vmatpush1.msra.mxu0 %v4089
    %4119 = vmatprep.subr.mxu0 0.0
    %4120 = vmatpush1.msra.mxu0 %v4090
    %4121 = vmatprep.subr.mxu0 0.0
    %4122 = vmatpush1.msra.mxu0 %v4091
    %4123 = vmatprep.subr.mxu0 0.0
    %4124 = vmatpush1.msra.mxu0 %v4092
    %4125 = vmatprep.subr.mxu0 0.0
    %4126 = vmatpush1.msra.mxu0 0.0
    %4127 = vmatprep.subr.mxu0 0.0
    %4128 = vmatpush1.msra.mxu0 0.0
    %4129 = vmatprep.subr.mxu0 0.0
    %4130 = vmatpush1.msra.mxu0 0.0
    %4131 = vmatprep.subr.mxu0 0.0
    %4132 = vmatpush1.msra.mxu0 0.0
    %4133 = vmatprep.subr.mxu0 0.0
    %4134 = vmatpush1.msra.mxu0 0.0
    %4135 = vmatprep.subr.mxu0 0.0
    %4136 = vmatpush1.msra.mxu0 0.0
    %4137 = vmatprep.subr.mxu0 0.0
    %4138 = vmatpush1.msra.mxu0 0.0
    %4139 = vmatprep.subr.mxu0 0.0
    %4140 = vmatpush1.msra.mxu0 0.0
    %4141 = vmatprep.subr.mxu0 0.0
    %4142 = vmatpush1.msra.mxu0 0.0
    %4143 = vmatprep.subr.mxu0 0.0
    %4144 = vmatpush1.msra.mxu0 0.0
    %4145 = vmatprep.subr.mxu0 0.0
    %4146 = vmatpush1.msra.mxu0 0.0
    %4147 = vmatprep.subr.mxu0 0.0
    %4148 = vmatpush1.msra.mxu0 0.0
    %4149 = vmatprep.subr.mxu0 0.0
    %4150 = vmatpush1.msra.mxu0 0.0
    %4151 = vmatprep.subr.mxu0 0.0
    %4152 = vmatpush1.msra.mxu0 0.0
    %4153 = vmatprep.subr.mxu0 0.0
    %4154 = vmatpush1.msra.mxu0 0.0
    %4155 = vmatprep.subr.mxu0 0.0
    %4156 = vmatpush1.msra.mxu0 0.0
    %4157 = vmatprep.mubr.f32.mxu0 0.0
    %4158 = vmatmul.mubr.f32.gmra.mrb[0].mxu0 %v4076
    %v4159 = vpop.f32.mrb[0].mxu0
    %v4160 = vadd.f32 0.0, %v4159
    %v4161 = vpop.f32.mrb[0].mxu0
    %4162 = vdwg.mxu0
    %v4163 = vld [vmem:[%s5] sm:$0xf]
    %s4164 = scalar_lea.vmem %s3, 128
    %v4165 = vld [vmem:[%s4164] sm:$0xff]
    %v4166 = vld [vmem:[%s4164 + $0x8] sm:$0xff]
    %v4167 = vld [vmem:[%s4164 + $0x10] sm:$0xff]
    %v4168 = vld [vmem:[%s4164 + $0x18] sm:$0xff]
    %v4169 = vld [vmem:[%s4164 + $0x20] sm:$0xff]
    %v4170 = vld [vmem:[%s4164 + $0x28] sm:$0xff]
    %v4171 = vld [vmem:[%s4164 + $0x30] sm:$0xff]
    %v4172 = vld [vmem:[%s4164 + $0x38] sm:$0xff]
    %v4173 = vld [vmem:[%s4164 + $0x40] sm:$0xff]
    %v4174 = vld [vmem:[%s4164 + $0x48] sm:$0xff]
    %v4175 = vld [vmem:[%s4164 + $0x50] sm:$0xff]
    %v4176 = vld [vmem:[%s4164 + $0x58] sm:$0xff]
    %v4177 = vld [vmem:[%s4164 + $0x60] sm:$0xff]
    %v4178 = vld [vmem:[%s4164 + $0x68] sm:$0xff]
    %v4179 = vld [vmem:[%s4164 + $0x70] sm:$0xff]
    %v4180 = vld [vmem:[%s4164 + $0x78] sm:$0xff]
    %4181 = vmatprep.subr.mxu0 0.0
    %4182 = vmatpush1.msra.mxu0 %v4165
    %4183 = vmatprep.subr.mxu0 0.0
    %4184 = vmatpush1.msra.mxu0 %v4166
    %4185 = vmatprep.subr.mxu0 0.0
    %4186 = vmatpush1.msra.mxu0 %v4167
    %4187 = vmatprep.subr.mxu0 0.0
    %4188 = vmatpush1.msra.mxu0 %v4168
    %4189 = vmatprep.subr.mxu0 0.0
    %4190 = vmatpush1.msra.mxu0 %v4169
    %4191 = vmatprep.subr.mxu0 0.0
    %4192 = vmatpush1.msra.mxu0 %v4170
    %4193 = vmatprep.subr.mxu0 0.0
    %4194 = vmatpush1.msra.mxu0 %v4171
    %4195 = vmatprep.subr.mxu0 0.0
    %4196 = vmatpush1.msra.mxu0 %v4172
    %4197 = vmatprep.subr.mxu0 0.0
    %4198 = vmatpush1.msra.mxu0 %v4173
    %4199 = vmatprep.subr.mxu0 0.0
    %4200 = vmatpush1.msra.mxu0 %v4174
    %4201 = vmatprep.subr.mxu0 0.0
    %4202 = vmatpush1.msra.mxu0 %v4175
    %4203 = vmatprep.subr.mxu0 0.0
    %4204 = vmatpush1.msra.mxu0 %v4176
    %4205 = vmatprep.subr.mxu0 0.0
    %4206 = vmatpush1.msra.mxu0 %v4177
    %4207 = vmatprep.subr.mxu0 0.0
    %4208 = vmatpush1.msra.mxu0 %v4178
    %4209 = vmatprep.subr.mxu0 0.0
    %4210 = vmatpush1.msra.mxu0 %v4179
    %4211 = vmatprep.subr.mxu0 0.0
    %4212 = vmatpush1.msra.mxu0 %v4180
    %4213 = vmatprep.subr.mxu0 0.0
    %4214 = vmatpush1.msra.mxu0 0.0
    %4215 = vmatprep.subr.mxu0 0.0
    %4216 = vmatpush1.msra.mxu0 0.0
    %4217 = vmatprep.subr.mxu0 0.0
    %4218 = vmatpush1.msra.mxu0 0.0
    %4219 = vmatprep.subr.mxu0 0.0
    %4220 = vmatpush1.msra.mxu0 0.0
    %4221 = vmatprep.subr.mxu0 0.0
    %4222 = vmatpush1.msra.mxu0 0.0
    %4223 = vmatprep.subr.mxu0 0.0
    %4224 = vmatpush1.msra.mxu0 0.0
    %4225 = vmatprep.subr.mxu0 0.0
    %4226 = vmatpush1.msra.mxu0 0.0
    %4227 = vmatprep.subr.mxu0 0.0
    %4228 = vmatpush1.msra.mxu0 0.0
    %4229 = vmatprep.subr.mxu0 0.0
    %4230 = vmatpush1.msra.mxu0 0.0
    %4231 = vmatprep.subr.mxu0 0.0
    %4232 = vmatpush1.msra.mxu0 0.0
    %4233 = vmatprep.subr.mxu0 0.0
    %4234 = vmatpush1.msra.mxu0 0.0
    %4235 = vmatprep.subr.mxu0 0.0
    %4236 = vmatpush1.msra.mxu0 0.0
    %4237 = vmatprep.subr.mxu0 0.0
    %4238 = vmatpush1.msra.mxu0 0.0
    %4239 = vmatprep.subr.mxu0 0.0
    %4240 = vmatpush1.msra.mxu0 0.0
    %4241 = vmatprep.subr.mxu0 0.0
    %4242 = vmatpush1.msra.mxu0 0.0
    %4243 = vmatprep.subr.mxu0 0.0
    %4244 = vmatpush1.msra.mxu0 0.0
    %4245 = vmatprep.mubr.f32.mxu0 0.0
    %4246 = vmatmul.mubr.f32.gmra.mrb[0].mxu0 %v4076
    %v4247 = vpop.f32.mrb[0].mxu0
    %v4248 = vadd.f32 0.0, %v4247
    %v4249 = vpop.f32.mrb[0].mxu0
    %4250 = vdwg.mxu0
    %s4251 = scalar_lea.vmem %s5, 4
    %v4252 = vld [vmem:[%s4251] sm:$0xf]
    %vm4253 = vcmask 15360
    %v4255 = vsel %vm4253, %v4252, 0
    %vm4257 = vcmask 1041408
    %v4259 = vsel %vm4257, %v4248, 0
    %4261 = vmatprep.subr.mxu0 0.0
    %4262 = vmatpush1.msra.mxu0 %v4259
    %4263 = vmatprep.subr.mxu0 0.0
    %4264 = vmatpush1.msra.mxu0 0.0
    %4265 = vmatprep.subr.mxu0 0.0
    %4266 = vmatpush1.msra.mxu0 0.0
    %4267 = vmatprep.subr.mxu0 0.0
    %4268 = vmatpush1.msra.mxu0 0.0
    %4269 = vmatprep.subr.mxu0 0.0
    %4270 = vmatpush1.msra.mxu0 0.0
    %4271 = vmatprep.subr.mxu0 0.0
    %4272 = vmatpush1.msra.mxu0 0.0
    %4273 = vmatprep.subr.mxu0 0.0
    %4274 = vmatpush1.msra.mxu0 0.0
    %4275 = vmatprep.subr.mxu0 0.0
    %4276 = vmatpush1.msra.mxu0 0.0
    %4277 = vmatprep.subr.mxu0 0.0
    %4278 = vmatpush1.msra.mxu0 0.0
    %4279 = vmatprep.subr.mxu0 0.0
    %4280 = vmatpush1.msra.mxu0 0.0
    %4281 = vmatprep.subr.mxu0 0.0
    %4282 = vmatpush1.msra.mxu0 0.0
    %4283 = vmatprep.subr.mxu0 0.0
    %4284 = vmatpush1.msra.mxu0 0.0
    %4285 = vmatprep.subr.mxu0 0.0
    %4286 = vmatpush1.msra.mxu0 0.0
    %4287 = vmatprep.subr.mxu0 0.0
    %4288 = vmatpush1.msra.mxu0 0.0
    %4289 = vmatprep.subr.mxu0 0.0
    %4290 = vmatpush1.msra.mxu0 0.0
    %4291 = vmatprep.subr.mxu0 0.0
    %4292 = vmatpush1.msra.mxu0 0.0
    %4293 = vmatprep.subr.mxu0 0.0
    %4294 = vmatpush1.msra.mxu0 0.0
    %4295 = vmatprep.subr.mxu0 0.0
    %4296 = vmatpush1.msra.mxu0 0.0
    %4297 = vmatprep.subr.mxu0 0.0
    %4298 = vmatpush1.msra.mxu0 0.0
    %4299 = vmatprep.subr.mxu0 0.0
    %4300 = vmatpush1.msra.mxu0 0.0
    %4301 = vmatprep.subr.mxu0 0.0
    %4302 = vmatpush1.msra.mxu0 0.0
    %4303 = vmatprep.subr.mxu0 0.0
    %4304 = vmatpush1.msra.mxu0 0.0
    %4305 = vmatprep.subr.mxu0 0.0
    %4306 = vmatpush1.msra.mxu0 0.0
    %4307 = vmatprep.subr.mxu0 0.0
    %4308 = vmatpush1.msra.mxu0 0.0
    %4309 = vmatprep.subr.mxu0 0.0
    %4310 = vmatpush1.msra.mxu0 0.0
    %4311 = vmatprep.subr.mxu0 0.0
    %4312 = vmatpush1.msra.mxu0 0.0
    %4313 = vmatprep.subr.mxu0 0.0
    %4314 = vmatpush1.msra.mxu0 0.0
    %4315 = vmatprep.subr.mxu0 0.0
    %4316 = vmatpush1.msra.mxu0 0.0
    %4317 = vmatprep.subr.mxu0 0.0
    %4318 = vmatpush1.msra.mxu0 0.0
    %4319 = vmatprep.subr.mxu0 0.0
    %4320 = vmatpush1.msra.mxu0 0.0
    %4321 = vmatprep.subr.mxu0 0.0
    %4322 = vmatpush1.msra.mxu0 0.0
    %4323 = vmatprep.subr.mxu0 0.0
    %4324 = vmatpush1.msra.mxu0 0.0
    %4325 = vmatprep.mubr.f32.mxu0 0.0
    %4326 = vmatmul.mubr.f32.gmra.mrb[0].mxu0 %v4255
    %v4327 = vpop.f32.mrb[0].mxu0
    %v4328 = vadd.f32 0.0, %v4327
    %v4329 = vpop.f32.mrb[0].mxu0
    %4330 = vdwg.mxu0
    %v4332 = vsel %vm4253, %v4163, 0
    %v4335 = vsel %vm4257, %v4160, 0
    %4337 = vmatprep.subr.mxu0 0.0
    %4338 = vmatpush1.msra.mxu0 %v4335
    %4339 = vmatprep.subr.mxu0 0.0
    %4340 = vmatpush1.msra.mxu0 0.0
    %4341 = vmatprep.subr.mxu0 0.0
    %4342 = vmatpush1.msra.mxu0 0.0
    %4343 = vmatprep.subr.mxu0 0.0
    %4344 = vmatpush1.msra.mxu0 0.0
    %4345 = vmatprep.subr.mxu0 0.0
    %4346 = vmatpush1.msra.mxu0 0.0
    %4347 = vmatprep.subr.mxu0 0.0
    %4348 = vmatpush1.msra.mxu0 0.0
    %4349 = vmatprep.subr.mxu0 0.0
    %4350 = vmatpush1.msra.mxu0 0.0
    %4351 = vmatprep.subr.mxu0 0.0
    %4352 = vmatpush1.msra.mxu0 0.0
    %4353 = vmatprep.subr.mxu0 0.0
    %4354 = vmatpush1.msra.mxu0 0.0
    %4355 = vmatprep.subr.mxu0 0.0
    %4356 = vmatpush1.msra.mxu0 0.0
    %4357 = vmatprep.subr.mxu0 0.0
    %4358 = vmatpush1.msra.mxu0 0.0
    %4359 = vmatprep.subr.mxu0 0.0
    %4360 = vmatpush1.msra.mxu0 0.0
    %4361 = vmatprep.subr.mxu0 0.0
    %4362 = vmatpush1.msra.mxu0 0.0
    %4363 = vmatprep.subr.mxu0 0.0
    %4364 = vmatpush1.msra.mxu0 0.0
    %4365 = vmatprep.subr.mxu0 0.0
    %4366 = vmatpush1.msra.mxu0 0.0
    %4367 = vmatprep.subr.mxu0 0.0
    %4368 = vmatpush1.msra.mxu0 0.0
    %4369 = vmatprep.subr.mxu0 0.0
    %4370 = vmatpush1.msra.mxu0 0.0
    %4371 = vmatprep.subr.mxu0 0.0
    %4372 = vmatpush1.msra.mxu0 0.0
    %4373 = vmatprep.subr.mxu0 0.0
    %4374 = vmatpush1.msra.mxu0 0.0
    %4375 = vmatprep.subr.mxu0 0.0
    %4376 = vmatpush1.msra.mxu0 0.0
    %4377 = vmatprep.subr.mxu0 0.0
    %4378 = vmatpush1.msra.mxu0 0.0
    %4379 = vmatprep.subr.mxu0 0.0
    %4380 = vmatpush1.msra.mxu0 0.0
    %4381 = vmatprep.subr.mxu0 0.0
    %4382 = vmatpush1.msra.mxu0 0.0
    %4383 = vmatprep.subr.mxu0 0.0
    %4384 = vmatpush1.msra.mxu0 0.0
    %4385 = vmatprep.subr.mxu0 0.0
    %4386 = vmatpush1.msra.mxu0 0.0
    %4387 = vmatprep.subr.mxu0 0.0
    %4388 = vmatpush1.msra.mxu0 0.0
    %4389 = vmatprep.subr.mxu0 0.0
    %4390 = vmatpush1.msra.mxu0 0.0
    %4391 = vmatprep.subr.mxu0 0.0
    %4392 = vmatpush1.msra.mxu0 0.0
    %4393 = vmatprep.subr.mxu0 0.0
    %4394 = vmatpush1.msra.mxu0 0.0
    %4395 = vmatprep.subr.mxu0 0.0
    %4396 = vmatpush1.msra.mxu0 0.0
    %4397 = vmatprep.subr.mxu0 0.0
    %4398 = vmatpush1.msra.mxu0 0.0
    %4399 = vmatprep.subr.mxu0 0.0
    %4400 = vmatpush1.msra.mxu0 0.0
    %4401 = vmatprep.mubr.f32.mxu0 0.0
    %4402 = vmatmul.mubr.f32.gmra.mrb[0].mxu0 %v4332
    %v4403 = vpop.f32.mrb[0].mxu0
    %v4404 = vadd.f32 %v4328, %v4403
    %v4405 = vpop.f32.mrb[0].mxu0
    %4406 = vdwg.mxu0
    %s4407 = scalar_lea.vmem %s3, 256
    %v4408 = vld [vmem:[%s4407] sm:$0xff]
    %v4409 = vld [vmem:[%s4407 + $0x8] sm:$0xff]
    %v4410 = vld [vmem:[%s4407 + $0x10] sm:$0xff]
    %v4411 = vld [vmem:[%s4407 + $0x18] sm:$0xff]
    %v4412 = vld [vmem:[%s4407 + $0x20] sm:$0xff]
    %v4413 = vld [vmem:[%s4407 + $0x28] sm:$0xff]
    %v4414 = vld [vmem:[%s4407 + $0x30] sm:$0xff]
    %v4415 = vld [vmem:[%s4407 + $0x38] sm:$0xff]
    %v4416 = vld [vmem:[%s4407 + $0x40] sm:$0xff]
    %v4417 = vld [vmem:[%s4407 + $0x48] sm:$0xff]
    %v4418 = vld [vmem:[%s4407 + $0x50] sm:$0xff]
    %v4419 = vld [vmem:[%s4407 + $0x58] sm:$0xff]
    %v4420 = vld [vmem:[%s4407 + $0x60] sm:$0xff]
    %v4421 = vld [vmem:[%s4407 + $0x68] sm:$0xff]
    %v4422 = vld [vmem:[%s4407 + $0x70] sm:$0xff]
    %v4423 = vld [vmem:[%s4407 + $0x78] sm:$0xff]
    %4424 = vmatprep.subr.mxu0 0.0
    %4425 = vmatpush1.msra.mxu0 %v4408
    %4426 = vmatprep.subr.mxu0 0.0
    %4427 = vmatpush1.msra.mxu0 %v4409
    %4428 = vmatprep.subr.mxu0 0.0
    %4429 = vmatpush1.msra.mxu0 %v4410
    %4430 = vmatprep.subr.mxu0 0.0
    %4431 = vmatpush1.msra.mxu0 %v4411
    %4432 = vmatprep.subr.mxu0 0.0
    %4433 = vmatpush1.msra.mxu0 %v4412
    %4434 = vmatprep.subr.mxu0 0.0
    %4435 = vmatpush1.msra.mxu0 %v4413
    %4436 = vmatprep.subr.mxu0 0.0
    %4437 = vmatpush1.msra.mxu0 %v4414
    %4438 = vmatprep.subr.mxu0 0.0
    %4439 = vmatpush1.msra.mxu0 %v4415
    %4440 = vmatprep.subr.mxu0 0.0
    %4441 = vmatpush1.msra.mxu0 %v4416
    %4442 = vmatprep.subr.mxu0 0.0
    %4443 = vmatpush1.msra.mxu0 %v4417
    %4444 = vmatprep.subr.mxu0 0.0
    %4445 = vmatpush1.msra.mxu0 %v4418
    %4446 = vmatprep.subr.mxu0 0.0
    %4447 = vmatpush1.msra.mxu0 %v4419
    %4448 = vmatprep.subr.mxu0 0.0
    %4449 = vmatpush1.msra.mxu0 %v4420
    %4450 = vmatprep.subr.mxu0 0.0
    %4451 = vmatpush1.msra.mxu0 %v4421
    %4452 = vmatprep.subr.mxu0 0.0
    %4453 = vmatpush1.msra.mxu0 %v4422
    %4454 = vmatprep.subr.mxu0 0.0
    %4455 = vmatpush1.msra.mxu0 %v4423
    %4456 = vmatprep.subr.mxu0 0.0
    %4457 = vmatpush1.msra.mxu0 0.0
    %4458 = vmatprep.subr.mxu0 0.0
    %4459 = vmatpush1.msra.mxu0 0.0
    %4460 = vmatprep.subr.mxu0 0.0
    %4461 = vmatpush1.msra.mxu0 0.0
    %4462 = vmatprep.subr.mxu0 0.0
    %4463 = vmatpush1.msra.mxu0 0.0
    %4464 = vmatprep.subr.mxu0 0.0
    %4465 = vmatpush1.msra.mxu0 0.0
    %4466 = vmatprep.subr.mxu0 0.0
    %4467 = vmatpush1.msra.mxu0 0.0
    %4468 = vmatprep.subr.mxu0 0.0
    %4469 = vmatpush1.msra.mxu0 0.0
    %4470 = vmatprep.subr.mxu0 0.0
    %4471 = vmatpush1.msra.mxu0 0.0
    %4472 = vmatprep.subr.mxu0 0.0
    %4473 = vmatpush1.msra.mxu0 0.0
    %4474 = vmatprep.subr.mxu0 0.0
    %4475 = vmatpush1.msra.mxu0 0.0
    %4476 = vmatprep.subr.mxu0 0.0
    %4477 = vmatpush1.msra.mxu0 0.0
    %4478 = vmatprep.subr.mxu0 0.0
    %4479 = vmatpush1.msra.mxu0 0.0
    %4480 = vmatprep.subr.mxu0 0.0
    %4481 = vmatpush1.msra.mxu0 0.0
    %4482 = vmatprep.subr.mxu0 0.0
    %4483 = vmatpush1.msra.mxu0 0.0
    %4484 = vmatprep.subr.mxu0 0.0
    %4485 = vmatpush1.msra.mxu0 0.0
    %4486 = vmatprep.subr.mxu0 0.0
    %4487 = vmatpush1.msra.mxu0 0.0
    %4488 = vmatprep.mubr.f32.mxu0 0.0
    %4489 = vmatmul.mubr.f32.gmra.mrb[0].mxu0 %v4076
    %v4490 = vpop.f32.mrb[0].mxu0
    %v4491 = vadd.f32 0.0, %v4490
    %v4492 = vpop.f32.mrb[0].mxu0
    %4493 = vdwg.mxu0
    %s4494 = scalar_lea.vmem %s5, 8
    %v4495 = vld [vmem:[%s4494] sm:$0xf]
    %v4497 = vsel %vm4253, %v4495, 0
    %v4500 = vsel %vm4257, %v4491, 0
    %4502 = vmatprep.subr.mxu0 0.0
    %4503 = vmatpush1.msra.mxu0 %v4500
    %4504 = vmatprep.subr.mxu0 0.0
    %4505 = vmatpush1.msra.mxu0 0.0
    %4506 = vmatprep.subr.mxu0 0.0
    %4507 = vmatpush1.msra.mxu0 0.0
    %4508 = vmatprep.subr.mxu0 0.0
    %4509 = vmatpush1.msra.mxu0 0.0
    %4510 = vmatprep.subr.mxu0 0.0
    %4511 = vmatpush1.msra.mxu0 0.0
    %4512 = vmatprep.subr.mxu0 0.0
    %4513 = vmatpush1.msra.mxu0 0.0
    %4514 = vmatprep.subr.mxu0 0.0
    %4515 = vmatpush1.msra.mxu0 0.0
    %4516 = vmatprep.subr.mxu0 0.0
    %4517 = vmatpush1.msra.mxu0 0.0
    %4518 = vmatprep.subr.mxu0 0.0
    %4519 = vmatpush1.msra.mxu0 0.0
    %4520 = vmatprep.subr.mxu0 0.0
    %4521 = vmatpush1.msra.mxu0 0.0
    %4522 = vmatprep.subr.mxu0 0.0
    %4523 = vmatpush1.msra.mxu0 0.0
    %4524 = vmatprep.subr.mxu0 0.0
    %4525 = vmatpush1.msra.mxu0 0.0
    %4526 = vmatprep.subr.mxu0 0.0
    %4527 = vmatpush1.msra.mxu0 0.0
    %4528 = vmatprep.subr.mxu0 0.0
    %4529 = vmatpush1.msra.mxu0 0.0
    %4530 = vmatprep.subr.mxu0 0.0
    %4531 = vmatpush1.msra.mxu0 0.0
    %4532 = vmatprep.subr.mxu0 0.0
    %4533 = vmatpush1.msra.mxu0 0.0
    %4534 = vmatprep.subr.mxu0 0.0
    %4535 = vmatpush1.msra.mxu0 0.0
    %4536 = vmatprep.subr.mxu0 0.0
    %4537 = vmatpush1.msra.mxu0 0.0
    %4538 = vmatprep.subr.mxu0 0.0
    %4539 = vmatpush1.msra.mxu0 0.0
    %4540 = vmatprep.subr.mxu0 0.0
    %4541 = vmatpush1.msra.mxu0 0.0
    %4542 = vmatprep.subr.mxu0 0.0
    %4543 = vmatpush1.msra.mxu0 0.0
    %4544 = vmatprep.subr.mxu0 0.0
    %4545 = vmatpush1.msra.mxu0 0.0
    %4546 = vmatprep.subr.mxu0 0.0
    %4547 = vmatpush1.msra.mxu0 0.0
    %4548 = vmatprep.subr.mxu0 0.0
    %4549 = vmatpush1.msra.mxu0 0.0
    %4550 = vmatprep.subr.mxu0 0.0
    %4551 = vmatpush1.msra.mxu0 0.0
    %4552 = vmatprep.subr.mxu0 0.0
    %4553 = vmatpush1.msra.mxu0 0.0
    %4554 = vmatprep.subr.mxu0 0.0
    %4555 = vmatpush1.msra.mxu0 0.0
    %4556 = vmatprep.subr.mxu0 0.0
    %4557 = vmatpush1.msra.mxu0 0.0
    %4558 = vmatprep.subr.mxu0 0.0
    %4559 = vmatpush1.msra.mxu0 0.0
    %4560 = vmatprep.subr.mxu0 0.0
    %4561 = vmatpush1.msra.mxu0 0.0
    %4562 = vmatprep.subr.mxu0 0.0
    %4563 = vmatpush1.msra.mxu0 0.0
    %4564 = vmatprep.subr.mxu0 0.0
    %4565 = vmatpush1.msra.mxu0 0.0
    %4566 = vmatprep.mubr.f32.mxu0 0.0
    %4567 = vmatmul.mubr.f32.gmra.mrb[0].mxu0 %v4497
    %v4568 = vpop.f32.mrb[0].mxu0
    %v4569 = vadd.f32 0.0, %v4568
    %v4570 = vpop.f32.mrb[0].mxu0
    %4571 = vdwg.mxu0
    %v4572 = vadd.f32 %v4404, %v4569
    %s4573 = scalar_lea.vmem %s3, 384
    %v4574 = vld [vmem:[%s4573] sm:$0xff]
    %v4575 = vld [vmem:[%s4573 + $0x8] sm:$0xff]
    %v4576 = vld [vmem:[%s4573 + $0x10] sm:$0xff]
    %v4577 = vld [vmem:[%s4573 + $0x18] sm:$0xff]
    %v4578 = vld [vmem:[%s4573 + $0x20] sm:$0xff]
    %v4579 = vld [vmem:[%s4573 + $0x28] sm:$0xff]
    %v4580 = vld [vmem:[%s4573 + $0x30] sm:$0xff]
    %v4581 = vld [vmem:[%s4573 + $0x38] sm:$0xff]
    %v4582 = vld [vmem:[%s4573 + $0x40] sm:$0xff]
    %v4583 = vld [vmem:[%s4573 + $0x48] sm:$0xff]
    %v4584 = vld [vmem:[%s4573 + $0x50] sm:$0xff]
    %v4585 = vld [vmem:[%s4573 + $0x58] sm:$0xff]
    %v4586 = vld [vmem:[%s4573 + $0x60] sm:$0xff]
    %v4587 = vld [vmem:[%s4573 + $0x68] sm:$0xff]
    %v4588 = vld [vmem:[%s4573 + $0x70] sm:$0xff]
    %v4589 = vld [vmem:[%s4573 + $0x78] sm:$0xff]
    %4590 = vmatprep.subr.mxu0 0.0
    %4591 = vmatpush1.msra.mxu0 %v4574
    %4592 = vmatprep.subr.mxu0 0.0
    %4593 = vmatpush1.msra.mxu0 %v4575
    %4594 = vmatprep.subr.mxu0 0.0
    %4595 = vmatpush1.msra.mxu0 %v4576
    %4596 = vmatprep.subr.mxu0 0.0
    %4597 = vmatpush1.msra.mxu0 %v4577
    %4598 = vmatprep.subr.mxu0 0.0
    %4599 = vmatpush1.msra.mxu0 %v4578
    %4600 = vmatprep.subr.mxu0 0.0
    %4601 = vmatpush1.msra.mxu0 %v4579
    %4602 = vmatprep.subr.mxu0 0.0
    %4603 = vmatpush1.msra.mxu0 %v4580
    %4604 = vmatprep.subr.mxu0 0.0
    %4605 = vmatpush1.msra.mxu0 %v4581
    %4606 = vmatprep.subr.mxu0 0.0
    %4607 = vmatpush1.msra.mxu0 %v4582
    %4608 = vmatprep.subr.mxu0 0.0
    %4609 = vmatpush1.msra.mxu0 %v4583
    %4610 = vmatprep.subr.mxu0 0.0
    %4611 = vmatpush1.msra.mxu0 %v4584
    %4612 = vmatprep.subr.mxu0 0.0
    %4613 = vmatpush1.msra.mxu0 %v4585
    %4614 = vmatprep.subr.mxu0 0.0
    %4615 = vmatpush1.msra.mxu0 %v4586
    %4616 = vmatprep.subr.mxu0 0.0
    %4617 = vmatpush1.msra.mxu0 %v4587
    %4618 = vmatprep.subr.mxu0 0.0
    %4619 = vmatpush1.msra.mxu0 %v4588
    %4620 = vmatprep.subr.mxu0 0.0
    %4621 = vmatpush1.msra.mxu0 %v4589
    %4622 = vmatprep.subr.mxu0 0.0
    %4623 = vmatpush1.msra.mxu0 0.0
    %4624 = vmatprep.subr.mxu0 0.0
    %4625 = vmatpush1.msra.mxu0 0.0
    %4626 = vmatprep.subr.mxu0 0.0
    %4627 = vmatpush1.msra.mxu0 0.0
    %4628 = vmatprep.subr.mxu0 0.0
    %4629 = vmatpush1.msra.mxu0 0.0
    %4630 = vmatprep.subr.mxu0 0.0
    %4631 = vmatpush1.msra.mxu0 0.0
    %4632 = vmatprep.subr.mxu0 0.0
    %4633 = vmatpush1.msra.mxu0 0.0
    %4634 = vmatprep.subr.mxu0 0.0
    %4635 = vmatpush1.msra.mxu0 0.0
    %4636 = vmatprep.subr.mxu0 0.0
    %4637 = vmatpush1.msra.mxu0 0.0
    %4638 = vmatprep.subr.mxu0 0.0
    %4639 = vmatpush1.msra.mxu0 0.0
    %4640 = vmatprep.subr.mxu0 0.0
    %4641 = vmatpush1.msra.mxu0 0.0
    %4642 = vmatprep.subr.mxu0 0.0
    %4643 = vmatpush1.msra.mxu0 0.0
    %4644 = vmatprep.subr.mxu0 0.0
    %4645 = vmatpush1.msra.mxu0 0.0
    %4646 = vmatprep.subr.mxu0 0.0
    %4647 = vmatpush1.msra.mxu0 0.0
    %4648 = vmatprep.subr.mxu0 0.0
    %4649 = vmatpush1.msra.mxu0 0.0
    %4650 = vmatprep.subr.mxu0 0.0
    %4651 = vmatpush1.msra.mxu0 0.0
    %4652 = vmatprep.subr.mxu0 0.0
    %4653 = vmatpush1.msra.mxu0 0.0
    %4654 = vmatprep.mubr.f32.mxu0 0.0
    %4655 = vmatmul.mubr.f32.gmra.mrb[0].mxu0 %v4076
    %v4656 = vpop.f32.mrb[0].mxu0
    %v4657 = vadd.f32 0.0, %v4656
    %v4658 = vpop.f32.mrb[0].mxu0
    %4659 = vdwg.mxu0
    %s4660 = scalar_lea.vmem %s5, 12
    %v4661 = vld [vmem:[%s4660] sm:$0xf]
    %v4663 = vsel %vm4253, %v4661, 0
    %v4666 = vsel %vm4257, %v4657, 0
    %4668 = vmatprep.subr.mxu0 0.0
    %4669 = vmatpush1.msra.mxu0 %v4666
    %4670 = vmatprep.subr.mxu0 0.0
    %4671 = vmatpush1.msra.mxu0 0.0
    %4672 = vmatprep.subr.mxu0 0.0
    %4673 = vmatpush1.msra.mxu0 0.0
    %4674 = vmatprep.subr.mxu0 0.0
    %4675 = vmatpush1.msra.mxu0 0.0
    %4676 = vmatprep.subr.mxu0 0.0
    %4677 = vmatpush1.msra.mxu0 0.0
    %4678 = vmatprep.subr.mxu0 0.0
    %4679 = vmatpush1.msra.mxu0 0.0
    %4680 = vmatprep.subr.mxu0 0.0
    %4681 = vmatpush1.msra.mxu0 0.0
    %4682 = vmatprep.subr.mxu0 0.0
    %4683 = vmatpush1.msra.mxu0 0.0
    %4684 = vmatprep.subr.mxu0 0.0
    %4685 = vmatpush1.msra.mxu0 0.0
    %4686 = vmatprep.subr.mxu0 0.0
    %4687 = vmatpush1.msra.mxu0 0.0
    %4688 = vmatprep.subr.mxu0 0.0
    %4689 = vmatpush1.msra.mxu0 0.0
    %4690 = vmatprep.subr.mxu0 0.0
    %4691 = vmatpush1.msra.mxu0 0.0
    %4692 = vmatprep.subr.mxu0 0.0
    %4693 = vmatpush1.msra.mxu0 0.0
    %4694 = vmatprep.subr.mxu0 0.0
    %4695 = vmatpush1.msra.mxu0 0.0
    %4696 = vmatprep.subr.mxu0 0.0
    %4697 = vmatpush1.msra.mxu0 0.0
    %4698 = vmatprep.subr.mxu0 0.0
    %4699 = vmatpush1.msra.mxu0 0.0
    %4700 = vmatprep.subr.mxu0 0.0
    %4701 = vmatpush1.msra.mxu0 0.0
    %4702 = vmatprep.subr.mxu0 0.0
    %4703 = vmatpush1.msra.mxu0 0.0
    %4704 = vmatprep.subr.mxu0 0.0
    %4705 = vmatpush1.msra.mxu0 0.0
    %4706 = vmatprep.subr.mxu0 0.0
    %4707 = vmatpush1.msra.mxu0 0.0
    %4708 = vmatprep.subr.mxu0 0.0
    %4709 = vmatpush1.msra.mxu0 0.0
    %4710 = vmatprep.subr.mxu0 0.0
    %4711 = vmatpush1.msra.mxu0 0.0
    %4712 = vmatprep.subr.mxu0 0.0
    %4713 = vmatpush1.msra.mxu0 0.0
    %4714 = vmatprep.subr.mxu0 0.0
    %4715 = vmatpush1.msra.mxu0 0.0
    %4716 = vmatprep.subr.mxu0 0.0
    %4717 = vmatpush1.msra.mxu0 0.0
    %4718 = vmatprep.subr.mxu0 0.0
    %4719 = vmatpush1.msra.mxu0 0.0
    %4720 = vmatprep.subr.mxu0 0.0
    %4721 = vmatpush1.msra.mxu0 0.0
    %4722 = vmatprep.subr.mxu0 0.0
    %4723 = vmatpush1.msra.mxu0 0.0
    %4724 = vmatprep.subr.mxu0 0.0
    %4725 = vmatpush1.msra.mxu0 0.0
    %4726 = vmatprep.subr.mxu0 0.0
    %4727 = vmatpush1.msra.mxu0 0.0
    %4728 = vmatprep.subr.mxu0 0.0
    %4729 = vmatpush1.msra.mxu0 0.0
    %4730 = vmatprep.subr.mxu0 0.0
    %4731 = vmatpush1.msra.mxu0 0.0
    %4732 = vmatprep.mubr.f32.mxu0 0.0
    %4733 = vmatmul.mubr.f32.gmra.mrb[0].mxu0 %v4663
    %v4734 = vpop.f32.mrb[0].mxu0
    %v4735 = vadd.f32 0.0, %v4734
    %v4736 = vpop.f32.mrb[0].mxu0
    %4737 = vdwg.mxu0
    %v4738 = vadd.f32 %v4572, %v4735
    %v4739 = vld [vmem:[#allocation5] sm:$0x1]
    %v4741 = vlaneseq
    %v4742 = vshrl.u32 %v4741, 7
    %v4743 = vsub.s32 0, %v4742
    %v4744 = vrot.slane %v4739, %v4743
    %v4746 = vadd.f32 %v4738, %v4744
    %v4747 = vmax.f32 %v4746, 0.0
    %v4748 = vld [vmem:[%s9] sm:$0xff]
    %v4749 = vld [vmem:[%s9 + $0x8] sm:$0xff]
    %v4750 = vld [vmem:[%s9 + $0x10] sm:$0xff]
    %v4751 = vld [vmem:[%s9 + $0x18] sm:$0xff]
    %v4752 = vld [vmem:[%s9 + $0x20] sm:$0xff]
    %v4753 = vld [vmem:[%s9 + $0x28] sm:$0xff]
    %v4754 = vld [vmem:[%s9 + $0x30] sm:$0xff]
    %v4755 = vld [vmem:[%s9 + $0x38] sm:$0xff]
    %v4756 = vld [vmem:[%s9 + $0x40] sm:$0xff]
    %v4757 = vld [vmem:[%s9 + $0x48] sm:$0xff]
    %v4758 = vld [vmem:[%s9 + $0x50] sm:$0xff]
    %v4759 = vld [vmem:[%s9 + $0x58] sm:$0xff]
    %v4760 = vld [vmem:[%s9 + $0x60] sm:$0xff]
    %v4761 = vld [vmem:[%s9 + $0x68] sm:$0xff]
    %v4762 = vld [vmem:[%s9 + $0x70] sm:$0xff]
    %v4763 = vld [vmem:[%s9 + $0x78] sm:$0xff]
    %4764 = vmatprep.subr.mxu0 0.0
    %4765 = vmatpush1.msra.mxu0 %v4748
    %4766 = vmatprep.subr.mxu0 0.0
    %4767 = vmatpush1.msra.mxu0 %v4749
    %4768 = vmatprep.subr.mxu0 0.0
    %4769 = vmatpush1.msra.mxu0 %v4750
    %4770 = vmatprep.subr.mxu0 0.0
    %4771 = vmatpush1.msra.mxu0 %v4751
    %4772 = vmatprep.subr.mxu0 0.0
    %4773 = vmatpush1.msra.mxu0 %v4752
    %4774 = vmatprep.subr.mxu0 0.0
    %4775 = vmatpush1.msra.mxu0 %v4753
    %4776 = vmatprep.subr.mxu0 0.0
    %4777 = vmatpush1.msra.mxu0 %v4754
    %4778 = vmatprep.subr.mxu0 0.0
    %4779 = vmatpush1.msra.mxu0 %v4755
    %4780 = vmatprep.subr.mxu0 0.0
    %4781 = vmatpush1.msra.mxu0 %v4756
    %4782 = vmatprep.subr.mxu0 0.0
    %4783 = vmatpush1.msra.mxu0 %v4757
    %4784 = vmatprep.subr.mxu0 0.0
    %4785 = vmatpush1.msra.mxu0 %v4758
    %4786 = vmatprep.subr.mxu0 0.0
    %4787 = vmatpush1.msra.mxu0 %v4759
    %4788 = vmatprep.subr.mxu0 0.0
    %4789 = vmatpush1.msra.mxu0 %v4760
    %4790 = vmatprep.subr.mxu0 0.0
    %4791 = vmatpush1.msra.mxu0 %v4761
    %4792 = vmatprep.subr.mxu0 0.0
    %4793 = vmatpush1.msra.mxu0 %v4762
    %4794 = vmatprep.subr.mxu0 0.0
    %4795 = vmatpush1.msra.mxu0 %v4763
    %4796 = vmatprep.subr.mxu0 0.0
    %4797 = vmatpush1.msra.mxu0 0.0
    %4798 = vmatprep.subr.mxu0 0.0
    %4799 = vmatpush1.msra.mxu0 0.0
    %4800 = vmatprep.subr.mxu0 0.0
    %4801 = vmatpush1.msra.mxu0 0.0
    %4802 = vmatprep.subr.mxu0 0.0
    %4803 = vmatpush1.msra.mxu0 0.0
    %4804 = vmatprep.subr.mxu0 0.0
    %4805 = vmatpush1.msra.mxu0 0.0
    %4806 = vmatprep.subr.mxu0 0.0
    %4807 = vmatpush1.msra.mxu0 0.0
    %4808 = vmatprep.subr.mxu0 0.0
    %4809 = vmatpush1.msra.mxu0 0.0
    %4810 = vmatprep.subr.mxu0 0.0
    %4811 = vmatpush1.msra.mxu0 0.0
    %4812 = vmatprep.subr.mxu0 0.0
    %4813 = vmatpush1.msra.mxu0 0.0
    %4814 = vmatprep.subr.mxu0 0.0
    %4815 = vmatpush1.msra.mxu0 0.0
    %4816 = vmatprep.subr.mxu0 0.0
    %4817 = vmatpush1.msra.mxu0 0.0
    %4818 = vmatprep.subr.mxu0 0.0
    %4819 = vmatpush1.msra.mxu0 0.0
    %4820 = vmatprep.subr.mxu0 0.0
    %4821 = vmatpush1.msra.mxu0 0.0
    %4822 = vmatprep.subr.mxu0 0.0
    %4823 = vmatpush1.msra.mxu0 0.0
    %4824 = vmatprep.subr.mxu0 0.0
    %4825 = vmatpush1.msra.mxu0 0.0
    %4826 = vmatprep.subr.mxu0 0.0
    %4827 = vmatpush1.msra.mxu0 0.0
    %4828 = vmatprep.mubr.f32.mxu0 0.0
    %4829 = vmatmul.mubr.f32.gmra.mrb[0].mxu0 %v4747
    %v4830 = vpop.f32.mrb[0].mxu0
    %v4831 = vadd.f32 0.0, %v4830
    %v4832 = vpop.f32.mrb[0].mxu0
    %4833 = vdwg.mxu0
    %v4834 = vld [vmem:[%s11] sm:$0xff]
    %s4835 = scalar_lea.vmem %s9, 128
    %v4836 = vld [vmem:[%s4835] sm:$0xff]
    %v4837 = vld [vmem:[%s4835 + $0x8] sm:$0xff]
    %v4838 = vld [vmem:[%s4835 + $0x10] sm:$0xff]
    %v4839 = vld [vmem:[%s4835 + $0x18] sm:$0xff]
    %v4840 = vld [vmem:[%s4835 + $0x20] sm:$0xff]
    %v4841 = vld [vmem:[%s4835 + $0x28] sm:$0xff]
    %v4842 = vld [vmem:[%s4835 + $0x30] sm:$0xff]
    %v4843 = vld [vmem:[%s4835 + $0x38] sm:$0xff]
    %v4844 = vld [vmem:[%s4835 + $0x40] sm:$0xff]
    %v4845 = vld [vmem:[%s4835 + $0x48] sm:$0xff]
    %v4846 = vld [vmem:[%s4835 + $0x50] sm:$0xff]
    %v4847 = vld [vmem:[%s4835 + $0x58] sm:$0xff]
    %v4848 = vld [vmem:[%s4835 + $0x60] sm:$0xff]
    %v4849 = vld [vmem:[%s4835 + $0x68] sm:$0xff]
    %v4850 = vld [vmem:[%s4835 + $0x70] sm:$0xff]
    %v4851 = vld [vmem:[%s4835 + $0x78] sm:$0xff]
    %4852 = vmatprep.subr.mxu0 0.0
    %4853 = vmatpush1.msra.mxu0 %v4836
    %4854 = vmatprep.subr.mxu0 0.0
    %4855 = vmatpush1.msra.mxu0 %v4837
    %4856 = vmatprep.subr.mxu0 0.0
    %4857 = vmatpush1.msra.mxu0 %v4838
    %4858 = vmatprep.subr.mxu0 0.0
    %4859 = vmatpush1.msra.mxu0 %v4839
    %4860 = vmatprep.subr.mxu0 0.0
    %4861 = vmatpush1.msra.mxu0 %v4840
    %4862 = vmatprep.subr.mxu0 0.0
    %4863 = vmatpush1.msra.mxu0 %v4841
    %4864 = vmatprep.subr.mxu0 0.0
    %4865 = vmatpush1.msra.mxu0 %v4842
    %4866 = vmatprep.subr.mxu0 0.0
    %4867 = vmatpush1.msra.mxu0 %v4843
    %4868 = vmatprep.subr.mxu0 0.0
    %4869 = vmatpush1.msra.mxu0 %v4844
    %4870 = vmatprep.subr.mxu0 0.0
    %4871 = vmatpush1.msra.mxu0 %v4845
    %4872 = vmatprep.subr.mxu0 0.0
    %4873 = vmatpush1.msra.mxu0 %v4846
    %4874 = vmatprep.subr.mxu0 0.0
    %4875 = vmatpush1.msra.mxu0 %v4847
    %4876 = vmatprep.subr.mxu0 0.0
    %4877 = vmatpush1.msra.mxu0 %v4848
    %4878 = vmatprep.subr.mxu0 0.0
    %4879 = vmatpush1.msra.mxu0 %v4849
    %4880 = vmatprep.subr.mxu0 0.0
    %4881 = vmatpush1.msra.mxu0 %v4850
    %4882 = vmatprep.subr.mxu0 0.0
    %4883 = vmatpush1.msra.mxu0 %v4851
    %4884 = vmatprep.subr.mxu0 0.0
    %4885 = vmatpush1.msra.mxu0 0.0
    %4886 = vmatprep.subr.mxu0 0.0
    %4887 = vmatpush1.msra.mxu0 0.0
    %4888 = vmatprep.subr.mxu0 0.0
    %4889 = vmatpush1.msra.mxu0 0.0
    %4890 = vmatprep.subr.mxu0 0.0
    %4891 = vmatpush1.msra.mxu0 0.0
    %4892 = vmatprep.subr.mxu0 0.0
    %4893 = vmatpush1.msra.mxu0 0.0
    %4894 = vmatprep.subr.mxu0 0.0
    %4895 = vmatpush1.msra.mxu0 0.0
    %4896 = vmatprep.subr.mxu0 0.0
    %4897 = vmatpush1.msra.mxu0 0.0
    %4898 = vmatprep.subr.mxu0 0.0
    %4899 = vmatpush1.msra.mxu0 0.0
    %4900 = vmatprep.subr.mxu0 0.0
    %4901 = vmatpush1.msra.mxu0 0.0
    %4902 = vmatprep.subr.mxu0 0.0
    %4903 = vmatpush1.msra.mxu0 0.0
    %4904 = vmatprep.subr.mxu0 0.0
    %4905 = vmatpush1.msra.mxu0 0.0
    %4906 = vmatprep.subr.mxu0 0.0
    %4907 = vmatpush1.msra.mxu0 0.0
    %4908 = vmatprep.subr.mxu0 0.0
    %4909 = vmatpush1.msra.mxu0 0.0
    %4910 = vmatprep.subr.mxu0 0.0
    %4911 = vmatpush1.msra.mxu0 0.0
    %4912 = vmatprep.subr.mxu0 0.0
    %4913 = vmatpush1.msra.mxu0 0.0
    %4914 = vmatprep.subr.mxu0 0.0
    %4915 = vmatpush1.msra.mxu0 0.0
    %4916 = vmatprep.mubr.f32.mxu0 0.0
    %4917 = vmatmul.mubr.f32.gmra.mrb[0].mxu0 %v4747
    %v4918 = vpop.f32.mrb[0].mxu0
    %v4919 = vadd.f32 0.0, %v4918
    %v4920 = vpop.f32.mrb[0].mxu0
    %4921 = vdwg.mxu0
    %s4922 = scalar_lea.vmem %s11, 8
    %v4923 = vld [vmem:[%s4922] sm:$0xff]
    %v4925 = vsel %vm3397, %v4923, 0
    %v4928 = vsel %vm3401, %v4919, 0
    %4930 = vmatprep.subr.mxu0 0.0
    %4931 = vmatpush1.msra.mxu0 %v4928
    %4932 = vmatprep.subr.mxu0 0.0
    %4933 = vmatpush1.msra.mxu0 0.0
    %4934 = vmatprep.subr.mxu0 0.0
    %4935 = vmatpush1.msra.mxu0 0.0
    %4936 = vmatprep.subr.mxu0 0.0
    %4937 = vmatpush1.msra.mxu0 0.0
    %4938 = vmatprep.subr.mxu0 0.0
    %4939 = vmatpush1.msra.mxu0 0.0
    %4940 = vmatprep.subr.mxu0 0.0
    %4941 = vmatpush1.msra.mxu0 0.0
    %4942 = vmatprep.subr.mxu0 0.0
    %4943 = vmatpush1.msra.mxu0 0.0
    %4944 = vmatprep.subr.mxu0 0.0
    %4945 = vmatpush1.msra.mxu0 0.0
    %4946 = vmatprep.subr.mxu0 0.0
    %4947 = vmatpush1.msra.mxu0 0.0
    %4948 = vmatprep.subr.mxu0 0.0
    %4949 = vmatpush1.msra.mxu0 0.0
    %4950 = vmatprep.subr.mxu0 0.0
    %4951 = vmatpush1.msra.mxu0 0.0
    %4952 = vmatprep.subr.mxu0 0.0
    %4953 = vmatpush1.msra.mxu0 0.0
    %4954 = vmatprep.subr.mxu0 0.0
    %4955 = vmatpush1.msra.mxu0 0.0
    %4956 = vmatprep.subr.mxu0 0.0
    %4957 = vmatpush1.msra.mxu0 0.0
    %4958 = vmatprep.subr.mxu0 0.0
    %4959 = vmatpush1.msra.mxu0 0.0
    %4960 = vmatprep.subr.mxu0 0.0
    %4961 = vmatpush1.msra.mxu0 0.0
    %4962 = vmatprep.subr.mxu0 0.0
    %4963 = vmatpush1.msra.mxu0 0.0
    %4964 = vmatprep.subr.mxu0 0.0
    %4965 = vmatpush1.msra.mxu0 0.0
    %4966 = vmatprep.subr.mxu0 0.0
    %4967 = vmatpush1.msra.mxu0 0.0
    %4968 = vmatprep.subr.mxu0 0.0
    %4969 = vmatpush1.msra.mxu0 0.0
    %4970 = vmatprep.subr.mxu0 0.0
    %4971 = vmatpush1.msra.mxu0 0.0
    %4972 = vmatprep.subr.mxu0 0.0
    %4973 = vmatpush1.msra.mxu0 0.0
    %4974 = vmatprep.subr.mxu0 0.0
    %4975 = vmatpush1.msra.mxu0 0.0
    %4976 = vmatprep.subr.mxu0 0.0
    %4977 = vmatpush1.msra.mxu0 0.0
    %4978 = vmatprep.subr.mxu0 0.0
    %4979 = vmatpush1.msra.mxu0 0.0
    %4980 = vmatprep.subr.mxu0 0.0
    %4981 = vmatpush1.msra.mxu0 0.0
    %4982 = vmatprep.subr.mxu0 0.0
    %4983 = vmatpush1.msra.mxu0 0.0
    %4984 = vmatprep.subr.mxu0 0.0
    %4985 = vmatpush1.msra.mxu0 0.0
    %4986 = vmatprep.subr.mxu0 0.0
    %4987 = vmatpush1.msra.mxu0 0.0
    %4988 = vmatprep.subr.mxu0 0.0
    %4989 = vmatpush1.msra.mxu0 0.0
    %4990 = vmatprep.subr.mxu0 0.0
    %4991 = vmatpush1.msra.mxu0 0.0
    %4992 = vmatprep.subr.mxu0 0.0
    %4993 = vmatpush1.msra.mxu0 0.0
    %4994 = vmatprep.mubr.f32.mxu0 0.0
    %4995 = vmatmul.mubr.f32.gmra.mrb[0].mxu0 %v4925
    %v4996 = vpop.f32.mrb[0].mxu0
    %v4997 = vadd.f32 0.0, %v4996
    %v4998 = vpop.f32.mrb[0].mxu0
    %4999 = vdwg.mxu0
    %v5001 = vsel %vm3397, %v4834, 0
    %v5004 = vsel %vm3401, %v4831, 0
    %5006 = vmatprep.subr.mxu0 0.0
    %5007 = vmatpush1.msra.mxu0 %v5004
    %5008 = vmatprep.subr.mxu0 0.0
    %5009 = vmatpush1.msra.mxu0 0.0
    %5010 = vmatprep.subr.mxu0 0.0
    %5011 = vmatpush1.msra.mxu0 0.0
    %5012 = vmatprep.subr.mxu0 0.0
    %5013 = vmatpush1.msra.mxu0 0.0
    %5014 = vmatprep.subr.mxu0 0.0
    %5015 = vmatpush1.msra.mxu0 0.0
    %5016 = vmatprep.subr.mxu0 0.0
    %5017 = vmatpush1.msra.mxu0 0.0
    %5018 = vmatprep.subr.mxu0 0.0
    %5019 = vmatpush1.msra.mxu0 0.0
    %5020 = vmatprep.subr.mxu0 0.0
    %5021 = vmatpush1.msra.mxu0 0.0
    %5022 = vmatprep.subr.mxu0 0.0
    %5023 = vmatpush1.msra.mxu0 0.0
    %5024 = vmatprep.subr.mxu0 0.0
    %5025 = vmatpush1.msra.mxu0 0.0
    %5026 = vmatprep.subr.mxu0 0.0
    %5027 = vmatpush1.msra.mxu0 0.0
    %5028 = vmatprep.subr.mxu0 0.0
    %5029 = vmatpush1.msra.mxu0 0.0
    %5030 = vmatprep.subr.mxu0 0.0
    %5031 = vmatpush1.msra.mxu0 0.0
    %5032 = vmatprep.subr.mxu0 0.0
    %5033 = vmatpush1.msra.mxu0 0.0
    %5034 = vmatprep.subr.mxu0 0.0
    %5035 = vmatpush1.msra.mxu0 0.0
    %5036 = vmatprep.subr.mxu0 0.0
    %5037 = vmatpush1.msra.mxu0 0.0
    %5038 = vmatprep.subr.mxu0 0.0
    %5039 = vmatpush1.msra.mxu0 0.0
    %5040 = vmatprep.subr.mxu0 0.0
    %5041 = vmatpush1.msra.mxu0 0.0
    %5042 = vmatprep.subr.mxu0 0.0
    %5043 = vmatpush1.msra.mxu0 0.0
    %5044 = vmatprep.subr.mxu0 0.0
    %5045 = vmatpush1.msra.mxu0 0.0
    %5046 = vmatprep.subr.mxu0 0.0
    %5047 = vmatpush1.msra.mxu0 0.0
    %5048 = vmatprep.subr.mxu0 0.0
    %5049 = vmatpush1.msra.mxu0 0.0
    %5050 = vmatprep.subr.mxu0 0.0
    %5051 = vmatpush1.msra.mxu0 0.0
    %5052 = vmatprep.subr.mxu0 0.0
    %5053 = vmatpush1.msra.mxu0 0.0
    %5054 = vmatprep.subr.mxu0 0.0
    %5055 = vmatpush1.msra.mxu0 0.0
    %5056 = vmatprep.subr.mxu0 0.0
    %5057 = vmatpush1.msra.mxu0 0.0
    %5058 = vmatprep.subr.mxu0 0.0
    %5059 = vmatpush1.msra.mxu0 0.0
    %5060 = vmatprep.subr.mxu0 0.0
    %5061 = vmatpush1.msra.mxu0 0.0
    %5062 = vmatprep.subr.mxu0 0.0
    %5063 = vmatpush1.msra.mxu0 0.0
    %5064 = vmatprep.subr.mxu0 0.0
    %5065 = vmatpush1.msra.mxu0 0.0
    %5066 = vmatprep.subr.mxu0 0.0
    %5067 = vmatpush1.msra.mxu0 0.0
    %5068 = vmatprep.subr.mxu0 0.0
    %5069 = vmatpush1.msra.mxu0 0.0
    %5070 = vmatprep.mubr.f32.mxu0 0.0
    %5071 = vmatmul.mubr.f32.gmra.mrb[0].mxu0 %v5001
    %v5072 = vpop.f32.mrb[0].mxu0
    %v5073 = vadd.f32 %v4997, %v5072
    %v5074 = vpop.f32.mrb[0].mxu0
    %5075 = vdwg.mxu0
    %s5076 = scalar_lea.vmem %s9, 256
    %v5077 = vld [vmem:[%s5076] sm:$0xff]
    %v5078 = vld [vmem:[%s5076 + $0x8] sm:$0xff]
    %v5079 = vld [vmem:[%s5076 + $0x10] sm:$0xff]
    %v5080 = vld [vmem:[%s5076 + $0x18] sm:$0xff]
    %v5081 = vld [vmem:[%s5076 + $0x20] sm:$0xff]
    %v5082 = vld [vmem:[%s5076 + $0x28] sm:$0xff]
    %v5083 = vld [vmem:[%s5076 + $0x30] sm:$0xff]
    %v5084 = vld [vmem:[%s5076 + $0x38] sm:$0xff]
    %v5085 = vld [vmem:[%s5076 + $0x40] sm:$0xff]
    %v5086 = vld [vmem:[%s5076 + $0x48] sm:$0xff]
    %v5087 = vld [vmem:[%s5076 + $0x50] sm:$0xff]
    %v5088 = vld [vmem:[%s5076 + $0x58] sm:$0xff]
    %v5089 = vld [vmem:[%s5076 + $0x60] sm:$0xff]
    %v5090 = vld [vmem:[%s5076 + $0x68] sm:$0xff]
    %v5091 = vld [vmem:[%s5076 + $0x70] sm:$0xff]
    %v5092 = vld [vmem:[%s5076 + $0x78] sm:$0xff]
    %5093 = vmatprep.subr.mxu0 0.0
    %5094 = vmatpush1.msra.mxu0 %v5077
    %5095 = vmatprep.subr.mxu0 0.0
    %5096 = vmatpush1.msra.mxu0 %v5078
    %5097 = vmatprep.subr.mxu0 0.0
    %5098 = vmatpush1.msra.mxu0 %v5079
    %5099 = vmatprep.subr.mxu0 0.0
    %5100 = vmatpush1.msra.mxu0 %v5080
    %5101 = vmatprep.subr.mxu0 0.0
    %5102 = vmatpush1.msra.mxu0 %v5081
    %5103 = vmatprep.subr.mxu0 0.0
    %5104 = vmatpush1.msra.mxu0 %v5082
    %5105 = vmatprep.subr.mxu0 0.0
    %5106 = vmatpush1.msra.mxu0 %v5083
    %5107 = vmatprep.subr.mxu0 0.0
    %5108 = vmatpush1.msra.mxu0 %v5084
    %5109 = vmatprep.subr.mxu0 0.0
    %5110 = vmatpush1.msra.mxu0 %v5085
    %5111 = vmatprep.subr.mxu0 0.0
    %5112 = vmatpush1.msra.mxu0 %v5086
    %5113 = vmatprep.subr.mxu0 0.0
    %5114 = vmatpush1.msra.mxu0 %v5087
    %5115 = vmatprep.subr.mxu0 0.0
    %5116 = vmatpush1.msra.mxu0 %v5088
    %5117 = vmatprep.subr.mxu0 0.0
    %5118 = vmatpush1.msra.mxu0 %v5089
    %5119 = vmatprep.subr.mxu0 0.0
    %5120 = vmatpush1.msra.mxu0 %v5090
    %5121 = vmatprep.subr.mxu0 0.0
    %5122 = vmatpush1.msra.mxu0 %v5091
    %5123 = vmatprep.subr.mxu0 0.0
    %5124 = vmatpush1.msra.mxu0 %v5092
    %5125 = vmatprep.subr.mxu0 0.0
    %5126 = vmatpush1.msra.mxu0 0.0
    %5127 = vmatprep.subr.mxu0 0.0
    %5128 = vmatpush1.msra.mxu0 0.0
    %5129 = vmatprep.subr.mxu0 0.0
    %5130 = vmatpush1.msra.mxu0 0.0
    %5131 = vmatprep.subr.mxu0 0.0
    %5132 = vmatpush1.msra.mxu0 0.0
    %5133 = vmatprep.subr.mxu0 0.0
    %5134 = vmatpush1.msra.mxu0 0.0
    %5135 = vmatprep.subr.mxu0 0.0
    %5136 = vmatpush1.msra.mxu0 0.0
    %5137 = vmatprep.subr.mxu0 0.0
    %5138 = vmatpush1.msra.mxu0 0.0
    %5139 = vmatprep.subr.mxu0 0.0
    %5140 = vmatpush1.msra.mxu0 0.0
    %5141 = vmatprep.subr.mxu0 0.0
    %5142 = vmatpush1.msra.mxu0 0.0
    %5143 = vmatprep.subr.mxu0 0.0
    %5144 = vmatpush1.msra.mxu0 0.0
    %5145 = vmatprep.subr.mxu0 0.0
    %5146 = vmatpush1.msra.mxu0 0.0
    %5147 = vmatprep.subr.mxu0 0.0
    %5148 = vmatpush1.msra.mxu0 0.0
    %5149 = vmatprep.subr.mxu0 0.0
    %5150 = vmatpush1.msra.mxu0 0.0
    %5151 = vmatprep.subr.mxu0 0.0
    %5152 = vmatpush1.msra.mxu0 0.0
    %5153 = vmatprep.subr.mxu0 0.0
    %5154 = vmatpush1.msra.mxu0 0.0
    %5155 = vmatprep.subr.mxu0 0.0
    %5156 = vmatpush1.msra.mxu0 0.0
    %5157 = vmatprep.mubr.f32.mxu0 0.0
    %5158 = vmatmul.mubr.f32.gmra.mrb[0].mxu0 %v4747
    %v5159 = vpop.f32.mrb[0].mxu0
    %v5160 = vadd.f32 0.0, %v5159
    %v5161 = vpop.f32.mrb[0].mxu0
    %5162 = vdwg.mxu0
    %s5163 = scalar_lea.vmem %s11, 16
    %v5164 = vld [vmem:[%s5163] sm:$0xff]
    %v5166 = vsel %vm3397, %v5164, 0
    %v5169 = vsel %vm3401, %v5160, 0
    %5171 = vmatprep.subr.mxu0 0.0
    %5172 = vmatpush1.msra.mxu0 %v5169
    %5173 = vmatprep.subr.mxu0 0.0
    %5174 = vmatpush1.msra.mxu0 0.0
    %5175 = vmatprep.subr.mxu0 0.0
    %5176 = vmatpush1.msra.mxu0 0.0
    %5177 = vmatprep.subr.mxu0 0.0
    %5178 = vmatpush1.msra.mxu0 0.0
    %5179 = vmatprep.subr.mxu0 0.0
    %5180 = vmatpush1.msra.mxu0 0.0
    %5181 = vmatprep.subr.mxu0 0.0
    %5182 = vmatpush1.msra.mxu0 0.0
    %5183 = vmatprep.subr.mxu0 0.0
    %5184 = vmatpush1.msra.mxu0 0.0
    %5185 = vmatprep.subr.mxu0 0.0
    %5186 = vmatpush1.msra.mxu0 0.0
    %5187 = vmatprep.subr.mxu0 0.0
    %5188 = vmatpush1.msra.mxu0 0.0
    %5189 = vmatprep.subr.mxu0 0.0
    %5190 = vmatpush1.msra.mxu0 0.0
    %5191 = vmatprep.subr.mxu0 0.0
    %5192 = vmatpush1.msra.mxu0 0.0
    %5193 = vmatprep.subr.mxu0 0.0
    %5194 = vmatpush1.msra.mxu0 0.0
    %5195 = vmatprep.subr.mxu0 0.0
    %5196 = vmatpush1.msra.mxu0 0.0
    %5197 = vmatprep.subr.mxu0 0.0
    %5198 = vmatpush1.msra.mxu0 0.0
    %5199 = vmatprep.subr.mxu0 0.0
    %5200 = vmatpush1.msra.mxu0 0.0
    %5201 = vmatprep.subr.mxu0 0.0
    %5202 = vmatpush1.msra.mxu0 0.0
    %5203 = vmatprep.subr.mxu0 0.0
    %5204 = vmatpush1.msra.mxu0 0.0
    %5205 = vmatprep.subr.mxu0 0.0
    %5206 = vmatpush1.msra.mxu0 0.0
    %5207 = vmatprep.subr.mxu0 0.0
    %5208 = vmatpush1.msra.mxu0 0.0
    %5209 = vmatprep.subr.mxu0 0.0
    %5210 = vmatpush1.msra.mxu0 0.0
    %5211 = vmatprep.subr.mxu0 0.0
    %5212 = vmatpush1.msra.mxu0 0.0
    %5213 = vmatprep.subr.mxu0 0.0
    %5214 = vmatpush1.msra.mxu0 0.0
    %5215 = vmatprep.subr.mxu0 0.0
    %5216 = vmatpush1.msra.mxu0 0.0
    %5217 = vmatprep.subr.mxu0 0.0
    %5218 = vmatpush1.msra.mxu0 0.0
    %5219 = vmatprep.subr.mxu0 0.0
    %5220 = vmatpush1.msra.mxu0 0.0
    %5221 = vmatprep.subr.mxu0 0.0
    %5222 = vmatpush1.msra.mxu0 0.0
    %5223 = vmatprep.subr.mxu0 0.0
    %5224 = vmatpush1.msra.mxu0 0.0
    %5225 = vmatprep.subr.mxu0 0.0
    %5226 = vmatpush1.msra.mxu0 0.0
    %5227 = vmatprep.subr.mxu0 0.0
    %5228 = vmatpush1.msra.mxu0 0.0
    %5229 = vmatprep.subr.mxu0 0.0
    %5230 = vmatpush1.msra.mxu0 0.0
    %5231 = vmatprep.subr.mxu0 0.0
    %5232 = vmatpush1.msra.mxu0 0.0
    %5233 = vmatprep.subr.mxu0 0.0
    %5234 = vmatpush1.msra.mxu0 0.0
    %5235 = vmatprep.mubr.f32.mxu0 0.0
    %5236 = vmatmul.mubr.f32.gmra.mrb[0].mxu0 %v5166
    %v5237 = vpop.f32.mrb[0].mxu0
    %v5238 = vadd.f32 0.0, %v5237
    %v5239 = vpop.f32.mrb[0].mxu0
    %5240 = vdwg.mxu0
    %v5241 = vadd.f32 %v5073, %v5238
    %s5242 = scalar_lea.vmem %s9, 384
    %v5243 = vld [vmem:[%s5242] sm:$0xff]
    %v5244 = vld [vmem:[%s5242 + $0x8] sm:$0xff]
    %v5245 = vld [vmem:[%s5242 + $0x10] sm:$0xff]
    %v5246 = vld [vmem:[%s5242 + $0x18] sm:$0xff]
    %v5247 = vld [vmem:[%s5242 + $0x20] sm:$0xff]
    %v5248 = vld [vmem:[%s5242 + $0x28] sm:$0xff]
    %v5249 = vld [vmem:[%s5242 + $0x30] sm:$0xff]
    %v5250 = vld [vmem:[%s5242 + $0x38] sm:$0xff]
    %v5251 = vld [vmem:[%s5242 + $0x40] sm:$0xff]
    %v5252 = vld [vmem:[%s5242 + $0x48] sm:$0xff]
    %v5253 = vld [vmem:[%s5242 + $0x50] sm:$0xff]
    %v5254 = vld [vmem:[%s5242 + $0x58] sm:$0xff]
    %v5255 = vld [vmem:[%s5242 + $0x60] sm:$0xff]
    %v5256 = vld [vmem:[%s5242 + $0x68] sm:$0xff]
    %v5257 = vld [vmem:[%s5242 + $0x70] sm:$0xff]
    %v5258 = vld [vmem:[%s5242 + $0x78] sm:$0xff]
    %5259 = vmatprep.subr.mxu0 0.0
    %5260 = vmatpush1.msra.mxu0 %v5243
    %5261 = vmatprep.subr.mxu0 0.0
    %5262 = vmatpush1.msra.mxu0 %v5244
    %5263 = vmatprep.subr.mxu0 0.0
    %5264 = vmatpush1.msra.mxu0 %v5245
    %5265 = vmatprep.subr.mxu0 0.0
    %5266 = vmatpush1.msra.mxu0 %v5246
    %5267 = vmatprep.subr.mxu0 0.0
    %5268 = vmatpush1.msra.mxu0 %v5247
    %5269 = vmatprep.subr.mxu0 0.0
    %5270 = vmatpush1.msra.mxu0 %v5248
    %5271 = vmatprep.subr.mxu0 0.0
    %5272 = vmatpush1.msra.mxu0 %v5249
    %5273 = vmatprep.subr.mxu0 0.0
    %5274 = vmatpush1.msra.mxu0 %v5250
    %5275 = vmatprep.subr.mxu0 0.0
    %5276 = vmatpush1.msra.mxu0 %v5251
    %5277 = vmatprep.subr.mxu0 0.0
    %5278 = vmatpush1.msra.mxu0 %v5252
    %5279 = vmatprep.subr.mxu0 0.0
    %5280 = vmatpush1.msra.mxu0 %v5253
    %5281 = vmatprep.subr.mxu0 0.0
    %5282 = vmatpush1.msra.mxu0 %v5254
    %5283 = vmatprep.subr.mxu0 0.0
    %5284 = vmatpush1.msra.mxu0 %v5255
    %5285 = vmatprep.subr.mxu0 0.0
    %5286 = vmatpush1.msra.mxu0 %v5256
    %5287 = vmatprep.subr.mxu0 0.0
    %5288 = vmatpush1.msra.mxu0 %v5257
    %5289 = vmatprep.subr.mxu0 0.0
    %5290 = vmatpush1.msra.mxu0 %v5258
    %5291 = vmatprep.subr.mxu0 0.0
    %5292 = vmatpush1.msra.mxu0 0.0
    %5293 = vmatprep.subr.mxu0 0.0
    %5294 = vmatpush1.msra.mxu0 0.0
    %5295 = vmatprep.subr.mxu0 0.0
    %5296 = vmatpush1.msra.mxu0 0.0
    %5297 = vmatprep.subr.mxu0 0.0
    %5298 = vmatpush1.msra.mxu0 0.0
    %5299 = vmatprep.subr.mxu0 0.0
    %5300 = vmatpush1.msra.mxu0 0.0
    %5301 = vmatprep.subr.mxu0 0.0
    %5302 = vmatpush1.msra.mxu0 0.0
    %5303 = vmatprep.subr.mxu0 0.0
    %5304 = vmatpush1.msra.mxu0 0.0
    %5305 = vmatprep.subr.mxu0 0.0
    %5306 = vmatpush1.msra.mxu0 0.0
    %5307 = vmatprep.subr.mxu0 0.0
    %5308 = vmatpush1.msra.mxu0 0.0
    %5309 = vmatprep.subr.mxu0 0.0
    %5310 = vmatpush1.msra.mxu0 0.0
    %5311 = vmatprep.subr.mxu0 0.0
    %5312 = vmatpush1.msra.mxu0 0.0
    %5313 = vmatprep.subr.mxu0 0.0
    %5314 = vmatpush1.msra.mxu0 0.0
    %5315 = vmatprep.subr.mxu0 0.0
    %5316 = vmatpush1.msra.mxu0 0.0
    %5317 = vmatprep.subr.mxu0 0.0
    %5318 = vmatpush1.msra.mxu0 0.0
    %5319 = vmatprep.subr.mxu0 0.0
    %5320 = vmatpush1.msra.mxu0 0.0
    %5321 = vmatprep.subr.mxu0 0.0
    %5322 = vmatpush1.msra.mxu0 0.0
    %5323 = vmatprep.mubr.f32.mxu0 0.0
    %5324 = vmatmul.mubr.f32.gmra.mrb[0].mxu0 %v4747
    %v5325 = vpop.f32.mrb[0].mxu0
    %v5326 = vadd.f32 0.0, %v5325
    %v5327 = vpop.f32.mrb[0].mxu0
    %5328 = vdwg.mxu0
    %s5329 = scalar_lea.vmem %s11, 24
    %v5330 = vld [vmem:[%s5329] sm:$0xff]
    %v5332 = vsel %vm3397, %v5330, 0
    %v5335 = vsel %vm3401, %v5326, 0
    %5337 = vmatprep.subr.mxu0 0.0
    %5338 = vmatpush1.msra.mxu0 %v5335
    %5339 = vmatprep.subr.mxu0 0.0
    %5340 = vmatpush1.msra.mxu0 0.0
    %5341 = vmatprep.subr.mxu0 0.0
    %5342 = vmatpush1.msra.mxu0 0.0
    %5343 = vmatprep.subr.mxu0 0.0
    %5344 = vmatpush1.msra.mxu0 0.0
    %5345 = vmatprep.subr.mxu0 0.0
    %5346 = vmatpush1.msra.mxu0 0.0
    %5347 = vmatprep.subr.mxu0 0.0
    %5348 = vmatpush1.msra.mxu0 0.0
    %5349 = vmatprep.subr.mxu0 0.0
    %5350 = vmatpush1.msra.mxu0 0.0
    %5351 = vmatprep.subr.mxu0 0.0
    %5352 = vmatpush1.msra.mxu0 0.0
    %5353 = vmatprep.subr.mxu0 0.0
    %5354 = vmatpush1.msra.mxu0 0.0
    %5355 = vmatprep.subr.mxu0 0.0
    %5356 = vmatpush1.msra.mxu0 0.0
    %5357 = vmatprep.subr.mxu0 0.0
    %5358 = vmatpush1.msra.mxu0 0.0
    %5359 = vmatprep.subr.mxu0 0.0
    %5360 = vmatpush1.msra.mxu0 0.0
    %5361 = vmatprep.subr.mxu0 0.0
    %5362 = vmatpush1.msra.mxu0 0.0
    %5363 = vmatprep.subr.mxu0 0.0
    %5364 = vmatpush1.msra.mxu0 0.0
    %5365 = vmatprep.subr.mxu0 0.0
    %5366 = vmatpush1.msra.mxu0 0.0
    %5367 = vmatprep.subr.mxu0 0.0
    %5368 = vmatpush1.msra.mxu0 0.0
    %5369 = vmatprep.subr.mxu0 0.0
    %5370 = vmatpush1.msra.mxu0 0.0
    %5371 = vmatprep.subr.mxu0 0.0
    %5372 = vmatpush1.msra.mxu0 0.0
    %5373 = vmatprep.subr.mxu0 0.0
    %5374 = vmatpush1.msra.mxu0 0.0
    %5375 = vmatprep.subr.mxu0 0.0
    %5376 = vmatpush1.msra.mxu0 0.0
    %5377 = vmatprep.subr.mxu0 0.0
    %5378 = vmatpush1.msra.mxu0 0.0
    %5379 = vmatprep.subr.mxu0 0.0
    %5380 = vmatpush1.msra.mxu0 0.0
    %5381 = vmatprep.subr.mxu0 0.0
    %5382 = vmatpush1.msra.mxu0 0.0
    %5383 = vmatprep.subr.mxu0 0.0
    %5384 = vmatpush1.msra.mxu0 0.0
    %5385 = vmatprep.subr.mxu0 0.0
    %5386 = vmatpush1.msra.mxu0 0.0
    %5387 = vmatprep.subr.mxu0 0.0
    %5388 = vmatpush1.msra.mxu0 0.0
    %5389 = vmatprep.subr.mxu0 0.0
    %5390 = vmatpush1.msra.mxu0 0.0
    %5391 = vmatprep.subr.mxu0 0.0
    %5392 = vmatpush1.msra.mxu0 0.0
    %5393 = vmatprep.subr.mxu0 0.0
    %5394 = vmatpush1.msra.mxu0 0.0
    %5395 = vmatprep.subr.mxu0 0.0
    %5396 = vmatpush1.msra.mxu0 0.0
    %5397 = vmatprep.subr.mxu0 0.0
    %5398 = vmatpush1.msra.mxu0 0.0
    %5399 = vmatprep.subr.mxu0 0.0
    %5400 = vmatpush1.msra.mxu0 0.0
    %5401 = vmatprep.mubr.f32.mxu0 0.0
    %5402 = vmatmul.mubr.f32.gmra.mrb[0].mxu0 %v5332
    %v5403 = vpop.f32.mrb[0].mxu0
    %v5404 = vadd.f32 0.0, %v5403
    %v5405 = vpop.f32.mrb[0].mxu0
    %5406 = vdwg.mxu0
    %v5407 = vadd.f32 %v5241, %v5404
    %v5408 = vld [vmem:[#allocation7] sm:$0x1]
    %v5410 = vlaneseq
    %v5411 = vshrl.u32 %v5410, 7
    %v5412 = vsub.s32 0, %v5411
    %v5413 = vrot.slane %v5408, %v5412
    %v5415 = vadd.f32 %v5407, %v5413
    %v5416 = vmax.f32 %v5415, 0.0
    %v5417 = vld [vmem:[%s15] sm:$0xff]
    %v5418 = vld [vmem:[%s15 + $0x8] sm:$0xff]
    %v5419 = vld [vmem:[%s15 + $0x10] sm:$0xff]
    %v5420 = vld [vmem:[%s15 + $0x18] sm:$0xff]
    %v5421 = vld [vmem:[%s15 + $0x20] sm:$0xff]
    %v5422 = vld [vmem:[%s15 + $0x28] sm:$0xff]
    %v5423 = vld [vmem:[%s15 + $0x30] sm:$0xff]
    %v5424 = vld [vmem:[%s15 + $0x38] sm:$0xff]
    %v5425 = vld [vmem:[%s15 + $0x40] sm:$0xff]
    %v5426 = vld [vmem:[%s15 + $0x48] sm:$0xff]
    %v5427 = vld [vmem:[%s15 + $0x50] sm:$0xff]
    %v5428 = vld [vmem:[%s15 + $0x58] sm:$0xff]
    %v5429 = vld [vmem:[%s15 + $0x60] sm:$0xff]
    %v5430 = vld [vmem:[%s15 + $0x68] sm:$0xff]
    %v5431 = vld [vmem:[%s15 + $0x70] sm:$0xff]
    %v5432 = vld [vmem:[%s15 + $0x78] sm:$0xff]
    %5433 = vmatprep.subr.mxu0 0.0
    %5434 = vmatpush1.msra.mxu0 %v5417
    %5435 = vmatprep.subr.mxu0 0.0
    %5436 = vmatpush1.msra.mxu0 %v5418
    %5437 = vmatprep.subr.mxu0 0.0
    %5438 = vmatpush1.msra.mxu0 %v5419
    %5439 = vmatprep.subr.mxu0 0.0
    %5440 = vmatpush1.msra.mxu0 %v5420
    %5441 = vmatprep.subr.mxu0 0.0
    %5442 = vmatpush1.msra.mxu0 %v5421
    %5443 = vmatprep.subr.mxu0 0.0
    %5444 = vmatpush1.msra.mxu0 %v5422
    %5445 = vmatprep.subr.mxu0 0.0
    %5446 = vmatpush1.msra.mxu0 %v5423
    %5447 = vmatprep.subr.mxu0 0.0
    %5448 = vmatpush1.msra.mxu0 %v5424
    %5449 = vmatprep.subr.mxu0 0.0
    %5450 = vmatpush1.msra.mxu0 %v5425
    %5451 = vmatprep.subr.mxu0 0.0
    %5452 = vmatpush1.msra.mxu0 %v5426
    %5453 = vmatprep.subr.mxu0 0.0
    %5454 = vmatpush1.msra.mxu0 %v5427
    %5455 = vmatprep.subr.mxu0 0.0
    %5456 = vmatpush1.msra.mxu0 %v5428
    %5457 = vmatprep.subr.mxu0 0.0
    %5458 = vmatpush1.msra.mxu0 %v5429
    %5459 = vmatprep.subr.mxu0 0.0
    %5460 = vmatpush1.msra.mxu0 %v5430
    %5461 = vmatprep.subr.mxu0 0.0
    %5462 = vmatpush1.msra.mxu0 %v5431
    %5463 = vmatprep.subr.mxu0 0.0
    %5464 = vmatpush1.msra.mxu0 %v5432
    %5465 = vmatprep.subr.mxu0 0.0
    %5466 = vmatpush1.msra.mxu0 0.0
    %5467 = vmatprep.subr.mxu0 0.0
    %5468 = vmatpush1.msra.mxu0 0.0
    %5469 = vmatprep.subr.mxu0 0.0
    %5470 = vmatpush1.msra.mxu0 0.0
    %5471 = vmatprep.subr.mxu0 0.0
    %5472 = vmatpush1.msra.mxu0 0.0
    %5473 = vmatprep.subr.mxu0 0.0
    %5474 = vmatpush1.msra.mxu0 0.0
    %5475 = vmatprep.subr.mxu0 0.0
    %5476 = vmatpush1.msra.mxu0 0.0
    %5477 = vmatprep.subr.mxu0 0.0
    %5478 = vmatpush1.msra.mxu0 0.0
    %5479 = vmatprep.subr.mxu0 0.0
    %5480 = vmatpush1.msra.mxu0 0.0
    %5481 = vmatprep.subr.mxu0 0.0
    %5482 = vmatpush1.msra.mxu0 0.0
    %5483 = vmatprep.subr.mxu0 0.0
    %5484 = vmatpush1.msra.mxu0 0.0
    %5485 = vmatprep.subr.mxu0 0.0
    %5486 = vmatpush1.msra.mxu0 0.0
    %5487 = vmatprep.subr.mxu0 0.0
    %5488 = vmatpush1.msra.mxu0 0.0
    %5489 = vmatprep.subr.mxu0 0.0
    %5490 = vmatpush1.msra.mxu0 0.0
    %5491 = vmatprep.subr.mxu0 0.0
    %5492 = vmatpush1.msra.mxu0 0.0
    %5493 = vmatprep.subr.mxu0 0.0
    %5494 = vmatpush1.msra.mxu0 0.0
    %5495 = vmatprep.subr.mxu0 0.0
    %5496 = vmatpush1.msra.mxu0 0.0
    %5497 = vmatprep.mubr.f32.mxu0 0.0
    %5498 = vmatmul.mubr.f32.gmra.mrb[0].mxu0 %v5416
    %v5499 = vpop.f32.mrb[0].mxu0
    %v5500 = vadd.f32 0.0, %v5499
    %v5501 = vpop.f32.mrb[0].mxu0
    %5502 = vdwg.mxu0
    %v5503 = vld [vmem:[%s17] sm:$0xff]
    %v5504 = vld [vmem:[%s17 + $0x8] sm:$0xff]
    %s5505 = scalar_lea.vmem %s15, 128
    %v5506 = vld [vmem:[%s5505] sm:$0xff]
    %v5507 = vld [vmem:[%s5505 + $0x8] sm:$0xff]
    %v5508 = vld [vmem:[%s5505 + $0x10] sm:$0xff]
    %v5509 = vld [vmem:[%s5505 + $0x18] sm:$0xff]
    %v5510 = vld [vmem:[%s5505 + $0x20] sm:$0xff]
    %v5511 = vld [vmem:[%s5505 + $0x28] sm:$0xff]
    %v5512 = vld [vmem:[%s5505 + $0x30] sm:$0xff]
    %v5513 = vld [vmem:[%s5505 + $0x38] sm:$0xff]
    %v5514 = vld [vmem:[%s5505 + $0x40] sm:$0xff]
    %v5515 = vld [vmem:[%s5505 + $0x48] sm:$0xff]
    %v5516 = vld [vmem:[%s5505 + $0x50] sm:$0xff]
    %v5517 = vld [vmem:[%s5505 + $0x58] sm:$0xff]
    %v5518 = vld [vmem:[%s5505 + $0x60] sm:$0xff]
    %v5519 = vld [vmem:[%s5505 + $0x68] sm:$0xff]
    %v5520 = vld [vmem:[%s5505 + $0x70] sm:$0xff]
    %v5521 = vld [vmem:[%s5505 + $0x78] sm:$0xff]
    %5522 = vmatprep.subr.mxu0 0.0
    %5523 = vmatpush1.msra.mxu0 %v5506
    %5524 = vmatprep.subr.mxu0 0.0
    %5525 = vmatpush1.msra.mxu0 %v5507
    %5526 = vmatprep.subr.mxu0 0.0
    %5527 = vmatpush1.msra.mxu0 %v5508
    %5528 = vmatprep.subr.mxu0 0.0
    %5529 = vmatpush1.msra.mxu0 %v5509
    %5530 = vmatprep.subr.mxu0 0.0
    %5531 = vmatpush1.msra.mxu0 %v5510
    %5532 = vmatprep.subr.mxu0 0.0
    %5533 = vmatpush1.msra.mxu0 %v5511
    %5534 = vmatprep.subr.mxu0 0.0
    %5535 = vmatpush1.msra.mxu0 %v5512
    %5536 = vmatprep.subr.mxu0 0.0
    %5537 = vmatpush1.msra.mxu0 %v5513
    %5538 = vmatprep.subr.mxu0 0.0
    %5539 = vmatpush1.msra.mxu0 %v5514
    %5540 = vmatprep.subr.mxu0 0.0
    %5541 = vmatpush1.msra.mxu0 %v5515
    %5542 = vmatprep.subr.mxu0 0.0
    %5543 = vmatpush1.msra.mxu0 %v5516
    %5544 = vmatprep.subr.mxu0 0.0
    %5545 = vmatpush1.msra.mxu0 %v5517
    %5546 = vmatprep.subr.mxu0 0.0
    %5547 = vmatpush1.msra.mxu0 %v5518
    %5548 = vmatprep.subr.mxu0 0.0
    %5549 = vmatpush1.msra.mxu0 %v5519
    %5550 = vmatprep.subr.mxu0 0.0
    %5551 = vmatpush1.msra.mxu0 %v5520
    %5552 = vmatprep.subr.mxu0 0.0
    %5553 = vmatpush1.msra.mxu0 %v5521
    %5554 = vmatprep.subr.mxu0 0.0
    %5555 = vmatpush1.msra.mxu0 0.0
    %5556 = vmatprep.subr.mxu0 0.0
    %5557 = vmatpush1.msra.mxu0 0.0
    %5558 = vmatprep.subr.mxu0 0.0
    %5559 = vmatpush1.msra.mxu0 0.0
    %5560 = vmatprep.subr.mxu0 0.0
    %5561 = vmatpush1.msra.mxu0 0.0
    %5562 = vmatprep.subr.mxu0 0.0
    %5563 = vmatpush1.msra.mxu0 0.0
    %5564 = vmatprep.subr.mxu0 0.0
    %5565 = vmatpush1.msra.mxu0 0.0
    %5566 = vmatprep.subr.mxu0 0.0
    %5567 = vmatpush1.msra.mxu0 0.0
    %5568 = vmatprep.subr.mxu0 0.0
    %5569 = vmatpush1.msra.mxu0 0.0
    %5570 = vmatprep.subr.mxu0 0.0
    %5571 = vmatpush1.msra.mxu0 0.0
    %5572 = vmatprep.subr.mxu0 0.0
    %5573 = vmatpush1.msra.mxu0 0.0
    %5574 = vmatprep.subr.mxu0 0.0
    %5575 = vmatpush1.msra.mxu0 0.0
    %5576 = vmatprep.subr.mxu0 0.0
    %5577 = vmatpush1.msra.mxu0 0.0
    %5578 = vmatprep.subr.mxu0 0.0
    %5579 = vmatpush1.msra.mxu0 0.0
    %5580 = vmatprep.subr.mxu0 0.0
    %5581 = vmatpush1.msra.mxu0 0.0
    %5582 = vmatprep.subr.mxu0 0.0
    %5583 = vmatpush1.msra.mxu0 0.0
    %5584 = vmatprep.subr.mxu0 0.0
    %5585 = vmatpush1.msra.mxu0 0.0
    %5586 = vmatprep.mubr.f32.mxu0 0.0
    %5587 = vmatmul.mubr.f32.gmra.mrb[0].mxu0 %v5416
    %v5588 = vpop.f32.mrb[0].mxu0
    %v5589 = vadd.f32 0.0, %v5588
    %v5590 = vpop.f32.mrb[0].mxu0
    %5591 = vdwg.mxu0
    %s5592 = scalar_lea.vmem %s17, 16
    %v5593 = vld [vmem:[%s5592] sm:$0xff]
    %v5594 = vld [vmem:[%s5592 + $0x8] sm:$0xff]
    %v5596 = vsel %vm2902, %v5593, 0
    %v5599 = vsel %vm2902, %v5594, 0
    %5601 = vmatprep.subr.mxu0 0.0
    %5602 = vmatpush1.msra.mxu0 %v5589
    %5603 = vmatprep.subr.mxu0 0.0
    %5604 = vmatpush1.msra.mxu0 0.0
    %5605 = vmatprep.subr.mxu0 0.0
    %5606 = vmatpush1.msra.mxu0 0.0
    %5607 = vmatprep.subr.mxu0 0.0
    %5608 = vmatpush1.msra.mxu0 0.0
    %5609 = vmatprep.subr.mxu0 0.0
    %5610 = vmatpush1.msra.mxu0 0.0
    %5611 = vmatprep.subr.mxu0 0.0
    %5612 = vmatpush1.msra.mxu0 0.0
    %5613 = vmatprep.subr.mxu0 0.0
    %5614 = vmatpush1.msra.mxu0 0.0
    %5615 = vmatprep.subr.mxu0 0.0
    %5616 = vmatpush1.msra.mxu0 0.0
    %5617 = vmatprep.subr.mxu0 0.0
    %5618 = vmatpush1.msra.mxu0 0.0
    %5619 = vmatprep.subr.mxu0 0.0
    %5620 = vmatpush1.msra.mxu0 0.0
    %5621 = vmatprep.subr.mxu0 0.0
    %5622 = vmatpush1.msra.mxu0 0.0
    %5623 = vmatprep.subr.mxu0 0.0
    %5624 = vmatpush1.msra.mxu0 0.0
    %5625 = vmatprep.subr.mxu0 0.0
    %5626 = vmatpush1.msra.mxu0 0.0
    %5627 = vmatprep.subr.mxu0 0.0
    %5628 = vmatpush1.msra.mxu0 0.0
    %5629 = vmatprep.subr.mxu0 0.0
    %5630 = vmatpush1.msra.mxu0 0.0
    %5631 = vmatprep.subr.mxu0 0.0
    %5632 = vmatpush1.msra.mxu0 0.0
    %5633 = vmatprep.subr.mxu0 0.0
    %5634 = vmatpush1.msra.mxu0 0.0
    %5635 = vmatprep.subr.mxu0 0.0
    %5636 = vmatpush1.msra.mxu0 0.0
    %5637 = vmatprep.subr.mxu0 0.0
    %5638 = vmatpush1.msra.mxu0 0.0
    %5639 = vmatprep.subr.mxu0 0.0
    %5640 = vmatpush1.msra.mxu0 0.0
    %5641 = vmatprep.subr.mxu0 0.0
    %5642 = vmatpush1.msra.mxu0 0.0
    %5643 = vmatprep.subr.mxu0 0.0
    %5644 = vmatpush1.msra.mxu0 0.0
    %5645 = vmatprep.subr.mxu0 0.0
    %5646 = vmatpush1.msra.mxu0 0.0
    %5647 = vmatprep.subr.mxu0 0.0
    %5648 = vmatpush1.msra.mxu0 0.0
    %5649 = vmatprep.subr.mxu0 0.0
    %5650 = vmatpush1.msra.mxu0 0.0
    %5651 = vmatprep.subr.mxu0 0.0
    %5652 = vmatpush1.msra.mxu0 0.0
    %5653 = vmatprep.subr.mxu0 0.0
    %5654 = vmatpush1.msra.mxu0 0.0
    %5655 = vmatprep.subr.mxu0 0.0
    %5656 = vmatpush1.msra.mxu0 0.0
    %5657 = vmatprep.subr.mxu0 0.0
    %5658 = vmatpush1.msra.mxu0 0.0
    %5659 = vmatprep.subr.mxu0 0.0
    %5660 = vmatpush1.msra.mxu0 0.0
    %5661 = vmatprep.subr.mxu0 0.0
    %5662 = vmatpush1.msra.mxu0 0.0
    %5663 = vmatprep.subr.mxu0 0.0
    %5664 = vmatpush1.msra.mxu0 0.0
    %5665 = vmatprep.mubr.f32.mxu0 0.0
    %5666 = vmatmul.mubr.f32.gmra.mrb[0].mxu0 %v5596
    %v5667 = vpop.f32.mrb[0].mxu0
    %v5668 = vadd.f32 0.0, %v5667
    %v5669 = vpop.f32.mrb[0].mxu0
    %5670 = vmatprep.mubr.f32.mxu0 0.0
    %5671 = vmatmul.mubr.f32.gmra.mrb[0].mxu0 %v5599
    %v5672 = vpop.f32.mrb[0].mxu0
    %v5673 = vadd.f32 0.0, %v5672
    %v5674 = vpop.f32.mrb[0].mxu0
    %5675 = vdwg.mxu0
    %v5677 = vsel %vm2902, %v5503, 0
    %v5680 = vsel %vm2902, %v5504, 0
    %5682 = vmatprep.subr.mxu0 0.0
    %5683 = vmatpush1.msra.mxu0 %v5500
    %5684 = vmatprep.subr.mxu0 0.0
    %5685 = vmatpush1.msra.mxu0 0.0
    %5686 = vmatprep.subr.mxu0 0.0
    %5687 = vmatpush1.msra.mxu0 0.0
    %5688 = vmatprep.subr.mxu0 0.0
    %5689 = vmatpush1.msra.mxu0 0.0
    %5690 = vmatprep.subr.mxu0 0.0
    %5691 = vmatpush1.msra.mxu0 0.0
    %5692 = vmatprep.subr.mxu0 0.0
    %5693 = vmatpush1.msra.mxu0 0.0
    %5694 = vmatprep.subr.mxu0 0.0
    %5695 = vmatpush1.msra.mxu0 0.0
    %5696 = vmatprep.subr.mxu0 0.0
    %5697 = vmatpush1.msra.mxu0 0.0
    %5698 = vmatprep.subr.mxu0 0.0
    %5699 = vmatpush1.msra.mxu0 0.0
    %5700 = vmatprep.subr.mxu0 0.0
    %5701 = vmatpush1.msra.mxu0 0.0
    %5702 = vmatprep.subr.mxu0 0.0
    %5703 = vmatpush1.msra.mxu0 0.0
    %5704 = vmatprep.subr.mxu0 0.0
    %5705 = vmatpush1.msra.mxu0 0.0
    %5706 = vmatprep.subr.mxu0 0.0
    %5707 = vmatpush1.msra.mxu0 0.0
    %5708 = vmatprep.subr.mxu0 0.0
    %5709 = vmatpush1.msra.mxu0 0.0
    %5710 = vmatprep.subr.mxu0 0.0
    %5711 = vmatpush1.msra.mxu0 0.0
    %5712 = vmatprep.subr.mxu0 0.0
    %5713 = vmatpush1.msra.mxu0 0.0
    %5714 = vmatprep.subr.mxu0 0.0
    %5715 = vmatpush1.msra.mxu0 0.0
    %5716 = vmatprep.subr.mxu0 0.0
    %5717 = vmatpush1.msra.mxu0 0.0
    %5718 = vmatprep.subr.mxu0 0.0
    %5719 = vmatpush1.msra.mxu0 0.0
    %5720 = vmatprep.subr.mxu0 0.0
    %5721 = vmatpush1.msra.mxu0 0.0
    %5722 = vmatprep.subr.mxu0 0.0
    %5723 = vmatpush1.msra.mxu0 0.0
    %5724 = vmatprep.subr.mxu0 0.0
    %5725 = vmatpush1.msra.mxu0 0.0
    %5726 = vmatprep.subr.mxu0 0.0
    %5727 = vmatpush1.msra.mxu0 0.0
    %5728 = vmatprep.subr.mxu0 0.0
    %5729 = vmatpush1.msra.mxu0 0.0
    %5730 = vmatprep.subr.mxu0 0.0
    %5731 = vmatpush1.msra.mxu0 0.0
    %5732 = vmatprep.subr.mxu0 0.0
    %5733 = vmatpush1.msra.mxu0 0.0
    %5734 = vmatprep.subr.mxu0 0.0
    %5735 = vmatpush1.msra.mxu0 0.0
    %5736 = vmatprep.subr.mxu0 0.0
    %5737 = vmatpush1.msra.mxu0 0.0
    %5738 = vmatprep.subr.mxu0 0.0
    %5739 = vmatpush1.msra.mxu0 0.0
    %5740 = vmatprep.subr.mxu0 0.0
    %5741 = vmatpush1.msra.mxu0 0.0
    %5742 = vmatprep.subr.mxu0 0.0
    %5743 = vmatpush1.msra.mxu0 0.0
    %5744 = vmatprep.subr.mxu0 0.0
    %5745 = vmatpush1.msra.mxu0 0.0
    %5746 = vmatprep.mubr.f32.mxu0 0.0
    %5747 = vmatmul.mubr.f32.gmra.mrb[0].mxu0 %v5677
    %v5748 = vpop.f32.mrb[0].mxu0
    %v5749 = vadd.f32 %v5668, %v5748
    %v5750 = vpop.f32.mrb[0].mxu0
    %5751 = vmatprep.mubr.f32.mxu0 0.0
    %5752 = vmatmul.mubr.f32.gmra.mrb[0].mxu0 %v5680
    %v5753 = vpop.f32.mrb[0].mxu0
    %v5754 = vadd.f32 %v5673, %v5753
    %v5755 = vpop.f32.mrb[0].mxu0
    %5756 = vdwg.mxu0
    %s5757 = scalar_lea.vmem %s15, 256
    %v5758 = vld [vmem:[%s5757] sm:$0xff]
    %v5759 = vld [vmem:[%s5757 + $0x8] sm:$0xff]
    %v5760 = vld [vmem:[%s5757 + $0x10] sm:$0xff]
    %v5761 = vld [vmem:[%s5757 + $0x18] sm:$0xff]
    %v5762 = vld [vmem:[%s5757 + $0x20] sm:$0xff]
    %v5763 = vld [vmem:[%s5757 + $0x28] sm:$0xff]
    %v5764 = vld [vmem:[%s5757 + $0x30] sm:$0xff]
    %v5765 = vld [vmem:[%s5757 + $0x38] sm:$0xff]
    %v5766 = vld [vmem:[%s5757 + $0x40] sm:$0xff]
    %v5767 = vld [vmem:[%s5757 + $0x48] sm:$0xff]
    %v5768 = vld [vmem:[%s5757 + $0x50] sm:$0xff]
    %v5769 = vld [vmem:[%s5757 + $0x58] sm:$0xff]
    %v5770 = vld [vmem:[%s5757 + $0x60] sm:$0xff]
    %v5771 = vld [vmem:[%s5757 + $0x68] sm:$0xff]
    %v5772 = vld [vmem:[%s5757 + $0x70] sm:$0xff]
    %v5773 = vld [vmem:[%s5757 + $0x78] sm:$0xff]
    %5774 = vmatprep.subr.mxu0 0.0
    %5775 = vmatpush1.msra.mxu0 %v5758
    %5776 = vmatprep.subr.mxu0 0.0
    %5777 = vmatpush1.msra.mxu0 %v5759
    %5778 = vmatprep.subr.mxu0 0.0
    %5779 = vmatpush1.msra.mxu0 %v5760
    %5780 = vmatprep.subr.mxu0 0.0
    %5781 = vmatpush1.msra.mxu0 %v5761
    %5782 = vmatprep.subr.mxu0 0.0
    %5783 = vmatpush1.msra.mxu0 %v5762
    %5784 = vmatprep.subr.mxu0 0.0
    %5785 = vmatpush1.msra.mxu0 %v5763
    %5786 = vmatprep.subr.mxu0 0.0
    %5787 = vmatpush1.msra.mxu0 %v5764
    %5788 = vmatprep.subr.mxu0 0.0
    %5789 = vmatpush1.msra.mxu0 %v5765
    %5790 = vmatprep.subr.mxu0 0.0
    %5791 = vmatpush1.msra.mxu0 %v5766
    %5792 = vmatprep.subr.mxu0 0.0
    %5793 = vmatpush1.msra.mxu0 %v5767
    %5794 = vmatprep.subr.mxu0 0.0
    %5795 = vmatpush1.msra.mxu0 %v5768
    %5796 = vmatprep.subr.mxu0 0.0
    %5797 = vmatpush1.msra.mxu0 %v5769
    %5798 = vmatprep.subr.mxu0 0.0
    %5799 = vmatpush1.msra.mxu0 %v5770
    %5800 = vmatprep.subr.mxu0 0.0
    %5801 = vmatpush1.msra.mxu0 %v5771
    %5802 = vmatprep.subr.mxu0 0.0
    %5803 = vmatpush1.msra.mxu0 %v5772
    %5804 = vmatprep.subr.mxu0 0.0
    %5805 = vmatpush1.msra.mxu0 %v5773
    %5806 = vmatprep.subr.mxu0 0.0
    %5807 = vmatpush1.msra.mxu0 0.0
    %5808 = vmatprep.subr.mxu0 0.0
    %5809 = vmatpush1.msra.mxu0 0.0
    %5810 = vmatprep.subr.mxu0 0.0
    %5811 = vmatpush1.msra.mxu0 0.0
    %5812 = vmatprep.subr.mxu0 0.0
    %5813 = vmatpush1.msra.mxu0 0.0
    %5814 = vmatprep.subr.mxu0 0.0
    %5815 = vmatpush1.msra.mxu0 0.0
    %5816 = vmatprep.subr.mxu0 0.0
    %5817 = vmatpush1.msra.mxu0 0.0
    %5818 = vmatprep.subr.mxu0 0.0
    %5819 = vmatpush1.msra.mxu0 0.0
    %5820 = vmatprep.subr.mxu0 0.0
    %5821 = vmatpush1.msra.mxu0 0.0
    %5822 = vmatprep.subr.mxu0 0.0
    %5823 = vmatpush1.msra.mxu0 0.0
    %5824 = vmatprep.subr.mxu0 0.0
    %5825 = vmatpush1.msra.mxu0 0.0
    %5826 = vmatprep.subr.mxu0 0.0
    %5827 = vmatpush1.msra.mxu0 0.0
    %5828 = vmatprep.subr.mxu0 0.0
    %5829 = vmatpush1.msra.mxu0 0.0
    %5830 = vmatprep.subr.mxu0 0.0
    %5831 = vmatpush1.msra.mxu0 0.0
    %5832 = vmatprep.subr.mxu0 0.0
    %5833 = vmatpush1.msra.mxu0 0.0
    %5834 = vmatprep.subr.mxu0 0.0
    %5835 = vmatpush1.msra.mxu0 0.0
    %5836 = vmatprep.subr.mxu0 0.0
    %5837 = vmatpush1.msra.mxu0 0.0
    %5838 = vmatprep.mubr.f32.mxu0 0.0
    %5839 = vmatmul.mubr.f32.gmra.mrb[0].mxu0 %v5416
    %v5840 = vpop.f32.mrb[0].mxu0
    %v5841 = vadd.f32 0.0, %v5840
    %v5842 = vpop.f32.mrb[0].mxu0
    %5843 = vdwg.mxu0
    %s5844 = scalar_lea.vmem %s17, 32
    %v5845 = vld [vmem:[%s5844] sm:$0xff]
    %v5846 = vld [vmem:[%s5844 + $0x8] sm:$0xff]
    %v5848 = vsel %vm2902, %v5845, 0
    %v5851 = vsel %vm2902, %v5846, 0
    %5853 = vmatprep.subr.mxu0 0.0
    %5854 = vmatpush1.msra.mxu0 %v5841
    %5855 = vmatprep.subr.mxu0 0.0
    %5856 = vmatpush1.msra.mxu0 0.0
    %5857 = vmatprep.subr.mxu0 0.0
    %5858 = vmatpush1.msra.mxu0 0.0
    %5859 = vmatprep.subr.mxu0 0.0
    %5860 = vmatpush1.msra.mxu0 0.0
    %5861 = vmatprep.subr.mxu0 0.0
    %5862 = vmatpush1.msra.mxu0 0.0
    %5863 = vmatprep.subr.mxu0 0.0
    %5864 = vmatpush1.msra.mxu0 0.0
    %5865 = vmatprep.subr.mxu0 0.0
    %5866 = vmatpush1.msra.mxu0 0.0
    %5867 = vmatprep.subr.mxu0 0.0
    %5868 = vmatpush1.msra.mxu0 0.0
    %5869 = vmatprep.subr.mxu0 0.0
    %5870 = vmatpush1.msra.mxu0 0.0
    %5871 = vmatprep.subr.mxu0 0.0
    %5872 = vmatpush1.msra.mxu0 0.0
    %5873 = vmatprep.subr.mxu0 0.0
    %5874 = vmatpush1.msra.mxu0 0.0
    %5875 = vmatprep.subr.mxu0 0.0
    %5876 = vmatpush1.msra.mxu0 0.0
    %5877 = vmatprep.subr.mxu0 0.0
    %5878 = vmatpush1.msra.mxu0 0.0
    %5879 = vmatprep.subr.mxu0 0.0
    %5880 = vmatpush1.msra.mxu0 0.0
    %5881 = vmatprep.subr.mxu0 0.0
    %5882 = vmatpush1.msra.mxu0 0.0
    %5883 = vmatprep.subr.mxu0 0.0
    %5884 = vmatpush1.msra.mxu0 0.0
    %5885 = vmatprep.subr.mxu0 0.0
    %5886 = vmatpush1.msra.mxu0 0.0
    %5887 = vmatprep.subr.mxu0 0.0
    %5888 = vmatpush1.msra.mxu0 0.0
    %5889 = vmatprep.subr.mxu0 0.0
    %5890 = vmatpush1.msra.mxu0 0.0
    %5891 = vmatprep.subr.mxu0 0.0
    %5892 = vmatpush1.msra.mxu0 0.0
    %5893 = vmatprep.subr.mxu0 0.0
    %5894 = vmatpush1.msra.mxu0 0.0
    %5895 = vmatprep.subr.mxu0 0.0
    %5896 = vmatpush1.msra.mxu0 0.0
    %5897 = vmatprep.subr.mxu0 0.0
    %5898 = vmatpush1.msra.mxu0 0.0
    %5899 = vmatprep.subr.mxu0 0.0
    %5900 = vmatpush1.msra.mxu0 0.0
    %5901 = vmatprep.subr.mxu0 0.0
    %5902 = vmatpush1.msra.mxu0 0.0
    %5903 = vmatprep.subr.mxu0 0.0
    %5904 = vmatpush1.msra.mxu0 0.0
    %5905 = vmatprep.subr.mxu0 0.0
    %5906 = vmatpush1.msra.mxu0 0.0
    %5907 = vmatprep.subr.mxu0 0.0
    %5908 = vmatpush1.msra.mxu0 0.0
    %5909 = vmatprep.subr.mxu0 0.0
    %5910 = vmatpush1.msra.mxu0 0.0
    %5911 = vmatprep.subr.mxu0 0.0
    %5912 = vmatpush1.msra.mxu0 0.0
    %5913 = vmatprep.subr.mxu0 0.0
    %5914 = vmatpush1.msra.mxu0 0.0
    %5915 = vmatprep.subr.mxu0 0.0
    %5916 = vmatpush1.msra.mxu0 0.0
    %5917 = vmatprep.mubr.f32.mxu0 0.0
    %5918 = vmatmul.mubr.f32.gmra.mrb[0].mxu0 %v5848
    %v5919 = vpop.f32.mrb[0].mxu0
    %v5920 = vadd.f32 0.0, %v5919
    %v5921 = vpop.f32.mrb[0].mxu0
    %5922 = vmatprep.mubr.f32.mxu0 0.0
    %5923 = vmatmul.mubr.f32.gmra.mrb[0].mxu0 %v5851
    %v5924 = vpop.f32.mrb[0].mxu0
    %v5925 = vadd.f32 0.0, %v5924
    %v5926 = vpop.f32.mrb[0].mxu0
    %5927 = vdwg.mxu0
    %v5928 = vadd.f32 %v5749, %v5920
    %v5929 = vadd.f32 %v5754, %v5925
    %s5930 = scalar_lea.vmem %s15, 384
    %v5931 = vld [vmem:[%s5930] sm:$0xff]
    %v5932 = vld [vmem:[%s5930 + $0x8] sm:$0xff]
    %v5933 = vld [vmem:[%s5930 + $0x10] sm:$0xff]
    %v5934 = vld [vmem:[%s5930 + $0x18] sm:$0xff]
    %v5935 = vld [vmem:[%s5930 + $0x20] sm:$0xff]
    %v5936 = vld [vmem:[%s5930 + $0x28] sm:$0xff]
    %v5937 = vld [vmem:[%s5930 + $0x30] sm:$0xff]
    %v5938 = vld [vmem:[%s5930 + $0x38] sm:$0xff]
    %v5939 = vld [vmem:[%s5930 + $0x40] sm:$0xff]
    %v5940 = vld [vmem:[%s5930 + $0x48] sm:$0xff]
    %v5941 = vld [vmem:[%s5930 + $0x50] sm:$0xff]
    %v5942 = vld [vmem:[%s5930 + $0x58] sm:$0xff]
    %v5943 = vld [vmem:[%s5930 + $0x60] sm:$0xff]
    %v5944 = vld [vmem:[%s5930 + $0x68] sm:$0xff]
    %v5945 = vld [vmem:[%s5930 + $0x70] sm:$0xff]
    %v5946 = vld [vmem:[%s5930 + $0x78] sm:$0xff]
    %5947 = vmatprep.subr.mxu0 0.0
    %5948 = vmatpush1.msra.mxu0 %v5931
    %5949 = vmatprep.subr.mxu0 0.0
    %5950 = vmatpush1.msra.mxu0 %v5932
    %5951 = vmatprep.subr.mxu0 0.0
    %5952 = vmatpush1.msra.mxu0 %v5933
    %5953 = vmatprep.subr.mxu0 0.0
    %5954 = vmatpush1.msra.mxu0 %v5934
    %5955 = vmatprep.subr.mxu0 0.0
    %5956 = vmatpush1.msra.mxu0 %v5935
    %5957 = vmatprep.subr.mxu0 0.0
    %5958 = vmatpush1.msra.mxu0 %v5936
    %5959 = vmatprep.subr.mxu0 0.0
    %5960 = vmatpush1.msra.mxu0 %v5937
    %5961 = vmatprep.subr.mxu0 0.0
    %5962 = vmatpush1.msra.mxu0 %v5938
    %5963 = vmatprep.subr.mxu0 0.0
    %5964 = vmatpush1.msra.mxu0 %v5939
    %5965 = vmatprep.subr.mxu0 0.0
    %5966 = vmatpush1.msra.mxu0 %v5940
    %5967 = vmatprep.subr.mxu0 0.0
    %5968 = vmatpush1.msra.mxu0 %v5941
    %5969 = vmatprep.subr.mxu0 0.0
    %5970 = vmatpush1.msra.mxu0 %v5942
    %5971 = vmatprep.subr.mxu0 0.0
    %5972 = vmatpush1.msra.mxu0 %v5943
    %5973 = vmatprep.subr.mxu0 0.0
    %5974 = vmatpush1.msra.mxu0 %v5944
    %5975 = vmatprep.subr.mxu0 0.0
    %5976 = vmatpush1.msra.mxu0 %v5945
    %5977 = vmatprep.subr.mxu0 0.0
    %5978 = vmatpush1.msra.mxu0 %v5946
    %5979 = vmatprep.subr.mxu0 0.0
    %5980 = vmatpush1.msra.mxu0 0.0
    %5981 = vmatprep.subr.mxu0 0.0
    %5982 = vmatpush1.msra.mxu0 0.0
    %5983 = vmatprep.subr.mxu0 0.0
    %5984 = vmatpush1.msra.mxu0 0.0
    %5985 = vmatprep.subr.mxu0 0.0
    %5986 = vmatpush1.msra.mxu0 0.0
    %5987 = vmatprep.subr.mxu0 0.0
    %5988 = vmatpush1.msra.mxu0 0.0
    %5989 = vmatprep.subr.mxu0 0.0
    %5990 = vmatpush1.msra.mxu0 0.0
    %5991 = vmatprep.subr.mxu0 0.0
    %5992 = vmatpush1.msra.mxu0 0.0
    %5993 = vmatprep.subr.mxu0 0.0
    %5994 = vmatpush1.msra.mxu0 0.0
    %5995 = vmatprep.subr.mxu0 0.0
    %5996 = vmatpush1.msra.mxu0 0.0
    %5997 = vmatprep.subr.mxu0 0.0
    %5998 = vmatpush1.msra.mxu0 0.0
    %5999 = vmatprep.subr.mxu0 0.0
    %6000 = vmatpush1.msra.mxu0 0.0
    %6001 = vmatprep.subr.mxu0 0.0
    %6002 = vmatpush1.msra.mxu0 0.0
    %6003 = vmatprep.subr.mxu0 0.0
    %6004 = vmatpush1.msra.mxu0 0.0
    %6005 = vmatprep.subr.mxu0 0.0
    %6006 = vmatpush1.msra.mxu0 0.0
    %6007 = vmatprep.subr.mxu0 0.0
    %6008 = vmatpush1.msra.mxu0 0.0
    %6009 = vmatprep.subr.mxu0 0.0
    %6010 = vmatpush1.msra.mxu0 0.0
    %6011 = vmatprep.mubr.f32.mxu0 0.0
    %6012 = vmatmul.mubr.f32.gmra.mrb[0].mxu0 %v5416
    %v6013 = vpop.f32.mrb[0].mxu0
    %v6014 = vadd.f32 0.0, %v6013
    %v6015 = vpop.f32.mrb[0].mxu0
    %6016 = vdwg.mxu0
    %s6017 = scalar_lea.vmem %s17, 48
    %v6018 = vld [vmem:[%s6017] sm:$0xff]
    %v6019 = vld [vmem:[%s6017 + $0x8] sm:$0xff]
    %v6021 = vsel %vm2902, %v6018, 0
    %v6024 = vsel %vm2902, %v6019, 0
    %6026 = vmatprep.subr.mxu0 0.0
    %6027 = vmatpush1.msra.mxu0 %v6014
    %6028 = vmatprep.subr.mxu0 0.0
    %6029 = vmatpush1.msra.mxu0 0.0
    %6030 = vmatprep.subr.mxu0 0.0
    %6031 = vmatpush1.msra.mxu0 0.0
    %6032 = vmatprep.subr.mxu0 0.0
    %6033 = vmatpush1.msra.mxu0 0.0
    %6034 = vmatprep.subr.mxu0 0.0
    %6035 = vmatpush1.msra.mxu0 0.0
    %6036 = vmatprep.subr.mxu0 0.0
    %6037 = vmatpush1.msra.mxu0 0.0
    %6038 = vmatprep.subr.mxu0 0.0
    %6039 = vmatpush1.msra.mxu0 0.0
    %6040 = vmatprep.subr.mxu0 0.0
    %6041 = vmatpush1.msra.mxu0 0.0
    %6042 = vmatprep.subr.mxu0 0.0
    %6043 = vmatpush1.msra.mxu0 0.0
    %6044 = vmatprep.subr.mxu0 0.0
    %6045 = vmatpush1.msra.mxu0 0.0
    %6046 = vmatprep.subr.mxu0 0.0
    %6047 = vmatpush1.msra.mxu0 0.0
    %6048 = vmatprep.subr.mxu0 0.0
    %6049 = vmatpush1.msra.mxu0 0.0
    %6050 = vmatprep.subr.mxu0 0.0
    %6051 = vmatpush1.msra.mxu0 0.0
    %6052 = vmatprep.subr.mxu0 0.0
    %6053 = vmatpush1.msra.mxu0 0.0
    %6054 = vmatprep.subr.mxu0 0.0
    %6055 = vmatpush1.msra.mxu0 0.0
    %6056 = vmatprep.subr.mxu0 0.0
    %6057 = vmatpush1.msra.mxu0 0.0
    %6058 = vmatprep.subr.mxu0 0.0
    %6059 = vmatpush1.msra.mxu0 0.0
    %6060 = vmatprep.subr.mxu0 0.0
    %6061 = vmatpush1.msra.mxu0 0.0
    %6062 = vmatprep.subr.mxu0 0.0
    %6063 = vmatpush1.msra.mxu0 0.0
    %6064 = vmatprep.subr.mxu0 0.0
    %6065 = vmatpush1.msra.mxu0 0.0
    %6066 = vmatprep.subr.mxu0 0.0
    %6067 = vmatpush1.msra.mxu0 0.0
    %6068 = vmatprep.subr.mxu0 0.0
    %6069 = vmatpush1.msra.mxu0 0.0
    %6070 = vmatprep.subr.mxu0 0.0
    %6071 = vmatpush1.msra.mxu0 0.0
    %6072 = vmatprep.subr.mxu0 0.0
    %6073 = vmatpush1.msra.mxu0 0.0
    %6074 = vmatprep.subr.mxu0 0.0
    %6075 = vmatpush1.msra.mxu0 0.0
    %6076 = vmatprep.subr.mxu0 0.0
    %6077 = vmatpush1.msra.mxu0 0.0
    %6078 = vmatprep.subr.mxu0 0.0
    %6079 = vmatpush1.msra.mxu0 0.0
    %6080 = vmatprep.subr.mxu0 0.0
    %6081 = vmatpush1.msra.mxu0 0.0
    %6082 = vmatprep.subr.mxu0 0.0
    %6083 = vmatpush1.msra.mxu0 0.0
    %6084 = vmatprep.subr.mxu0 0.0
    %6085 = vmatpush1.msra.mxu0 0.0
    %6086 = vmatprep.subr.mxu0 0.0
    %6087 = vmatpush1.msra.mxu0 0.0
    %6088 = vmatprep.subr.mxu0 0.0
    %6089 = vmatpush1.msra.mxu0 0.0
    %6090 = vmatprep.mubr.f32.mxu0 0.0
    %6091 = vmatmul.mubr.f32.gmra.mrb[0].mxu0 %v6021
    %v6092 = vpop.f32.mrb[0].mxu0
    %v6093 = vadd.f32 0.0, %v6092
    %v6094 = vpop.f32.mrb[0].mxu0
    %6095 = vmatprep.mubr.f32.mxu0 0.0
    %6096 = vmatmul.mubr.f32.gmra.mrb[0].mxu0 %v6024
    %v6097 = vpop.f32.mrb[0].mxu0
    %v6098 = vadd.f32 0.0, %v6097
    %v6099 = vpop.f32.mrb[0].mxu0
    %6100 = vdwg.mxu0
    %v6101 = vadd.f32 %v5928, %v6093
    %v6102 = vadd.f32 %v5929, %v6098
    %v6103 = vld [vmem:[#allocation8] sm:$0x1]
    %v6105 = vlaneseq
    %v6106 = vshrl.u32 %v6105, 7
    %v6107 = vsub.s32 0, %v6106
    %v6108 = vrot.slane %v6103, %v6107
    %v6110 = vadd.f32 %v6101, %v6108
    %v6111 = vadd.f32 %v6102, %v6108
    %v6112 = vmax.f32 %v6110, 0.0
    %v6113 = vmax.f32 %v6111, 0.0
    %v6114 = vld [vmem:[%s21] sm:$0xff]
    %v6115 = vld [vmem:[%s21 + $0x8] sm:$0xff]
    %v6116 = vld [vmem:[%s21 + $0x10] sm:$0xff]
    %v6117 = vld [vmem:[%s21 + $0x18] sm:$0xff]
    %v6118 = vld [vmem:[%s21 + $0x20] sm:$0xff]
    %v6119 = vld [vmem:[%s21 + $0x28] sm:$0xff]
    %v6120 = vld [vmem:[%s21 + $0x30] sm:$0xff]
    %v6121 = vld [vmem:[%s21 + $0x38] sm:$0xff]
    %v6122 = vld [vmem:[%s21 + $0x40] sm:$0xff]
    %v6123 = vld [vmem:[%s21 + $0x48] sm:$0xff]
    %v6124 = vld [vmem:[%s21 + $0x50] sm:$0xff]
    %v6125 = vld [vmem:[%s21 + $0x58] sm:$0xff]
    %v6126 = vld [vmem:[%s21 + $0x60] sm:$0xff]
    %v6127 = vld [vmem:[%s21 + $0x68] sm:$0xff]
    %v6128 = vld [vmem:[%s21 + $0x70] sm:$0xff]
    %v6129 = vld [vmem:[%s21 + $0x78] sm:$0xff]
    %6130 = vmatprep.subr.mxu0 0.0
    %6131 = vmatpush1.msra.mxu0 %v6114
    %6132 = vmatprep.subr.mxu0 0.0
    %6133 = vmatpush1.msra.mxu0 %v6115
    %6134 = vmatprep.subr.mxu0 0.0
    %6135 = vmatpush1.msra.mxu0 %v6116
    %6136 = vmatprep.subr.mxu0 0.0
    %6137 = vmatpush1.msra.mxu0 %v6117
    %6138 = vmatprep.subr.mxu0 0.0
    %6139 = vmatpush1.msra.mxu0 %v6118
    %6140 = vmatprep.subr.mxu0 0.0
    %6141 = vmatpush1.msra.mxu0 %v6119
    %6142 = vmatprep.subr.mxu0 0.0
    %6143 = vmatpush1.msra.mxu0 %v6120
    %6144 = vmatprep.subr.mxu0 0.0
    %6145 = vmatpush1.msra.mxu0 %v6121
    %6146 = vmatprep.subr.mxu0 0.0
    %6147 = vmatpush1.msra.mxu0 %v6122
    %6148 = vmatprep.subr.mxu0 0.0
    %6149 = vmatpush1.msra.mxu0 %v6123
    %6150 = vmatprep.subr.mxu0 0.0
    %6151 = vmatpush1.msra.mxu0 %v6124
    %6152 = vmatprep.subr.mxu0 0.0
    %6153 = vmatpush1.msra.mxu0 %v6125
    %6154 = vmatprep.subr.mxu0 0.0
    %6155 = vmatpush1.msra.mxu0 %v6126
    %6156 = vmatprep.subr.mxu0 0.0
    %6157 = vmatpush1.msra.mxu0 %v6127
    %6158 = vmatprep.subr.mxu0 0.0
    %6159 = vmatpush1.msra.mxu0 %v6128
    %6160 = vmatprep.subr.mxu0 0.0
    %6161 = vmatpush1.msra.mxu0 %v6129
    %6162 = vmatprep.subr.mxu0 0.0
    %6163 = vmatpush1.msra.mxu0 0.0
    %6164 = vmatprep.subr.mxu0 0.0
    %6165 = vmatpush1.msra.mxu0 0.0
    %6166 = vmatprep.subr.mxu0 0.0
    %6167 = vmatpush1.msra.mxu0 0.0
    %6168 = vmatprep.subr.mxu0 0.0
    %6169 = vmatpush1.msra.mxu0 0.0
    %6170 = vmatprep.subr.mxu0 0.0
    %6171 = vmatpush1.msra.mxu0 0.0
    %6172 = vmatprep.subr.mxu0 0.0
    %6173 = vmatpush1.msra.mxu0 0.0
    %6174 = vmatprep.subr.mxu0 0.0
    %6175 = vmatpush1.msra.mxu0 0.0
    %6176 = vmatprep.subr.mxu0 0.0
    %6177 = vmatpush1.msra.mxu0 0.0
    %6178 = vmatprep.subr.mxu0 0.0
    %6179 = vmatpush1.msra.mxu0 0.0
    %6180 = vmatprep.subr.mxu0 0.0
    %6181 = vmatpush1.msra.mxu0 0.0
    %6182 = vmatprep.subr.mxu0 0.0
    %6183 = vmatpush1.msra.mxu0 0.0
    %6184 = vmatprep.subr.mxu0 0.0
    %6185 = vmatpush1.msra.mxu0 0.0
    %6186 = vmatprep.subr.mxu0 0.0
    %6187 = vmatpush1.msra.mxu0 0.0
    %6188 = vmatprep.subr.mxu0 0.0
    %6189 = vmatpush1.msra.mxu0 0.0
    %6190 = vmatprep.subr.mxu0 0.0
    %6191 = vmatpush1.msra.mxu0 0.0
    %6192 = vmatprep.subr.mxu0 0.0
    %6193 = vmatpush1.msra.mxu0 0.0
    %6194 = vmatprep.mubr.f32.mxu0 0.0
    %6195 = vmatmul.mubr.f32.gmra.mrb[0].mxu0 %v6112
    %v6196 = vpop.f32.mrb[0].mxu0
    %v6197 = vadd.f32 0.0, %v6196
    %v6198 = vpop.f32.mrb[0].mxu0
    %6199 = vmatprep.mubr.f32.mxu0 0.0
    %6200 = vmatmul.mubr.f32.gmra.mrb[0].mxu0 %v6113
    %v6201 = vpop.f32.mrb[0].mxu0
    %v6202 = vadd.f32 0.0, %v6201
    %v6203 = vpop.f32.mrb[0].mxu0
    %6204 = vdwg.mxu0
    %v6205 = vld [vmem:[%s23] sm:$0xff]
    %v6206 = vld [vmem:[%s23 + $0x8] sm:$0xff]
    %v6207 = vld [vmem:[%s23 + $0x10] sm:$0xff]
    %v6208 = vld [vmem:[%s23 + $0x18] sm:$0xff]
    %s6209 = scalar_lea.vmem %s21, 128
    %v6210 = vld [vmem:[%s6209] sm:$0xff]
    %v6211 = vld [vmem:[%s6209 + $0x8] sm:$0xff]
    %v6212 = vld [vmem:[%s6209 + $0x10] sm:$0xff]
    %v6213 = vld [vmem:[%s6209 + $0x18] sm:$0xff]
    %v6214 = vld [vmem:[%s6209 + $0x20] sm:$0xff]
    %v6215 = vld [vmem:[%s6209 + $0x28] sm:$0xff]
    %v6216 = vld [vmem:[%s6209 + $0x30] sm:$0xff]
    %v6217 = vld [vmem:[%s6209 + $0x38] sm:$0xff]
    %v6218 = vld [vmem:[%s6209 + $0x40] sm:$0xff]
    %v6219 = vld [vmem:[%s6209 + $0x48] sm:$0xff]
    %v6220 = vld [vmem:[%s6209 + $0x50] sm:$0xff]
    %v6221 = vld [vmem:[%s6209 + $0x58] sm:$0xff]
    %v6222 = vld [vmem:[%s6209 + $0x60] sm:$0xff]
    %v6223 = vld [vmem:[%s6209 + $0x68] sm:$0xff]
    %v6224 = vld [vmem:[%s6209 + $0x70] sm:$0xff]
    %v6225 = vld [vmem:[%s6209 + $0x78] sm:$0xff]
    %6226 = vmatprep.subr.mxu0 0.0
    %6227 = vmatpush1.msra.mxu0 %v6210
    %6228 = vmatprep.subr.mxu0 0.0
    %6229 = vmatpush1.msra.mxu0 %v6211
    %6230 = vmatprep.subr.mxu0 0.0
    %6231 = vmatpush1.msra.mxu0 %v6212
    %6232 = vmatprep.subr.mxu0 0.0
    %6233 = vmatpush1.msra.mxu0 %v6213
    %6234 = vmatprep.subr.mxu0 0.0
    %6235 = vmatpush1.msra.mxu0 %v6214
    %6236 = vmatprep.subr.mxu0 0.0
    %6237 = vmatpush1.msra.mxu0 %v6215
    %6238 = vmatprep.subr.mxu0 0.0
    %6239 = vmatpush1.msra.mxu0 %v6216
    %6240 = vmatprep.subr.mxu0 0.0
    %6241 = vmatpush1.msra.mxu0 %v6217
    %6242 = vmatprep.subr.mxu0 0.0
    %6243 = vmatpush1.msra.mxu0 %v6218
    %6244 = vmatprep.subr.mxu0 0.0
    %6245 = vmatpush1.msra.mxu0 %v6219
    %6246 = vmatprep.subr.mxu0 0.0
    %6247 = vmatpush1.msra.mxu0 %v6220
    %6248 = vmatprep.subr.mxu0 0.0
    %6249 = vmatpush1.msra.mxu0 %v6221
    %6250 = vmatprep.subr.mxu0 0.0
    %6251 = vmatpush1.msra.mxu0 %v6222
    %6252 = vmatprep.subr.mxu0 0.0
    %6253 = vmatpush1.msra.mxu0 %v6223
    %6254 = vmatprep.subr.mxu0 0.0
    %6255 = vmatpush1.msra.mxu0 %v6224
    %6256 = vmatprep.subr.mxu0 0.0
    %6257 = vmatpush1.msra.mxu0 %v6225
    %6258 = vmatprep.subr.mxu0 0.0
    %6259 = vmatpush1.msra.mxu0 0.0
    %6260 = vmatprep.subr.mxu0 0.0
    %6261 = vmatpush1.msra.mxu0 0.0
    %6262 = vmatprep.subr.mxu0 0.0
    %6263 = vmatpush1.msra.mxu0 0.0
    %6264 = vmatprep.subr.mxu0 0.0
    %6265 = vmatpush1.msra.mxu0 0.0
    %6266 = vmatprep.subr.mxu0 0.0
    %6267 = vmatpush1.msra.mxu0 0.0
    %6268 = vmatprep.subr.mxu0 0.0
    %6269 = vmatpush1.msra.mxu0 0.0
    %6270 = vmatprep.subr.mxu0 0.0
    %6271 = vmatpush1.msra.mxu0 0.0
    %6272 = vmatprep.subr.mxu0 0.0
    %6273 = vmatpush1.msra.mxu0 0.0
    %6274 = vmatprep.subr.mxu0 0.0
    %6275 = vmatpush1.msra.mxu0 0.0
    %6276 = vmatprep.subr.mxu0 0.0
    %6277 = vmatpush1.msra.mxu0 0.0
    %6278 = vmatprep.subr.mxu0 0.0
    %6279 = vmatpush1.msra.mxu0 0.0
    %6280 = vmatprep.subr.mxu0 0.0
    %6281 = vmatpush1.msra.mxu0 0.0
    %6282 = vmatprep.subr.mxu0 0.0
    %6283 = vmatpush1.msra.mxu0 0.0
    %6284 = vmatprep.subr.mxu0 0.0
    %6285 = vmatpush1.msra.mxu0 0.0
    %6286 = vmatprep.subr.mxu0 0.0
    %6287 = vmatpush1.msra.mxu0 0.0
    %6288 = vmatprep.subr.mxu0 0.0
    %6289 = vmatpush1.msra.mxu0 0.0
    %6290 = vmatprep.mubr.f32.mxu0 0.0
    %6291 = vmatmul.mubr.f32.gmra.mrb[0].mxu0 %v6112
    %v6292 = vpop.f32.mrb[0].mxu0
    %v6293 = vadd.f32 0.0, %v6292
    %v6294 = vpop.f32.mrb[0].mxu0
    %6295 = vmatprep.mubr.f32.mxu0 0.0
    %6296 = vmatmul.mubr.f32.gmra.mrb[0].mxu0 %v6113
    %v6297 = vpop.f32.mrb[0].mxu0
    %v6298 = vadd.f32 0.0, %v6297
    %v6299 = vpop.f32.mrb[0].mxu0
    %6300 = vdwg.mxu0
    %s6301 = scalar_lea.vmem %s23, 32
    %v6302 = vld [vmem:[%s6301] sm:$0xff]
    %v6303 = vld [vmem:[%s6301 + $0x8] sm:$0xff]
    %v6304 = vld [vmem:[%s6301 + $0x10] sm:$0xff]
    %v6305 = vld [vmem:[%s6301 + $0x18] sm:$0xff]
    %v6307 = vsel %vm2407, %v6302, 0
    %v6310 = vsel %vm2407, %v6303, 0
    %v6313 = vsel %vm2407, %v6304, 0
    %v6316 = vsel %vm2407, %v6305, 0
    %6318 = vmatprep.subr.mxu0 0.0
    %6319 = vmatpush1.msra.mxu0 %v6293
    %6320 = vmatprep.subr.mxu0 0.0
    %6321 = vmatpush1.msra.mxu0 %v6298
    %6322 = vmatprep.subr.mxu0 0.0
    %6323 = vmatpush1.msra.mxu0 0.0
    %6324 = vmatprep.subr.mxu0 0.0
    %6325 = vmatpush1.msra.mxu0 0.0
    %6326 = vmatprep.subr.mxu0 0.0
    %6327 = vmatpush1.msra.mxu0 0.0
    %6328 = vmatprep.subr.mxu0 0.0
    %6329 = vmatpush1.msra.mxu0 0.0
    %6330 = vmatprep.subr.mxu0 0.0
    %6331 = vmatpush1.msra.mxu0 0.0
    %6332 = vmatprep.subr.mxu0 0.0
    %6333 = vmatpush1.msra.mxu0 0.0
    %6334 = vmatprep.subr.mxu0 0.0
    %6335 = vmatpush1.msra.mxu0 0.0
    %6336 = vmatprep.subr.mxu0 0.0
    %6337 = vmatpush1.msra.mxu0 0.0
    %6338 = vmatprep.subr.mxu0 0.0
    %6339 = vmatpush1.msra.mxu0 0.0
    %6340 = vmatprep.subr.mxu0 0.0
    %6341 = vmatpush1.msra.mxu0 0.0
    %6342 = vmatprep.subr.mxu0 0.0
    %6343 = vmatpush1.msra.mxu0 0.0
    %6344 = vmatprep.subr.mxu0 0.0
    %6345 = vmatpush1.msra.mxu0 0.0
    %6346 = vmatprep.subr.mxu0 0.0
    %6347 = vmatpush1.msra.mxu0 0.0
    %6348 = vmatprep.subr.mxu0 0.0
    %6349 = vmatpush1.msra.mxu0 0.0
    %6350 = vmatprep.subr.mxu0 0.0
    %6351 = vmatpush1.msra.mxu0 0.0
    %6352 = vmatprep.subr.mxu0 0.0
    %6353 = vmatpush1.msra.mxu0 0.0
    %6354 = vmatprep.subr.mxu0 0.0
    %6355 = vmatpush1.msra.mxu0 0.0
    %6356 = vmatprep.subr.mxu0 0.0
    %6357 = vmatpush1.msra.mxu0 0.0
    %6358 = vmatprep.subr.mxu0 0.0
    %6359 = vmatpush1.msra.mxu0 0.0
    %6360 = vmatprep.subr.mxu0 0.0
    %6361 = vmatpush1.msra.mxu0 0.0
    %6362 = vmatprep.subr.mxu0 0.0
    %6363 = vmatpush1.msra.mxu0 0.0
    %6364 = vmatprep.subr.mxu0 0.0
    %6365 = vmatpush1.msra.mxu0 0.0
    %6366 = vmatprep.subr.mxu0 0.0
    %6367 = vmatpush1.msra.mxu0 0.0
    %6368 = vmatprep.subr.mxu0 0.0
    %6369 = vmatpush1.msra.mxu0 0.0
    %6370 = vmatprep.subr.mxu0 0.0
    %6371 = vmatpush1.msra.mxu0 0.0
    %6372 = vmatprep.subr.mxu0 0.0
    %6373 = vmatpush1.msra.mxu0 0.0
    %6374 = vmatprep.subr.mxu0 0.0
    %6375 = vmatpush1.msra.mxu0 0.0
    %6376 = vmatprep.subr.mxu0 0.0
    %6377 = vmatpush1.msra.mxu0 0.0
    %6378 = vmatprep.subr.mxu0 0.0
    %6379 = vmatpush1.msra.mxu0 0.0
    %6380 = vmatprep.subr.mxu0 0.0
    %6381 = vmatpush1.msra.mxu0 0.0
    %6382 = vmatprep.mubr.f32.mxu0 0.0
    %6383 = vmatmul.mubr.f32.gmra.mrb[0].mxu0 %v6307
    %v6384 = vpop.f32.mrb[0].mxu0
    %v6385 = vadd.f32 0.0, %v6384
    %v6386 = vpop.f32.mrb[0].mxu0
    %6387 = vmatprep.mubr.f32.mxu0 0.0
    %6388 = vmatmul.mubr.f32.gmra.mrb[0].mxu0 %v6310
    %v6389 = vpop.f32.mrb[0].mxu0
    %v6390 = vadd.f32 0.0, %v6389
    %v6391 = vpop.f32.mrb[0].mxu0
    %6392 = vmatprep.mubr.f32.mxu0 0.0
    %6393 = vmatmul.mubr.f32.gmra.mrb[0].mxu0 %v6313
    %v6394 = vpop.f32.mrb[0].mxu0
    %v6395 = vadd.f32 0.0, %v6394
    %v6396 = vpop.f32.mrb[0].mxu0
    %6397 = vmatprep.mubr.f32.mxu0 0.0
    %6398 = vmatmul.mubr.f32.gmra.mrb[0].mxu0 %v6316
    %v6399 = vpop.f32.mrb[0].mxu0
    %v6400 = vadd.f32 0.0, %v6399
    %v6401 = vpop.f32.mrb[0].mxu0
    %6402 = vdwg.mxu0
    %v6404 = vsel %vm2407, %v6205, 0
    %v6407 = vsel %vm2407, %v6206, 0
    %v6410 = vsel %vm2407, %v6207, 0
    %v6413 = vsel %vm2407, %v6208, 0
    %6415 = vmatprep.subr.mxu0 0.0
    %6416 = vmatpush1.msra.mxu0 %v6197
    %6417 = vmatprep.subr.mxu0 0.0
    %6418 = vmatpush1.msra.mxu0 %v6202
    %6419 = vmatprep.subr.mxu0 0.0
    %6420 = vmatpush1.msra.mxu0 0.0
    %6421 = vmatprep.subr.mxu0 0.0
    %6422 = vmatpush1.msra.mxu0 0.0
    %6423 = vmatprep.subr.mxu0 0.0
    %6424 = vmatpush1.msra.mxu0 0.0
    %6425 = vmatprep.subr.mxu0 0.0
    %6426 = vmatpush1.msra.mxu0 0.0
    %6427 = vmatprep.subr.mxu0 0.0
    %6428 = vmatpush1.msra.mxu0 0.0
    %6429 = vmatprep.subr.mxu0 0.0
    %6430 = vmatpush1.msra.mxu0 0.0
    %6431 = vmatprep.subr.mxu0 0.0
    %6432 = vmatpush1.msra.mxu0 0.0
    %6433 = vmatprep.subr.mxu0 0.0
    %6434 = vmatpush1.msra.mxu0 0.0
    %6435 = vmatprep.subr.mxu0 0.0
    %6436 = vmatpush1.msra.mxu0 0.0
    %6437 = vmatprep.subr.mxu0 0.0
    %6438 = vmatpush1.msra.mxu0 0.0
    %6439 = vmatprep.subr.mxu0 0.0
    %6440 = vmatpush1.msra.mxu0 0.0
    %6441 = vmatprep.subr.mxu0 0.0
    %6442 = vmatpush1.msra.mxu0 0.0
    %6443 = vmatprep.subr.mxu0 0.0
    %6444 = vmatpush1.msra.mxu0 0.0
    %6445 = vmatprep.subr.mxu0 0.0
    %6446 = vmatpush1.msra.mxu0 0.0
    %6447 = vmatprep.subr.mxu0 0.0
    %6448 = vmatpush1.msra.mxu0 0.0
    %6449 = vmatprep.subr.mxu0 0.0
    %6450 = vmatpush1.msra.mxu0 0.0
    %6451 = vmatprep.subr.mxu0 0.0
    %6452 = vmatpush1.msra.mxu0 0.0
    %6453 = vmatprep.subr.mxu0 0.0
    %6454 = vmatpush1.msra.mxu0 0.0
    %6455 = vmatprep.subr.mxu0 0.0
    %6456 = vmatpush1.msra.mxu0 0.0
    %6457 = vmatprep.subr.mxu0 0.0
    %6458 = vmatpush1.msra.mxu0 0.0
    %6459 = vmatprep.subr.mxu0 0.0
    %6460 = vmatpush1.msra.mxu0 0.0
    %6461 = vmatprep.subr.mxu0 0.0
    %6462 = vmatpush1.msra.mxu0 0.0
    %6463 = vmatprep.subr.mxu0 0.0
    %6464 = vmatpush1.msra.mxu0 0.0
    %6465 = vmatprep.subr.mxu0 0.0
    %6466 = vmatpush1.msra.mxu0 0.0
    %6467 = vmatprep.subr.mxu0 0.0
    %6468 = vmatpush1.msra.mxu0 0.0
    %6469 = vmatprep.subr.mxu0 0.0
    %6470 = vmatpush1.msra.mxu0 0.0
    %6471 = vmatprep.subr.mxu0 0.0
    %6472 = vmatpush1.msra.mxu0 0.0
    %6473 = vmatprep.subr.mxu0 0.0
    %6474 = vmatpush1.msra.mxu0 0.0
    %6475 = vmatprep.subr.mxu0 0.0
    %6476 = vmatpush1.msra.mxu0 0.0
    %6477 = vmatprep.subr.mxu0 0.0
    %6478 = vmatpush1.msra.mxu0 0.0
    %6479 = vmatprep.mubr.f32.mxu0 0.0
    %6480 = vmatmul.mubr.f32.gmra.mrb[0].mxu0 %v6404
    %v6481 = vpop.f32.mrb[0].mxu0
    %v6482 = vadd.f32 %v6385, %v6481
    %v6483 = vpop.f32.mrb[0].mxu0
    %6484 = vmatprep.mubr.f32.mxu0 0.0
    %6485 = vmatmul.mubr.f32.gmra.mrb[0].mxu0 %v6407
    %v6486 = vpop.f32.mrb[0].mxu0
    %v6487 = vadd.f32 %v6390, %v6486
    %v6488 = vpop.f32.mrb[0].mxu0
    %6489 = vmatprep.mubr.f32.mxu0 0.0
    %6490 = vmatmul.mubr.f32.gmra.mrb[0].mxu0 %v6410
    %v6491 = vpop.f32.mrb[0].mxu0
    %v6492 = vadd.f32 %v6395, %v6491
    %v6493 = vpop.f32.mrb[0].mxu0
    %6494 = vmatprep.mubr.f32.mxu0 0.0
    %6495 = vmatmul.mubr.f32.gmra.mrb[0].mxu0 %v6413
    %v6496 = vpop.f32.mrb[0].mxu0
    %v6497 = vadd.f32 %v6400, %v6496
    %v6498 = vpop.f32.mrb[0].mxu0
    %6499 = vdwg.mxu0
    %s6500 = scalar_lea.vmem %s21, 256
    %v6501 = vld [vmem:[%s6500] sm:$0xff]
    %v6502 = vld [vmem:[%s6500 + $0x8] sm:$0xff]
    %v6503 = vld [vmem:[%s6500 + $0x10] sm:$0xff]
    %v6504 = vld [vmem:[%s6500 + $0x18] sm:$0xff]
    %v6505 = vld [vmem:[%s6500 + $0x20] sm:$0xff]
    %v6506 = vld [vmem:[%s6500 + $0x28] sm:$0xff]
    %v6507 = vld [vmem:[%s6500 + $0x30] sm:$0xff]
    %v6508 = vld [vmem:[%s6500 + $0x38] sm:$0xff]
    %v6509 = vld [vmem:[%s6500 + $0x40] sm:$0xff]
    %v6510 = vld [vmem:[%s6500 + $0x48] sm:$0xff]
    %v6511 = vld [vmem:[%s6500 + $0x50] sm:$0xff]
    %v6512 = vld [vmem:[%s6500 + $0x58] sm:$0xff]
    %v6513 = vld [vmem:[%s6500 + $0x60] sm:$0xff]
    %v6514 = vld [vmem:[%s6500 + $0x68] sm:$0xff]
    %v6515 = vld [vmem:[%s6500 + $0x70] sm:$0xff]
    %v6516 = vld [vmem:[%s6500 + $0x78] sm:$0xff]
    %6517 = vmatprep.subr.mxu0 0.0
    %6518 = vmatpush1.msra.mxu0 %v6501
    %6519 = vmatprep.subr.mxu0 0.0
    %6520 = vmatpush1.msra.mxu0 %v6502
    %6521 = vmatprep.subr.mxu0 0.0
    %6522 = vmatpush1.msra.mxu0 %v6503
    %6523 = vmatprep.subr.mxu0 0.0
    %6524 = vmatpush1.msra.mxu0 %v6504
    %6525 = vmatprep.subr.mxu0 0.0
    %6526 = vmatpush1.msra.mxu0 %v6505
    %6527 = vmatprep.subr.mxu0 0.0
    %6528 = vmatpush1.msra.mxu0 %v6506
    %6529 = vmatprep.subr.mxu0 0.0
    %6530 = vmatpush1.msra.mxu0 %v6507
    %6531 = vmatprep.subr.mxu0 0.0
    %6532 = vmatpush1.msra.mxu0 %v6508
    %6533 = vmatprep.subr.mxu0 0.0
    %6534 = vmatpush1.msra.mxu0 %v6509
    %6535 = vmatprep.subr.mxu0 0.0
    %6536 = vmatpush1.msra.mxu0 %v6510
    %6537 = vmatprep.subr.mxu0 0.0
    %6538 = vmatpush1.msra.mxu0 %v6511
    %6539 = vmatprep.subr.mxu0 0.0
    %6540 = vmatpush1.msra.mxu0 %v6512
    %6541 = vmatprep.subr.mxu0 0.0
    %6542 = vmatpush1.msra.mxu0 %v6513
    %6543 = vmatprep.subr.mxu0 0.0
    %6544 = vmatpush1.msra.mxu0 %v6514
    %6545 = vmatprep.subr.mxu0 0.0
    %6546 = vmatpush1.msra.mxu0 %v6515
    %6547 = vmatprep.subr.mxu0 0.0
    %6548 = vmatpush1.msra.mxu0 %v6516
    %6549 = vmatprep.subr.mxu0 0.0
    %6550 = vmatpush1.msra.mxu0 0.0
    %6551 = vmatprep.subr.mxu0 0.0
    %6552 = vmatpush1.msra.mxu0 0.0
    %6553 = vmatprep.subr.mxu0 0.0
    %6554 = vmatpush1.msra.mxu0 0.0
    %6555 = vmatprep.subr.mxu0 0.0
    %6556 = vmatpush1.msra.mxu0 0.0
    %6557 = vmatprep.subr.mxu0 0.0
    %6558 = vmatpush1.msra.mxu0 0.0
    %6559 = vmatprep.subr.mxu0 0.0
    %6560 = vmatpush1.msra.mxu0 0.0
    %6561 = vmatprep.subr.mxu0 0.0
    %6562 = vmatpush1.msra.mxu0 0.0
    %6563 = vmatprep.subr.mxu0 0.0
    %6564 = vmatpush1.msra.mxu0 0.0
    %6565 = vmatprep.subr.mxu0 0.0
    %6566 = vmatpush1.msra.mxu0 0.0
    %6567 = vmatprep.subr.mxu0 0.0
    %6568 = vmatpush1.msra.mxu0 0.0
    %6569 = vmatprep.subr.mxu0 0.0
    %6570 = vmatpush1.msra.mxu0 0.0
    %6571 = vmatprep.subr.mxu0 0.0
    %6572 = vmatpush1.msra.mxu0 0.0
    %6573 = vmatprep.subr.mxu0 0.0
    %6574 = vmatpush1.msra.mxu0 0.0
    %6575 = vmatprep.subr.mxu0 0.0
    %6576 = vmatpush1.msra.mxu0 0.0
    %6577 = vmatprep.subr.mxu0 0.0
    %6578 = vmatpush1.msra.mxu0 0.0
    %6579 = vmatprep.subr.mxu0 0.0
    %6580 = vmatpush1.msra.mxu0 0.0
    %6581 = vmatprep.mubr.f32.mxu0 0.0
    %6582 = vmatmul.mubr.f32.gmra.mrb[0].mxu0 %v6112
    %v6583 = vpop.f32.mrb[0].mxu0
    %v6584 = vadd.f32 0.0, %v6583
    %v6585 = vpop.f32.mrb[0].mxu0
    %6586 = vmatprep.mubr.f32.mxu0 0.0
    %6587 = vmatmul.mubr.f32.gmra.mrb[0].mxu0 %v6113
    %v6588 = vpop.f32.mrb[0].mxu0
    %v6589 = vadd.f32 0.0, %v6588
    %v6590 = vpop.f32.mrb[0].mxu0
    %6591 = vdwg.mxu0
    %s6592 = scalar_lea.vmem %s23, 64
    %v6593 = vld [vmem:[%s6592] sm:$0xff]
    %v6594 = vld [vmem:[%s6592 + $0x8] sm:$0xff]
    %v6595 = vld [vmem:[%s6592 + $0x10] sm:$0xff]
    %v6596 = vld [vmem:[%s6592 + $0x18] sm:$0xff]
    %v6598 = vsel %vm2407, %v6593, 0
    %v6601 = vsel %vm2407, %v6594, 0
    %v6604 = vsel %vm2407, %v6595, 0
    %v6607 = vsel %vm2407, %v6596, 0
    %6609 = vmatprep.subr.mxu0 0.0
    %6610 = vmatpush1.msra.mxu0 %v6584
    %6611 = vmatprep.subr.mxu0 0.0
    %6612 = vmatpush1.msra.mxu0 %v6589
    %6613 = vmatprep.subr.mxu0 0.0
    %6614 = vmatpush1.msra.mxu0 0.0
    %6615 = vmatprep.subr.mxu0 0.0
    %6616 = vmatpush1.msra.mxu0 0.0
    %6617 = vmatprep.subr.mxu0 0.0
    %6618 = vmatpush1.msra.mxu0 0.0
    %6619 = vmatprep.subr.mxu0 0.0
    %6620 = vmatpush1.msra.mxu0 0.0
    %6621 = vmatprep.subr.mxu0 0.0
    %6622 = vmatpush1.msra.mxu0 0.0
    %6623 = vmatprep.subr.mxu0 0.0
    %6624 = vmatpush1.msra.mxu0 0.0
    %6625 = vmatprep.subr.mxu0 0.0
    %6626 = vmatpush1.msra.mxu0 0.0
    %6627 = vmatprep.subr.mxu0 0.0
    %6628 = vmatpush1.msra.mxu0 0.0
    %6629 = vmatprep.subr.mxu0 0.0
    %6630 = vmatpush1.msra.mxu0 0.0
    %6631 = vmatprep.subr.mxu0 0.0
    %6632 = vmatpush1.msra.mxu0 0.0
    %6633 = vmatprep.subr.mxu0 0.0
    %6634 = vmatpush1.msra.mxu0 0.0
    %6635 = vmatprep.subr.mxu0 0.0
    %6636 = vmatpush1.msra.mxu0 0.0
    %6637 = vmatprep.subr.mxu0 0.0
    %6638 = vmatpush1.msra.mxu0 0.0
    %6639 = vmatprep.subr.mxu0 0.0
    %6640 = vmatpush1.msra.mxu0 0.0
    %6641 = vmatprep.subr.mxu0 0.0
    %6642 = vmatpush1.msra.mxu0 0.0
    %6643 = vmatprep.subr.mxu0 0.0
    %6644 = vmatpush1.msra.mxu0 0.0
    %6645 = vmatprep.subr.mxu0 0.0
    %6646 = vmatpush1.msra.mxu0 0.0
    %6647 = vmatprep.subr.mxu0 0.0
    %6648 = vmatpush1.msra.mxu0 0.0
    %6649 = vmatprep.subr.mxu0 0.0
    %6650 = vmatpush1.msra.mxu0 0.0
    %6651 = vmatprep.subr.mxu0 0.0
    %6652 = vmatpush1.msra.mxu0 0.0
    %6653 = vmatprep.subr.mxu0 0.0
    %6654 = vmatpush1.msra.mxu0 0.0
    %6655 = vmatprep.subr.mxu0 0.0
    %6656 = vmatpush1.msra.mxu0 0.0
    %6657 = vmatprep.subr.mxu0 0.0
    %6658 = vmatpush1.msra.mxu0 0.0
    %6659 = vmatprep.subr.mxu0 0.0
    %6660 = vmatpush1.msra.mxu0 0.0
    %6661 = vmatprep.subr.mxu0 0.0
    %6662 = vmatpush1.msra.mxu0 0.0
    %6663 = vmatprep.subr.mxu0 0.0
    %6664 = vmatpush1.msra.mxu0 0.0
    %6665 = vmatprep.subr.mxu0 0.0
    %6666 = vmatpush1.msra.mxu0 0.0
    %6667 = vmatprep.subr.mxu0 0.0
    %6668 = vmatpush1.msra.mxu0 0.0
    %6669 = vmatprep.subr.mxu0 0.0
    %6670 = vmatpush1.msra.mxu0 0.0
    %6671 = vmatprep.subr.mxu0 0.0
    %6672 = vmatpush1.msra.mxu0 0.0
    %6673 = vmatprep.mubr.f32.mxu0 0.0
    %6674 = vmatmul.mubr.f32.gmra.mrb[0].mxu0 %v6598
    %v6675 = vpop.f32.mrb[0].mxu0
    %v6676 = vadd.f32 0.0, %v6675
    %v6677 = vpop.f32.mrb[0].mxu0
    %6678 = vmatprep.mubr.f32.mxu0 0.0
    %6679 = vmatmul.mubr.f32.gmra.mrb[0].mxu0 %v6601
    %v6680 = vpop.f32.mrb[0].mxu0
    %v6681 = vadd.f32 0.0, %v6680
    %v6682 = vpop.f32.mrb[0].mxu0
    %6683 = vmatprep.mubr.f32.mxu0 0.0
    %6684 = vmatmul.mubr.f32.gmra.mrb[0].mxu0 %v6604
    %v6685 = vpop.f32.mrb[0].mxu0
    %v6686 = vadd.f32 0.0, %v6685
    %v6687 = vpop.f32.mrb[0].mxu0
    %6688 = vmatprep.mubr.f32.mxu0 0.0
    %6689 = vmatmul.mubr.f32.gmra.mrb[0].mxu0 %v6607
    %v6690 = vpop.f32.mrb[0].mxu0
    %v6691 = vadd.f32 0.0, %v6690
    %v6692 = vpop.f32.mrb[0].mxu0
    %6693 = vdwg.mxu0
    %v6694 = vadd.f32 %v6482, %v6676
    %v6695 = vadd.f32 %v6487, %v6681
    %v6696 = vadd.f32 %v6492, %v6686
    %v6697 = vadd.f32 %v6497, %v6691
    %s6698 = scalar_lea.vmem %s21, 384
    %v6699 = vld [vmem:[%s6698] sm:$0xff]
    %v6700 = vld [vmem:[%s6698 + $0x8] sm:$0xff]
    %v6701 = vld [vmem:[%s6698 + $0x10] sm:$0xff]
    %v6702 = vld [vmem:[%s6698 + $0x18] sm:$0xff]
    %v6703 = vld [vmem:[%s6698 + $0x20] sm:$0xff]
    %v6704 = vld [vmem:[%s6698 + $0x28] sm:$0xff]
    %v6705 = vld [vmem:[%s6698 + $0x30] sm:$0xff]
    %v6706 = vld [vmem:[%s6698 + $0x38] sm:$0xff]
    %v6707 = vld [vmem:[%s6698 + $0x40] sm:$0xff]
    %v6708 = vld [vmem:[%s6698 + $0x48] sm:$0xff]
    %v6709 = vld [vmem:[%s6698 + $0x50] sm:$0xff]
    %v6710 = vld [vmem:[%s6698 + $0x58] sm:$0xff]
    %v6711 = vld [vmem:[%s6698 + $0x60] sm:$0xff]
    %v6712 = vld [vmem:[%s6698 + $0x68] sm:$0xff]
    %v6713 = vld [vmem:[%s6698 + $0x70] sm:$0xff]
    %v6714 = vld [vmem:[%s6698 + $0x78] sm:$0xff]
    %6715 = vmatprep.subr.mxu0 0.0
    %6716 = vmatpush1.msra.mxu0 %v6699
    %6717 = vmatprep.subr.mxu0 0.0
    %6718 = vmatpush1.msra.mxu0 %v6700
    %6719 = vmatprep.subr.mxu0 0.0
    %6720 = vmatpush1.msra.mxu0 %v6701
    %6721 = vmatprep.subr.mxu0 0.0
    %6722 = vmatpush1.msra.mxu0 %v6702
    %6723 = vmatprep.subr.mxu0 0.0
    %6724 = vmatpush1.msra.mxu0 %v6703
    %6725 = vmatprep.subr.mxu0 0.0
    %6726 = vmatpush1.msra.mxu0 %v6704
    %6727 = vmatprep.subr.mxu0 0.0
    %6728 = vmatpush1.msra.mxu0 %v6705
    %6729 = vmatprep.subr.mxu0 0.0
    %6730 = vmatpush1.msra.mxu0 %v6706
    %6731 = vmatprep.subr.mxu0 0.0
    %6732 = vmatpush1.msra.mxu0 %v6707
    %6733 = vmatprep.subr.mxu0 0.0
    %6734 = vmatpush1.msra.mxu0 %v6708
    %6735 = vmatprep.subr.mxu0 0.0
    %6736 = vmatpush1.msra.mxu0 %v6709
    %6737 = vmatprep.subr.mxu0 0.0
    %6738 = vmatpush1.msra.mxu0 %v6710
    %6739 = vmatprep.subr.mxu0 0.0
    %6740 = vmatpush1.msra.mxu0 %v6711
    %6741 = vmatprep.subr.mxu0 0.0
    %6742 = vmatpush1.msra.mxu0 %v6712
    %6743 = vmatprep.subr.mxu0 0.0
    %6744 = vmatpush1.msra.mxu0 %v6713
    %6745 = vmatprep.subr.mxu0 0.0
    %6746 = vmatpush1.msra.mxu0 %v6714
    %6747 = vmatprep.subr.mxu0 0.0
    %6748 = vmatpush1.msra.mxu0 0.0
    %6749 = vmatprep.subr.mxu0 0.0
    %6750 = vmatpush1.msra.mxu0 0.0
    %6751 = vmatprep.subr.mxu0 0.0
    %6752 = vmatpush1.msra.mxu0 0.0
    %6753 = vmatprep.subr.mxu0 0.0
    %6754 = vmatpush1.msra.mxu0 0.0
    %6755 = vmatprep.subr.mxu0 0.0
    %6756 = vmatpush1.msra.mxu0 0.0
    %6757 = vmatprep.subr.mxu0 0.0
    %6758 = vmatpush1.msra.mxu0 0.0
    %6759 = vmatprep.subr.mxu0 0.0
    %6760 = vmatpush1.msra.mxu0 0.0
    %6761 = vmatprep.subr.mxu0 0.0
    %6762 = vmatpush1.msra.mxu0 0.0
    %6763 = vmatprep.subr.mxu0 0.0
    %6764 = vmatpush1.msra.mxu0 0.0
    %6765 = vmatprep.subr.mxu0 0.0
    %6766 = vmatpush1.msra.mxu0 0.0
    %6767 = vmatprep.subr.mxu0 0.0
    %6768 = vmatpush1.msra.mxu0 0.0
    %6769 = vmatprep.subr.mxu0 0.0
    %6770 = vmatpush1.msra.mxu0 0.0
    %6771 = vmatprep.subr.mxu0 0.0
    %6772 = vmatpush1.msra.mxu0 0.0
    %6773 = vmatprep.subr.mxu0 0.0
    %6774 = vmatpush1.msra.mxu0 0.0
    %6775 = vmatprep.subr.mxu0 0.0
    %6776 = vmatpush1.msra.mxu0 0.0
    %6777 = vmatprep.subr.mxu0 0.0
    %6778 = vmatpush1.msra.mxu0 0.0
    %6779 = vmatprep.mubr.f32.mxu0 0.0
    %6780 = vmatmul.mubr.f32.gmra.mrb[0].mxu0 %v6112
    %v6781 = vpop.f32.mrb[0].mxu0
    %v6782 = vadd.f32 0.0, %v6781
    %v6783 = vpop.f32.mrb[0].mxu0
    %6784 = vmatprep.mubr.f32.mxu0 0.0
    %6785 = vmatmul.mubr.f32.gmra.mrb[0].mxu0 %v6113
    %v6786 = vpop.f32.mrb[0].mxu0
    %v6787 = vadd.f32 0.0, %v6786
    %v6788 = vpop.f32.mrb[0].mxu0
    %6789 = vdwg.mxu0
    %s6790 = scalar_lea.vmem %s23, 96
    %v6791 = vld [vmem:[%s6790] sm:$0xff]
    %v6792 = vld [vmem:[%s6790 + $0x8] sm:$0xff]
    %v6793 = vld [vmem:[%s6790 + $0x10] sm:$0xff]
    %v6794 = vld [vmem:[%s6790 + $0x18] sm:$0xff]
    %v6796 = vsel %vm2407, %v6791, 0
    %v6799 = vsel %vm2407, %v6792, 0
    %v6802 = vsel %vm2407, %v6793, 0
    %v6805 = vsel %vm2407, %v6794, 0
    %6807 = vmatprep.subr.mxu0 0.0
    %6808 = vmatpush1.msra.mxu0 %v6782
    %6809 = vmatprep.subr.mxu0 0.0
    %6810 = vmatpush1.msra.mxu0 %v6787
    %6811 = vmatprep.subr.mxu0 0.0
    %6812 = vmatpush1.msra.mxu0 0.0
    %6813 = vmatprep.subr.mxu0 0.0
    %6814 = vmatpush1.msra.mxu0 0.0
    %6815 = vmatprep.subr.mxu0 0.0
    %6816 = vmatpush1.msra.mxu0 0.0
    %6817 = vmatprep.subr.mxu0 0.0
    %6818 = vmatpush1.msra.mxu0 0.0
    %6819 = vmatprep.subr.mxu0 0.0
    %6820 = vmatpush1.msra.mxu0 0.0
    %6821 = vmatprep.subr.mxu0 0.0
    %6822 = vmatpush1.msra.mxu0 0.0
    %6823 = vmatprep.subr.mxu0 0.0
    %6824 = vmatpush1.msra.mxu0 0.0
    %6825 = vmatprep.subr.mxu0 0.0
    %6826 = vmatpush1.msra.mxu0 0.0
    %6827 = vmatprep.subr.mxu0 0.0
    %6828 = vmatpush1.msra.mxu0 0.0
    %6829 = vmatprep.subr.mxu0 0.0
    %6830 = vmatpush1.msra.mxu0 0.0
    %6831 = vmatprep.subr.mxu0 0.0
    %6832 = vmatpush1.msra.mxu0 0.0
    %6833 = vmatprep.subr.mxu0 0.0
    %6834 = vmatpush1.msra.mxu0 0.0
    %6835 = vmatprep.subr.mxu0 0.0
    %6836 = vmatpush1.msra.mxu0 0.0
    %6837 = vmatprep.subr.mxu0 0.0
    %6838 = vmatpush1.msra.mxu0 0.0
    %6839 = vmatprep.subr.mxu0 0.0
    %6840 = vmatpush1.msra.mxu0 0.0
    %6841 = vmatprep.subr.mxu0 0.0
    %6842 = vmatpush1.msra.mxu0 0.0
    %6843 = vmatprep.subr.mxu0 0.0
    %6844 = vmatpush1.msra.mxu0 0.0
    %6845 = vmatprep.subr.mxu0 0.0
    %6846 = vmatpush1.msra.mxu0 0.0
    %6847 = vmatprep.subr.mxu0 0.0
    %6848 = vmatpush1.msra.mxu0 0.0
    %6849 = vmatprep.subr.mxu0 0.0
    %6850 = vmatpush1.msra.mxu0 0.0
    %6851 = vmatprep.subr.mxu0 0.0
    %6852 = vmatpush1.msra.mxu0 0.0
    %6853 = vmatprep.subr.mxu0 0.0
    %6854 = vmatpush1.msra.mxu0 0.0
    %6855 = vmatprep.subr.mxu0 0.0
    %6856 = vmatpush1.msra.mxu0 0.0
    %6857 = vmatprep.subr.mxu0 0.0
    %6858 = vmatpush1.msra.mxu0 0.0
    %6859 = vmatprep.subr.mxu0 0.0
    %6860 = vmatpush1.msra.mxu0 0.0
    %6861 = vmatprep.subr.mxu0 0.0
    %6862 = vmatpush1.msra.mxu0 0.0
    %6863 = vmatprep.subr.mxu0 0.0
    %6864 = vmatpush1.msra.mxu0 0.0
    %6865 = vmatprep.subr.mxu0 0.0
    %6866 = vmatpush1.msra.mxu0 0.0
    %6867 = vmatprep.subr.mxu0 0.0
    %6868 = vmatpush1.msra.mxu0 0.0
    %6869 = vmatprep.subr.mxu0 0.0
    %6870 = vmatpush1.msra.mxu0 0.0
    %6871 = vmatprep.mubr.f32.mxu0 0.0
    %6872 = vmatmul.mubr.f32.gmra.mrb[0].mxu0 %v6796
    %v6873 = vpop.f32.mrb[0].mxu0
    %v6874 = vadd.f32 0.0, %v6873
    %v6875 = vpop.f32.mrb[0].mxu0
    %6876 = vmatprep.mubr.f32.mxu0 0.0
    %6877 = vmatmul.mubr.f32.gmra.mrb[0].mxu0 %v6799
    %v6878 = vpop.f32.mrb[0].mxu0
    %v6879 = vadd.f32 0.0, %v6878
    %v6880 = vpop.f32.mrb[0].mxu0
    %6881 = vmatprep.mubr.f32.mxu0 0.0
    %6882 = vmatmul.mubr.f32.gmra.mrb[0].mxu0 %v6802
    %v6883 = vpop.f32.mrb[0].mxu0
    %v6884 = vadd.f32 0.0, %v6883
    %v6885 = vpop.f32.mrb[0].mxu0
    %6886 = vmatprep.mubr.f32.mxu0 0.0
    %6887 = vmatmul.mubr.f32.gmra.mrb[0].mxu0 %v6805
    %v6888 = vpop.f32.mrb[0].mxu0
    %v6889 = vadd.f32 0.0, %v6888
    %v6890 = vpop.f32.mrb[0].mxu0
    %6891 = vdwg.mxu0
    %v6892 = vadd.f32 %v6694, %v6874
    %v6893 = vadd.f32 %v6695, %v6879
    %v6894 = vadd.f32 %v6696, %v6884
    %v6895 = vadd.f32 %v6697, %v6889
    %v6896 = vld [vmem:[#allocation10] sm:$0x1]
    %v6898 = vlaneseq
    %v6899 = vshrl.u32 %v6898, 7
    %v6900 = vsub.s32 0, %v6899
    %v6901 = vrot.slane %v6896, %v6900
    %v6903 = vadd.f32 %v6892, %v6901
    %v6904 = vadd.f32 %v6893, %v6901
    %v6905 = vadd.f32 %v6894, %v6901
    %v6906 = vadd.f32 %v6895, %v6901
    %v6907 = vmax.f32 %v6903, 0.0
    %v6908 = vmax.f32 %v6904, 0.0
    %v6909 = vmax.f32 %v6905, 0.0
    %v6910 = vmax.f32 %v6906, 0.0
    %v6911 = vld [vmem:[#allocation11] sm:$0xff]
    %v6912 = vld [vmem:[#allocation11 + $0x8] sm:$0xff]
    %v6913 = vld [vmem:[#allocation11 + $0x10] sm:$0xff]
    %v6914 = vld [vmem:[#allocation11 + $0x18] sm:$0xff]
    %v6915 = vld [vmem:[#allocation11 + $0x20] sm:$0xff]
    %v6916 = vld [vmem:[#allocation11 + $0x28] sm:$0xff]
    %v6917 = vld [vmem:[#allocation11 + $0x30] sm:$0xff]
    %v6918 = vld [vmem:[#allocation11 + $0x38] sm:$0xff]
    %v6919 = vld [vmem:[#allocation11 + $0x40] sm:$0xff]
    %v6920 = vld [vmem:[#allocation11 + $0x48] sm:$0xff]
    %v6921 = vld [vmem:[#allocation11 + $0x50] sm:$0xff]
    %v6922 = vld [vmem:[#allocation11 + $0x58] sm:$0xff]
    %v6923 = vld [vmem:[#allocation11 + $0x60] sm:$0xff]
    %v6924 = vld [vmem:[#allocation11 + $0x68] sm:$0xff]
    %v6925 = vld [vmem:[#allocation11 + $0x70] sm:$0xff]
    %v6926 = vld [vmem:[#allocation11 + $0x78] sm:$0xff]
    %6927 = vmatprep.subr.mxu0 0.0
    %6928 = vmatpush1.msra.mxu0 %v6911
    %6929 = vmatprep.subr.mxu0 0.0
    %6930 = vmatpush1.msra.mxu0 %v6912
    %6931 = vmatprep.subr.mxu0 0.0
    %6932 = vmatpush1.msra.mxu0 %v6913
    %6933 = vmatprep.subr.mxu0 0.0
    %6934 = vmatpush1.msra.mxu0 %v6914
    %6935 = vmatprep.subr.mxu0 0.0
    %6936 = vmatpush1.msra.mxu0 %v6915
    %6937 = vmatprep.subr.mxu0 0.0
    %6938 = vmatpush1.msra.mxu0 %v6916
    %6939 = vmatprep.subr.mxu0 0.0
    %6940 = vmatpush1.msra.mxu0 %v6917
    %6941 = vmatprep.subr.mxu0 0.0
    %6942 = vmatpush1.msra.mxu0 %v6918
    %6943 = vmatprep.subr.mxu0 0.0
    %6944 = vmatpush1.msra.mxu0 %v6919
    %6945 = vmatprep.subr.mxu0 0.0
    %6946 = vmatpush1.msra.mxu0 %v6920
    %6947 = vmatprep.subr.mxu0 0.0
    %6948 = vmatpush1.msra.mxu0 %v6921
    %6949 = vmatprep.subr.mxu0 0.0
    %6950 = vmatpush1.msra.mxu0 %v6922
    %6951 = vmatprep.subr.mxu0 0.0
    %6952 = vmatpush1.msra.mxu0 %v6923
    %6953 = vmatprep.subr.mxu0 0.0
    %6954 = vmatpush1.msra.mxu0 %v6924
    %6955 = vmatprep.subr.mxu0 0.0
    %6956 = vmatpush1.msra.mxu0 %v6925
    %6957 = vmatprep.subr.mxu0 0.0
    %6958 = vmatpush1.msra.mxu0 %v6926
    %6959 = vmatprep.subr.mxu0 0.0
    %6960 = vmatpush1.msra.mxu0 0.0
    %6961 = vmatprep.subr.mxu0 0.0
    %6962 = vmatpush1.msra.mxu0 0.0
    %6963 = vmatprep.subr.mxu0 0.0
    %6964 = vmatpush1.msra.mxu0 0.0
    %6965 = vmatprep.subr.mxu0 0.0
    %6966 = vmatpush1.msra.mxu0 0.0
    %6967 = vmatprep.subr.mxu0 0.0
    %6968 = vmatpush1.msra.mxu0 0.0
    %6969 = vmatprep.subr.mxu0 0.0
    %6970 = vmatpush1.msra.mxu0 0.0
    %6971 = vmatprep.subr.mxu0 0.0
    %6972 = vmatpush1.msra.mxu0 0.0
    %6973 = vmatprep.subr.mxu0 0.0
    %6974 = vmatpush1.msra.mxu0 0.0
    %6975 = vmatprep.subr.mxu0 0.0
    %6976 = vmatpush1.msra.mxu0 0.0
    %6977 = vmatprep.subr.mxu0 0.0
    %6978 = vmatpush1.msra.mxu0 0.0
    %6979 = vmatprep.subr.mxu0 0.0
    %6980 = vmatpush1.msra.mxu0 0.0
    %6981 = vmatprep.subr.mxu0 0.0
    %6982 = vmatpush1.msra.mxu0 0.0
    %6983 = vmatprep.subr.mxu0 0.0
    %6984 = vmatpush1.msra.mxu0 0.0
    %6985 = vmatprep.subr.mxu0 0.0
    %6986 = vmatpush1.msra.mxu0 0.0
    %6987 = vmatprep.subr.mxu0 0.0
    %6988 = vmatpush1.msra.mxu0 0.0
    %6989 = vmatprep.subr.mxu0 0.0
    %6990 = vmatpush1.msra.mxu0 0.0
    %6991 = vmatprep.mubr.f32.mxu0 0.0
    %6992 = vmatmul.mubr.f32.gmra.mrb[0].mxu0 %v6907
    %v6993 = vpop.f32.mrb[0].mxu0
    %v6994 = vadd.f32 0.0, %v6993
    %v6995 = vpop.f32.mrb[0].mxu0
    %6996 = vmatprep.mubr.f32.mxu0 0.0
    %6997 = vmatmul.mubr.f32.gmra.mrb[0].mxu0 %v6908
    %v6998 = vpop.f32.mrb[0].mxu0
    %v6999 = vadd.f32 0.0, %v6998
    %v7000 = vpop.f32.mrb[0].mxu0
    %7001 = vmatprep.mubr.f32.mxu0 0.0
    %7002 = vmatmul.mubr.f32.gmra.mrb[0].mxu0 %v6909
    %v7003 = vpop.f32.mrb[0].mxu0
    %v7004 = vadd.f32 0.0, %v7003
    %v7005 = vpop.f32.mrb[0].mxu0
    %7006 = vmatprep.mubr.f32.mxu0 0.0
    %7007 = vmatmul.mubr.f32.gmra.mrb[0].mxu0 %v6910
    %v7008 = vpop.f32.mrb[0].mxu0
    %v7009 = vadd.f32 0.0, %v7008
    %v7010 = vpop.f32.mrb[0].mxu0
    %7011 = vdwg.mxu0
    %v7012 = vld [vmem:[%s29] sm:$0xff]
    %v7013 = vld [vmem:[%s29 + $0x8] sm:$0xff]
    %v7014 = vld [vmem:[%s29 + $0x10] sm:$0xff]
    %v7015 = vld [vmem:[%s29 + $0x18] sm:$0xff]
    %v7016 = vld [vmem:[%s29 + $0x20] sm:$0xff]
    %v7017 = vld [vmem:[%s29 + $0x28] sm:$0xff]
    %v7018 = vld [vmem:[%s29 + $0x30] sm:$0xff]
    %v7019 = vld [vmem:[%s29 + $0x38] sm:$0xff]
    %s7020 = scalar_lea.vmem [#allocation11], 128
    %v7021 = vld [vmem:[%s7020] sm:$0xff]
    %v7022 = vld [vmem:[%s7020 + $0x8] sm:$0xff]
    %v7023 = vld [vmem:[%s7020 + $0x10] sm:$0xff]
    %v7024 = vld [vmem:[%s7020 + $0x18] sm:$0xff]
    %v7025 = vld [vmem:[%s7020 + $0x20] sm:$0xff]
    %v7026 = vld [vmem:[%s7020 + $0x28] sm:$0xff]
    %v7027 = vld [vmem:[%s7020 + $0x30] sm:$0xff]
    %v7028 = vld [vmem:[%s7020 + $0x38] sm:$0xff]
    %v7029 = vld [vmem:[%s7020 + $0x40] sm:$0xff]
    %v7030 = vld [vmem:[%s7020 + $0x48] sm:$0xff]
    %v7031 = vld [vmem:[%s7020 + $0x50] sm:$0xff]
    %v7032 = vld [vmem:[%s7020 + $0x58] sm:$0xff]
    %v7033 = vld [vmem:[%s7020 + $0x60] sm:$0xff]
    %v7034 = vld [vmem:[%s7020 + $0x68] sm:$0xff]
    %v7035 = vld [vmem:[%s7020 + $0x70] sm:$0xff]
    %v7036 = vld [vmem:[%s7020 + $0x78] sm:$0xff]
    %7037 = vmatprep.subr.mxu0 0.0
    %7038 = vmatpush1.msra.mxu0 %v7021
    %7039 = vmatprep.subr.mxu0 0.0
    %7040 = vmatpush1.msra.mxu0 %v7022
    %7041 = vmatprep.subr.mxu0 0.0
    %7042 = vmatpush1.msra.mxu0 %v7023
    %7043 = vmatprep.subr.mxu0 0.0
    %7044 = vmatpush1.msra.mxu0 %v7024
    %7045 = vmatprep.subr.mxu0 0.0
    %7046 = vmatpush1.msra.mxu0 %v7025
    %7047 = vmatprep.subr.mxu0 0.0
    %7048 = vmatpush1.msra.mxu0 %v7026
    %7049 = vmatprep.subr.mxu0 0.0
    %7050 = vmatpush1.msra.mxu0 %v7027
    %7051 = vmatprep.subr.mxu0 0.0
    %7052 = vmatpush1.msra.mxu0 %v7028
    %7053 = vmatprep.subr.mxu0 0.0
    %7054 = vmatpush1.msra.mxu0 %v7029
    %7055 = vmatprep.subr.mxu0 0.0
    %7056 = vmatpush1.msra.mxu0 %v7030
    %7057 = vmatprep.subr.mxu0 0.0
    %7058 = vmatpush1.msra.mxu0 %v7031
    %7059 = vmatprep.subr.mxu0 0.0
    %7060 = vmatpush1.msra.mxu0 %v7032
    %7061 = vmatprep.subr.mxu0 0.0
    %7062 = vmatpush1.msra.mxu0 %v7033
    %7063 = vmatprep.subr.mxu0 0.0
    %7064 = vmatpush1.msra.mxu0 %v7034
    %7065 = vmatprep.subr.mxu0 0.0
    %7066 = vmatpush1.msra.mxu0 %v7035
    %7067 = vmatprep.subr.mxu0 0.0
    %7068 = vmatpush1.msra.mxu0 %v7036
    %7069 = vmatprep.subr.mxu0 0.0
    %7070 = vmatpush1.msra.mxu0 0.0
    %7071 = vmatprep.subr.mxu0 0.0
    %7072 = vmatpush1.msra.mxu0 0.0
    %7073 = vmatprep.subr.mxu0 0.0
    %7074 = vmatpush1.msra.mxu0 0.0
    %7075 = vmatprep.subr.mxu0 0.0
    %7076 = vmatpush1.msra.mxu0 0.0
    %7077 = vmatprep.subr.mxu0 0.0
    %7078 = vmatpush1.msra.mxu0 0.0
    %7079 = vmatprep.subr.mxu0 0.0
    %7080 = vmatpush1.msra.mxu0 0.0
    %7081 = vmatprep.subr.mxu0 0.0
    %7082 = vmatpush1.msra.mxu0 0.0
    %7083 = vmatprep.subr.mxu0 0.0
    %7084 = vmatpush1.msra.mxu0 0.0
    %7085 = vmatprep.subr.mxu0 0.0
    %7086 = vmatpush1.msra.mxu0 0.0
    %7087 = vmatprep.subr.mxu0 0.0
    %7088 = vmatpush1.msra.mxu0 0.0
    %7089 = vmatprep.subr.mxu0 0.0
    %7090 = vmatpush1.msra.mxu0 0.0
    %7091 = vmatprep.subr.mxu0 0.0
    %7092 = vmatpush1.msra.mxu0 0.0
    %7093 = vmatprep.subr.mxu0 0.0
    %7094 = vmatpush1.msra.mxu0 0.0
    %7095 = vmatprep.subr.mxu0 0.0
    %7096 = vmatpush1.msra.mxu0 0.0
    %7097 = vmatprep.subr.mxu0 0.0
    %7098 = vmatpush1.msra.mxu0 0.0
    %7099 = vmatprep.subr.mxu0 0.0
    %7100 = vmatpush1.msra.mxu0 0.0
    %7101 = vmatprep.mubr.f32.mxu0 0.0
    %7102 = vmatmul.mubr.f32.gmra.mrb[0].mxu0 %v6907
    %v7103 = vpop.f32.mrb[0].mxu0
    %v7104 = vadd.f32 0.0, %v7103
    %v7105 = vpop.f32.mrb[0].mxu0
    %7106 = vmatprep.mubr.f32.mxu0 0.0
    %7107 = vmatmul.mubr.f32.gmra.mrb[0].mxu0 %v6908
    %v7108 = vpop.f32.mrb[0].mxu0
    %v7109 = vadd.f32 0.0, %v7108
    %v7110 = vpop.f32.mrb[0].mxu0
    %7111 = vmatprep.mubr.f32.mxu0 0.0
    %7112 = vmatmul.mubr.f32.gmra.mrb[0].mxu0 %v6909
    %v7113 = vpop.f32.mrb[0].mxu0
    %v7114 = vadd.f32 0.0, %v7113
    %v7115 = vpop.f32.mrb[0].mxu0
    %7116 = vmatprep.mubr.f32.mxu0 0.0
    %7117 = vmatmul.mubr.f32.gmra.mrb[0].mxu0 %v6910
    %v7118 = vpop.f32.mrb[0].mxu0
    %v7119 = vadd.f32 0.0, %v7118
    %v7120 = vpop.f32.mrb[0].mxu0
    %7121 = vdwg.mxu0
    %s7122 = scalar_lea.vmem %s29, 64
    %v7123 = vld [vmem:[%s7122] sm:$0xff]
    %v7124 = vld [vmem:[%s7122 + $0x8] sm:$0xff]
    %v7125 = vld [vmem:[%s7122 + $0x10] sm:$0xff]
    %v7126 = vld [vmem:[%s7122 + $0x18] sm:$0xff]
    %v7127 = vld [vmem:[%s7122 + $0x20] sm:$0xff]
    %v7128 = vld [vmem:[%s7122 + $0x28] sm:$0xff]
    %v7129 = vld [vmem:[%s7122 + $0x30] sm:$0xff]
    %v7130 = vld [vmem:[%s7122 + $0x38] sm:$0xff]
    %v7132 = vsel %vm1868, %v7123, 0
    %v7135 = vsel %vm1868, %v7124, 0
    %v7138 = vsel %vm1868, %v7125, 0
    %v7141 = vsel %vm1868, %v7126, 0
    %v7144 = vsel %vm1868, %v7127, 0
    %v7147 = vsel %vm1868, %v7128, 0
    %v7150 = vsel %vm1868, %v7129, 0
    %v7153 = vsel %vm1868, %v7130, 0
    %7155 = vmatprep.subr.mxu0 0.0
    %7156 = vmatpush1.msra.mxu0 %v7104
    %7157 = vmatprep.subr.mxu0 0.0
    %7158 = vmatpush1.msra.mxu0 %v7109
    %7159 = vmatprep.subr.mxu0 0.0
    %7160 = vmatpush1.msra.mxu0 %v7114
    %7161 = vmatprep.subr.mxu0 0.0
    %7162 = vmatpush1.msra.mxu0 %v7119
    %7163 = vmatprep.subr.mxu0 0.0
    %7164 = vmatpush1.msra.mxu0 0.0
    %7165 = vmatprep.subr.mxu0 0.0
    %7166 = vmatpush1.msra.mxu0 0.0
    %7167 = vmatprep.subr.mxu0 0.0
    %7168 = vmatpush1.msra.mxu0 0.0
    %7169 = vmatprep.subr.mxu0 0.0
    %7170 = vmatpush1.msra.mxu0 0.0
    %7171 = vmatprep.subr.mxu0 0.0
    %7172 = vmatpush1.msra.mxu0 0.0
    %7173 = vmatprep.subr.mxu0 0.0
    %7174 = vmatpush1.msra.mxu0 0.0
    %7175 = vmatprep.subr.mxu0 0.0
    %7176 = vmatpush1.msra.mxu0 0.0
    %7177 = vmatprep.subr.mxu0 0.0
    %7178 = vmatpush1.msra.mxu0 0.0
    %7179 = vmatprep.subr.mxu0 0.0
    %7180 = vmatpush1.msra.mxu0 0.0
    %7181 = vmatprep.subr.mxu0 0.0
    %7182 = vmatpush1.msra.mxu0 0.0
    %7183 = vmatprep.subr.mxu0 0.0
    %7184 = vmatpush1.msra.mxu0 0.0
    %7185 = vmatprep.subr.mxu0 0.0
    %7186 = vmatpush1.msra.mxu0 0.0
    %7187 = vmatprep.subr.mxu0 0.0
    %7188 = vmatpush1.msra.mxu0 0.0
    %7189 = vmatprep.subr.mxu0 0.0
    %7190 = vmatpush1.msra.mxu0 0.0
    %7191 = vmatprep.subr.mxu0 0.0
    %7192 = vmatpush1.msra.mxu0 0.0
    %7193 = vmatprep.subr.mxu0 0.0
    %7194 = vmatpush1.msra.mxu0 0.0
    %7195 = vmatprep.subr.mxu0 0.0
    %7196 = vmatpush1.msra.mxu0 0.0
    %7197 = vmatprep.subr.mxu0 0.0
    %7198 = vmatpush1.msra.mxu0 0.0
    %7199 = vmatprep.subr.mxu0 0.0
    %7200 = vmatpush1.msra.mxu0 0.0
    %7201 = vmatprep.subr.mxu0 0.0
    %7202 = vmatpush1.msra.mxu0 0.0
    %7203 = vmatprep.subr.mxu0 0.0
    %7204 = vmatpush1.msra.mxu0 0.0
    %7205 = vmatprep.subr.mxu0 0.0
    %7206 = vmatpush1.msra.mxu0 0.0
    %7207 = vmatprep.subr.mxu0 0.0
    %7208 = vmatpush1.msra.mxu0 0.0
    %7209 = vmatprep.subr.mxu0 0.0
    %7210 = vmatpush1.msra.mxu0 0.0
    %7211 = vmatprep.subr.mxu0 0.0
    %7212 = vmatpush1.msra.mxu0 0.0
    %7213 = vmatprep.subr.mxu0 0.0
    %7214 = vmatpush1.msra.mxu0 0.0
    %7215 = vmatprep.subr.mxu0 0.0
    %7216 = vmatpush1.msra.mxu0 0.0
    %7217 = vmatprep.subr.mxu0 0.0
    %7218 = vmatpush1.msra.mxu0 0.0
    %7219 = vmatprep.mubr.f32.mxu0 0.0
    %7220 = vmatmul.mubr.f32.gmra.mrb[0].mxu0 %v7132
    %v7221 = vpop.f32.mrb[0].mxu0
    %v7222 = vadd.f32 0.0, %v7221
    %v7223 = vpop.f32.mrb[0].mxu0
    %7224 = vmatprep.mubr.f32.mxu0 0.0
    %7225 = vmatmul.mubr.f32.gmra.mrb[0].mxu0 %v7135
    %v7226 = vpop.f32.mrb[0].mxu0
    %v7227 = vadd.f32 0.0, %v7226
    %v7228 = vpop.f32.mrb[0].mxu0
    %7229 = vmatprep.mubr.f32.mxu0 0.0
    %7230 = vmatmul.mubr.f32.gmra.mrb[0].mxu0 %v7138
    %v7231 = vpop.f32.mrb[0].mxu0
    %v7232 = vadd.f32 0.0, %v7231
    %v7233 = vpop.f32.mrb[0].mxu0
    %7234 = vmatprep.mubr.f32.mxu0 0.0
    %7235 = vmatmul.mubr.f32.gmra.mrb[0].mxu0 %v7141
    %v7236 = vpop.f32.mrb[0].mxu0
    %v7237 = vadd.f32 0.0, %v7236
    %v7238 = vpop.f32.mrb[0].mxu0
    %7239 = vmatprep.mubr.f32.mxu0 0.0
    %7240 = vmatmul.mubr.f32.gmra.mrb[0].mxu0 %v7144
    %v7241 = vpop.f32.mrb[0].mxu0
    %v7242 = vadd.f32 0.0, %v7241
    %v7243 = vpop.f32.mrb[0].mxu0
    %7244 = vmatprep.mubr.f32.mxu0 0.0
    %7245 = vmatmul.mubr.f32.gmra.mrb[0].mxu0 %v7147
    %v7246 = vpop.f32.mrb[0].mxu0
    %v7247 = vadd.f32 0.0, %v7246
    %v7248 = vpop.f32.mrb[0].mxu0
    %7249 = vmatprep.mubr.f32.mxu0 0.0
    %7250 = vmatmul.mubr.f32.gmra.mrb[0].mxu0 %v7150
    %v7251 = vpop.f32.mrb[0].mxu0
    %v7252 = vadd.f32 0.0, %v7251
    %v7253 = vpop.f32.mrb[0].mxu0
    %7254 = vmatprep.mubr.f32.mxu0 0.0
    %7255 = vmatmul.mubr.f32.gmra.mrb[0].mxu0 %v7153
    %v7256 = vpop.f32.mrb[0].mxu0
    %v7257 = vadd.f32 0.0, %v7256
    %v7258 = vpop.f32.mrb[0].mxu0
    %7259 = vdwg.mxu0
    %v7261 = vsel %vm1868, %v7012, 0
    %v7264 = vsel %vm1868, %v7013, 0
    %v7267 = vsel %vm1868, %v7014, 0
    %v7270 = vsel %vm1868, %v7015, 0
    %v7273 = vsel %vm1868, %v7016, 0
    %v7276 = vsel %vm1868, %v7017, 0
    %v7279 = vsel %vm1868, %v7018, 0
    %v7282 = vsel %vm1868, %v7019, 0
    %7284 = vmatprep.subr.mxu0 0.0
    %7285 = vmatpush1.msra.mxu0 %v6994
    %7286 = vmatprep.subr.mxu0 0.0
    %7287 = vmatpush1.msra.mxu0 %v6999
    %7288 = vmatprep.subr.mxu0 0.0
    %7289 = vmatpush1.msra.mxu0 %v7004
    %7290 = vmatprep.subr.mxu0 0.0
    %7291 = vmatpush1.msra.mxu0 %v7009
    %7292 = vmatprep.subr.mxu0 0.0
    %7293 = vmatpush1.msra.mxu0 0.0
    %7294 = vmatprep.subr.mxu0 0.0
    %7295 = vmatpush1.msra.mxu0 0.0
    %7296 = vmatprep.subr.mxu0 0.0
    %7297 = vmatpush1.msra.mxu0 0.0
    %7298 = vmatprep.subr.mxu0 0.0
    %7299 = vmatpush1.msra.mxu0 0.0
    %7300 = vmatprep.subr.mxu0 0.0
    %7301 = vmatpush1.msra.mxu0 0.0
    %7302 = vmatprep.subr.mxu0 0.0
    %7303 = vmatpush1.msra.mxu0 0.0
    %7304 = vmatprep.subr.mxu0 0.0
    %7305 = vmatpush1.msra.mxu0 0.0
    %7306 = vmatprep.subr.mxu0 0.0
    %7307 = vmatpush1.msra.mxu0 0.0
    %7308 = vmatprep.subr.mxu0 0.0
    %7309 = vmatpush1.msra.mxu0 0.0
    %7310 = vmatprep.subr.mxu0 0.0
    %7311 = vmatpush1.msra.mxu0 0.0
    %7312 = vmatprep.subr.mxu0 0.0
    %7313 = vmatpush1.msra.mxu0 0.0
    %7314 = vmatprep.subr.mxu0 0.0
    %7315 = vmatpush1.msra.mxu0 0.0
    %7316 = vmatprep.subr.mxu0 0.0
    %7317 = vmatpush1.msra.mxu0 0.0
    %7318 = vmatprep.subr.mxu0 0.0
    %7319 = vmatpush1.msra.mxu0 0.0
    %7320 = vmatprep.subr.mxu0 0.0
    %7321 = vmatpush1.msra.mxu0 0.0
    %7322 = vmatprep.subr.mxu0 0.0
    %7323 = vmatpush1.msra.mxu0 0.0
    %7324 = vmatprep.subr.mxu0 0.0
    %7325 = vmatpush1.msra.mxu0 0.0
    %7326 = vmatprep.subr.mxu0 0.0
    %7327 = vmatpush1.msra.mxu0 0.0
    %7328 = vmatprep.subr.mxu0 0.0
    %7329 = vmatpush1.msra.mxu0 0.0
    %7330 = vmatprep.subr.mxu0 0.0
    %7331 = vmatpush1.msra.mxu0 0.0
    %7332 = vmatprep.subr.mxu0 0.0
    %7333 = vmatpush1.msra.mxu0 0.0
    %7334 = vmatprep.subr.mxu0 0.0
    %7335 = vmatpush1.msra.mxu0 0.0
    %7336 = vmatprep.subr.mxu0 0.0
    %7337 = vmatpush1.msra.mxu0 0.0
    %7338 = vmatprep.subr.mxu0 0.0
    %7339 = vmatpush1.msra.mxu0 0.0
    %7340 = vmatprep.subr.mxu0 0.0
    %7341 = vmatpush1.msra.mxu0 0.0
    %7342 = vmatprep.subr.mxu0 0.0
    %7343 = vmatpush1.msra.mxu0 0.0
    %7344 = vmatprep.subr.mxu0 0.0
    %7345 = vmatpush1.msra.mxu0 0.0
    %7346 = vmatprep.subr.mxu0 0.0
    %7347 = vmatpush1.msra.mxu0 0.0
    %7348 = vmatprep.mubr.f32.mxu0 0.0
    %7349 = vmatmul.mubr.f32.gmra.mrb[0].mxu0 %v7261
    %v7350 = vpop.f32.mrb[0].mxu0
    %v7351 = vadd.f32 %v7222, %v7350
    %v7352 = vpop.f32.mrb[0].mxu0
    %7353 = vmatprep.mubr.f32.mxu0 0.0
    %7354 = vmatmul.mubr.f32.gmra.mrb[0].mxu0 %v7264
    %v7355 = vpop.f32.mrb[0].mxu0
    %v7356 = vadd.f32 %v7227, %v7355
    %v7357 = vpop.f32.mrb[0].mxu0
    %7358 = vmatprep.mubr.f32.mxu0 0.0
    %7359 = vmatmul.mubr.f32.gmra.mrb[0].mxu0 %v7267
    %v7360 = vpop.f32.mrb[0].mxu0
    %v7361 = vadd.f32 %v7232, %v7360
    %v7362 = vpop.f32.mrb[0].mxu0
    %7363 = vmatprep.mubr.f32.mxu0 0.0
    %7364 = vmatmul.mubr.f32.gmra.mrb[0].mxu0 %v7270
    %v7365 = vpop.f32.mrb[0].mxu0
    %v7366 = vadd.f32 %v7237, %v7365
    %v7367 = vpop.f32.mrb[0].mxu0
    %7368 = vmatprep.mubr.f32.mxu0 0.0
    %7369 = vmatmul.mubr.f32.gmra.mrb[0].mxu0 %v7273
    %v7370 = vpop.f32.mrb[0].mxu0
    %v7371 = vadd.f32 %v7242, %v7370
    %v7372 = vpop.f32.mrb[0].mxu0
    %7373 = vmatprep.mubr.f32.mxu0 0.0
    %7374 = vmatmul.mubr.f32.gmra.mrb[0].mxu0 %v7276
    %v7375 = vpop.f32.mrb[0].mxu0
    %v7376 = vadd.f32 %v7247, %v7375
    %v7377 = vpop.f32.mrb[0].mxu0
    %7378 = vmatprep.mubr.f32.mxu0 0.0
    %7379 = vmatmul.mubr.f32.gmra.mrb[0].mxu0 %v7279
    %v7380 = vpop.f32.mrb[0].mxu0
    %v7381 = vadd.f32 %v7252, %v7380
    %v7382 = vpop.f32.mrb[0].mxu0
    %7383 = vmatprep.mubr.f32.mxu0 0.0
    %7384 = vmatmul.mubr.f32.gmra.mrb[0].mxu0 %v7282
    %v7385 = vpop.f32.mrb[0].mxu0
    %v7386 = vadd.f32 %v7257, %v7385
    %v7387 = vpop.f32.mrb[0].mxu0
    %7388 = vdwg.mxu0
    %s7389 = scalar_lea.vmem [#allocation11], 256
    %v7390 = vld [vmem:[%s7389] sm:$0xff]
    %v7391 = vld [vmem:[%s7389 + $0x8] sm:$0xff]
    %v7392 = vld [vmem:[%s7389 + $0x10] sm:$0xff]
    %v7393 = vld [vmem:[%s7389 + $0x18] sm:$0xff]
    %v7394 = vld [vmem:[%s7389 + $0x20] sm:$0xff]
    %v7395 = vld [vmem:[%s7389 + $0x28] sm:$0xff]
    %v7396 = vld [vmem:[%s7389 + $0x30] sm:$0xff]
    %v7397 = vld [vmem:[%s7389 + $0x38] sm:$0xff]
    %v7398 = vld [vmem:[%s7389 + $0x40] sm:$0xff]
    %v7399 = vld [vmem:[%s7389 + $0x48] sm:$0xff]
    %v7400 = vld [vmem:[%s7389 + $0x50] sm:$0xff]
    %v7401 = vld [vmem:[%s7389 + $0x58] sm:$0xff]
    %v7402 = vld [vmem:[%s7389 + $0x60] sm:$0xff]
    %v7403 = vld [vmem:[%s7389 + $0x68] sm:$0xff]
    %v7404 = vld [vmem:[%s7389 + $0x70] sm:$0xff]
    %v7405 = vld [vmem:[%s7389 + $0x78] sm:$0xff]
    %7406 = vmatprep.subr.mxu0 0.0
    %7407 = vmatpush1.msra.mxu0 %v7390
    %7408 = vmatprep.subr.mxu0 0.0
    %7409 = vmatpush1.msra.mxu0 %v7391
    %7410 = vmatprep.subr.mxu0 0.0
    %7411 = vmatpush1.msra.mxu0 %v7392
    %7412 = vmatprep.subr.mxu0 0.0
    %7413 = vmatpush1.msra.mxu0 %v7393
    %7414 = vmatprep.subr.mxu0 0.0
    %7415 = vmatpush1.msra.mxu0 %v7394
    %7416 = vmatprep.subr.mxu0 0.0
    %7417 = vmatpush1.msra.mxu0 %v7395
    %7418 = vmatprep.subr.mxu0 0.0
    %7419 = vmatpush1.msra.mxu0 %v7396
    %7420 = vmatprep.subr.mxu0 0.0
    %7421 = vmatpush1.msra.mxu0 %v7397
    %7422 = vmatprep.subr.mxu0 0.0
    %7423 = vmatpush1.msra.mxu0 %v7398
    %7424 = vmatprep.subr.mxu0 0.0
    %7425 = vmatpush1.msra.mxu0 %v7399
    %7426 = vmatprep.subr.mxu0 0.0
    %7427 = vmatpush1.msra.mxu0 %v7400
    %7428 = vmatprep.subr.mxu0 0.0
    %7429 = vmatpush1.msra.mxu0 %v7401
    %7430 = vmatprep.subr.mxu0 0.0
    %7431 = vmatpush1.msra.mxu0 %v7402
    %7432 = vmatprep.subr.mxu0 0.0
    %7433 = vmatpush1.msra.mxu0 %v7403
    %7434 = vmatprep.subr.mxu0 0.0
    %7435 = vmatpush1.msra.mxu0 %v7404
    %7436 = vmatprep.subr.mxu0 0.0
    %7437 = vmatpush1.msra.mxu0 %v7405
    %7438 = vmatprep.subr.mxu0 0.0
    %7439 = vmatpush1.msra.mxu0 0.0
    %7440 = vmatprep.subr.mxu0 0.0
    %7441 = vmatpush1.msra.mxu0 0.0
    %7442 = vmatprep.subr.mxu0 0.0
    %7443 = vmatpush1.msra.mxu0 0.0
    %7444 = vmatprep.subr.mxu0 0.0
    %7445 = vmatpush1.msra.mxu0 0.0
    %7446 = vmatprep.subr.mxu0 0.0
    %7447 = vmatpush1.msra.mxu0 0.0
    %7448 = vmatprep.subr.mxu0 0.0
    %7449 = vmatpush1.msra.mxu0 0.0
    %7450 = vmatprep.subr.mxu0 0.0
    %7451 = vmatpush1.msra.mxu0 0.0
    %7452 = vmatprep.subr.mxu0 0.0
    %7453 = vmatpush1.msra.mxu0 0.0
    %7454 = vmatprep.subr.mxu0 0.0
    %7455 = vmatpush1.msra.mxu0 0.0
    %7456 = vmatprep.subr.mxu0 0.0
    %7457 = vmatpush1.msra.mxu0 0.0
    %7458 = vmatprep.subr.mxu0 0.0
    %7459 = vmatpush1.msra.mxu0 0.0
    %7460 = vmatprep.subr.mxu0 0.0
    %7461 = vmatpush1.msra.mxu0 0.0
    %7462 = vmatprep.subr.mxu0 0.0
    %7463 = vmatpush1.msra.mxu0 0.0
    %7464 = vmatprep.subr.mxu0 0.0
    %7465 = vmatpush1.msra.mxu0 0.0
    %7466 = vmatprep.subr.mxu0 0.0
    %7467 = vmatpush1.msra.mxu0 0.0
    %7468 = vmatprep.subr.mxu0 0.0
    %7469 = vmatpush1.msra.mxu0 0.0
    %7470 = vmatprep.mubr.f32.mxu0 0.0
    %7471 = vmatmul.mubr.f32.gmra.mrb[0].mxu0 %v6907
    %v7472 = vpop.f32.mrb[0].mxu0
    %v7473 = vadd.f32 0.0, %v7472
    %v7474 = vpop.f32.mrb[0].mxu0
    %7475 = vmatprep.mubr.f32.mxu0 0.0
    %7476 = vmatmul.mubr.f32.gmra.mrb[0].mxu0 %v6908
    %v7477 = vpop.f32.mrb[0].mxu0
    %v7478 = vadd.f32 0.0, %v7477
    %v7479 = vpop.f32.mrb[0].mxu0
    %7480 = vmatprep.mubr.f32.mxu0 0.0
    %7481 = vmatmul.mubr.f32.gmra.mrb[0].mxu0 %v6909
    %v7482 = vpop.f32.mrb[0].mxu0
    %v7483 = vadd.f32 0.0, %v7482
    %v7484 = vpop.f32.mrb[0].mxu0
    %7485 = vmatprep.mubr.f32.mxu0 0.0
    %7486 = vmatmul.mubr.f32.gmra.mrb[0].mxu0 %v6910
    %v7487 = vpop.f32.mrb[0].mxu0
    %v7488 = vadd.f32 0.0, %v7487
    %v7489 = vpop.f32.mrb[0].mxu0
    %7490 = vdwg.mxu0
    %s7491 = scalar_lea.vmem %s29, 128
    %v7492 = vld [vmem:[%s7491] sm:$0xff]
    %v7493 = vld [vmem:[%s7491 + $0x8] sm:$0xff]
    %v7494 = vld [vmem:[%s7491 + $0x10] sm:$0xff]
    %v7495 = vld [vmem:[%s7491 + $0x18] sm:$0xff]
    %v7496 = vld [vmem:[%s7491 + $0x20] sm:$0xff]
    %v7497 = vld [vmem:[%s7491 + $0x28] sm:$0xff]
    %v7498 = vld [vmem:[%s7491 + $0x30] sm:$0xff]
    %v7499 = vld [vmem:[%s7491 + $0x38] sm:$0xff]
    %v7501 = vsel %vm1868, %v7492, 0
    %v7504 = vsel %vm1868, %v7493, 0
    %v7507 = vsel %vm1868, %v7494, 0
    %v7510 = vsel %vm1868, %v7495, 0
    %v7513 = vsel %vm1868, %v7496, 0
    %v7516 = vsel %vm1868, %v7497, 0
    %v7519 = vsel %vm1868, %v7498, 0
    %v7522 = vsel %vm1868, %v7499, 0
    %7524 = vmatprep.subr.mxu0 0.0
    %7525 = vmatpush1.msra.mxu0 %v7473
    %7526 = vmatprep.subr.mxu0 0.0
    %7527 = vmatpush1.msra.mxu0 %v7478
    %7528 = vmatprep.subr.mxu0 0.0
    %7529 = vmatpush1.msra.mxu0 %v7483
    %7530 = vmatprep.subr.mxu0 0.0
    %7531 = vmatpush1.msra.mxu0 %v7488
    %7532 = vmatprep.subr.mxu0 0.0
    %7533 = vmatpush1.msra.mxu0 0.0
    %7534 = vmatprep.subr.mxu0 0.0
    %7535 = vmatpush1.msra.mxu0 0.0
    %7536 = vmatprep.subr.mxu0 0.0
    %7537 = vmatpush1.msra.mxu0 0.0
    %7538 = vmatprep.subr.mxu0 0.0
    %7539 = vmatpush1.msra.mxu0 0.0
    %7540 = vmatprep.subr.mxu0 0.0
    %7541 = vmatpush1.msra.mxu0 0.0
    %7542 = vmatprep.subr.mxu0 0.0
    %7543 = vmatpush1.msra.mxu0 0.0
    %7544 = vmatprep.subr.mxu0 0.0
    %7545 = vmatpush1.msra.mxu0 0.0
    %7546 = vmatprep.subr.mxu0 0.0
    %7547 = vmatpush1.msra.mxu0 0.0
    %7548 = vmatprep.subr.mxu0 0.0
    %7549 = vmatpush1.msra.mxu0 0.0
    %7550 = vmatprep.subr.mxu0 0.0
    %7551 = vmatpush1.msra.mxu0 0.0
    %7552 = vmatprep.subr.mxu0 0.0
    %7553 = vmatpush1.msra.mxu0 0.0
    %7554 = vmatprep.subr.mxu0 0.0
    %7555 = vmatpush1.msra.mxu0 0.0
    %7556 = vmatprep.subr.mxu0 0.0
    %7557 = vmatpush1.msra.mxu0 0.0
    %7558 = vmatprep.subr.mxu0 0.0
    %7559 = vmatpush1.msra.mxu0 0.0
    %7560 = vmatprep.subr.mxu0 0.0
    %7561 = vmatpush1.msra.mxu0 0.0
    %7562 = vmatprep.subr.mxu0 0.0
    %7563 = vmatpush1.msra.mxu0 0.0
    %7564 = vmatprep.subr.mxu0 0.0
    %7565 = vmatpush1.msra.mxu0 0.0
    %7566 = vmatprep.subr.mxu0 0.0
    %7567 = vmatpush1.msra.mxu0 0.0
    %7568 = vmatprep.subr.mxu0 0.0
    %7569 = vmatpush1.msra.mxu0 0.0
    %7570 = vmatprep.subr.mxu0 0.0
    %7571 = vmatpush1.msra.mxu0 0.0
    %7572 = vmatprep.subr.mxu0 0.0
    %7573 = vmatpush1.msra.mxu0 0.0
    %7574 = vmatprep.subr.mxu0 0.0
    %7575 = vmatpush1.msra.mxu0 0.0
    %7576 = vmatprep.subr.mxu0 0.0
    %7577 = vmatpush1.msra.mxu0 0.0
    %7578 = vmatprep.subr.mxu0 0.0
    %7579 = vmatpush1.msra.mxu0 0.0
    %7580 = vmatprep.subr.mxu0 0.0
    %7581 = vmatpush1.msra.mxu0 0.0
    %7582 = vmatprep.subr.mxu0 0.0
    %7583 = vmatpush1.msra.mxu0 0.0
    %7584 = vmatprep.subr.mxu0 0.0
    %7585 = vmatpush1.msra.mxu0 0.0
    %7586 = vmatprep.subr.mxu0 0.0
    %7587 = vmatpush1.msra.mxu0 0.0
    %7588 = vmatprep.mubr.f32.mxu0 0.0
    %7589 = vmatmul.mubr.f32.gmra.mrb[0].mxu0 %v7501
    %v7590 = vpop.f32.mrb[0].mxu0
    %v7591 = vadd.f32 0.0, %v7590
    %v7592 = vpop.f32.mrb[0].mxu0
    %7593 = vmatprep.mubr.f32.mxu0 0.0
    %7594 = vmatmul.mubr.f32.gmra.mrb[0].mxu0 %v7504
    %v7595 = vpop.f32.mrb[0].mxu0
    %v7596 = vadd.f32 0.0, %v7595
    %v7597 = vpop.f32.mrb[0].mxu0
    %7598 = vmatprep.mubr.f32.mxu0 0.0
    %7599 = vmatmul.mubr.f32.gmra.mrb[0].mxu0 %v7507
    %v7600 = vpop.f32.mrb[0].mxu0
    %v7601 = vadd.f32 0.0, %v7600
    %v7602 = vpop.f32.mrb[0].mxu0
    %7603 = vmatprep.mubr.f32.mxu0 0.0
    %7604 = vmatmul.mubr.f32.gmra.mrb[0].mxu0 %v7510
    %v7605 = vpop.f32.mrb[0].mxu0
    %v7606 = vadd.f32 0.0, %v7605
    %v7607 = vpop.f32.mrb[0].mxu0
    %7608 = vmatprep.mubr.f32.mxu0 0.0
    %7609 = vmatmul.mubr.f32.gmra.mrb[0].mxu0 %v7513
    %v7610 = vpop.f32.mrb[0].mxu0
    %v7611 = vadd.f32 0.0, %v7610
    %v7612 = vpop.f32.mrb[0].mxu0
    %7613 = vmatprep.mubr.f32.mxu0 0.0
    %7614 = vmatmul.mubr.f32.gmra.mrb[0].mxu0 %v7516
    %v7615 = vpop.f32.mrb[0].mxu0
    %v7616 = vadd.f32 0.0, %v7615
    %v7617 = vpop.f32.mrb[0].mxu0
    %7618 = vmatprep.mubr.f32.mxu0 0.0
    %7619 = vmatmul.mubr.f32.gmra.mrb[0].mxu0 %v7519
    %v7620 = vpop.f32.mrb[0].mxu0
    %v7621 = vadd.f32 0.0, %v7620
    %v7622 = vpop.f32.mrb[0].mxu0
    %7623 = vmatprep.mubr.f32.mxu0 0.0
    %7624 = vmatmul.mubr.f32.gmra.mrb[0].mxu0 %v7522
    %v7625 = vpop.f32.mrb[0].mxu0
    %v7626 = vadd.f32 0.0, %v7625
    %v7627 = vpop.f32.mrb[0].mxu0
    %7628 = vdwg.mxu0
    %v7629 = vadd.f32 %v7351, %v7591
    %v7630 = vadd.f32 %v7356, %v7596
    %v7631 = vadd.f32 %v7361, %v7601
    %v7632 = vadd.f32 %v7366, %v7606
    %v7633 = vadd.f32 %v7371, %v7611
    %v7634 = vadd.f32 %v7376, %v7616
    %v7635 = vadd.f32 %v7381, %v7621
    %v7636 = vadd.f32 %v7386, %v7626
    %s7637 = scalar_lea.vmem [#allocation11], 384
    %v7638 = vld [vmem:[%s7637] sm:$0xff]
    %v7639 = vld [vmem:[%s7637 + $0x8] sm:$0xff]
    %v7640 = vld [vmem:[%s7637 + $0x10] sm:$0xff]
    %v7641 = vld [vmem:[%s7637 + $0x18] sm:$0xff]
    %v7642 = vld [vmem:[%s7637 + $0x20] sm:$0xff]
    %v7643 = vld [vmem:[%s7637 + $0x28] sm:$0xff]
    %v7644 = vld [vmem:[%s7637 + $0x30] sm:$0xff]
    %v7645 = vld [vmem:[%s7637 + $0x38] sm:$0xff]
    %v7646 = vld [vmem:[%s7637 + $0x40] sm:$0xff]
    %v7647 = vld [vmem:[%s7637 + $0x48] sm:$0xff]
    %v7648 = vld [vmem:[%s7637 + $0x50] sm:$0xff]
    %v7649 = vld [vmem:[%s7637 + $0x58] sm:$0xff]
    %v7650 = vld [vmem:[%s7637 + $0x60] sm:$0xff]
    %v7651 = vld [vmem:[%s7637 + $0x68] sm:$0xff]
    %v7652 = vld [vmem:[%s7637 + $0x70] sm:$0xff]
    %v7653 = vld [vmem:[%s7637 + $0x78] sm:$0xff]
    %7654 = vmatprep.subr.mxu0 0.0
    %7655 = vmatpush1.msra.mxu0 %v7638
    %7656 = vmatprep.subr.mxu0 0.0
    %7657 = vmatpush1.msra.mxu0 %v7639
    %7658 = vmatprep.subr.mxu0 0.0
    %7659 = vmatpush1.msra.mxu0 %v7640
    %7660 = vmatprep.subr.mxu0 0.0
    %7661 = vmatpush1.msra.mxu0 %v7641
    %7662 = vmatprep.subr.mxu0 0.0
    %7663 = vmatpush1.msra.mxu0 %v7642
    %7664 = vmatprep.subr.mxu0 0.0
    %7665 = vmatpush1.msra.mxu0 %v7643
    %7666 = vmatprep.subr.mxu0 0.0
    %7667 = vmatpush1.msra.mxu0 %v7644
    %7668 = vmatprep.subr.mxu0 0.0
    %7669 = vmatpush1.msra.mxu0 %v7645
    %7670 = vmatprep.subr.mxu0 0.0
    %7671 = vmatpush1.msra.mxu0 %v7646
    %7672 = vmatprep.subr.mxu0 0.0
    %7673 = vmatpush1.msra.mxu0 %v7647
    %7674 = vmatprep.subr.mxu0 0.0
    %7675 = vmatpush1.msra.mxu0 %v7648
    %7676 = vmatprep.subr.mxu0 0.0
    %7677 = vmatpush1.msra.mxu0 %v7649
    %7678 = vmatprep.subr.mxu0 0.0
    %7679 = vmatpush1.msra.mxu0 %v7650
    %7680 = vmatprep.subr.mxu0 0.0
    %7681 = vmatpush1.msra.mxu0 %v7651
    %7682 = vmatprep.subr.mxu0 0.0
    %7683 = vmatpush1.msra.mxu0 %v7652
    %7684 = vmatprep.subr.mxu0 0.0
    %7685 = vmatpush1.msra.mxu0 %v7653
    %7686 = vmatprep.subr.mxu0 0.0
    %7687 = vmatpush1.msra.mxu0 0.0
    %7688 = vmatprep.subr.mxu0 0.0
    %7689 = vmatpush1.msra.mxu0 0.0
    %7690 = vmatprep.subr.mxu0 0.0
    %7691 = vmatpush1.msra.mxu0 0.0
    %7692 = vmatprep.subr.mxu0 0.0
    %7693 = vmatpush1.msra.mxu0 0.0
    %7694 = vmatprep.subr.mxu0 0.0
    %7695 = vmatpush1.msra.mxu0 0.0
    %7696 = vmatprep.subr.mxu0 0.0
    %7697 = vmatpush1.msra.mxu0 0.0
    %7698 = vmatprep.subr.mxu0 0.0
    %7699 = vmatpush1.msra.mxu0 0.0
    %7700 = vmatprep.subr.mxu0 0.0
    %7701 = vmatpush1.msra.mxu0 0.0
    %7702 = vmatprep.subr.mxu0 0.0
    %7703 = vmatpush1.msra.mxu0 0.0
    %7704 = vmatprep.subr.mxu0 0.0
    %7705 = vmatpush1.msra.mxu0 0.0
    %7706 = vmatprep.subr.mxu0 0.0
    %7707 = vmatpush1.msra.mxu0 0.0
    %7708 = vmatprep.subr.mxu0 0.0
    %7709 = vmatpush1.msra.mxu0 0.0
    %7710 = vmatprep.subr.mxu0 0.0
    %7711 = vmatpush1.msra.mxu0 0.0
    %7712 = vmatprep.subr.mxu0 0.0
    %7713 = vmatpush1.msra.mxu0 0.0
    %7714 = vmatprep.subr.mxu0 0.0
    %7715 = vmatpush1.msra.mxu0 0.0
    %7716 = vmatprep.subr.mxu0 0.0
    %7717 = vmatpush1.msra.mxu0 0.0
    %7718 = vmatprep.mubr.f32.mxu0 0.0
    %7719 = vmatmul.mubr.f32.gmra.mrb[0].mxu0 %v6907
    %v7720 = vpop.f32.mrb[0].mxu0
    %v7721 = vadd.f32 0.0, %v7720
    %v7722 = vpop.f32.mrb[0].mxu0
    %7723 = vmatprep.mubr.f32.mxu0 0.0
    %7724 = vmatmul.mubr.f32.gmra.mrb[0].mxu0 %v6908
    %v7725 = vpop.f32.mrb[0].mxu0
    %v7726 = vadd.f32 0.0, %v7725
    %v7727 = vpop.f32.mrb[0].mxu0
    %7728 = vmatprep.mubr.f32.mxu0 0.0
    %7729 = vmatmul.mubr.f32.gmra.mrb[0].mxu0 %v6909
    %v7730 = vpop.f32.mrb[0].mxu0
    %v7731 = vadd.f32 0.0, %v7730
    %v7732 = vpop.f32.mrb[0].mxu0
    %7733 = vmatprep.mubr.f32.mxu0 0.0
    %7734 = vmatmul.mubr.f32.gmra.mrb[0].mxu0 %v6910
    %v7735 = vpop.f32.mrb[0].mxu0
    %v7736 = vadd.f32 0.0, %v7735
    %v7737 = vpop.f32.mrb[0].mxu0
    %7738 = vdwg.mxu0
    %s7739 = scalar_lea.vmem %s29, 192
    %v7740 = vld [vmem:[%s7739] sm:$0xff]
    %v7741 = vld [vmem:[%s7739 + $0x8] sm:$0xff]
    %v7742 = vld [vmem:[%s7739 + $0x10] sm:$0xff]
    %v7743 = vld [vmem:[%s7739 + $0x18] sm:$0xff]
    %v7744 = vld [vmem:[%s7739 + $0x20] sm:$0xff]
    %v7745 = vld [vmem:[%s7739 + $0x28] sm:$0xff]
    %v7746 = vld [vmem:[%s7739 + $0x30] sm:$0xff]
    %v7747 = vld [vmem:[%s7739 + $0x38] sm:$0xff]
    %v7749 = vsel %vm1868, %v7740, 0
    %v7752 = vsel %vm1868, %v7741, 0
    %v7755 = vsel %vm1868, %v7742, 0
    %v7758 = vsel %vm1868, %v7743, 0
    %v7761 = vsel %vm1868, %v7744, 0
    %v7764 = vsel %vm1868, %v7745, 0
    %v7767 = vsel %vm1868, %v7746, 0
    %v7770 = vsel %vm1868, %v7747, 0
    %7772 = vmatprep.subr.mxu0 0.0
    %7773 = vmatpush1.msra.mxu0 %v7721
    %7774 = vmatprep.subr.mxu0 0.0
    %7775 = vmatpush1.msra.mxu0 %v7726
    %7776 = vmatprep.subr.mxu0 0.0
    %7777 = vmatpush1.msra.mxu0 %v7731
    %7778 = vmatprep.subr.mxu0 0.0
    %7779 = vmatpush1.msra.mxu0 %v7736
    %7780 = vmatprep.subr.mxu0 0.0
    %7781 = vmatpush1.msra.mxu0 0.0
    %7782 = vmatprep.subr.mxu0 0.0
    %7783 = vmatpush1.msra.mxu0 0.0
    %7784 = vmatprep.subr.mxu0 0.0
    %7785 = vmatpush1.msra.mxu0 0.0
    %7786 = vmatprep.subr.mxu0 0.0
    %7787 = vmatpush1.msra.mxu0 0.0
    %7788 = vmatprep.subr.mxu0 0.0
    %7789 = vmatpush1.msra.mxu0 0.0
    %7790 = vmatprep.subr.mxu0 0.0
    %7791 = vmatpush1.msra.mxu0 0.0
    %7792 = vmatprep.subr.mxu0 0.0
    %7793 = vmatpush1.msra.mxu0 0.0
    %7794 = vmatprep.subr.mxu0 0.0
    %7795 = vmatpush1.msra.mxu0 0.0
    %7796 = vmatprep.subr.mxu0 0.0
    %7797 = vmatpush1.msra.mxu0 0.0
    %7798 = vmatprep.subr.mxu0 0.0
    %7799 = vmatpush1.msra.mxu0 0.0
    %7800 = vmatprep.subr.mxu0 0.0
    %7801 = vmatpush1.msra.mxu0 0.0
    %7802 = vmatprep.subr.mxu0 0.0
    %7803 = vmatpush1.msra.mxu0 0.0
    %7804 = vmatprep.subr.mxu0 0.0
    %7805 = vmatpush1.msra.mxu0 0.0
    %7806 = vmatprep.subr.mxu0 0.0
    %7807 = vmatpush1.msra.mxu0 0.0
    %7808 = vmatprep.subr.mxu0 0.0
    %7809 = vmatpush1.msra.mxu0 0.0
    %7810 = vmatprep.subr.mxu0 0.0
    %7811 = vmatpush1.msra.mxu0 0.0
    %7812 = vmatprep.subr.mxu0 0.0
    %7813 = vmatpush1.msra.mxu0 0.0
    %7814 = vmatprep.subr.mxu0 0.0
    %7815 = vmatpush1.msra.mxu0 0.0
    %7816 = vmatprep.subr.mxu0 0.0
    %7817 = vmatpush1.msra.mxu0 0.0
    %7818 = vmatprep.subr.mxu0 0.0
    %7819 = vmatpush1.msra.mxu0 0.0
    %7820 = vmatprep.subr.mxu0 0.0
    %7821 = vmatpush1.msra.mxu0 0.0
    %7822 = vmatprep.subr.mxu0 0.0
    %7823 = vmatpush1.msra.mxu0 0.0
    %7824 = vmatprep.subr.mxu0 0.0
    %7825 = vmatpush1.msra.mxu0 0.0
    %7826 = vmatprep.subr.mxu0 0.0
    %7827 = vmatpush1.msra.mxu0 0.0
    %7828 = vmatprep.subr.mxu0 0.0
    %7829 = vmatpush1.msra.mxu0 0.0
    %7830 = vmatprep.subr.mxu0 0.0
    %7831 = vmatpush1.msra.mxu0 0.0
    %7832 = vmatprep.subr.mxu0 0.0
    %7833 = vmatpush1.msra.mxu0 0.0
    %7834 = vmatprep.subr.mxu0 0.0
    %7835 = vmatpush1.msra.mxu0 0.0
    %7836 = vmatprep.mubr.f32.mxu0 0.0
    %7837 = vmatmul.mubr.f32.gmra.mrb[0].mxu0 %v7749
    %v7838 = vpop.f32.mrb[0].mxu0
    %v7839 = vadd.f32 0.0, %v7838
    %v7840 = vpop.f32.mrb[0].mxu0
    %7841 = vmatprep.mubr.f32.mxu0 0.0
    %7842 = vmatmul.mubr.f32.gmra.mrb[0].mxu0 %v7752
    %v7843 = vpop.f32.mrb[0].mxu0
    %v7844 = vadd.f32 0.0, %v7843
    %v7845 = vpop.f32.mrb[0].mxu0
    %7846 = vmatprep.mubr.f32.mxu0 0.0
    %7847 = vmatmul.mubr.f32.gmra.mrb[0].mxu0 %v7755
    %v7848 = vpop.f32.mrb[0].mxu0
    %v7849 = vadd.f32 0.0, %v7848
    %v7850 = vpop.f32.mrb[0].mxu0
    %7851 = vmatprep.mubr.f32.mxu0 0.0
    %7852 = vmatmul.mubr.f32.gmra.mrb[0].mxu0 %v7758
    %v7853 = vpop.f32.mrb[0].mxu0
    %v7854 = vadd.f32 0.0, %v7853
    %v7855 = vpop.f32.mrb[0].mxu0
    %7856 = vmatprep.mubr.f32.mxu0 0.0
    %7857 = vmatmul.mubr.f32.gmra.mrb[0].mxu0 %v7761
    %v7858 = vpop.f32.mrb[0].mxu0
    %v7859 = vadd.f32 0.0, %v7858
    %v7860 = vpop.f32.mrb[0].mxu0
    %7861 = vmatprep.mubr.f32.mxu0 0.0
    %7862 = vmatmul.mubr.f32.gmra.mrb[0].mxu0 %v7764
    %v7863 = vpop.f32.mrb[0].mxu0
    %v7864 = vadd.f32 0.0, %v7863
    %v7865 = vpop.f32.mrb[0].mxu0
    %7866 = vmatprep.mubr.f32.mxu0 0.0
    %7867 = vmatmul.mubr.f32.gmra.mrb[0].mxu0 %v7767
    %v7868 = vpop.f32.mrb[0].mxu0
    %v7869 = vadd.f32 0.0, %v7868
    %v7870 = vpop.f32.mrb[0].mxu0
    %7871 = vmatprep.mubr.f32.mxu0 0.0
    %7872 = vmatmul.mubr.f32.gmra.mrb[0].mxu0 %v7770
    %v7873 = vpop.f32.mrb[0].mxu0
    %v7874 = vadd.f32 0.0, %v7873
    %v7875 = vpop.f32.mrb[0].mxu0
    %7876 = vdwg.mxu0
    %v7877 = vadd.f32 %v7629, %v7839
    %v7878 = vadd.f32 %v7630, %v7844
    %v7879 = vadd.f32 %v7631, %v7849
    %v7880 = vadd.f32 %v7632, %v7854
    %v7881 = vadd.f32 %v7633, %v7859
    %v7882 = vadd.f32 %v7634, %v7864
    %v7883 = vadd.f32 %v7635, %v7869
    %v7884 = vadd.f32 %v7636, %v7874
    %v7885 = vld [vmem:[#allocation13] sm:$0x1]
    %v7887 = vlaneseq
    %v7888 = vshrl.u32 %v7887, 7
    %v7889 = vsub.s32 0, %v7888
    %v7890 = vrot.slane %v7885, %v7889
    %v7892 = vadd.f32 %v7877, %v7890
    %v7893 = vadd.f32 %v7878, %v7890
    %v7894 = vadd.f32 %v7879, %v7890
    %v7895 = vadd.f32 %v7880, %v7890
    %v7896 = vadd.f32 %v7881, %v7890
    %v7897 = vadd.f32 %v7882, %v7890
    %v7898 = vadd.f32 %v7883, %v7890
    %v7899 = vadd.f32 %v7884, %v7890
    %v7900 = vmax.f32 %v7892, 0.0
    %v7901 = vmax.f32 %v7893, 0.0
    %v7902 = vmax.f32 %v7894, 0.0
    %v7903 = vmax.f32 %v7895, 0.0
    %v7904 = vmax.f32 %v7896, 0.0
    %v7905 = vmax.f32 %v7897, 0.0
    %v7906 = vmax.f32 %v7898, 0.0
    %v7907 = vmax.f32 %v7899, 0.0
    %v7908 = vld [vmem:[%s33] sm:$0xff]
    %v7909 = vld [vmem:[%s33 + $0x8] sm:$0xff]
    %v7910 = vld [vmem:[%s33 + $0x10] sm:$0xff]
    %v7911 = vld [vmem:[%s33 + $0x18] sm:$0xff]
    %v7912 = vld [vmem:[%s33 + $0x20] sm:$0xff]
    %v7913 = vld [vmem:[%s33 + $0x28] sm:$0xff]
    %v7914 = vld [vmem:[%s33 + $0x30] sm:$0xff]
    %v7915 = vld [vmem:[%s33 + $0x38] sm:$0xff]
    %v7916 = vld [vmem:[%s33 + $0x40] sm:$0xff]
    %v7917 = vld [vmem:[%s33 + $0x48] sm:$0xff]
    %v7918 = vld [vmem:[%s33 + $0x50] sm:$0xff]
    %v7919 = vld [vmem:[%s33 + $0x58] sm:$0xff]
    %v7920 = vld [vmem:[%s33 + $0x60] sm:$0xff]
    %v7921 = vld [vmem:[%s33 + $0x68] sm:$0xff]
    %v7922 = vld [vmem:[%s33 + $0x70] sm:$0xff]
    %v7923 = vld [vmem:[%s33 + $0x78] sm:$0xff]
    %7924 = vmatprep.subr.mxu0 0.0
    %7925 = vmatpush1.msra.mxu0 %v7908
    %7926 = vmatprep.subr.mxu0 0.0
    %7927 = vmatpush1.msra.mxu0 %v7909
    %7928 = vmatprep.subr.mxu0 0.0
    %7929 = vmatpush1.msra.mxu0 %v7910
    %7930 = vmatprep.subr.mxu0 0.0
    %7931 = vmatpush1.msra.mxu0 %v7911
    %7932 = vmatprep.subr.mxu0 0.0
    %7933 = vmatpush1.msra.mxu0 %v7912
    %7934 = vmatprep.subr.mxu0 0.0
    %7935 = vmatpush1.msra.mxu0 %v7913
    %7936 = vmatprep.subr.mxu0 0.0
    %7937 = vmatpush1.msra.mxu0 %v7914
    %7938 = vmatprep.subr.mxu0 0.0
    %7939 = vmatpush1.msra.mxu0 %v7915
    %7940 = vmatprep.subr.mxu0 0.0
    %7941 = vmatpush1.msra.mxu0 %v7916
    %7942 = vmatprep.subr.mxu0 0.0
    %7943 = vmatpush1.msra.mxu0 %v7917
    %7944 = vmatprep.subr.mxu0 0.0
    %7945 = vmatpush1.msra.mxu0 %v7918
    %7946 = vmatprep.subr.mxu0 0.0
    %7947 = vmatpush1.msra.mxu0 %v7919
    %7948 = vmatprep.subr.mxu0 0.0
    %7949 = vmatpush1.msra.mxu0 %v7920
    %7950 = vmatprep.subr.mxu0 0.0
    %7951 = vmatpush1.msra.mxu0 %v7921
    %7952 = vmatprep.subr.mxu0 0.0
    %7953 = vmatpush1.msra.mxu0 %v7922
    %7954 = vmatprep.subr.mxu0 0.0
    %7955 = vmatpush1.msra.mxu0 %v7923
    %7956 = vmatprep.subr.mxu0 0.0
    %7957 = vmatpush1.msra.mxu0 0.0
    %7958 = vmatprep.subr.mxu0 0.0
    %7959 = vmatpush1.msra.mxu0 0.0
    %7960 = vmatprep.subr.mxu0 0.0
    %7961 = vmatpush1.msra.mxu0 0.0
    %7962 = vmatprep.subr.mxu0 0.0
    %7963 = vmatpush1.msra.mxu0 0.0
    %7964 = vmatprep.subr.mxu0 0.0
    %7965 = vmatpush1.msra.mxu0 0.0
    %7966 = vmatprep.subr.mxu0 0.0
    %7967 = vmatpush1.msra.mxu0 0.0
    %7968 = vmatprep.subr.mxu0 0.0
    %7969 = vmatpush1.msra.mxu0 0.0
    %7970 = vmatprep.subr.mxu0 0.0
    %7971 = vmatpush1.msra.mxu0 0.0
    %7972 = vmatprep.subr.mxu0 0.0
    %7973 = vmatpush1.msra.mxu0 0.0
    %7974 = vmatprep.subr.mxu0 0.0
    %7975 = vmatpush1.msra.mxu0 0.0
    %7976 = vmatprep.subr.mxu0 0.0
    %7977 = vmatpush1.msra.mxu0 0.0
    %7978 = vmatprep.subr.mxu0 0.0
    %7979 = vmatpush1.msra.mxu0 0.0
    %7980 = vmatprep.subr.mxu0 0.0
    %7981 = vmatpush1.msra.mxu0 0.0
    %7982 = vmatprep.subr.mxu0 0.0
    %7983 = vmatpush1.msra.mxu0 0.0
    %7984 = vmatprep.subr.mxu0 0.0
    %7985 = vmatpush1.msra.mxu0 0.0
    %7986 = vmatprep.subr.mxu0 0.0
    %7987 = vmatpush1.msra.mxu0 0.0
    %7988 = vmatprep.mubr.f32.mxu0 0.0
    %7989 = vmatmul.mubr.f32.gmra.mrb[0].mxu0 %v7900
    %v7990 = vpop.f32.mrb[0].mxu0
    %v7991 = vadd.f32 0.0, %v7990
    %v7992 = vpop.f32.mrb[0].mxu0
    %7993 = vmatprep.mubr.f32.mxu0 0.0
    %7994 = vmatmul.mubr.f32.gmra.mrb[0].mxu0 %v7901
    %v7995 = vpop.f32.mrb[0].mxu0
    %v7996 = vadd.f32 0.0, %v7995
    %v7997 = vpop.f32.mrb[0].mxu0
    %7998 = vmatprep.mubr.f32.mxu0 0.0
    %7999 = vmatmul.mubr.f32.gmra.mrb[0].mxu0 %v7902
    %v8000 = vpop.f32.mrb[0].mxu0
    %v8001 = vadd.f32 0.0, %v8000
    %v8002 = vpop.f32.mrb[0].mxu0
    %8003 = vmatprep.mubr.f32.mxu0 0.0
    %8004 = vmatmul.mubr.f32.gmra.mrb[0].mxu0 %v7903
    %v8005 = vpop.f32.mrb[0].mxu0
    %v8006 = vadd.f32 0.0, %v8005
    %v8007 = vpop.f32.mrb[0].mxu0
    %8008 = vmatprep.mubr.f32.mxu0 0.0
    %8009 = vmatmul.mubr.f32.gmra.mrb[0].mxu0 %v7904
    %v8010 = vpop.f32.mrb[0].mxu0
    %v8011 = vadd.f32 0.0, %v8010
    %v8012 = vpop.f32.mrb[0].mxu0
    %8013 = vmatprep.mubr.f32.mxu0 0.0
    %8014 = vmatmul.mubr.f32.gmra.mrb[0].mxu0 %v7905
    %v8015 = vpop.f32.mrb[0].mxu0
    %v8016 = vadd.f32 0.0, %v8015
    %v8017 = vpop.f32.mrb[0].mxu0
    %8018 = vmatprep.mubr.f32.mxu0 0.0
    %8019 = vmatmul.mubr.f32.gmra.mrb[0].mxu0 %v7906
    %v8020 = vpop.f32.mrb[0].mxu0
    %v8021 = vadd.f32 0.0, %v8020
    %v8022 = vpop.f32.mrb[0].mxu0
    %8023 = vmatprep.mubr.f32.mxu0 0.0
    %8024 = vmatmul.mubr.f32.gmra.mrb[0].mxu0 %v7907
    %v8025 = vpop.f32.mrb[0].mxu0
    %v8026 = vadd.f32 0.0, %v8025
    %v8027 = vpop.f32.mrb[0].mxu0
    %8028 = vdwg.mxu0
    %v8029 = vld [vmem:[%s35] sm:$0xff]
    %v8030 = vld [vmem:[%s35 + $0x8] sm:$0xff]
    %v8031 = vld [vmem:[%s35 + $0x10] sm:$0xff]
    %v8032 = vld [vmem:[%s35 + $0x18] sm:$0xff]
    %v8033 = vld [vmem:[%s35 + $0x20] sm:$0xff]
    %v8034 = vld [vmem:[%s35 + $0x28] sm:$0xff]
    %v8035 = vld [vmem:[%s35 + $0x30] sm:$0xff]
    %v8036 = vld [vmem:[%s35 + $0x38] sm:$0xff]
    %v8037 = vld [vmem:[%s35 + $0x40] sm:$0xff]
    %v8038 = vld [vmem:[%s35 + $0x48] sm:$0xff]
    %v8039 = vld [vmem:[%s35 + $0x50] sm:$0xff]
    %v8040 = vld [vmem:[%s35 + $0x58] sm:$0xff]
    %v8041 = vld [vmem:[%s35 + $0x60] sm:$0xff]
    %v8042 = vld [vmem:[%s35 + $0x68] sm:$0xff]
    %v8043 = vld [vmem:[%s35 + $0x70] sm:$0xff]
    %v8044 = vld [vmem:[%s35 + $0x78] sm:$0xff]
    %s8045 = scalar_lea.vmem %s33, 128
    %v8046 = vld [vmem:[%s8045] sm:$0xff]
    %v8047 = vld [vmem:[%s8045 + $0x8] sm:$0xff]
    %v8048 = vld [vmem:[%s8045 + $0x10] sm:$0xff]
    %v8049 = vld [vmem:[%s8045 + $0x18] sm:$0xff]
    %v8050 = vld [vmem:[%s8045 + $0x20] sm:$0xff]
    %v8051 = vld [vmem:[%s8045 + $0x28] sm:$0xff]
    %v8052 = vld [vmem:[%s8045 + $0x30] sm:$0xff]
    %v8053 = vld [vmem:[%s8045 + $0x38] sm:$0xff]
    %v8054 = vld [vmem:[%s8045 + $0x40] sm:$0xff]
    %v8055 = vld [vmem:[%s8045 + $0x48] sm:$0xff]
    %v8056 = vld [vmem:[%s8045 + $0x50] sm:$0xff]
    %v8057 = vld [vmem:[%s8045 + $0x58] sm:$0xff]
    %v8058 = vld [vmem:[%s8045 + $0x60] sm:$0xff]
    %v8059 = vld [vmem:[%s8045 + $0x68] sm:$0xff]
    %v8060 = vld [vmem:[%s8045 + $0x70] sm:$0xff]
    %v8061 = vld [vmem:[%s8045 + $0x78] sm:$0xff]
    %8062 = vmatprep.subr.mxu0 0.0
    %8063 = vmatpush1.msra.mxu0 %v8046
    %8064 = vmatprep.subr.mxu0 0.0
    %8065 = vmatpush1.msra.mxu0 %v8047
    %8066 = vmatprep.subr.mxu0 0.0
    %8067 = vmatpush1.msra.mxu0 %v8048
    %8068 = vmatprep.subr.mxu0 0.0
    %8069 = vmatpush1.msra.mxu0 %v8049
    %8070 = vmatprep.subr.mxu0 0.0
    %8071 = vmatpush1.msra.mxu0 %v8050
    %8072 = vmatprep.subr.mxu0 0.0
    %8073 = vmatpush1.msra.mxu0 %v8051
    %8074 = vmatprep.subr.mxu0 0.0
    %8075 = vmatpush1.msra.mxu0 %v8052
    %8076 = vmatprep.subr.mxu0 0.0
    %8077 = vmatpush1.msra.mxu0 %v8053
    %8078 = vmatprep.subr.mxu0 0.0
    %8079 = vmatpush1.msra.mxu0 %v8054
    %8080 = vmatprep.subr.mxu0 0.0
    %8081 = vmatpush1.msra.mxu0 %v8055
    %8082 = vmatprep.subr.mxu0 0.0
    %8083 = vmatpush1.msra.mxu0 %v8056
    %8084 = vmatprep.subr.mxu0 0.0
    %8085 = vmatpush1.msra.mxu0 %v8057
    %8086 = vmatprep.subr.mxu0 0.0
    %8087 = vmatpush1.msra.mxu0 %v8058
    %8088 = vmatprep.subr.mxu0 0.0
    %8089 = vmatpush1.msra.mxu0 %v8059
    %8090 = vmatprep.subr.mxu0 0.0
    %8091 = vmatpush1.msra.mxu0 %v8060
    %8092 = vmatprep.subr.mxu0 0.0
    %8093 = vmatpush1.msra.mxu0 %v8061
    %8094 = vmatprep.subr.mxu0 0.0
    %8095 = vmatpush1.msra.mxu0 0.0
    %8096 = vmatprep.subr.mxu0 0.0
    %8097 = vmatpush1.msra.mxu0 0.0
    %8098 = vmatprep.subr.mxu0 0.0
    %8099 = vmatpush1.msra.mxu0 0.0
    %8100 = vmatprep.subr.mxu0 0.0
    %8101 = vmatpush1.msra.mxu0 0.0
    %8102 = vmatprep.subr.mxu0 0.0
    %8103 = vmatpush1.msra.mxu0 0.0
    %8104 = vmatprep.subr.mxu0 0.0
    %8105 = vmatpush1.msra.mxu0 0.0
    %8106 = vmatprep.subr.mxu0 0.0
    %8107 = vmatpush1.msra.mxu0 0.0
    %8108 = vmatprep.subr.mxu0 0.0
    %8109 = vmatpush1.msra.mxu0 0.0
    %8110 = vmatprep.subr.mxu0 0.0
    %8111 = vmatpush1.msra.mxu0 0.0
    %8112 = vmatprep.subr.mxu0 0.0
    %8113 = vmatpush1.msra.mxu0 0.0
    %8114 = vmatprep.subr.mxu0 0.0
    %8115 = vmatpush1.msra.mxu0 0.0
    %8116 = vmatprep.subr.mxu0 0.0
    %8117 = vmatpush1.msra.mxu0 0.0
    %8118 = vmatprep.subr.mxu0 0.0
    %8119 = vmatpush1.msra.mxu0 0.0
    %8120 = vmatprep.subr.mxu0 0.0
    %8121 = vmatpush1.msra.mxu0 0.0
    %8122 = vmatprep.subr.mxu0 0.0
    %8123 = vmatpush1.msra.mxu0 0.0
    %8124 = vmatprep.subr.mxu0 0.0
    %8125 = vmatpush1.msra.mxu0 0.0
    %8126 = vmatprep.mubr.f32.mxu0 0.0
    %8127 = vmatmul.mubr.f32.gmra.mrb[0].mxu0 %v7900
    %v8128 = vpop.f32.mrb[0].mxu0
    %v8129 = vadd.f32 0.0, %v8128
    %v8130 = vpop.f32.mrb[0].mxu0
    %8131 = vmatprep.mubr.f32.mxu0 0.0
    %8132 = vmatmul.mubr.f32.gmra.mrb[0].mxu0 %v7901
    %v8133 = vpop.f32.mrb[0].mxu0
    %v8134 = vadd.f32 0.0, %v8133
    %v8135 = vpop.f32.mrb[0].mxu0
    %8136 = vmatprep.mubr.f32.mxu0 0.0
    %8137 = vmatmul.mubr.f32.gmra.mrb[0].mxu0 %v7902
    %v8138 = vpop.f32.mrb[0].mxu0
    %v8139 = vadd.f32 0.0, %v8138
    %v8140 = vpop.f32.mrb[0].mxu0
    %8141 = vmatprep.mubr.f32.mxu0 0.0
    %8142 = vmatmul.mubr.f32.gmra.mrb[0].mxu0 %v7903
    %v8143 = vpop.f32.mrb[0].mxu0
    %v8144 = vadd.f32 0.0, %v8143
    %v8145 = vpop.f32.mrb[0].mxu0
    %8146 = vmatprep.mubr.f32.mxu0 0.0
    %8147 = vmatmul.mubr.f32.gmra.mrb[0].mxu0 %v7904
    %v8148 = vpop.f32.mrb[0].mxu0
    %v8149 = vadd.f32 0.0, %v8148
    %v8150 = vpop.f32.mrb[0].mxu0
    %8151 = vmatprep.mubr.f32.mxu0 0.0
    %8152 = vmatmul.mubr.f32.gmra.mrb[0].mxu0 %v7905
    %v8153 = vpop.f32.mrb[0].mxu0
    %v8154 = vadd.f32 0.0, %v8153
    %v8155 = vpop.f32.mrb[0].mxu0
    %8156 = vmatprep.mubr.f32.mxu0 0.0
    %8157 = vmatmul.mubr.f32.gmra.mrb[0].mxu0 %v7906
    %v8158 = vpop.f32.mrb[0].mxu0
    %v8159 = vadd.f32 0.0, %v8158
    %v8160 = vpop.f32.mrb[0].mxu0
    %8161 = vmatprep.mubr.f32.mxu0 0.0
    %8162 = vmatmul.mubr.f32.gmra.mrb[0].mxu0 %v7907
    %v8163 = vpop.f32.mrb[0].mxu0
    %v8164 = vadd.f32 0.0, %v8163
    %v8165 = vpop.f32.mrb[0].mxu0
    %8166 = vdwg.mxu0
    %s8167 = scalar_lea.vmem %s35, 128
    %v8168 = vld [vmem:[%s8167] sm:$0xff]
    %v8169 = vld [vmem:[%s8167 + $0x8] sm:$0xff]
    %v8170 = vld [vmem:[%s8167 + $0x10] sm:$0xff]
    %v8171 = vld [vmem:[%s8167 + $0x18] sm:$0xff]
    %v8172 = vld [vmem:[%s8167 + $0x20] sm:$0xff]
    %v8173 = vld [vmem:[%s8167 + $0x28] sm:$0xff]
    %v8174 = vld [vmem:[%s8167 + $0x30] sm:$0xff]
    %v8175 = vld [vmem:[%s8167 + $0x38] sm:$0xff]
    %v8176 = vld [vmem:[%s8167 + $0x40] sm:$0xff]
    %v8177 = vld [vmem:[%s8167 + $0x48] sm:$0xff]
    %v8178 = vld [vmem:[%s8167 + $0x50] sm:$0xff]
    %v8179 = vld [vmem:[%s8167 + $0x58] sm:$0xff]
    %v8180 = vld [vmem:[%s8167 + $0x60] sm:$0xff]
    %v8181 = vld [vmem:[%s8167 + $0x68] sm:$0xff]
    %v8182 = vld [vmem:[%s8167 + $0x70] sm:$0xff]
    %v8183 = vld [vmem:[%s8167 + $0x78] sm:$0xff]
    %v8185 = vsel %vm695, %v8168, 0
    %v8188 = vsel %vm695, %v8169, 0
    %v8191 = vsel %vm695, %v8170, 0
    %v8194 = vsel %vm695, %v8171, 0
    %v8197 = vsel %vm695, %v8172, 0
    %v8200 = vsel %vm695, %v8173, 0
    %v8203 = vsel %vm695, %v8174, 0
    %v8206 = vsel %vm695, %v8175, 0
    %v8209 = vsel %vm695, %v8176, 0
    %v8212 = vsel %vm695, %v8177, 0
    %v8215 = vsel %vm695, %v8178, 0
    %v8218 = vsel %vm695, %v8179, 0
    %v8221 = vsel %vm695, %v8180, 0
    %v8224 = vsel %vm695, %v8181, 0
    %v8227 = vsel %vm695, %v8182, 0
    %v8230 = vsel %vm695, %v8183, 0
    %8232 = vmatprep.subr.mxu0 0.0
    %8233 = vmatpush1.msra.mxu0 %v8129
    %8234 = vmatprep.subr.mxu0 0.0
    %8235 = vmatpush1.msra.mxu0 %v8134
    %8236 = vmatprep.subr.mxu0 0.0
    %8237 = vmatpush1.msra.mxu0 %v8139
    %8238 = vmatprep.subr.mxu0 0.0
    %8239 = vmatpush1.msra.mxu0 %v8144
    %8240 = vmatprep.subr.mxu0 0.0
    %8241 = vmatpush1.msra.mxu0 %v8149
    %8242 = vmatprep.subr.mxu0 0.0
    %8243 = vmatpush1.msra.mxu0 %v8154
    %8244 = vmatprep.subr.mxu0 0.0
    %8245 = vmatpush1.msra.mxu0 %v8159
    %8246 = vmatprep.subr.mxu0 0.0
    %8247 = vmatpush1.msra.mxu0 %v8164
    %8248 = vmatprep.subr.mxu0 0.0
    %8249 = vmatpush1.msra.mxu0 0.0
    %8250 = vmatprep.subr.mxu0 0.0
    %8251 = vmatpush1.msra.mxu0 0.0
    %8252 = vmatprep.subr.mxu0 0.0
    %8253 = vmatpush1.msra.mxu0 0.0
    %8254 = vmatprep.subr.mxu0 0.0
    %8255 = vmatpush1.msra.mxu0 0.0
    %8256 = vmatprep.subr.mxu0 0.0
    %8257 = vmatpush1.msra.mxu0 0.0
    %8258 = vmatprep.subr.mxu0 0.0
    %8259 = vmatpush1.msra.mxu0 0.0
    %8260 = vmatprep.subr.mxu0 0.0
    %8261 = vmatpush1.msra.mxu0 0.0
    %8262 = vmatprep.subr.mxu0 0.0
    %8263 = vmatpush1.msra.mxu0 0.0
    %8264 = vmatprep.subr.mxu0 0.0
    %8265 = vmatpush1.msra.mxu0 0.0
    %8266 = vmatprep.subr.mxu0 0.0
    %8267 = vmatpush1.msra.mxu0 0.0
    %8268 = vmatprep.subr.mxu0 0.0
    %8269 = vmatpush1.msra.mxu0 0.0
    %8270 = vmatprep.subr.mxu0 0.0
    %8271 = vmatpush1.msra.mxu0 0.0
    %8272 = vmatprep.subr.mxu0 0.0
    %8273 = vmatpush1.msra.mxu0 0.0
    %8274 = vmatprep.subr.mxu0 0.0
    %8275 = vmatpush1.msra.mxu0 0.0
    %8276 = vmatprep.subr.mxu0 0.0
    %8277 = vmatpush1.msra.mxu0 0.0
    %8278 = vmatprep.subr.mxu0 0.0
    %8279 = vmatpush1.msra.mxu0 0.0
    %8280 = vmatprep.subr.mxu0 0.0
    %8281 = vmatpush1.msra.mxu0 0.0
    %8282 = vmatprep.subr.mxu0 0.0
    %8283 = vmatpush1.msra.mxu0 0.0
    %8284 = vmatprep.subr.mxu0 0.0
    %8285 = vmatpush1.msra.mxu0 0.0
    %8286 = vmatprep.subr.mxu0 0.0
    %8287 = vmatpush1.msra.mxu0 0.0
    %8288 = vmatprep.subr.mxu0 0.0
    %8289 = vmatpush1.msra.mxu0 0.0
    %8290 = vmatprep.subr.mxu0 0.0
    %8291 = vmatpush1.msra.mxu0 0.0
    %8292 = vmatprep.subr.mxu0 0.0
    %8293 = vmatpush1.msra.mxu0 0.0
    %8294 = vmatprep.subr.mxu0 0.0
    %8295 = vmatpush1.msra.mxu0 0.0
    %8296 = vmatprep.mubr.f32.mxu0 0.0
    %8297 = vmatmul.mubr.f32.gmra.mrb[0].mxu0 %v8185
    %v8298 = vpop.f32.mrb[0].mxu0
    %v8299 = vadd.f32 0.0, %v8298
    %v8300 = vpop.f32.mrb[0].mxu0
    %8301 = vmatprep.mubr.f32.mxu0 0.0
    %8302 = vmatmul.mubr.f32.gmra.mrb[0].mxu0 %v8188
    %v8303 = vpop.f32.mrb[0].mxu0
    %v8304 = vadd.f32 0.0, %v8303
    %v8305 = vpop.f32.mrb[0].mxu0
    %8306 = vmatprep.mubr.f32.mxu0 0.0
    %8307 = vmatmul.mubr.f32.gmra.mrb[0].mxu0 %v8191
    %v8308 = vpop.f32.mrb[0].mxu0
    %v8309 = vadd.f32 0.0, %v8308
    %v8310 = vpop.f32.mrb[0].mxu0
    %8311 = vmatprep.mubr.f32.mxu0 0.0
    %8312 = vmatmul.mubr.f32.gmra.mrb[0].mxu0 %v8194
    %v8313 = vpop.f32.mrb[0].mxu0
    %v8314 = vadd.f32 0.0, %v8313
    %v8315 = vpop.f32.mrb[0].mxu0
    %8316 = vmatprep.mubr.f32.mxu0 0.0
    %8317 = vmatmul.mubr.f32.gmra.mrb[0].mxu0 %v8197
    %v8318 = vpop.f32.mrb[0].mxu0
    %v8319 = vadd.f32 0.0, %v8318
    %v8320 = vpop.f32.mrb[0].mxu0
    %8321 = vmatprep.mubr.f32.mxu0 0.0
    %8322 = vmatmul.mubr.f32.gmra.mrb[0].mxu0 %v8200
    %v8323 = vpop.f32.mrb[0].mxu0
    %v8324 = vadd.f32 0.0, %v8323
    %v8325 = vpop.f32.mrb[0].mxu0
    %8326 = vmatprep.mubr.f32.mxu0 0.0
    %8327 = vmatmul.mubr.f32.gmra.mrb[0].mxu0 %v8203
    %v8328 = vpop.f32.mrb[0].mxu0
    %v8329 = vadd.f32 0.0, %v8328
    %v8330 = vpop.f32.mrb[0].mxu0
    %8331 = vmatprep.mubr.f32.mxu0 0.0
    %8332 = vmatmul.mubr.f32.gmra.mrb[0].mxu0 %v8206
    %v8333 = vpop.f32.mrb[0].mxu0
    %v8334 = vadd.f32 0.0, %v8333
    %v8335 = vpop.f32.mrb[0].mxu0
    %8336 = vmatprep.mubr.f32.mxu0 0.0
    %8337 = vmatmul.mubr.f32.gmra.mrb[0].mxu0 %v8209
    %v8338 = vpop.f32.mrb[0].mxu0
    %v8339 = vadd.f32 0.0, %v8338
    %v8340 = vpop.f32.mrb[0].mxu0
    %8341 = vmatprep.mubr.f32.mxu0 0.0
    %8342 = vmatmul.mubr.f32.gmra.mrb[0].mxu0 %v8212
    %v8343 = vpop.f32.mrb[0].mxu0
    %v8344 = vadd.f32 0.0, %v8343
    %v8345 = vpop.f32.mrb[0].mxu0
    %8346 = vmatprep.mubr.f32.mxu0 0.0
    %8347 = vmatmul.mubr.f32.gmra.mrb[0].mxu0 %v8215
    %v8348 = vpop.f32.mrb[0].mxu0
    %v8349 = vadd.f32 0.0, %v8348
    %v8350 = vpop.f32.mrb[0].mxu0
    %8351 = vmatprep.mubr.f32.mxu0 0.0
    %8352 = vmatmul.mubr.f32.gmra.mrb[0].mxu0 %v8218
    %v8353 = vpop.f32.mrb[0].mxu0
    %v8354 = vadd.f32 0.0, %v8353
    %v8355 = vpop.f32.mrb[0].mxu0
    %8356 = vmatprep.mubr.f32.mxu0 0.0
    %8357 = vmatmul.mubr.f32.gmra.mrb[0].mxu0 %v8221
    %v8358 = vpop.f32.mrb[0].mxu0
    %v8359 = vadd.f32 0.0, %v8358
    %v8360 = vpop.f32.mrb[0].mxu0
    %8361 = vmatprep.mubr.f32.mxu0 0.0
    %8362 = vmatmul.mubr.f32.gmra.mrb[0].mxu0 %v8224
    %v8363 = vpop.f32.mrb[0].mxu0
    %v8364 = vadd.f32 0.0, %v8363
    %v8365 = vpop.f32.mrb[0].mxu0
    %8366 = vmatprep.mubr.f32.mxu0 0.0
    %8367 = vmatmul.mubr.f32.gmra.mrb[0].mxu0 %v8227
    %v8368 = vpop.f32.mrb[0].mxu0
    %v8369 = vadd.f32 0.0, %v8368
    %v8370 = vpop.f32.mrb[0].mxu0
    %8371 = vmatprep.mubr.f32.mxu0 0.0
    %8372 = vmatmul.mubr.f32.gmra.mrb[0].mxu0 %v8230
    %v8373 = vpop.f32.mrb[0].mxu0
    %v8374 = vadd.f32 0.0, %v8373
    %v8375 = vpop.f32.mrb[0].mxu0
    %8376 = vdwg.mxu0
    %v8378 = vsel %vm695, %v8029, 0
    %v8381 = vsel %vm695, %v8030, 0
    %v8384 = vsel %vm695, %v8031, 0
    %v8387 = vsel %vm695, %v8032, 0
    %v8390 = vsel %vm695, %v8033, 0
    %v8393 = vsel %vm695, %v8034, 0
    %v8396 = vsel %vm695, %v8035, 0
    %v8399 = vsel %vm695, %v8036, 0
    %v8402 = vsel %vm695, %v8037, 0
    %v8405 = vsel %vm695, %v8038, 0
    %v8408 = vsel %vm695, %v8039, 0
    %v8411 = vsel %vm695, %v8040, 0
    %v8414 = vsel %vm695, %v8041, 0
    %v8417 = vsel %vm695, %v8042, 0
    %v8420 = vsel %vm695, %v8043, 0
    %v8423 = vsel %vm695, %v8044, 0
    %8425 = vmatprep.subr.mxu0 0.0
    %8426 = vmatpush1.msra.mxu0 %v7991
    %8427 = vmatprep.subr.mxu0 0.0
    %8428 = vmatpush1.msra.mxu0 %v7996
    %8429 = vmatprep.subr.mxu0 0.0
    %8430 = vmatpush1.msra.mxu0 %v8001
    %8431 = vmatprep.subr.mxu0 0.0
    %8432 = vmatpush1.msra.mxu0 %v8006
    %8433 = vmatprep.subr.mxu0 0.0
    %8434 = vmatpush1.msra.mxu0 %v8011
    %8435 = vmatprep.subr.mxu0 0.0
    %8436 = vmatpush1.msra.mxu0 %v8016
    %8437 = vmatprep.subr.mxu0 0.0
    %8438 = vmatpush1.msra.mxu0 %v8021
    %8439 = vmatprep.subr.mxu0 0.0
    %8440 = vmatpush1.msra.mxu0 %v8026
    %8441 = vmatprep.subr.mxu0 0.0
    %8442 = vmatpush1.msra.mxu0 0.0
    %8443 = vmatprep.subr.mxu0 0.0
    %8444 = vmatpush1.msra.mxu0 0.0
    %8445 = vmatprep.subr.mxu0 0.0
    %8446 = vmatpush1.msra.mxu0 0.0
    %8447 = vmatprep.subr.mxu0 0.0
    %8448 = vmatpush1.msra.mxu0 0.0
    %8449 = vmatprep.subr.mxu0 0.0
    %8450 = vmatpush1.msra.mxu0 0.0
    %8451 = vmatprep.subr.mxu0 0.0
    %8452 = vmatpush1.msra.mxu0 0.0
    %8453 = vmatprep.subr.mxu0 0.0
    %8454 = vmatpush1.msra.mxu0 0.0
    %8455 = vmatprep.subr.mxu0 0.0
    %8456 = vmatpush1.msra.mxu0 0.0
    %8457 = vmatprep.subr.mxu0 0.0
    %8458 = vmatpush1.msra.mxu0 0.0
    %8459 = vmatprep.subr.mxu0 0.0
    %8460 = vmatpush1.msra.mxu0 0.0
    %8461 = vmatprep.subr.mxu0 0.0
    %8462 = vmatpush1.msra.mxu0 0.0
    %8463 = vmatprep.subr.mxu0 0.0
    %8464 = vmatpush1.msra.mxu0 0.0
    %8465 = vmatprep.subr.mxu0 0.0
    %8466 = vmatpush1.msra.mxu0 0.0
    %8467 = vmatprep.subr.mxu0 0.0
    %8468 = vmatpush1.msra.mxu0 0.0
    %8469 = vmatprep.subr.mxu0 0.0
    %8470 = vmatpush1.msra.mxu0 0.0
    %8471 = vmatprep.subr.mxu0 0.0
    %8472 = vmatpush1.msra.mxu0 0.0
    %8473 = vmatprep.subr.mxu0 0.0
    %8474 = vmatpush1.msra.mxu0 0.0
    %8475 = vmatprep.subr.mxu0 0.0
    %8476 = vmatpush1.msra.mxu0 0.0
    %8477 = vmatprep.subr.mxu0 0.0
    %8478 = vmatpush1.msra.mxu0 0.0
    %8479 = vmatprep.subr.mxu0 0.0
    %8480 = vmatpush1.msra.mxu0 0.0
    %8481 = vmatprep.subr.mxu0 0.0
    %8482 = vmatpush1.msra.mxu0 0.0
    %8483 = vmatprep.subr.mxu0 0.0
    %8484 = vmatpush1.msra.mxu0 0.0
    %8485 = vmatprep.subr.mxu0 0.0
    %8486 = vmatpush1.msra.mxu0 0.0
    %8487 = vmatprep.subr.mxu0 0.0
    %8488 = vmatpush1.msra.mxu0 0.0
    %8489 = vmatprep.mubr.f32.mxu0 0.0
    %8490 = vmatmul.mubr.f32.gmra.mrb[0].mxu0 %v8378
    %v8491 = vpop.f32.mrb[0].mxu0
    %v8492 = vadd.f32 %v8299, %v8491
    %v8493 = vpop.f32.mrb[0].mxu0
    %8494 = vmatprep.mubr.f32.mxu0 0.0
    %8495 = vmatmul.mubr.f32.gmra.mrb[0].mxu0 %v8381
    %v8496 = vpop.f32.mrb[0].mxu0
    %v8497 = vadd.f32 %v8304, %v8496
    %v8498 = vpop.f32.mrb[0].mxu0
    %8499 = vmatprep.mubr.f32.mxu0 0.0
    %8500 = vmatmul.mubr.f32.gmra.mrb[0].mxu0 %v8384
    %v8501 = vpop.f32.mrb[0].mxu0
    %v8502 = vadd.f32 %v8309, %v8501
    %v8503 = vpop.f32.mrb[0].mxu0
    %8504 = vmatprep.mubr.f32.mxu0 0.0
    %8505 = vmatmul.mubr.f32.gmra.mrb[0].mxu0 %v8387
    %v8506 = vpop.f32.mrb[0].mxu0
    %v8507 = vadd.f32 %v8314, %v8506
    %v8508 = vpop.f32.mrb[0].mxu0
    %8509 = vmatprep.mubr.f32.mxu0 0.0
    %8510 = vmatmul.mubr.f32.gmra.mrb[0].mxu0 %v8390
    %v8511 = vpop.f32.mrb[0].mxu0
    %v8512 = vadd.f32 %v8319, %v8511
    %v8513 = vpop.f32.mrb[0].mxu0
    %8514 = vmatprep.mubr.f32.mxu0 0.0
    %8515 = vmatmul.mubr.f32.gmra.mrb[0].mxu0 %v8393
    %v8516 = vpop.f32.mrb[0].mxu0
    %v8517 = vadd.f32 %v8324, %v8516
    %v8518 = vpop.f32.mrb[0].mxu0
    %8519 = vmatprep.mubr.f32.mxu0 0.0
    %8520 = vmatmul.mubr.f32.gmra.mrb[0].mxu0 %v8396
    %v8521 = vpop.f32.mrb[0].mxu0
    %v8522 = vadd.f32 %v8329, %v8521
    %v8523 = vpop.f32.mrb[0].mxu0
    %8524 = vmatprep.mubr.f32.mxu0 0.0
    %8525 = vmatmul.mubr.f32.gmra.mrb[0].mxu0 %v8399
    %v8526 = vpop.f32.mrb[0].mxu0
    %v8527 = vadd.f32 %v8334, %v8526
    %v8528 = vpop.f32.mrb[0].mxu0
    %8529 = vmatprep.mubr.f32.mxu0 0.0
    %8530 = vmatmul.mubr.f32.gmra.mrb[0].mxu0 %v8402
    %v8531 = vpop.f32.mrb[0].mxu0
    %v8532 = vadd.f32 %v8339, %v8531
    %v8533 = vpop.f32.mrb[0].mxu0
    %8534 = vmatprep.mubr.f32.mxu0 0.0
    %8535 = vmatmul.mubr.f32.gmra.mrb[0].mxu0 %v8405
    %v8536 = vpop.f32.mrb[0].mxu0
    %v8537 = vadd.f32 %v8344, %v8536
    %v8538 = vpop.f32.mrb[0].mxu0
    %8539 = vmatprep.mubr.f32.mxu0 0.0
    %8540 = vmatmul.mubr.f32.gmra.mrb[0].mxu0 %v8408
    %v8541 = vpop.f32.mrb[0].mxu0
    %v8542 = vadd.f32 %v8349, %v8541
    %v8543 = vpop.f32.mrb[0].mxu0
    %8544 = vmatprep.mubr.f32.mxu0 0.0
    %8545 = vmatmul.mubr.f32.gmra.mrb[0].mxu0 %v8411
    %v8546 = vpop.f32.mrb[0].mxu0
    %v8547 = vadd.f32 %v8354, %v8546
    %v8548 = vpop.f32.mrb[0].mxu0
    %8549 = vmatprep.mubr.f32.mxu0 0.0
    %8550 = vmatmul.mubr.f32.gmra.mrb[0].mxu0 %v8414
    %v8551 = vpop.f32.mrb[0].mxu0
    %v8552 = vadd.f32 %v8359, %v8551
    %v8553 = vpop.f32.mrb[0].mxu0
    %8554 = vmatprep.mubr.f32.mxu0 0.0
    %8555 = vmatmul.mubr.f32.gmra.mrb[0].mxu0 %v8417
    %v8556 = vpop.f32.mrb[0].mxu0
    %v8557 = vadd.f32 %v8364, %v8556
    %v8558 = vpop.f32.mrb[0].mxu0
    %8559 = vmatprep.mubr.f32.mxu0 0.0
    %8560 = vmatmul.mubr.f32.gmra.mrb[0].mxu0 %v8420
    %v8561 = vpop.f32.mrb[0].mxu0
    %v8562 = vadd.f32 %v8369, %v8561
    %v8563 = vpop.f32.mrb[0].mxu0
    %8564 = vmatprep.mubr.f32.mxu0 0.0
    %8565 = vmatmul.mubr.f32.gmra.mrb[0].mxu0 %v8423
    %v8566 = vpop.f32.mrb[0].mxu0
    %v8567 = vadd.f32 %v8374, %v8566
    %v8568 = vpop.f32.mrb[0].mxu0
    %8569 = vdwg.mxu0
    %s8570 = scalar_lea.vmem %s33, 256
    %v8571 = vld [vmem:[%s8570] sm:$0xff]
    %v8572 = vld [vmem:[%s8570 + $0x8] sm:$0xff]
    %v8573 = vld [vmem:[%s8570 + $0x10] sm:$0xff]
    %v8574 = vld [vmem:[%s8570 + $0x18] sm:$0xff]
    %v8575 = vld [vmem:[%s8570 + $0x20] sm:$0xff]
    %v8576 = vld [vmem:[%s8570 + $0x28] sm:$0xff]
    %v8577 = vld [vmem:[%s8570 + $0x30] sm:$0xff]
    %v8578 = vld [vmem:[%s8570 + $0x38] sm:$0xff]
    %v8579 = vld [vmem:[%s8570 + $0x40] sm:$0xff]
    %v8580 = vld [vmem:[%s8570 + $0x48] sm:$0xff]
    %v8581 = vld [vmem:[%s8570 + $0x50] sm:$0xff]
    %v8582 = vld [vmem:[%s8570 + $0x58] sm:$0xff]
    %v8583 = vld [vmem:[%s8570 + $0x60] sm:$0xff]
    %v8584 = vld [vmem:[%s8570 + $0x68] sm:$0xff]
    %v8585 = vld [vmem:[%s8570 + $0x70] sm:$0xff]
    %v8586 = vld [vmem:[%s8570 + $0x78] sm:$0xff]
    %8587 = vmatprep.subr.mxu0 0.0
    %8588 = vmatpush1.msra.mxu0 %v8571
    %8589 = vmatprep.subr.mxu0 0.0
    %8590 = vmatpush1.msra.mxu0 %v8572
    %8591 = vmatprep.subr.mxu0 0.0
    %8592 = vmatpush1.msra.mxu0 %v8573
    %8593 = vmatprep.subr.mxu0 0.0
    %8594 = vmatpush1.msra.mxu0 %v8574
    %8595 = vmatprep.subr.mxu0 0.0
    %8596 = vmatpush1.msra.mxu0 %v8575
    %8597 = vmatprep.subr.mxu0 0.0
    %8598 = vmatpush1.msra.mxu0 %v8576
    %8599 = vmatprep.subr.mxu0 0.0
    %8600 = vmatpush1.msra.mxu0 %v8577
    %8601 = vmatprep.subr.mxu0 0.0
    %8602 = vmatpush1.msra.mxu0 %v8578
    %8603 = vmatprep.subr.mxu0 0.0
    %8604 = vmatpush1.msra.mxu0 %v8579
    %8605 = vmatprep.subr.mxu0 0.0
    %8606 = vmatpush1.msra.mxu0 %v8580
    %8607 = vmatprep.subr.mxu0 0.0
    %8608 = vmatpush1.msra.mxu0 %v8581
    %8609 = vmatprep.subr.mxu0 0.0
    %8610 = vmatpush1.msra.mxu0 %v8582
    %8611 = vmatprep.subr.mxu0 0.0
    %8612 = vmatpush1.msra.mxu0 %v8583
    %8613 = vmatprep.subr.mxu0 0.0
    %8614 = vmatpush1.msra.mxu0 %v8584
    %8615 = vmatprep.subr.mxu0 0.0
    %8616 = vmatpush1.msra.mxu0 %v8585
    %8617 = vmatprep.subr.mxu0 0.0
    %8618 = vmatpush1.msra.mxu0 %v8586
    %8619 = vmatprep.subr.mxu0 0.0
    %8620 = vmatpush1.msra.mxu0 0.0
    %8621 = vmatprep.subr.mxu0 0.0
    %8622 = vmatpush1.msra.mxu0 0.0
    %8623 = vmatprep.subr.mxu0 0.0
    %8624 = vmatpush1.msra.mxu0 0.0
    %8625 = vmatprep.subr.mxu0 0.0
    %8626 = vmatpush1.msra.mxu0 0.0
    %8627 = vmatprep.subr.mxu0 0.0
    %8628 = vmatpush1.msra.mxu0 0.0
    %8629 = vmatprep.subr.mxu0 0.0
    %8630 = vmatpush1.msra.mxu0 0.0
    %8631 = vmatprep.subr.mxu0 0.0
    %8632 = vmatpush1.msra.mxu0 0.0
    %8633 = vmatprep.subr.mxu0 0.0
    %8634 = vmatpush1.msra.mxu0 0.0
    %8635 = vmatprep.subr.mxu0 0.0
    %8636 = vmatpush1.msra.mxu0 0.0
    %8637 = vmatprep.subr.mxu0 0.0
    %8638 = vmatpush1.msra.mxu0 0.0
    %8639 = vmatprep.subr.mxu0 0.0
    %8640 = vmatpush1.msra.mxu0 0.0
    %8641 = vmatprep.subr.mxu0 0.0
    %8642 = vmatpush1.msra.mxu0 0.0
    %8643 = vmatprep.subr.mxu0 0.0
    %8644 = vmatpush1.msra.mxu0 0.0
    %8645 = vmatprep.subr.mxu0 0.0
    %8646 = vmatpush1.msra.mxu0 0.0
    %8647 = vmatprep.subr.mxu0 0.0
    %8648 = vmatpush1.msra.mxu0 0.0
    %8649 = vmatprep.subr.mxu0 0.0
    %8650 = vmatpush1.msra.mxu0 0.0
    %8651 = vmatprep.mubr.f32.mxu0 0.0
    %8652 = vmatmul.mubr.f32.gmra.mrb[0].mxu0 %v7900
    %v8653 = vpop.f32.mrb[0].mxu0
    %v8654 = vadd.f32 0.0, %v8653
    %v8655 = vpop.f32.mrb[0].mxu0
    %8656 = vmatprep.mubr.f32.mxu0 0.0
    %8657 = vmatmul.mubr.f32.gmra.mrb[0].mxu0 %v7901
    %v8658 = vpop.f32.mrb[0].mxu0
    %v8659 = vadd.f32 0.0, %v8658
    %v8660 = vpop.f32.mrb[0].mxu0
    %8661 = vmatprep.mubr.f32.mxu0 0.0
    %8662 = vmatmul.mubr.f32.gmra.mrb[0].mxu0 %v7902
    %v8663 = vpop.f32.mrb[0].mxu0
    %v8664 = vadd.f32 0.0, %v8663
    %v8665 = vpop.f32.mrb[0].mxu0
    %8666 = vmatprep.mubr.f32.mxu0 0.0
    %8667 = vmatmul.mubr.f32.gmra.mrb[0].mxu0 %v7903
    %v8668 = vpop.f32.mrb[0].mxu0
    %v8669 = vadd.f32 0.0, %v8668
    %v8670 = vpop.f32.mrb[0].mxu0
    %8671 = vmatprep.mubr.f32.mxu0 0.0
    %8672 = vmatmul.mubr.f32.gmra.mrb[0].mxu0 %v7904
    %v8673 = vpop.f32.mrb[0].mxu0
    %v8674 = vadd.f32 0.0, %v8673
    %v8675 = vpop.f32.mrb[0].mxu0
    %8676 = vmatprep.mubr.f32.mxu0 0.0
    %8677 = vmatmul.mubr.f32.gmra.mrb[0].mxu0 %v7905
    %v8678 = vpop.f32.mrb[0].mxu0
    %v8679 = vadd.f32 0.0, %v8678
    %v8680 = vpop.f32.mrb[0].mxu0
    %8681 = vmatprep.mubr.f32.mxu0 0.0
    %8682 = vmatmul.mubr.f32.gmra.mrb[0].mxu0 %v7906
    %v8683 = vpop.f32.mrb[0].mxu0
    %v8684 = vadd.f32 0.0, %v8683
    %v8685 = vpop.f32.mrb[0].mxu0
    %8686 = vmatprep.mubr.f32.mxu0 0.0
    %8687 = vmatmul.mubr.f32.gmra.mrb[0].mxu0 %v7907
    %v8688 = vpop.f32.mrb[0].mxu0
    %v8689 = vadd.f32 0.0, %v8688
    %v8690 = vpop.f32.mrb[0].mxu0
    %8691 = vdwg.mxu0
    %s8692 = scalar_lea.vmem %s35, 256
    %v8693 = vld [vmem:[%s8692] sm:$0xff]
    %v8694 = vld [vmem:[%s8692 + $0x8] sm:$0xff]
    %v8695 = vld [vmem:[%s8692 + $0x10] sm:$0xff]
    %v8696 = vld [vmem:[%s8692 + $0x18] sm:$0xff]
    %v8697 = vld [vmem:[%s8692 + $0x20] sm:$0xff]
    %v8698 = vld [vmem:[%s8692 + $0x28] sm:$0xff]
    %v8699 = vld [vmem:[%s8692 + $0x30] sm:$0xff]
    %v8700 = vld [vmem:[%s8692 + $0x38] sm:$0xff]
    %v8701 = vld [vmem:[%s8692 + $0x40] sm:$0xff]
    %v8702 = vld [vmem:[%s8692 + $0x48] sm:$0xff]
    %v8703 = vld [vmem:[%s8692 + $0x50] sm:$0xff]
    %v8704 = vld [vmem:[%s8692 + $0x58] sm:$0xff]
    %v8705 = vld [vmem:[%s8692 + $0x60] sm:$0xff]
    %v8706 = vld [vmem:[%s8692 + $0x68] sm:$0xff]
    %v8707 = vld [vmem:[%s8692 + $0x70] sm:$0xff]
    %v8708 = vld [vmem:[%s8692 + $0x78] sm:$0xff]
    %v8710 = vsel %vm695, %v8693, 0
    %v8713 = vsel %vm695, %v8694, 0
    %v8716 = vsel %vm695, %v8695, 0
    %v8719 = vsel %vm695, %v8696, 0
    %v8722 = vsel %vm695, %v8697, 0
    %v8725 = vsel %vm695, %v8698, 0
    %v8728 = vsel %vm695, %v8699, 0
    %v8731 = vsel %vm695, %v8700, 0
    %v8734 = vsel %vm695, %v8701, 0
    %v8737 = vsel %vm695, %v8702, 0
    %v8740 = vsel %vm695, %v8703, 0
    %v8743 = vsel %vm695, %v8704, 0
    %v8746 = vsel %vm695, %v8705, 0
    %v8749 = vsel %vm695, %v8706, 0
    %v8752 = vsel %vm695, %v8707, 0
    %v8755 = vsel %vm695, %v8708, 0
    %8757 = vmatprep.subr.mxu0 0.0
    %8758 = vmatpush1.msra.mxu0 %v8654
    %8759 = vmatprep.subr.mxu0 0.0
    %8760 = vmatpush1.msra.mxu0 %v8659
    %8761 = vmatprep.subr.mxu0 0.0
    %8762 = vmatpush1.msra.mxu0 %v8664
    %8763 = vmatprep.subr.mxu0 0.0
    %8764 = vmatpush1.msra.mxu0 %v8669
    %8765 = vmatprep.subr.mxu0 0.0
    %8766 = vmatpush1.msra.mxu0 %v8674
    %8767 = vmatprep.subr.mxu0 0.0
    %8768 = vmatpush1.msra.mxu0 %v8679
    %8769 = vmatprep.subr.mxu0 0.0
    %8770 = vmatpush1.msra.mxu0 %v8684
    %8771 = vmatprep.subr.mxu0 0.0
    %8772 = vmatpush1.msra.mxu0 %v8689
    %8773 = vmatprep.subr.mxu0 0.0
    %8774 = vmatpush1.msra.mxu0 0.0
    %8775 = vmatprep.subr.mxu0 0.0
    %8776 = vmatpush1.msra.mxu0 0.0
    %8777 = vmatprep.subr.mxu0 0.0
    %8778 = vmatpush1.msra.mxu0 0.0
    %8779 = vmatprep.subr.mxu0 0.0
    %8780 = vmatpush1.msra.mxu0 0.0
    %8781 = vmatprep.subr.mxu0 0.0
    %8782 = vmatpush1.msra.mxu0 0.0
    %8783 = vmatprep.subr.mxu0 0.0
    %8784 = vmatpush1.msra.mxu0 0.0
    %8785 = vmatprep.subr.mxu0 0.0
    %8786 = vmatpush1.msra.mxu0 0.0
    %8787 = vmatprep.subr.mxu0 0.0
    %8788 = vmatpush1.msra.mxu0 0.0
    %8789 = vmatprep.subr.mxu0 0.0
    %8790 = vmatpush1.msra.mxu0 0.0
    %8791 = vmatprep.subr.mxu0 0.0
    %8792 = vmatpush1.msra.mxu0 0.0
    %8793 = vmatprep.subr.mxu0 0.0
    %8794 = vmatpush1.msra.mxu0 0.0
    %8795 = vmatprep.subr.mxu0 0.0
    %8796 = vmatpush1.msra.mxu0 0.0
    %8797 = vmatprep.subr.mxu0 0.0
    %8798 = vmatpush1.msra.mxu0 0.0
    %8799 = vmatprep.subr.mxu0 0.0
    %8800 = vmatpush1.msra.mxu0 0.0
    %8801 = vmatprep.subr.mxu0 0.0
    %8802 = vmatpush1.msra.mxu0 0.0
    %8803 = vmatprep.subr.mxu0 0.0
    %8804 = vmatpush1.msra.mxu0 0.0
    %8805 = vmatprep.subr.mxu0 0.0
    %8806 = vmatpush1.msra.mxu0 0.0
    %8807 = vmatprep.subr.mxu0 0.0
    %8808 = vmatpush1.msra.mxu0 0.0
    %8809 = vmatprep.subr.mxu0 0.0
    %8810 = vmatpush1.msra.mxu0 0.0
    %8811 = vmatprep.subr.mxu0 0.0
    %8812 = vmatpush1.msra.mxu0 0.0
    %8813 = vmatprep.subr.mxu0 0.0
    %8814 = vmatpush1.msra.mxu0 0.0
    %8815 = vmatprep.subr.mxu0 0.0
    %8816 = vmatpush1.msra.mxu0 0.0
    %8817 = vmatprep.subr.mxu0 0.0
    %8818 = vmatpush1.msra.mxu0 0.0
    %8819 = vmatprep.subr.mxu0 0.0
    %8820 = vmatpush1.msra.mxu0 0.0
    %8821 = vmatprep.mubr.f32.mxu0 0.0
    %8822 = vmatmul.mubr.f32.gmra.mrb[0].mxu0 %v8710
    %v8823 = vpop.f32.mrb[0].mxu0
    %v8824 = vadd.f32 0.0, %v8823
    %v8825 = vpop.f32.mrb[0].mxu0
    %8826 = vmatprep.mubr.f32.mxu0 0.0
    %8827 = vmatmul.mubr.f32.gmra.mrb[0].mxu0 %v8713
    %v8828 = vpop.f32.mrb[0].mxu0
    %v8829 = vadd.f32 0.0, %v8828
    %v8830 = vpop.f32.mrb[0].mxu0
    %8831 = vmatprep.mubr.f32.mxu0 0.0
    %8832 = vmatmul.mubr.f32.gmra.mrb[0].mxu0 %v8716
    %v8833 = vpop.f32.mrb[0].mxu0
    %v8834 = vadd.f32 0.0, %v8833
    %v8835 = vpop.f32.mrb[0].mxu0
    %8836 = vmatprep.mubr.f32.mxu0 0.0
    %8837 = vmatmul.mubr.f32.gmra.mrb[0].mxu0 %v8719
    %v8838 = vpop.f32.mrb[0].mxu0
    %v8839 = vadd.f32 0.0, %v8838
    %v8840 = vpop.f32.mrb[0].mxu0
    %8841 = vmatprep.mubr.f32.mxu0 0.0
    %8842 = vmatmul.mubr.f32.gmra.mrb[0].mxu0 %v8722
    %v8843 = vpop.f32.mrb[0].mxu0
    %v8844 = vadd.f32 0.0, %v8843
    %v8845 = vpop.f32.mrb[0].mxu0
    %8846 = vmatprep.mubr.f32.mxu0 0.0
    %8847 = vmatmul.mubr.f32.gmra.mrb[0].mxu0 %v8725
    %v8848 = vpop.f32.mrb[0].mxu0
    %v8849 = vadd.f32 0.0, %v8848
    %v8850 = vpop.f32.mrb[0].mxu0
    %8851 = vmatprep.mubr.f32.mxu0 0.0
    %8852 = vmatmul.mubr.f32.gmra.mrb[0].mxu0 %v8728
    %v8853 = vpop.f32.mrb[0].mxu0
    %v8854 = vadd.f32 0.0, %v8853
    %v8855 = vpop.f32.mrb[0].mxu0
    %8856 = vmatprep.mubr.f32.mxu0 0.0
    %8857 = vmatmul.mubr.f32.gmra.mrb[0].mxu0 %v8731
    %v8858 = vpop.f32.mrb[0].mxu0
    %v8859 = vadd.f32 0.0, %v8858
    %v8860 = vpop.f32.mrb[0].mxu0
    %8861 = vmatprep.mubr.f32.mxu0 0.0
    %8862 = vmatmul.mubr.f32.gmra.mrb[0].mxu0 %v8734
    %v8863 = vpop.f32.mrb[0].mxu0
    %v8864 = vadd.f32 0.0, %v8863
    %v8865 = vpop.f32.mrb[0].mxu0
    %8866 = vmatprep.mubr.f32.mxu0 0.0
    %8867 = vmatmul.mubr.f32.gmra.mrb[0].mxu0 %v8737
    %v8868 = vpop.f32.mrb[0].mxu0
    %v8869 = vadd.f32 0.0, %v8868
    %v8870 = vpop.f32.mrb[0].mxu0
    %8871 = vmatprep.mubr.f32.mxu0 0.0
    %8872 = vmatmul.mubr.f32.gmra.mrb[0].mxu0 %v8740
    %v8873 = vpop.f32.mrb[0].mxu0
    %v8874 = vadd.f32 0.0, %v8873
    %v8875 = vpop.f32.mrb[0].mxu0
    %8876 = vmatprep.mubr.f32.mxu0 0.0
    %8877 = vmatmul.mubr.f32.gmra.mrb[0].mxu0 %v8743
    %v8878 = vpop.f32.mrb[0].mxu0
    %v8879 = vadd.f32 0.0, %v8878
    %v8880 = vpop.f32.mrb[0].mxu0
    %8881 = vmatprep.mubr.f32.mxu0 0.0
    %8882 = vmatmul.mubr.f32.gmra.mrb[0].mxu0 %v8746
    %v8883 = vpop.f32.mrb[0].mxu0
    %v8884 = vadd.f32 0.0, %v8883
    %v8885 = vpop.f32.mrb[0].mxu0
    %8886 = vmatprep.mubr.f32.mxu0 0.0
    %8887 = vmatmul.mubr.f32.gmra.mrb[0].mxu0 %v8749
    %v8888 = vpop.f32.mrb[0].mxu0
    %v8889 = vadd.f32 0.0, %v8888
    %v8890 = vpop.f32.mrb[0].mxu0
    %8891 = vmatprep.mubr.f32.mxu0 0.0
    %8892 = vmatmul.mubr.f32.gmra.mrb[0].mxu0 %v8752
    %v8893 = vpop.f32.mrb[0].mxu0
    %v8894 = vadd.f32 0.0, %v8893
    %v8895 = vpop.f32.mrb[0].mxu0
    %8896 = vmatprep.mubr.f32.mxu0 0.0
    %8897 = vmatmul.mubr.f32.gmra.mrb[0].mxu0 %v8755
    %v8898 = vpop.f32.mrb[0].mxu0
    %v8899 = vadd.f32 0.0, %v8898
    %v8900 = vpop.f32.mrb[0].mxu0
    %8901 = vdwg.mxu0
    %v8902 = vadd.f32 %v8492, %v8824
    %v8903 = vadd.f32 %v8497, %v8829
    %v8904 = vadd.f32 %v8502, %v8834
    %v8905 = vadd.f32 %v8507, %v8839
    %v8906 = vadd.f32 %v8512, %v8844
    %v8907 = vadd.f32 %v8517, %v8849
    %v8908 = vadd.f32 %v8522, %v8854
    %v8909 = vadd.f32 %v8527, %v8859
    %v8910 = vadd.f32 %v8532, %v8864
    %v8911 = vadd.f32 %v8537, %v8869
    %v8912 = vadd.f32 %v8542, %v8874
    %v8913 = vadd.f32 %v8547, %v8879
    %v8914 = vadd.f32 %v8552, %v8884
    %v8915 = vadd.f32 %v8557, %v8889
    %v8916 = vadd.f32 %v8562, %v8894
    %v8917 = vadd.f32 %v8567, %v8899
    %s8918 = scalar_lea.vmem %s33, 384
    %v8919 = vld [vmem:[%s8918] sm:$0xff]
    %v8920 = vld [vmem:[%s8918 + $0x8] sm:$0xff]
    %v8921 = vld [vmem:[%s8918 + $0x10] sm:$0xff]
    %v8922 = vld [vmem:[%s8918 + $0x18] sm:$0xff]
    %v8923 = vld [vmem:[%s8918 + $0x20] sm:$0xff]
    %v8924 = vld [vmem:[%s8918 + $0x28] sm:$0xff]
    %v8925 = vld [vmem:[%s8918 + $0x30] sm:$0xff]
    %v8926 = vld [vmem:[%s8918 + $0x38] sm:$0xff]
    %v8927 = vld [vmem:[%s8918 + $0x40] sm:$0xff]
    %v8928 = vld [vmem:[%s8918 + $0x48] sm:$0xff]
    %v8929 = vld [vmem:[%s8918 + $0x50] sm:$0xff]
    %v8930 = vld [vmem:[%s8918 + $0x58] sm:$0xff]
    %v8931 = vld [vmem:[%s8918 + $0x60] sm:$0xff]
    %v8932 = vld [vmem:[%s8918 + $0x68] sm:$0xff]
    %v8933 = vld [vmem:[%s8918 + $0x70] sm:$0xff]
    %v8934 = vld [vmem:[%s8918 + $0x78] sm:$0xff]
    %8935 = vmatprep.subr.mxu0 0.0
    %8936 = vmatpush1.msra.mxu0 %v8919
    %8937 = vmatprep.subr.mxu0 0.0
    %8938 = vmatpush1.msra.mxu0 %v8920
    %8939 = vmatprep.subr.mxu0 0.0
    %8940 = vmatpush1.msra.mxu0 %v8921
    %8941 = vmatprep.subr.mxu0 0.0
    %8942 = vmatpush1.msra.mxu0 %v8922
    %8943 = vmatprep.subr.mxu0 0.0
    %8944 = vmatpush1.msra.mxu0 %v8923
    %8945 = vmatprep.subr.mxu0 0.0
    %8946 = vmatpush1.msra.mxu0 %v8924
    %8947 = vmatprep.subr.mxu0 0.0
    %8948 = vmatpush1.msra.mxu0 %v8925
    %8949 = vmatprep.subr.mxu0 0.0
    %8950 = vmatpush1.msra.mxu0 %v8926
    %8951 = vmatprep.subr.mxu0 0.0
    %8952 = vmatpush1.msra.mxu0 %v8927
    %8953 = vmatprep.subr.mxu0 0.0
    %8954 = vmatpush1.msra.mxu0 %v8928
    %8955 = vmatprep.subr.mxu0 0.0
    %8956 = vmatpush1.msra.mxu0 %v8929
    %8957 = vmatprep.subr.mxu0 0.0
    %8958 = vmatpush1.msra.mxu0 %v8930
    %8959 = vmatprep.subr.mxu0 0.0
    %8960 = vmatpush1.msra.mxu0 %v8931
    %8961 = vmatprep.subr.mxu0 0.0
    %8962 = vmatpush1.msra.mxu0 %v8932
    %8963 = vmatprep.subr.mxu0 0.0
    %8964 = vmatpush1.msra.mxu0 %v8933
    %8965 = vmatprep.subr.mxu0 0.0
    %8966 = vmatpush1.msra.mxu0 %v8934
    %8967 = vmatprep.subr.mxu0 0.0
    %8968 = vmatpush1.msra.mxu0 0.0
    %8969 = vmatprep.subr.mxu0 0.0
    %8970 = vmatpush1.msra.mxu0 0.0
    %8971 = vmatprep.subr.mxu0 0.0
    %8972 = vmatpush1.msra.mxu0 0.0
    %8973 = vmatprep.subr.mxu0 0.0
    %8974 = vmatpush1.msra.mxu0 0.0
    %8975 = vmatprep.subr.mxu0 0.0
    %8976 = vmatpush1.msra.mxu0 0.0
    %8977 = vmatprep.subr.mxu0 0.0
    %8978 = vmatpush1.msra.mxu0 0.0
    %8979 = vmatprep.subr.mxu0 0.0
    %8980 = vmatpush1.msra.mxu0 0.0
    %8981 = vmatprep.subr.mxu0 0.0
    %8982 = vmatpush1.msra.mxu0 0.0
    %8983 = vmatprep.subr.mxu0 0.0
    %8984 = vmatpush1.msra.mxu0 0.0
    %8985 = vmatprep.subr.mxu0 0.0
    %8986 = vmatpush1.msra.mxu0 0.0
    %8987 = vmatprep.subr.mxu0 0.0
    %8988 = vmatpush1.msra.mxu0 0.0
    %8989 = vmatprep.subr.mxu0 0.0
    %8990 = vmatpush1.msra.mxu0 0.0
    %8991 = vmatprep.subr.mxu0 0.0
    %8992 = vmatpush1.msra.mxu0 0.0
    %8993 = vmatprep.subr.mxu0 0.0
    %8994 = vmatpush1.msra.mxu0 0.0
    %8995 = vmatprep.subr.mxu0 0.0
    %8996 = vmatpush1.msra.mxu0 0.0
    %8997 = vmatprep.subr.mxu0 0.0
    %8998 = vmatpush1.msra.mxu0 0.0
    %8999 = vmatprep.mubr.f32.mxu0 0.0
    %9000 = vmatmul.mubr.f32.gmra.mrb[0].mxu0 %v7900
    %v9001 = vpop.f32.mrb[0].mxu0
    %v9002 = vadd.f32 0.0, %v9001
    %v9003 = vpop.f32.mrb[0].mxu0
    %9004 = vmatprep.mubr.f32.mxu0 0.0
    %9005 = vmatmul.mubr.f32.gmra.mrb[0].mxu0 %v7901
    %v9006 = vpop.f32.mrb[0].mxu0
    %v9007 = vadd.f32 0.0, %v9006
    %v9008 = vpop.f32.mrb[0].mxu0
    %9009 = vmatprep.mubr.f32.mxu0 0.0
    %9010 = vmatmul.mubr.f32.gmra.mrb[0].mxu0 %v7902
    %v9011 = vpop.f32.mrb[0].mxu0
    %v9012 = vadd.f32 0.0, %v9011
    %v9013 = vpop.f32.mrb[0].mxu0
    %9014 = vmatprep.mubr.f32.mxu0 0.0
    %9015 = vmatmul.mubr.f32.gmra.mrb[0].mxu0 %v7903
    %v9016 = vpop.f32.mrb[0].mxu0
    %v9017 = vadd.f32 0.0, %v9016
    %v9018 = vpop.f32.mrb[0].mxu0
    %9019 = vmatprep.mubr.f32.mxu0 0.0
    %9020 = vmatmul.mubr.f32.gmra.mrb[0].mxu0 %v7904
    %v9021 = vpop.f32.mrb[0].mxu0
    %v9022 = vadd.f32 0.0, %v9021
    %v9023 = vpop.f32.mrb[0].mxu0
    %9024 = vmatprep.mubr.f32.mxu0 0.0
    %9025 = vmatmul.mubr.f32.gmra.mrb[0].mxu0 %v7905
    %v9026 = vpop.f32.mrb[0].mxu0
    %v9027 = vadd.f32 0.0, %v9026
    %v9028 = vpop.f32.mrb[0].mxu0
    %9029 = vmatprep.mubr.f32.mxu0 0.0
    %9030 = vmatmul.mubr.f32.gmra.mrb[0].mxu0 %v7906
    %v9031 = vpop.f32.mrb[0].mxu0
    %v9032 = vadd.f32 0.0, %v9031
    %v9033 = vpop.f32.mrb[0].mxu0
    %9034 = vmatprep.mubr.f32.mxu0 0.0
    %9035 = vmatmul.mubr.f32.gmra.mrb[0].mxu0 %v7907
    %v9036 = vpop.f32.mrb[0].mxu0
    %v9037 = vadd.f32 0.0, %v9036
    %v9038 = vpop.f32.mrb[0].mxu0
    %9039 = vdwg.mxu0
    %s9040 = scalar_lea.vmem %s35, 384
    %v9041 = vld [vmem:[%s9040] sm:$0xff]
    %v9042 = vld [vmem:[%s9040 + $0x8] sm:$0xff]
    %v9043 = vld [vmem:[%s9040 + $0x10] sm:$0xff]
    %v9044 = vld [vmem:[%s9040 + $0x18] sm:$0xff]
    %v9045 = vld [vmem:[%s9040 + $0x20] sm:$0xff]
    %v9046 = vld [vmem:[%s9040 + $0x28] sm:$0xff]
    %v9047 = vld [vmem:[%s9040 + $0x30] sm:$0xff]
    %v9048 = vld [vmem:[%s9040 + $0x38] sm:$0xff]
    %v9049 = vld [vmem:[%s9040 + $0x40] sm:$0xff]
    %v9050 = vld [vmem:[%s9040 + $0x48] sm:$0xff]
    %v9051 = vld [vmem:[%s9040 + $0x50] sm:$0xff]
    %v9052 = vld [vmem:[%s9040 + $0x58] sm:$0xff]
    %v9053 = vld [vmem:[%s9040 + $0x60] sm:$0xff]
    %v9054 = vld [vmem:[%s9040 + $0x68] sm:$0xff]
    %v9055 = vld [vmem:[%s9040 + $0x70] sm:$0xff]
    %v9056 = vld [vmem:[%s9040 + $0x78] sm:$0xff]
    %v9058 = vsel %vm695, %v9041, 0
    %v9061 = vsel %vm695, %v9042, 0
    %v9064 = vsel %vm695, %v9043, 0
    %v9067 = vsel %vm695, %v9044, 0
    %v9070 = vsel %vm695, %v9045, 0
    %v9073 = vsel %vm695, %v9046, 0
    %v9076 = vsel %vm695, %v9047, 0
    %v9079 = vsel %vm695, %v9048, 0
    %v9082 = vsel %vm695, %v9049, 0
    %v9085 = vsel %vm695, %v9050, 0
    %v9088 = vsel %vm695, %v9051, 0
    %v9091 = vsel %vm695, %v9052, 0
    %v9094 = vsel %vm695, %v9053, 0
    %v9097 = vsel %vm695, %v9054, 0
    %v9100 = vsel %vm695, %v9055, 0
    %v9103 = vsel %vm695, %v9056, 0
    %9105 = vmatprep.subr.mxu0 0.0
    %9106 = vmatpush1.msra.mxu0 %v9002
    %9107 = vmatprep.subr.mxu0 0.0
    %9108 = vmatpush1.msra.mxu0 %v9007
    %9109 = vmatprep.subr.mxu0 0.0
    %9110 = vmatpush1.msra.mxu0 %v9012
    %9111 = vmatprep.subr.mxu0 0.0
    %9112 = vmatpush1.msra.mxu0 %v9017
    %9113 = vmatprep.subr.mxu0 0.0
    %9114 = vmatpush1.msra.mxu0 %v9022
    %9115 = vmatprep.subr.mxu0 0.0
    %9116 = vmatpush1.msra.mxu0 %v9027
    %9117 = vmatprep.subr.mxu0 0.0
    %9118 = vmatpush1.msra.mxu0 %v9032
    %9119 = vmatprep.subr.mxu0 0.0
    %9120 = vmatpush1.msra.mxu0 %v9037
    %9121 = vmatprep.subr.mxu0 0.0
    %9122 = vmatpush1.msra.mxu0 0.0
    %9123 = vmatprep.subr.mxu0 0.0
    %9124 = vmatpush1.msra.mxu0 0.0
    %9125 = vmatprep.subr.mxu0 0.0
    %9126 = vmatpush1.msra.mxu0 0.0
    %9127 = vmatprep.subr.mxu0 0.0
    %9128 = vmatpush1.msra.mxu0 0.0
    %9129 = vmatprep.subr.mxu0 0.0
    %9130 = vmatpush1.msra.mxu0 0.0
    %9131 = vmatprep.subr.mxu0 0.0
    %9132 = vmatpush1.msra.mxu0 0.0
    %9133 = vmatprep.subr.mxu0 0.0
    %9134 = vmatpush1.msra.mxu0 0.0
    %9135 = vmatprep.subr.mxu0 0.0
    %9136 = vmatpush1.msra.mxu0 0.0
    %9137 = vmatprep.subr.mxu0 0.0
    %9138 = vmatpush1.msra.mxu0 0.0
    %9139 = vmatprep.subr.mxu0 0.0
    %9140 = vmatpush1.msra.mxu0 0.0
    %9141 = vmatprep.subr.mxu0 0.0
    %9142 = vmatpush1.msra.mxu0 0.0
    %9143 = vmatprep.subr.mxu0 0.0
    %9144 = vmatpush1.msra.mxu0 0.0
    %9145 = vmatprep.subr.mxu0 0.0
    %9146 = vmatpush1.msra.mxu0 0.0
    %9147 = vmatprep.subr.mxu0 0.0
    %9148 = vmatpush1.msra.mxu0 0.0
    %9149 = vmatprep.subr.mxu0 0.0
    %9150 = vmatpush1.msra.mxu0 0.0
    %9151 = vmatprep.subr.mxu0 0.0
    %9152 = vmatpush1.msra.mxu0 0.0
    %9153 = vmatprep.subr.mxu0 0.0
    %9154 = vmatpush1.msra.mxu0 0.0
    %9155 = vmatprep.subr.mxu0 0.0
    %9156 = vmatpush1.msra.mxu0 0.0
    %9157 = vmatprep.subr.mxu0 0.0
    %9158 = vmatpush1.msra.mxu0 0.0
    %9159 = vmatprep.subr.mxu0 0.0
    %9160 = vmatpush1.msra.mxu0 0.0
    %9161 = vmatprep.subr.mxu0 0.0
    %9162 = vmatpush1.msra.mxu0 0.0
    %9163 = vmatprep.subr.mxu0 0.0
    %9164 = vmatpush1.msra.mxu0 0.0
    %9165 = vmatprep.subr.mxu0 0.0
    %9166 = vmatpush1.msra.mxu0 0.0
    %9167 = vmatprep.subr.mxu0 0.0
    %9168 = vmatpush1.msra.mxu0 0.0
    %9169 = vmatprep.mubr.f32.mxu0 0.0
    %9170 = vmatmul.mubr.f32.gmra.mrb[0].mxu0 %v9058
    %v9171 = vpop.f32.mrb[0].mxu0
    %v9172 = vadd.f32 0.0, %v9171
    %v9173 = vpop.f32.mrb[0].mxu0
    %9174 = vmatprep.mubr.f32.mxu0 0.0
    %9175 = vmatmul.mubr.f32.gmra.mrb[0].mxu0 %v9061
    %v9176 = vpop.f32.mrb[0].mxu0
    %v9177 = vadd.f32 0.0, %v9176
    %v9178 = vpop.f32.mrb[0].mxu0
    %9179 = vmatprep.mubr.f32.mxu0 0.0
    %9180 = vmatmul.mubr.f32.gmra.mrb[0].mxu0 %v9064
    %v9181 = vpop.f32.mrb[0].mxu0
    %v9182 = vadd.f32 0.0, %v9181
    %v9183 = vpop.f32.mrb[0].mxu0
    %9184 = vmatprep.mubr.f32.mxu0 0.0
    %9185 = vmatmul.mubr.f32.gmra.mrb[0].mxu0 %v9067
    %v9186 = vpop.f32.mrb[0].mxu0
    %v9187 = vadd.f32 0.0, %v9186
    %v9188 = vpop.f32.mrb[0].mxu0
    %9189 = vmatprep.mubr.f32.mxu0 0.0
    %9190 = vmatmul.mubr.f32.gmra.mrb[0].mxu0 %v9070
    %v9191 = vpop.f32.mrb[0].mxu0
    %v9192 = vadd.f32 0.0, %v9191
    %v9193 = vpop.f32.mrb[0].mxu0
    %9194 = vmatprep.mubr.f32.mxu0 0.0
    %9195 = vmatmul.mubr.f32.gmra.mrb[0].mxu0 %v9073
    %v9196 = vpop.f32.mrb[0].mxu0
    %v9197 = vadd.f32 0.0, %v9196
    %v9198 = vpop.f32.mrb[0].mxu0
    %9199 = vmatprep.mubr.f32.mxu0 0.0
    %9200 = vmatmul.mubr.f32.gmra.mrb[0].mxu0 %v9076
    %v9201 = vpop.f32.mrb[0].mxu0
    %v9202 = vadd.f32 0.0, %v9201
    %v9203 = vpop.f32.mrb[0].mxu0
    %9204 = vmatprep.mubr.f32.mxu0 0.0
    %9205 = vmatmul.mubr.f32.gmra.mrb[0].mxu0 %v9079
    %v9206 = vpop.f32.mrb[0].mxu0
    %v9207 = vadd.f32 0.0, %v9206
    %v9208 = vpop.f32.mrb[0].mxu0
    %9209 = vmatprep.mubr.f32.mxu0 0.0
    %9210 = vmatmul.mubr.f32.gmra.mrb[0].mxu0 %v9082
    %v9211 = vpop.f32.mrb[0].mxu0
    %v9212 = vadd.f32 0.0, %v9211
    %v9213 = vpop.f32.mrb[0].mxu0
    %9214 = vmatprep.mubr.f32.mxu0 0.0
    %9215 = vmatmul.mubr.f32.gmra.mrb[0].mxu0 %v9085
    %v9216 = vpop.f32.mrb[0].mxu0
    %v9217 = vadd.f32 0.0, %v9216
    %v9218 = vpop.f32.mrb[0].mxu0
    %9219 = vmatprep.mubr.f32.mxu0 0.0
    %9220 = vmatmul.mubr.f32.gmra.mrb[0].mxu0 %v9088
    %v9221 = vpop.f32.mrb[0].mxu0
    %v9222 = vadd.f32 0.0, %v9221
    %v9223 = vpop.f32.mrb[0].mxu0
    %9224 = vmatprep.mubr.f32.mxu0 0.0
    %9225 = vmatmul.mubr.f32.gmra.mrb[0].mxu0 %v9091
    %v9226 = vpop.f32.mrb[0].mxu0
    %v9227 = vadd.f32 0.0, %v9226
    %v9228 = vpop.f32.mrb[0].mxu0
    %9229 = vmatprep.mubr.f32.mxu0 0.0
    %9230 = vmatmul.mubr.f32.gmra.mrb[0].mxu0 %v9094
    %v9231 = vpop.f32.mrb[0].mxu0
    %v9232 = vadd.f32 0.0, %v9231
    %v9233 = vpop.f32.mrb[0].mxu0
    %9234 = vmatprep.mubr.f32.mxu0 0.0
    %9235 = vmatmul.mubr.f32.gmra.mrb[0].mxu0 %v9097
    %v9236 = vpop.f32.mrb[0].mxu0
    %v9237 = vadd.f32 0.0, %v9236
    %v9238 = vpop.f32.mrb[0].mxu0
    %9239 = vmatprep.mubr.f32.mxu0 0.0
    %9240 = vmatmul.mubr.f32.gmra.mrb[0].mxu0 %v9100
    %v9241 = vpop.f32.mrb[0].mxu0
    %v9242 = vadd.f32 0.0, %v9241
    %v9243 = vpop.f32.mrb[0].mxu0
    %9244 = vmatprep.mubr.f32.mxu0 0.0
    %9245 = vmatmul.mubr.f32.gmra.mrb[0].mxu0 %v9103
    %v9246 = vpop.f32.mrb[0].mxu0
    %v9247 = vadd.f32 0.0, %v9246
    %v9248 = vpop.f32.mrb[0].mxu0
    %9249 = vdwg.mxu0
    %v9250 = vadd.f32 %v8902, %v9172
    %v9251 = vadd.f32 %v8903, %v9177
    %v9252 = vadd.f32 %v8904, %v9182
    %v9253 = vadd.f32 %v8905, %v9187
    %v9254 = vadd.f32 %v8906, %v9192
    %v9255 = vadd.f32 %v8907, %v9197
    %v9256 = vadd.f32 %v8908, %v9202
    %v9257 = vadd.f32 %v8909, %v9207
    %v9258 = vadd.f32 %v8910, %v9212
    %v9259 = vadd.f32 %v8911, %v9217
    %v9260 = vadd.f32 %v8912, %v9222
    %v9261 = vadd.f32 %v8913, %v9227
    %v9262 = vadd.f32 %v8914, %v9232
    %v9263 = vadd.f32 %v8915, %v9237
    %v9264 = vadd.f32 %v8916, %v9242
    %v9265 = vadd.f32 %v8917, %v9247
    %v9266 = vld [vmem:[#allocation14] sm:$0x1]
    %v9268 = vlaneseq
    %v9269 = vshrl.u32 %v9268, 7
    %v9270 = vsub.s32 0, %v9269
    %v9271 = vrot.slane %v9266, %v9270
    %v9273 = vadd.f32 %v9250, %v9271
    %v9274 = vadd.f32 %v9251, %v9271
    %v9275 = vadd.f32 %v9252, %v9271
    %v9276 = vadd.f32 %v9253, %v9271
    %v9277 = vadd.f32 %v9254, %v9271
    %v9278 = vadd.f32 %v9255, %v9271
    %v9279 = vadd.f32 %v9256, %v9271
    %v9280 = vadd.f32 %v9257, %v9271
    %v9281 = vadd.f32 %v9258, %v9271
    %v9282 = vadd.f32 %v9259, %v9271
    %v9283 = vadd.f32 %v9260, %v9271
    %v9284 = vadd.f32 %v9261, %v9271
    %v9285 = vadd.f32 %v9262, %v9271
    %v9286 = vadd.f32 %v9263, %v9271
    %v9287 = vadd.f32 %v9264, %v9271
    %v9288 = vadd.f32 %v9265, %v9271
    %v9289 = vmax.f32 %v9273, 0.0
    %v9290 = vmax.f32 %v9274, 0.0
    %v9291 = vmax.f32 %v9275, 0.0
    %v9292 = vmax.f32 %v9276, 0.0
    %v9293 = vmax.f32 %v9277, 0.0
    %v9294 = vmax.f32 %v9278, 0.0
    %v9295 = vmax.f32 %v9279, 0.0
    %v9296 = vmax.f32 %v9280, 0.0
    %v9297 = vmax.f32 %v9281, 0.0
    %v9298 = vmax.f32 %v9282, 0.0
    %v9299 = vmax.f32 %v9283, 0.0
    %v9300 = vmax.f32 %v9284, 0.0
    %v9301 = vmax.f32 %v9285, 0.0
    %v9302 = vmax.f32 %v9286, 0.0
    %v9303 = vmax.f32 %v9287, 0.0
    %v9304 = vmax.f32 %v9288, 0.0
    %9305 = vst.msk [vmem:[#allocation35] sm:$0xff] %vm695, %v9289
    %9306 = vst.msk [vmem:[#allocation35 + $0x8] sm:$0xff] %vm695, %v9290
    %9307 = vst.msk [vmem:[#allocation35 + $0x10] sm:$0xff] %vm695, %v9291
    %9308 = vst.msk [vmem:[#allocation35 + $0x18] sm:$0xff] %vm695, %v9292
    %9309 = vst.msk [vmem:[#allocation35 + $0x20] sm:$0xff] %vm695, %v9293
    %9310 = vst.msk [vmem:[#allocation35 + $0x28] sm:$0xff] %vm695, %v9294
    %9311 = vst.msk [vmem:[#allocation35 + $0x30] sm:$0xff] %vm695, %v9295
    %9312 = vst.msk [vmem:[#allocation35 + $0x38] sm:$0xff] %vm695, %v9296
    %9313 = vst.msk [vmem:[#allocation35 + $0x40] sm:$0xff] %vm695, %v9297
    %9314 = vst.msk [vmem:[#allocation35 + $0x48] sm:$0xff] %vm695, %v9298
    %9315 = vst.msk [vmem:[#allocation35 + $0x50] sm:$0xff] %vm695, %v9299
    %9316 = vst.msk [vmem:[#allocation35 + $0x58] sm:$0xff] %vm695, %v9300
    %9317 = vst.msk [vmem:[#allocation35 + $0x60] sm:$0xff] %vm695, %v9301
    %9318 = vst.msk [vmem:[#allocation35 + $0x68] sm:$0xff] %vm695, %v9302
    %9319 = vst.msk [vmem:[#allocation35 + $0x70] sm:$0xff] %vm695, %v9303
    %9320 = vst.msk [vmem:[#allocation35 + $0x78] sm:$0xff] %vm695, %v9304
    // Predicated region
    $region250: #{image_reconstructor_forward.1} parent=1 // pred_check
      _
    $region251: #{image_reconstructor_forward.1} parent=1 // pred_check_branch
      %9322 = sbr.rel (0) target = $region253
    $region252: #{image_reconstructor_forward.1} parent=1 // pred_region
      %s9324 = ssub.s32 2048, 2048
      %9325 = vsyncadd [#allocation4], %s9324
      %s9326 = sshll.u32 [#allocation35], 4
      %s9327 = int_to_ptr.vmem [resolvable:$true] %s9326
      %9332 = dma.vmem_to_hbm [thread:$0]  %s9327, 2048, %s83, [#allocation4], 128, 128, 8
    $region253: #{image_reconstructor_forward.1} parent=1 // pred_fallthru
      _
    // Predicated region
    $region254: #{image_reconstructor_forward.1} parent=1 // pred_check
      _
    $region255: #{image_reconstructor_forward.1} parent=1 // pred_check_branch
      %9334 = sbr.rel (0) target = $region257
    $region256: #{image_reconstructor_forward.1} parent=1 // pred_region
      %9335 = dma.done [#allocation4], 2048
    $region257: #{image_reconstructor_forward.1} parent=1 // pred_fallthru
      _
    %9336 = vsyncpa [#allocation3], 1
    %9337 = vsyncpa [#allocation6], 1
    %9338 = vsyncpa [#allocation9], 1
    %9339 = vsyncpa [#allocation12], 1
    %9340 = vsyncpa [#allocation15], 1
    %9341 = vsyncpa [#allocation18], 1
    %9342 = vsyncpa [#allocation21], 1
    %9343 = vsyncpa [#allocation24], 1
    %9344 = vsyncpa [#allocation27], 1
    %9345 = vsyncpa [#allocation30], 1
    %9346 = vsyncpa [#allocation33], 1
    %9347 = vsyncpa [#allocation4], 1

</llo_original>
